<compile_context>
chip_gen: v6e
topology: v6e:2x2x1
jax: 0.10.0
libtpu: 0.0.40
codegen_flags: <defaults>
</compile_context>

<pallas_src>
import jax
import jax.numpy as jnp
from jax.experimental import pallas as pl
from jax.experimental.pallas import tpu as pltpu

_LANE = 128
_SUBLANE = 8
# Double-buffered working-set budget for the three row tiles (E, table_mapping,
# out).  Conservative enough for v7x (64 MiB physical / 32 MiB scoped default).
_VMEM_TILE_BUDGET = 16 * 1024 * 1024
_VMEM_LIMIT_BYTES = 32 * 1024 * 1024


def _tnn_fused_kernel(e_ref, tm_ref, w_ref, out_ref):
    """out[:, :dE] = E tile (passthrough); out[:, dE:] = tm tile @ W (MXU)."""
    dE = e_ref.shape[1]
    a = jnp.dot(tm_ref[...], w_ref[...], preferred_element_type=jnp.float32)
    out_ref[:, :dE] = e_ref[...].astype(out_ref.dtype)
    out_ref[:, dE:] = a.astype(out_ref.dtype)


def _round_up(x, m):
    return ((x + m - 1) // m) * m


def _choose_block_n(N, dE, tn, dW, itemsize):
    """Pick the row-tile size from the lane-padded, double-buffered footprint."""
    padded_row_bytes = (
        _round_up(dE, _LANE) + _round_up(tn, _LANE) + _round_up(dE + dW, _LANE)
    ) * itemsize * 2  # x2: each BlockSpec tile is double-buffered
    max_rows_vmem = max(_SUBLANE, _VMEM_TILE_BUDGET // padded_row_bytes)
    # Cap at cdiv(N, 2): always >= 2 "parallel" grid steps so both v7x
    # TensorCores are used (harmless on single-TC v5e/v6e).
    block_n = min(max_rows_vmem, pl.cdiv(N, 2))
    block_n = max(_SUBLANE, (block_n // _SUBLANE) * _SUBLANE)
    return block_n


def tnn_forward(E, table_mapping, W, *, min_rows_for_kernel=4096):
    """E: (N, dE), table_mapping: (N, tn), W: (tn, dW) -> (N, dE + dW)."""
    N, dE = E.shape
    N2, tn = table_mapping.shape
    assert N == N2
    tn2, dW = W.shape
    assert tn == tn2

    out_dtype = jnp.result_type(E.dtype, table_mapping.dtype, W.dtype)

    if N < min_rows_for_kernel:
        # Fast path: at small N the pallas_call launch/DMA-setup overhead
        # exceeds the entire op; XLA does the tiny fused GEMM + concat.
        A = (table_mapping @ W).astype(out_dtype)
        return jnp.concatenate([E.astype(out_dtype), A], axis=1)

    block_n = _choose_block_n(N, dE, tn, dW, jnp.dtype(out_dtype).itemsize)
    grid_n = pl.cdiv(N, block_n)
    # Tail block (when block_n does not divide N) is safe: output rows are
    # independent and Pallas clips the out-of-bounds writeback.

    cost = pl.CostEstimate(
        flops=2 * N * tn * dW,
        transcendentals=0,
        bytes_accessed=(
            E.dtype.itemsize * N * dE
            + table_mapping.dtype.itemsize * N * tn
            + W.dtype.itemsize * tn * dW
            + jnp.dtype(out_dtype).itemsize * N * (dE + dW)
        ),
    )

    return pl.pallas_call(
        _tnn_fused_kernel,
        out_shape=jax.ShapeDtypeStruct((N, dE + dW), out_dtype),
        grid_spec=pltpu.PrefetchScalarGridSpec(
            num_scalar_prefetch=0,
            grid=(grid_n,),
            in_specs=[
                pl.BlockSpec((block_n, dE), lambda i: (i, 0)),   # E row tile
                pl.BlockSpec((block_n, tn), lambda i: (i, 0)),   # table_mapping tile
                pl.BlockSpec((tn, dW), lambda i: (0, 0)),        # W, resident across grid
            ],
            out_specs=pl.BlockSpec((block_n, dE + dW), lambda i: (i, 0)),
        ),
        compiler_params=pltpu.CompilerParams(
            dimension_semantics=("parallel",),
            vmem_limit_bytes=_VMEM_LIMIT_BYTES,
        ),
        cost_estimate=cost,
    )(E, table_mapping, W)

    # TODO(synk): self.activation = nn.Softmax(dim=1) is defined in __init__
    # but never applied in forward(), so it is intentionally not implemented.


if __name__ == "__main__":
    key = jax.random.PRNGKey(0)
    k_w, k_e, k_tm, k_e2, k_tm2 = jax.random.split(key, 5)

    tn, dW, dE = 8, 10, 32  # W is (tn, 10) in the module

    # Deterministic parameter init (mirrors torch.randn(tn, 10)).
    W = jax.random.normal(k_w, (tn, dW), dtype=jnp.float32)

    # Case 1: small, module-consistent shapes -> XLA fast path.
    N_small = 128
    E_s = jax.random.normal(k_e, (N_small, dE), dtype=jnp.float32)
    tm_s = jax.random.normal(k_tm, (N_small, tn), dtype=jnp.float32)
    out_s = jax.block_until_ready(tnn_forward(E_s, tm_s, W))
    ref_s = jnp.concatenate([E_s, tm_s @ W], axis=1)
    assert out_s.shape == (N_small, dE + dW)
    assert jnp.allclose(out_s, ref_s, atol=1e-5, rtol=1e-5)

    # Case 2: larger N -> exercises the Pallas kernel path, including the
    # >=2-step parallel grid and the masked tail block (N not a multiple of
    # the chosen block_n).
    N_big = 9000
    E_b = jax.random.normal(k_e2, (N_big, dE), dtype=jnp.float32)
    tm_b = jax.random.normal(k_tm2, (N_big, tn), dtype=jnp.float32)
    out_b = jax.block_until_ready(tnn_forward(E_b, tm_b, W))
    ref_b = jnp.concatenate([E_b, tm_b @ W], axis=1)
    assert out_b.shape == (N_big, dE + dW)
    assert jnp.allclose(out_b, ref_b, atol=1e-5, rtol=1e-5)

    print("KERNEL_OK")
</pallas_src>

<mosaic_0001>
module attributes {stable_mosaic.version = 11 : i64} {
  func.func @_tnn_fused_kernel(%arg0: i32, %arg1: memref<4496x32xf32, #tpu.memory_space<vmem>>, %arg2: memref<4496x8xf32, #tpu.memory_space<vmem>>, %arg3: memref<8x10xf32, #tpu.memory_space<vmem>>, %arg4: memref<4496x42xf32, #tpu.memory_space<vmem>>) attributes {dimension_semantics = [#tpu.dimension_semantics<parallel>], iteration_bounds = array<i64: 3>, scalar_prefetch = 0 : i64, scratch_operands = 0 : i64, tpu.core_type = #tpu.core_type<tc>, window_params = [{transform_indices = @transform_0, window_bounds = array<i64: 4496, 32>}, {transform_indices = @transform_1, window_bounds = array<i64: 4496, 8>}, {pipeline_mode = #tpu.pipeline_mode<synchronous>, transform_indices = @transform_2, window_bounds = array<i64: 8, 10>}, {transform_indices = @transform_3, window_bounds = array<i64: 4496, 42>}]} {
    %c0 = arith.constant 0 : index
    %c0_0 = arith.constant 0 : index
    %0 = vector.load %arg2[%c0, %c0_0] : memref<4496x8xf32, #tpu.memory_space<vmem>>, vector<4496x8xf32>
    %c0_1 = arith.constant 0 : index
    %c0_2 = arith.constant 0 : index
    %1 = vector.load %arg3[%c0_1, %c0_2] : memref<8x10xf32, #tpu.memory_space<vmem>>, vector<8x10xf32>
    %cst = arith.constant dense<0.000000e+00> : vector<4496x10xf32>
    %2 = tpu.matmul %0, %1, %cst {dimension_numbers = #tpu.dot_dimension_numbers<[1], [0], [0], [1], [0, 0, 1, 1], [], []>} : vector<4496x8xf32>, vector<8x10xf32>, vector<4496x10xf32> -> vector<4496x10xf32>
    %c0_3 = arith.constant 0 : index
    %c0_4 = arith.constant 0 : index
    %3 = vector.load %arg1[%c0_3, %c0_4] : memref<4496x32xf32, #tpu.memory_space<vmem>>, vector<4496x32xf32>
    %c0_5 = arith.constant 0 : index
    %c0_6 = arith.constant 0 : index
    %4 = vector.load %arg4[%c0_5, %c0_6] : memref<4496x42xf32, #tpu.memory_space<vmem>>, vector<4496x32xf32>
    tpu.vector_store %arg4[%c0_5, %c0_6], %3 {strides = array<i32>} : memref<4496x42xf32, #tpu.memory_space<vmem>>, vector<4496x32xf32>,
    %c0_7 = arith.constant 0 : index
    %c32 = arith.constant 32 : index
    %5 = vector.load %arg4[%c0_7, %c32] : memref<4496x42xf32, #tpu.memory_space<vmem>>, vector<4496x10xf32>
    tpu.vector_store %arg4[%c0_7, %c32], %2 {strides = array<i32>} : memref<4496x42xf32, #tpu.memory_space<vmem>>, vector<4496x10xf32>,
    return
  }
  func.func @transform_0(%arg0: i32) -> (i32, i32) {
    %c0_i32 = arith.constant 0 : i32
    %c0_i32_0 = arith.constant 0 : i32
    return %arg0, %c0_i32 : i32, i32
  }
  func.func @transform_1(%arg0: i32) -> (i32, i32) {
    %c0_i32 = arith.constant 0 : i32
    %c0_i32_0 = arith.constant 0 : i32
    return %arg0, %c0_i32 : i32, i32
  }
  func.func @transform_2(%arg0: i32) -> (i32, i32) {
    %c0_i32 = arith.constant 0 : i32
    %c0_i32_0 = arith.constant 0 : i32
    %c0_i32_1 = arith.constant 0 : i32
    return %c0_i32, %c0_i32_0 : i32, i32
  }
  func.func @transform_3(%arg0: i32) -> (i32, i32) {
    %c0_i32 = arith.constant 0 : i32
    %c0_i32_0 = arith.constant 0 : i32
    return %arg0, %c0_i32 : i32, i32
  }
}

</mosaic_0001>

<llo_original>
// kernel: tpu_custom_call.1
$region0: #{tpu_custom_call.1}
  #allocation0 [shape = 'u32[]', space=smem, size = 0x4, offset = 0x4, fixed_abs, tag = 'smem constant byte address 0x4 - core index']
  #allocation1 [shape = 'u32[144,128]{1,0:T(1,128)}', space=vmem, size = 0x12000, scoped, tag = 'internal scratch']
  %s0 = inlined_call_operand.vmem [shape: f32[9000,32], index: 0, kind: input, shape index: {}]
  %s1 = inlined_call_operand.vmem [shape: f32[9000,8], index: 1, kind: input, shape index: {}]
  %s2 = inlined_call_operand.vmem [shape: f32[8,10], index: 2, kind: input, shape index: {}]
  %s3 = inlined_call_operand.vmem [shape: f32[9000,42], index: 3, kind: output, shape index: {}]
  %s4 = sld [smem:[#allocation0]]
  $region93: #{tpu_custom_call.1} parent=0
    _
  %s6 = ssub.s32 1, %s4
  %s7 = scalar_select 0, %s6, %s4
  $region1: #{tpu_custom_call.1} parent=0
    #allocation2 [shape = 'u8[4603904]{0}', space=vmem, size = 0x464000, scoped, tag = 'output window, operand 0']
    loop: start=0, step=1, limit=5
    $region2: #{tpu_custom_call.1} parent=1 // loop_pre_header
      _
    $region3: #{tpu_custom_call.1} parent=1 // loop_header
      %s9 = sphi 0, %s13
      %p10 = scmp.ge.s32.totalorder %s9, 5
      %s19 = sphi 0, %s21
      %s22 = sphi 0, %s19
      %s23 = sphi 0, %s22
      %s39 = sphi 0, %s23
      %s45 = sphi 0, %s47
      %s48 = sphi 0, %s45
      %s49 = sphi 0, %s48
      %s65 = sphi 0, %s49
      %s69 = sphi 0, %s69
      %s71 = sphi 0, %s69
      %s72 = sphi 0, %s71
      %s86 = sphi 0, %s72
      %s92 = sphi 0, %s94
      %s95 = sphi 0, %s92
      %s96 = sphi 0, %s95
      %s112 = sphi 0, %s96
    $region4: #{tpu_custom_call.1} parent=1 // loop_header_branch
      %12 = sbr.rel (%p10) target = $region8
    $region5: #{tpu_custom_call.1} parent=1 // loop_body
      %s14 = ssub.s32 %s9, 1
      %s15 = ssub.s32 %s9, 2
      %s16 = sadd.s32 %s9, 1
      %s17 = ssub.s32 %s9, %s16
      %p18 = scmp.eq.s32.totalorder %s17, 0
      %s20 = sadd.s32 %s19, 1
      %s21 = scalar_select %p18, %s19, %s20
      %p24 = pneg %p18
      %p25 = scmp.eq.s32.totalorder %s9, 2
      %p26 = por %p24, %p25
      %p27 = scmp.ne.s32.totalorder %s19, %s22
      %p28 = scmp.eq.s32.totalorder %s9, 0
      %p29 = por %p27, %p28
      %p30 = scmp.ne.s32.totalorder %s19, %s22
      %p31 = scmp.eq.s32.totalorder %s14, 2
      %p32 = por %p30, %p31
      %p33 = scmp.ne.s32.totalorder %s22, %s23
      %p34 = scmp.eq.s32.totalorder %s14, 0
      %p35 = por %p33, %p34
      %p36 = scmp.ne.s32.totalorder %s22, %s23
      %p37 = scmp.eq.s32.totalorder %s15, 2
      %p38 = por %p36, %p37
      %p40 = scmp.ne.s32.totalorder %s23, %s39
      %p41 = scmp.eq.s32.totalorder %s15, 0
      %p42 = por %p40, %p41
      %s43 = ssub.s32 %s9, %s16
      %p44 = scmp.eq.s32.totalorder %s43, 0
      %s46 = sadd.s32 %s45, 1
      %s47 = scalar_select %p44, %s45, %s46
      %p50 = pneg %p44
      %p51 = scmp.eq.s32.totalorder %s9, 2
      %p52 = por %p50, %p51
      %p53 = scmp.ne.s32.totalorder %s45, %s48
      %p54 = scmp.eq.s32.totalorder %s9, 0
      %p55 = por %p53, %p54
      %p56 = scmp.ne.s32.totalorder %s45, %s48
      %p57 = scmp.eq.s32.totalorder %s14, 2
      %p58 = por %p56, %p57
      %p59 = scmp.ne.s32.totalorder %s48, %s49
      %p60 = scmp.eq.s32.totalorder %s14, 0
      %p61 = por %p59, %p60
      %p62 = scmp.ne.s32.totalorder %s48, %s49
      %p63 = scmp.eq.s32.totalorder %s15, 2
      %p64 = por %p62, %p63
      %p66 = scmp.ne.s32.totalorder %s49, %s65
      %p67 = scmp.eq.s32.totalorder %s15, 0
      %p68 = por %p66, %p67
      %s70 = sadd.s32 %s69, 1
      %p73 = scmp.eq.s32.totalorder %s9, 2
      %p74 = scmp.ne.s32.totalorder %s69, %s71
      %p75 = scmp.eq.s32.totalorder %s9, 0
      %p76 = por %p74, %p75
      %p77 = scmp.ne.s32.totalorder %s69, %s71
      %p78 = scmp.eq.s32.totalorder %s14, 2
      %p79 = por %p77, %p78
      %p80 = scmp.ne.s32.totalorder %s71, %s72
      %p81 = scmp.eq.s32.totalorder %s14, 0
      %p82 = por %p80, %p81
      %p83 = scmp.ne.s32.totalorder %s71, %s72
      %p84 = scmp.eq.s32.totalorder %s15, 2
      %p85 = por %p83, %p84
      %p87 = scmp.ne.s32.totalorder %s72, %s86
      %p88 = scmp.eq.s32.totalorder %s15, 0
      %p89 = por %p87, %p88
      %s90 = ssub.s32 %s9, %s16
      %p91 = scmp.eq.s32.totalorder %s90, 0
      %s93 = sadd.s32 %s92, 1
      %s94 = scalar_select %p91, %s92, %s93
      %p97 = pneg %p91
      %p98 = scmp.eq.s32.totalorder %s9, 2
      %p99 = por %p97, %p98
      %p100 = scmp.ne.s32.totalorder %s92, %s95
      %p101 = scmp.eq.s32.totalorder %s9, 0
      %p102 = por %p100, %p101
      %p103 = scmp.ne.s32.totalorder %s92, %s95
      %p104 = scmp.eq.s32.totalorder %s14, 2
      %p105 = por %p103, %p104
      %p106 = scmp.ne.s32.totalorder %s95, %s96
      %p107 = scmp.eq.s32.totalorder %s14, 0
      %p108 = por %p106, %p107
      %p109 = scmp.ne.s32.totalorder %s95, %s96
      %p110 = scmp.eq.s32.totalorder %s15, 2
      %p111 = por %p109, %p110
      %p113 = scmp.ne.s32.totalorder %s96, %s112
      %p114 = scmp.eq.s32.totalorder %s15, 0
      %p115 = por %p113, %p114
      %p116 = scmp.le.s32.totalorder 1, %s9
      %p117 = scmp.lt.s32.totalorder %s9, 4
      %p118 = pnand %p116, %p117
      %p119 = pneg %p118
      // Predicated region
      $region9: #{tpu_custom_call.1} parent=5 // pred_check
        _
      $region10: #{tpu_custom_call.1} parent=5 // pred_check_branch
        %121 = sbr.rel (%p118) target = $region12
      $region11: #{tpu_custom_call.1} parent=5 // pred_region
        %s122 = ssub.s32 %s9, 1
        // Predicated region
        $region13: #{tpu_custom_call.1} parent=11 // pred_check
          %p123 = pneg %p82
        $region14: #{tpu_custom_call.1} parent=11 // pred_check_branch
          %125 = sbr.rel (%p123) target = $region16
        $region15: #{tpu_custom_call.1} parent=11 // pred_region
          _
        $region16: #{tpu_custom_call.1} parent=11 // pred_fallthru
          _
      $region12: #{tpu_custom_call.1} parent=5 // pred_fallthru
        _
      %p126 = scmp.lt.s32.totalorder %s9, 3
      // Predicated region
      $region17: #{tpu_custom_call.1} parent=5 // pred_check
        %p127 = pneg %p126
      $region18: #{tpu_custom_call.1} parent=5 // pred_check_branch
        %129 = sbr.rel (%p127) target = $region20
      $region19: #{tpu_custom_call.1} parent=5 // pred_region
        // Predicated region
        $region21: #{tpu_custom_call.1} parent=19 // pred_check
          %p130 = pneg %p29
        $region22: #{tpu_custom_call.1} parent=19 // pred_check_branch
          %132 = sbr.rel (%p130) target = $region24
        $region23: #{tpu_custom_call.1} parent=19 // pred_region
          %s133 = smul.u32 562, %s9
          %s134 = ssub.s32 1125, %s133
          %p135 = scmp.lt.s32.totalorder %s134, 562
          %s136 = scalar_select %p135, %s134, 562
          %s137 = smul.u32 128, %s136
          %p138 = scmp.lt.s32.totalorder %s133, 1124
          %s139 = scalar_select %p138, %s133, 1124
          %s140 = smul.addr %s139, 8
          %s141 = scalar_lea.vmem %s0, %s140
          %s142 = smul.u32 562, %s9
          %s143 = ssub.s32 1125, %s142
          %p144 = scmp.lt.s32.totalorder %s143, 562
          %s145 = scalar_select %p144, %s143, 562
          %s146 = smul.u32 128, %s145
        $region24: #{tpu_custom_call.1} parent=19 // pred_fallthru
          _
        // Predicated region
        $region25: #{tpu_custom_call.1} parent=19 // pred_check
          %p147 = pneg %p55
        $region26: #{tpu_custom_call.1} parent=19 // pred_check_branch
          %149 = sbr.rel (%p147) target = $region28
        $region27: #{tpu_custom_call.1} parent=19 // pred_region
          %s150 = smul.u32 562, %s9
          %s151 = ssub.s32 1125, %s150
          %p152 = scmp.lt.s32.totalorder %s151, 562
          %s153 = scalar_select %p152, %s151, 562
          %s154 = smul.u32 128, %s153
          %p155 = scmp.lt.s32.totalorder %s150, 1124
          %s156 = scalar_select %p155, %s150, 1124
          %s157 = smul.addr %s156, 8
          %s158 = scalar_lea.vmem %s1, %s157
          %s159 = smul.u32 562, %s9
          %s160 = ssub.s32 1125, %s159
          %p161 = scmp.lt.s32.totalorder %s160, 562
          %s162 = scalar_select %p161, %s160, 562
          %s163 = smul.u32 128, %s162
        $region28: #{tpu_custom_call.1} parent=19 // pred_fallthru
          _
      $region20: #{tpu_custom_call.1} parent=5 // pred_fallthru
        _
      %p164 = scmp.le.s32.totalorder 1, %s9
      %p165 = scmp.lt.s32.totalorder %s9, 4
      %p166 = pnand %p164, %p165
      %p167 = pneg %p166
      // Predicated region
      $region29: #{tpu_custom_call.1} parent=5 // pred_check
        _
      $region30: #{tpu_custom_call.1} parent=5 // pred_check_branch
        %169 = sbr.rel (%p166) target = $region32
      $region31: #{tpu_custom_call.1} parent=5 // pred_region
        %s170 = ssub.s32 %s9, 1
        %s171 = smul.u32 562, %s14
        %s172 = ssub.s32 1125, %s171
        %p173 = scmp.lt.s32.totalorder %s172, 562
        %s174 = scalar_select %p173, %s172, 562
        %s175 = smul.u32 128, %s174
        %p176 = scmp.lt.s32.totalorder %s171, 1124
        %s177 = scalar_select %p176, %s171, 1124
        %s178 = smul.addr %s177, 8
        %s179 = scalar_lea.vmem %s0, %s178
        %p180 = pneg %p35
        %p181 = pneg %p32
        %s182 = smul.u32 562, %s14
        %s183 = ssub.s32 1125, %s182
        %p184 = scmp.lt.s32.totalorder %s183, 562
        %s185 = scalar_select %p184, %s183, 562
        %s186 = smul.u32 128, %s185
        %p187 = scmp.lt.s32.totalorder %s182, 1124
        %s188 = scalar_select %p187, %s182, 1124
        %s189 = smul.addr %s188, 8
        %s190 = scalar_lea.vmem %s1, %s189
        %p191 = pneg %p61
        %p192 = pneg %p58
        %p193 = pneg %p82
        %p194 = pneg %p79
        %p195 = pneg %p108
        %p196 = pneg %p105
        %s197 = sand.u32 %s95, 1
        %s198 = sand.u32 %s95, 1
        %s199 = smul.addr %s198, 4496
        %s200 = scalar_lea.vmem [#allocation2], %s199
        %s201 = smul.u32 562, %s14
        %s202 = ssub.s32 1125, %s201
        %p203 = scmp.lt.s32.totalorder %s202, 562
        %s204 = scalar_select %p203, %s202, 562
        %s205 = smul.u32 128, %s204
        %p206 = scmp.lt.s32.totalorder %s201, 1124
        %s207 = scalar_select %p206, %s201, 1124
        %s208 = smul.addr %s207, 8
        %s209 = scalar_lea.vmem %s0, %s208
        %s210 = smul.u32 562, %s14
        %s211 = ssub.s32 1125, %s210
        %p212 = scmp.lt.s32.totalorder %s211, 562
        %s213 = scalar_select %p212, %s211, 562
        %s214 = smul.u32 128, %s213
        %s215 = smul.u32 562, %s14
        %s216 = ssub.s32 1125, %s215
        %p217 = scmp.lt.s32.totalorder %s216, 562
        %s218 = scalar_select %p217, %s216, 562
        %s219 = smul.u32 128, %s218
        %p220 = scmp.lt.s32.totalorder %s215, 1124
        %s221 = scalar_select %p220, %s215, 1124
        %s222 = smul.addr %s221, 8
        %s223 = scalar_lea.vmem %s1, %s222
        %s224 = smul.u32 562, %s14
        %s225 = ssub.s32 1125, %s224
        %p226 = scmp.lt.s32.totalorder %s225, 562
        %s227 = scalar_select %p226, %s225, 562
        %s228 = smul.u32 128, %s227
        %s229 = smul.u32 562, %s14
        %s230 = ssub.s32 1125, %s229
        %p231 = scmp.lt.s32.totalorder %s230, 562
        %s232 = scalar_select %p231, %s230, 562
        %s233 = smul.u32 128, %s232
        %v234 = vld [vmem:[%s223] sm:$0xff]
        %v235 = vld [vmem:[%s223 + $0x8] sm:$0xff]
        %v236 = vld [vmem:[%s223 + $0x10] sm:$0xff]
        %v237 = vld [vmem:[%s223 + $0x18] sm:$0xff]
        %v238 = vld [vmem:[%s223 + $0x20] sm:$0xff]
        %v239 = vld [vmem:[%s223 + $0x28] sm:$0xff]
        %v240 = vld [vmem:[%s223 + $0x30] sm:$0xff]
        %v241 = vld [vmem:[%s223 + $0x38] sm:$0xff]
        %v242 = vld [vmem:[%s223 + $0x40] sm:$0xff]
        %v243 = vld [vmem:[%s223 + $0x48] sm:$0xff]
        %v244 = vld [vmem:[%s223 + $0x50] sm:$0xff]
        %v245 = vld [vmem:[%s223 + $0x58] sm:$0xff]
        %v246 = vld [vmem:[%s223 + $0x60] sm:$0xff]
        %v247 = vld [vmem:[%s223 + $0x68] sm:$0xff]
        %v248 = vld [vmem:[%s223 + $0x70] sm:$0xff]
        %v249 = vld [vmem:[%s223 + $0x78] sm:$0xff]
        %v250 = vld [vmem:[%s223 + $0x80] sm:$0xff]
        %v251 = vld [vmem:[%s223 + $0x88] sm:$0xff]
        %v252 = vld [vmem:[%s223 + $0x90] sm:$0xff]
        %v253 = vld [vmem:[%s223 + $0x98] sm:$0xff]
        %v254 = vld [vmem:[%s223 + $0xa0] sm:$0xff]
        %v255 = vld [vmem:[%s223 + $0xa8] sm:$0xff]
        %v256 = vld [vmem:[%s223 + $0xb0] sm:$0xff]
        %v257 = vld [vmem:[%s223 + $0xb8] sm:$0xff]
        %v258 = vld [vmem:[%s223 + $0xc0] sm:$0xff]
        %v259 = vld [vmem:[%s223 + $0xc8] sm:$0xff]
        %v260 = vld [vmem:[%s223 + $0xd0] sm:$0xff]
        %v261 = vld [vmem:[%s223 + $0xd8] sm:$0xff]
        %v262 = vld [vmem:[%s223 + $0xe0] sm:$0xff]
        %v263 = vld [vmem:[%s223 + $0xe8] sm:$0xff]
        %v264 = vld [vmem:[%s223 + $0xf0] sm:$0xff]
        %v265 = vld [vmem:[%s223 + $0xf8] sm:$0xff]
        %v266 = vld [vmem:[%s223 + $0x100] sm:$0xff]
        %v267 = vld [vmem:[%s223 + $0x108] sm:$0xff]
        %v268 = vld [vmem:[%s223 + $0x110] sm:$0xff]
        %v269 = vld [vmem:[%s223 + $0x118] sm:$0xff]
        %v270 = vld [vmem:[%s223 + $0x120] sm:$0xff]
        %v271 = vld [vmem:[%s223 + $0x128] sm:$0xff]
        %v272 = vld [vmem:[%s223 + $0x130] sm:$0xff]
        %v273 = vld [vmem:[%s223 + $0x138] sm:$0xff]
        %v274 = vld [vmem:[%s223 + $0x140] sm:$0xff]
        %v275 = vld [vmem:[%s223 + $0x148] sm:$0xff]
        %v276 = vld [vmem:[%s223 + $0x150] sm:$0xff]
        %v277 = vld [vmem:[%s223 + $0x158] sm:$0xff]
        %v278 = vld [vmem:[%s223 + $0x160] sm:$0xff]
        %v279 = vld [vmem:[%s223 + $0x168] sm:$0xff]
        %v280 = vld [vmem:[%s223 + $0x170] sm:$0xff]
        %v281 = vld [vmem:[%s223 + $0x178] sm:$0xff]
        %v282 = vld [vmem:[%s223 + $0x180] sm:$0xff]
        %v283 = vld [vmem:[%s223 + $0x188] sm:$0xff]
        %v284 = vld [vmem:[%s223 + $0x190] sm:$0xff]
        %v285 = vld [vmem:[%s223 + $0x198] sm:$0xff]
        %v286 = vld [vmem:[%s223 + $0x1a0] sm:$0xff]
        %v287 = vld [vmem:[%s223 + $0x1a8] sm:$0xff]
        %v288 = vld [vmem:[%s223 + $0x1b0] sm:$0xff]
        %v289 = vld [vmem:[%s223 + $0x1b8] sm:$0xff]
        %v290 = vld [vmem:[%s223 + $0x1c0] sm:$0xff]
        %v291 = vld [vmem:[%s223 + $0x1c8] sm:$0xff]
        %v292 = vld [vmem:[%s223 + $0x1d0] sm:$0xff]
        %v293 = vld [vmem:[%s223 + $0x1d8] sm:$0xff]
        %v294 = vld [vmem:[%s223 + $0x1e0] sm:$0xff]
        %v295 = vld [vmem:[%s223 + $0x1e8] sm:$0xff]
        %v296 = vld [vmem:[%s223 + $0x1f0] sm:$0xff]
        %v297 = vld [vmem:[%s223 + $0x1f8] sm:$0xff]
        %v298 = vld [vmem:[%s223 + $0x200] sm:$0xff]
        %v299 = vld [vmem:[%s223 + $0x208] sm:$0xff]
        %v300 = vld [vmem:[%s223 + $0x210] sm:$0xff]
        %v301 = vld [vmem:[%s223 + $0x218] sm:$0xff]
        %v302 = vld [vmem:[%s223 + $0x220] sm:$0xff]
        %v303 = vld [vmem:[%s223 + $0x228] sm:$0xff]
        %v304 = vld [vmem:[%s223 + $0x230] sm:$0xff]
        %v305 = vld [vmem:[%s223 + $0x238] sm:$0xff]
        %v306 = vld [vmem:[%s223 + $0x240] sm:$0xff]
        %v307 = vld [vmem:[%s223 + $0x248] sm:$0xff]
        %v308 = vld [vmem:[%s223 + $0x250] sm:$0xff]
        %v309 = vld [vmem:[%s223 + $0x258] sm:$0xff]
        %v310 = vld [vmem:[%s223 + $0x260] sm:$0xff]
        %v311 = vld [vmem:[%s223 + $0x268] sm:$0xff]
        %v312 = vld [vmem:[%s223 + $0x270] sm:$0xff]
        %v313 = vld [vmem:[%s223 + $0x278] sm:$0xff]
        %v314 = vld [vmem:[%s223 + $0x280] sm:$0xff]
        %v315 = vld [vmem:[%s223 + $0x288] sm:$0xff]
        %v316 = vld [vmem:[%s223 + $0x290] sm:$0xff]
        %v317 = vld [vmem:[%s223 + $0x298] sm:$0xff]
        %v318 = vld [vmem:[%s223 + $0x2a0] sm:$0xff]
        %v319 = vld [vmem:[%s223 + $0x2a8] sm:$0xff]
        %v320 = vld [vmem:[%s223 + $0x2b0] sm:$0xff]
        %v321 = vld [vmem:[%s223 + $0x2b8] sm:$0xff]
        %v322 = vld [vmem:[%s223 + $0x2c0] sm:$0xff]
        %v323 = vld [vmem:[%s223 + $0x2c8] sm:$0xff]
        %v324 = vld [vmem:[%s223 + $0x2d0] sm:$0xff]
        %v325 = vld [vmem:[%s223 + $0x2d8] sm:$0xff]
        %v326 = vld [vmem:[%s223 + $0x2e0] sm:$0xff]
        %v327 = vld [vmem:[%s223 + $0x2e8] sm:$0xff]
        %v328 = vld [vmem:[%s223 + $0x2f0] sm:$0xff]
        %v329 = vld [vmem:[%s223 + $0x2f8] sm:$0xff]
        %v330 = vld [vmem:[%s223 + $0x300] sm:$0xff]
        %v331 = vld [vmem:[%s223 + $0x308] sm:$0xff]
        %v332 = vld [vmem:[%s223 + $0x310] sm:$0xff]
        %v333 = vld [vmem:[%s223 + $0x318] sm:$0xff]
        %v334 = vld [vmem:[%s223 + $0x320] sm:$0xff]
        %v335 = vld [vmem:[%s223 + $0x328] sm:$0xff]
        %v336 = vld [vmem:[%s223 + $0x330] sm:$0xff]
        %v337 = vld [vmem:[%s223 + $0x338] sm:$0xff]
        %v338 = vld [vmem:[%s223 + $0x340] sm:$0xff]
        %v339 = vld [vmem:[%s223 + $0x348] sm:$0xff]
        %v340 = vld [vmem:[%s223 + $0x350] sm:$0xff]
        %v341 = vld [vmem:[%s223 + $0x358] sm:$0xff]
        %v342 = vld [vmem:[%s223 + $0x360] sm:$0xff]
        %v343 = vld [vmem:[%s223 + $0x368] sm:$0xff]
        %v344 = vld [vmem:[%s223 + $0x370] sm:$0xff]
        %v345 = vld [vmem:[%s223 + $0x378] sm:$0xff]
        %v346 = vld [vmem:[%s223 + $0x380] sm:$0xff]
        %v347 = vld [vmem:[%s223 + $0x388] sm:$0xff]
        %v348 = vld [vmem:[%s223 + $0x390] sm:$0xff]
        %v349 = vld [vmem:[%s223 + $0x398] sm:$0xff]
        %v350 = vld [vmem:[%s223 + $0x3a0] sm:$0xff]
        %v351 = vld [vmem:[%s223 + $0x3a8] sm:$0xff]
        %v352 = vld [vmem:[%s223 + $0x3b0] sm:$0xff]
        %v353 = vld [vmem:[%s223 + $0x3b8] sm:$0xff]
        %v354 = vld [vmem:[%s223 + $0x3c0] sm:$0xff]
        %v355 = vld [vmem:[%s223 + $0x3c8] sm:$0xff]
        %v356 = vld [vmem:[%s223 + $0x3d0] sm:$0xff]
        %v357 = vld [vmem:[%s223 + $0x3d8] sm:$0xff]
        %v358 = vld [vmem:[%s223 + $0x3e0] sm:$0xff]
        %v359 = vld [vmem:[%s223 + $0x3e8] sm:$0xff]
        %v360 = vld [vmem:[%s223 + $0x3f0] sm:$0xff]
        %v361 = vld [vmem:[%s223 + $0x3f8] sm:$0xff]
        %v362 = vld [vmem:[%s223 + $0x400] sm:$0xff]
        %v363 = vld [vmem:[%s223 + $0x408] sm:$0xff]
        %v364 = vld [vmem:[%s223 + $0x410] sm:$0xff]
        %v365 = vld [vmem:[%s223 + $0x418] sm:$0xff]
        %v366 = vld [vmem:[%s223 + $0x420] sm:$0xff]
        %v367 = vld [vmem:[%s223 + $0x428] sm:$0xff]
        %v368 = vld [vmem:[%s223 + $0x430] sm:$0xff]
        %v369 = vld [vmem:[%s223 + $0x438] sm:$0xff]
        %v370 = vld [vmem:[%s223 + $0x440] sm:$0xff]
        %v371 = vld [vmem:[%s223 + $0x448] sm:$0xff]
        %v372 = vld [vmem:[%s223 + $0x450] sm:$0xff]
        %v373 = vld [vmem:[%s223 + $0x458] sm:$0xff]
        %v374 = vld [vmem:[%s223 + $0x460] sm:$0xff]
        %v375 = vld [vmem:[%s223 + $0x468] sm:$0xff]
        %v376 = vld [vmem:[%s223 + $0x470] sm:$0xff]
        %v377 = vld [vmem:[%s223 + $0x478] sm:$0xff]
        %v378 = vld [vmem:[%s223 + $0x480] sm:$0xff]
        %v379 = vld [vmem:[%s223 + $0x488] sm:$0xff]
        %v380 = vld [vmem:[%s223 + $0x490] sm:$0xff]
        %v381 = vld [vmem:[%s223 + $0x498] sm:$0xff]
        %v382 = vld [vmem:[%s223 + $0x4a0] sm:$0xff]
        %v383 = vld [vmem:[%s223 + $0x4a8] sm:$0xff]
        %v384 = vld [vmem:[%s223 + $0x4b0] sm:$0xff]
        %v385 = vld [vmem:[%s223 + $0x4b8] sm:$0xff]
        %v386 = vld [vmem:[%s223 + $0x4c0] sm:$0xff]
        %v387 = vld [vmem:[%s223 + $0x4c8] sm:$0xff]
        %v388 = vld [vmem:[%s223 + $0x4d0] sm:$0xff]
        %v389 = vld [vmem:[%s223 + $0x4d8] sm:$0xff]
        %v390 = vld [vmem:[%s223 + $0x4e0] sm:$0xff]
        %v391 = vld [vmem:[%s223 + $0x4e8] sm:$0xff]
        %v392 = vld [vmem:[%s223 + $0x4f0] sm:$0xff]
        %v393 = vld [vmem:[%s223 + $0x4f8] sm:$0xff]
        %v394 = vld [vmem:[%s223 + $0x500] sm:$0xff]
        %v395 = vld [vmem:[%s223 + $0x508] sm:$0xff]
        %v396 = vld [vmem:[%s223 + $0x510] sm:$0xff]
        %v397 = vld [vmem:[%s223 + $0x518] sm:$0xff]
        %v398 = vld [vmem:[%s223 + $0x520] sm:$0xff]
        %v399 = vld [vmem:[%s223 + $0x528] sm:$0xff]
        %v400 = vld [vmem:[%s223 + $0x530] sm:$0xff]
        %v401 = vld [vmem:[%s223 + $0x538] sm:$0xff]
        %v402 = vld [vmem:[%s223 + $0x540] sm:$0xff]
        %v403 = vld [vmem:[%s223 + $0x548] sm:$0xff]
        %v404 = vld [vmem:[%s223 + $0x550] sm:$0xff]
        %v405 = vld [vmem:[%s223 + $0x558] sm:$0xff]
        %v406 = vld [vmem:[%s223 + $0x560] sm:$0xff]
        %v407 = vld [vmem:[%s223 + $0x568] sm:$0xff]
        %v408 = vld [vmem:[%s223 + $0x570] sm:$0xff]
        %v409 = vld [vmem:[%s223 + $0x578] sm:$0xff]
        %v410 = vld [vmem:[%s223 + $0x580] sm:$0xff]
        %v411 = vld [vmem:[%s223 + $0x588] sm:$0xff]
        %v412 = vld [vmem:[%s223 + $0x590] sm:$0xff]
        %v413 = vld [vmem:[%s223 + $0x598] sm:$0xff]
        %v414 = vld [vmem:[%s223 + $0x5a0] sm:$0xff]
        %v415 = vld [vmem:[%s223 + $0x5a8] sm:$0xff]
        %v416 = vld [vmem:[%s223 + $0x5b0] sm:$0xff]
        %v417 = vld [vmem:[%s223 + $0x5b8] sm:$0xff]
        %v418 = vld [vmem:[%s223 + $0x5c0] sm:$0xff]
        %v419 = vld [vmem:[%s223 + $0x5c8] sm:$0xff]
        %v420 = vld [vmem:[%s223 + $0x5d0] sm:$0xff]
        %v421 = vld [vmem:[%s223 + $0x5d8] sm:$0xff]
        %v422 = vld [vmem:[%s223 + $0x5e0] sm:$0xff]
        %v423 = vld [vmem:[%s223 + $0x5e8] sm:$0xff]
        %v424 = vld [vmem:[%s223 + $0x5f0] sm:$0xff]
        %v425 = vld [vmem:[%s223 + $0x5f8] sm:$0xff]
        %v426 = vld [vmem:[%s223 + $0x600] sm:$0xff]
        %v427 = vld [vmem:[%s223 + $0x608] sm:$0xff]
        %v428 = vld [vmem:[%s223 + $0x610] sm:$0xff]
        %v429 = vld [vmem:[%s223 + $0x618] sm:$0xff]
        %v430 = vld [vmem:[%s223 + $0x620] sm:$0xff]
        %v431 = vld [vmem:[%s223 + $0x628] sm:$0xff]
        %v432 = vld [vmem:[%s223 + $0x630] sm:$0xff]
        %v433 = vld [vmem:[%s223 + $0x638] sm:$0xff]
        %v434 = vld [vmem:[%s223 + $0x640] sm:$0xff]
        %v435 = vld [vmem:[%s223 + $0x648] sm:$0xff]
        %v436 = vld [vmem:[%s223 + $0x650] sm:$0xff]
        %v437 = vld [vmem:[%s223 + $0x658] sm:$0xff]
        %v438 = vld [vmem:[%s223 + $0x660] sm:$0xff]
        %v439 = vld [vmem:[%s223 + $0x668] sm:$0xff]
        %v440 = vld [vmem:[%s223 + $0x670] sm:$0xff]
        %v441 = vld [vmem:[%s223 + $0x678] sm:$0xff]
        %v442 = vld [vmem:[%s223 + $0x680] sm:$0xff]
        %v443 = vld [vmem:[%s223 + $0x688] sm:$0xff]
        %v444 = vld [vmem:[%s223 + $0x690] sm:$0xff]
        %v445 = vld [vmem:[%s223 + $0x698] sm:$0xff]
        %v446 = vld [vmem:[%s223 + $0x6a0] sm:$0xff]
        %v447 = vld [vmem:[%s223 + $0x6a8] sm:$0xff]
        %v448 = vld [vmem:[%s223 + $0x6b0] sm:$0xff]
        %v449 = vld [vmem:[%s223 + $0x6b8] sm:$0xff]
        %v450 = vld [vmem:[%s223 + $0x6c0] sm:$0xff]
        %v451 = vld [vmem:[%s223 + $0x6c8] sm:$0xff]
        %v452 = vld [vmem:[%s223 + $0x6d0] sm:$0xff]
        %v453 = vld [vmem:[%s223 + $0x6d8] sm:$0xff]
        %v454 = vld [vmem:[%s223 + $0x6e0] sm:$0xff]
        %v455 = vld [vmem:[%s223 + $0x6e8] sm:$0xff]
        %v456 = vld [vmem:[%s223 + $0x6f0] sm:$0xff]
        %v457 = vld [vmem:[%s223 + $0x6f8] sm:$0xff]
        %v458 = vld [vmem:[%s223 + $0x700] sm:$0xff]
        %v459 = vld [vmem:[%s223 + $0x708] sm:$0xff]
        %v460 = vld [vmem:[%s223 + $0x710] sm:$0xff]
        %v461 = vld [vmem:[%s223 + $0x718] sm:$0xff]
        %v462 = vld [vmem:[%s223 + $0x720] sm:$0xff]
        %v463 = vld [vmem:[%s223 + $0x728] sm:$0xff]
        %v464 = vld [vmem:[%s223 + $0x730] sm:$0xff]
        %v465 = vld [vmem:[%s223 + $0x738] sm:$0xff]
        %v466 = vld [vmem:[%s223 + $0x740] sm:$0xff]
        %v467 = vld [vmem:[%s223 + $0x748] sm:$0xff]
        %v468 = vld [vmem:[%s223 + $0x750] sm:$0xff]
        %v469 = vld [vmem:[%s223 + $0x758] sm:$0xff]
        %v470 = vld [vmem:[%s223 + $0x760] sm:$0xff]
        %v471 = vld [vmem:[%s223 + $0x768] sm:$0xff]
        %v472 = vld [vmem:[%s223 + $0x770] sm:$0xff]
        %v473 = vld [vmem:[%s223 + $0x778] sm:$0xff]
        %v474 = vld [vmem:[%s223 + $0x780] sm:$0xff]
        %v475 = vld [vmem:[%s223 + $0x788] sm:$0xff]
        %v476 = vld [vmem:[%s223 + $0x790] sm:$0xff]
        %v477 = vld [vmem:[%s223 + $0x798] sm:$0xff]
        %v478 = vld [vmem:[%s223 + $0x7a0] sm:$0xff]
        %v479 = vld [vmem:[%s223 + $0x7a8] sm:$0xff]
        %v480 = vld [vmem:[%s223 + $0x7b0] sm:$0xff]
        %v481 = vld [vmem:[%s223 + $0x7b8] sm:$0xff]
        %v482 = vld [vmem:[%s223 + $0x7c0] sm:$0xff]
        %v483 = vld [vmem:[%s223 + $0x7c8] sm:$0xff]
        %v484 = vld [vmem:[%s223 + $0x7d0] sm:$0xff]
        %v485 = vld [vmem:[%s223 + $0x7d8] sm:$0xff]
        %v486 = vld [vmem:[%s223 + $0x7e0] sm:$0xff]
        %v487 = vld [vmem:[%s223 + $0x7e8] sm:$0xff]
        %v488 = vld [vmem:[%s223 + $0x7f0] sm:$0xff]
        %v489 = vld [vmem:[%s223 + $0x7f8] sm:$0xff]
        %v490 = vld [vmem:[%s223 + $0x800] sm:$0xff]
        %v491 = vld [vmem:[%s223 + $0x808] sm:$0xff]
        %v492 = vld [vmem:[%s223 + $0x810] sm:$0xff]
        %v493 = vld [vmem:[%s223 + $0x818] sm:$0xff]
        %v494 = vld [vmem:[%s223 + $0x820] sm:$0xff]
        %v495 = vld [vmem:[%s223 + $0x828] sm:$0xff]
        %v496 = vld [vmem:[%s223 + $0x830] sm:$0xff]
        %v497 = vld [vmem:[%s223 + $0x838] sm:$0xff]
        %v498 = vld [vmem:[%s223 + $0x840] sm:$0xff]
        %v499 = vld [vmem:[%s223 + $0x848] sm:$0xff]
        %v500 = vld [vmem:[%s223 + $0x850] sm:$0xff]
        %v501 = vld [vmem:[%s223 + $0x858] sm:$0xff]
        %v502 = vld [vmem:[%s223 + $0x860] sm:$0xff]
        %v503 = vld [vmem:[%s223 + $0x868] sm:$0xff]
        %v504 = vld [vmem:[%s223 + $0x870] sm:$0xff]
        %v505 = vld [vmem:[%s223 + $0x878] sm:$0xff]
        %v506 = vld [vmem:[%s223 + $0x880] sm:$0xff]
        %v507 = vld [vmem:[%s223 + $0x888] sm:$0xff]
        %v508 = vld [vmem:[%s223 + $0x890] sm:$0xff]
        %v509 = vld [vmem:[%s223 + $0x898] sm:$0xff]
        %v510 = vld [vmem:[%s223 + $0x8a0] sm:$0xff]
        %v511 = vld [vmem:[%s223 + $0x8a8] sm:$0xff]
        %v512 = vld [vmem:[%s223 + $0x8b0] sm:$0xff]
        %v513 = vld [vmem:[%s223 + $0x8b8] sm:$0xff]
        %v514 = vld [vmem:[%s223 + $0x8c0] sm:$0xff]
        %v515 = vld [vmem:[%s223 + $0x8c8] sm:$0xff]
        %v516 = vld [vmem:[%s223 + $0x8d0] sm:$0xff]
        %v517 = vld [vmem:[%s223 + $0x8d8] sm:$0xff]
        %v518 = vld [vmem:[%s223 + $0x8e0] sm:$0xff]
        %v519 = vld [vmem:[%s223 + $0x8e8] sm:$0xff]
        %v520 = vld [vmem:[%s223 + $0x8f0] sm:$0xff]
        %v521 = vld [vmem:[%s223 + $0x8f8] sm:$0xff]
        %v522 = vld [vmem:[%s223 + $0x900] sm:$0xff]
        %v523 = vld [vmem:[%s223 + $0x908] sm:$0xff]
        %v524 = vld [vmem:[%s223 + $0x910] sm:$0xff]
        %v525 = vld [vmem:[%s223 + $0x918] sm:$0xff]
        %v526 = vld [vmem:[%s223 + $0x920] sm:$0xff]
        %v527 = vld [vmem:[%s223 + $0x928] sm:$0xff]
        %v528 = vld [vmem:[%s223 + $0x930] sm:$0xff]
        %v529 = vld [vmem:[%s223 + $0x938] sm:$0xff]
        %v530 = vld [vmem:[%s223 + $0x940] sm:$0xff]
        %v531 = vld [vmem:[%s223 + $0x948] sm:$0xff]
        %v532 = vld [vmem:[%s223 + $0x950] sm:$0xff]
        %v533 = vld [vmem:[%s223 + $0x958] sm:$0xff]
        %v534 = vld [vmem:[%s223 + $0x960] sm:$0xff]
        %v535 = vld [vmem:[%s223 + $0x968] sm:$0xff]
        %v536 = vld [vmem:[%s223 + $0x970] sm:$0xff]
        %v537 = vld [vmem:[%s223 + $0x978] sm:$0xff]
        %v538 = vld [vmem:[%s223 + $0x980] sm:$0xff]
        %v539 = vld [vmem:[%s223 + $0x988] sm:$0xff]
        %v540 = vld [vmem:[%s223 + $0x990] sm:$0xff]
        %v541 = vld [vmem:[%s223 + $0x998] sm:$0xff]
        %v542 = vld [vmem:[%s223 + $0x9a0] sm:$0xff]
        %v543 = vld [vmem:[%s223 + $0x9a8] sm:$0xff]
        %v544 = vld [vmem:[%s223 + $0x9b0] sm:$0xff]
        %v545 = vld [vmem:[%s223 + $0x9b8] sm:$0xff]
        %v546 = vld [vmem:[%s223 + $0x9c0] sm:$0xff]
        %v547 = vld [vmem:[%s223 + $0x9c8] sm:$0xff]
        %v548 = vld [vmem:[%s223 + $0x9d0] sm:$0xff]
        %v549 = vld [vmem:[%s223 + $0x9d8] sm:$0xff]
        %v550 = vld [vmem:[%s223 + $0x9e0] sm:$0xff]
        %v551 = vld [vmem:[%s223 + $0x9e8] sm:$0xff]
        %v552 = vld [vmem:[%s223 + $0x9f0] sm:$0xff]
        %v553 = vld [vmem:[%s223 + $0x9f8] sm:$0xff]
        %v554 = vld [vmem:[%s223 + $0xa00] sm:$0xff]
        %v555 = vld [vmem:[%s223 + $0xa08] sm:$0xff]
        %v556 = vld [vmem:[%s223 + $0xa10] sm:$0xff]
        %v557 = vld [vmem:[%s223 + $0xa18] sm:$0xff]
        %v558 = vld [vmem:[%s223 + $0xa20] sm:$0xff]
        %v559 = vld [vmem:[%s223 + $0xa28] sm:$0xff]
        %v560 = vld [vmem:[%s223 + $0xa30] sm:$0xff]
        %v561 = vld [vmem:[%s223 + $0xa38] sm:$0xff]
        %v562 = vld [vmem:[%s223 + $0xa40] sm:$0xff]
        %v563 = vld [vmem:[%s223 + $0xa48] sm:$0xff]
        %v564 = vld [vmem:[%s223 + $0xa50] sm:$0xff]
        %v565 = vld [vmem:[%s223 + $0xa58] sm:$0xff]
        %v566 = vld [vmem:[%s223 + $0xa60] sm:$0xff]
        %v567 = vld [vmem:[%s223 + $0xa68] sm:$0xff]
        %v568 = vld [vmem:[%s223 + $0xa70] sm:$0xff]
        %v569 = vld [vmem:[%s223 + $0xa78] sm:$0xff]
        %v570 = vld [vmem:[%s223 + $0xa80] sm:$0xff]
        %v571 = vld [vmem:[%s223 + $0xa88] sm:$0xff]
        %v572 = vld [vmem:[%s223 + $0xa90] sm:$0xff]
        %v573 = vld [vmem:[%s223 + $0xa98] sm:$0xff]
        %v574 = vld [vmem:[%s223 + $0xaa0] sm:$0xff]
        %v575 = vld [vmem:[%s223 + $0xaa8] sm:$0xff]
        %v576 = vld [vmem:[%s223 + $0xab0] sm:$0xff]
        %v577 = vld [vmem:[%s223 + $0xab8] sm:$0xff]
        %v578 = vld [vmem:[%s223 + $0xac0] sm:$0xff]
        %v579 = vld [vmem:[%s223 + $0xac8] sm:$0xff]
        %v580 = vld [vmem:[%s223 + $0xad0] sm:$0xff]
        %v581 = vld [vmem:[%s223 + $0xad8] sm:$0xff]
        %v582 = vld [vmem:[%s223 + $0xae0] sm:$0xff]
        %v583 = vld [vmem:[%s223 + $0xae8] sm:$0xff]
        %v584 = vld [vmem:[%s223 + $0xaf0] sm:$0xff]
        %v585 = vld [vmem:[%s223 + $0xaf8] sm:$0xff]
        %v586 = vld [vmem:[%s223 + $0xb00] sm:$0xff]
        %v587 = vld [vmem:[%s223 + $0xb08] sm:$0xff]
        %v588 = vld [vmem:[%s223 + $0xb10] sm:$0xff]
        %v589 = vld [vmem:[%s223 + $0xb18] sm:$0xff]
        %v590 = vld [vmem:[%s223 + $0xb20] sm:$0xff]
        %v591 = vld [vmem:[%s223 + $0xb28] sm:$0xff]
        %v592 = vld [vmem:[%s223 + $0xb30] sm:$0xff]
        %v593 = vld [vmem:[%s223 + $0xb38] sm:$0xff]
        %v594 = vld [vmem:[%s223 + $0xb40] sm:$0xff]
        %v595 = vld [vmem:[%s223 + $0xb48] sm:$0xff]
        %v596 = vld [vmem:[%s223 + $0xb50] sm:$0xff]
        %v597 = vld [vmem:[%s223 + $0xb58] sm:$0xff]
        %v598 = vld [vmem:[%s223 + $0xb60] sm:$0xff]
        %v599 = vld [vmem:[%s223 + $0xb68] sm:$0xff]
        %v600 = vld [vmem:[%s223 + $0xb70] sm:$0xff]
        %v601 = vld [vmem:[%s223 + $0xb78] sm:$0xff]
        %v602 = vld [vmem:[%s223 + $0xb80] sm:$0xff]
        %v603 = vld [vmem:[%s223 + $0xb88] sm:$0xff]
        %v604 = vld [vmem:[%s223 + $0xb90] sm:$0xff]
        %v605 = vld [vmem:[%s223 + $0xb98] sm:$0xff]
        %v606 = vld [vmem:[%s223 + $0xba0] sm:$0xff]
        %v607 = vld [vmem:[%s223 + $0xba8] sm:$0xff]
        %v608 = vld [vmem:[%s223 + $0xbb0] sm:$0xff]
        %v609 = vld [vmem:[%s223 + $0xbb8] sm:$0xff]
        %v610 = vld [vmem:[%s223 + $0xbc0] sm:$0xff]
        %v611 = vld [vmem:[%s223 + $0xbc8] sm:$0xff]
        %v612 = vld [vmem:[%s223 + $0xbd0] sm:$0xff]
        %v613 = vld [vmem:[%s223 + $0xbd8] sm:$0xff]
        %v614 = vld [vmem:[%s223 + $0xbe0] sm:$0xff]
        %v615 = vld [vmem:[%s223 + $0xbe8] sm:$0xff]
        %v616 = vld [vmem:[%s223 + $0xbf0] sm:$0xff]
        %v617 = vld [vmem:[%s223 + $0xbf8] sm:$0xff]
        %v618 = vld [vmem:[%s223 + $0xc00] sm:$0xff]
        %v619 = vld [vmem:[%s223 + $0xc08] sm:$0xff]
        %v620 = vld [vmem:[%s223 + $0xc10] sm:$0xff]
        %v621 = vld [vmem:[%s223 + $0xc18] sm:$0xff]
        %v622 = vld [vmem:[%s223 + $0xc20] sm:$0xff]
        %v623 = vld [vmem:[%s223 + $0xc28] sm:$0xff]
        %v624 = vld [vmem:[%s223 + $0xc30] sm:$0xff]
        %v625 = vld [vmem:[%s223 + $0xc38] sm:$0xff]
        %v626 = vld [vmem:[%s223 + $0xc40] sm:$0xff]
        %v627 = vld [vmem:[%s223 + $0xc48] sm:$0xff]
        %v628 = vld [vmem:[%s223 + $0xc50] sm:$0xff]
        %v629 = vld [vmem:[%s223 + $0xc58] sm:$0xff]
        %v630 = vld [vmem:[%s223 + $0xc60] sm:$0xff]
        %v631 = vld [vmem:[%s223 + $0xc68] sm:$0xff]
        %v632 = vld [vmem:[%s223 + $0xc70] sm:$0xff]
        %v633 = vld [vmem:[%s223 + $0xc78] sm:$0xff]
        %v634 = vld [vmem:[%s223 + $0xc80] sm:$0xff]
        %v635 = vld [vmem:[%s223 + $0xc88] sm:$0xff]
        %v636 = vld [vmem:[%s223 + $0xc90] sm:$0xff]
        %v637 = vld [vmem:[%s223 + $0xc98] sm:$0xff]
        %v638 = vld [vmem:[%s223 + $0xca0] sm:$0xff]
        %v639 = vld [vmem:[%s223 + $0xca8] sm:$0xff]
        %v640 = vld [vmem:[%s223 + $0xcb0] sm:$0xff]
        %v641 = vld [vmem:[%s223 + $0xcb8] sm:$0xff]
        %v642 = vld [vmem:[%s223 + $0xcc0] sm:$0xff]
        %v643 = vld [vmem:[%s223 + $0xcc8] sm:$0xff]
        %v644 = vld [vmem:[%s223 + $0xcd0] sm:$0xff]
        %v645 = vld [vmem:[%s223 + $0xcd8] sm:$0xff]
        %v646 = vld [vmem:[%s223 + $0xce0] sm:$0xff]
        %v647 = vld [vmem:[%s223 + $0xce8] sm:$0xff]
        %v648 = vld [vmem:[%s223 + $0xcf0] sm:$0xff]
        %v649 = vld [vmem:[%s223 + $0xcf8] sm:$0xff]
        %v650 = vld [vmem:[%s223 + $0xd00] sm:$0xff]
        %v651 = vld [vmem:[%s223 + $0xd08] sm:$0xff]
        %v652 = vld [vmem:[%s223 + $0xd10] sm:$0xff]
        %v653 = vld [vmem:[%s223 + $0xd18] sm:$0xff]
        %v654 = vld [vmem:[%s223 + $0xd20] sm:$0xff]
        %v655 = vld [vmem:[%s223 + $0xd28] sm:$0xff]
        %v656 = vld [vmem:[%s223 + $0xd30] sm:$0xff]
        %v657 = vld [vmem:[%s223 + $0xd38] sm:$0xff]
        %v658 = vld [vmem:[%s223 + $0xd40] sm:$0xff]
        %v659 = vld [vmem:[%s223 + $0xd48] sm:$0xff]
        %v660 = vld [vmem:[%s223 + $0xd50] sm:$0xff]
        %v661 = vld [vmem:[%s223 + $0xd58] sm:$0xff]
        %v662 = vld [vmem:[%s223 + $0xd60] sm:$0xff]
        %v663 = vld [vmem:[%s223 + $0xd68] sm:$0xff]
        %v664 = vld [vmem:[%s223 + $0xd70] sm:$0xff]
        %v665 = vld [vmem:[%s223 + $0xd78] sm:$0xff]
        %v666 = vld [vmem:[%s223 + $0xd80] sm:$0xff]
        %v667 = vld [vmem:[%s223 + $0xd88] sm:$0xff]
        %v668 = vld [vmem:[%s223 + $0xd90] sm:$0xff]
        %v669 = vld [vmem:[%s223 + $0xd98] sm:$0xff]
        %v670 = vld [vmem:[%s223 + $0xda0] sm:$0xff]
        %v671 = vld [vmem:[%s223 + $0xda8] sm:$0xff]
        %v672 = vld [vmem:[%s223 + $0xdb0] sm:$0xff]
        %v673 = vld [vmem:[%s223 + $0xdb8] sm:$0xff]
        %v674 = vld [vmem:[%s223 + $0xdc0] sm:$0xff]
        %v675 = vld [vmem:[%s223 + $0xdc8] sm:$0xff]
        %v676 = vld [vmem:[%s223 + $0xdd0] sm:$0xff]
        %v677 = vld [vmem:[%s223 + $0xdd8] sm:$0xff]
        %v678 = vld [vmem:[%s223 + $0xde0] sm:$0xff]
        %v679 = vld [vmem:[%s223 + $0xde8] sm:$0xff]
        %v680 = vld [vmem:[%s223 + $0xdf0] sm:$0xff]
        %v681 = vld [vmem:[%s223 + $0xdf8] sm:$0xff]
        %v682 = vld [vmem:[%s223 + $0xe00] sm:$0xff]
        %v683 = vld [vmem:[%s223 + $0xe08] sm:$0xff]
        %v684 = vld [vmem:[%s223 + $0xe10] sm:$0xff]
        %v685 = vld [vmem:[%s223 + $0xe18] sm:$0xff]
        %v686 = vld [vmem:[%s223 + $0xe20] sm:$0xff]
        %v687 = vld [vmem:[%s223 + $0xe28] sm:$0xff]
        %v688 = vld [vmem:[%s223 + $0xe30] sm:$0xff]
        %v689 = vld [vmem:[%s223 + $0xe38] sm:$0xff]
        %v690 = vld [vmem:[%s223 + $0xe40] sm:$0xff]
        %v691 = vld [vmem:[%s223 + $0xe48] sm:$0xff]
        %v692 = vld [vmem:[%s223 + $0xe50] sm:$0xff]
        %v693 = vld [vmem:[%s223 + $0xe58] sm:$0xff]
        %v694 = vld [vmem:[%s223 + $0xe60] sm:$0xff]
        %v695 = vld [vmem:[%s223 + $0xe68] sm:$0xff]
        %v696 = vld [vmem:[%s223 + $0xe70] sm:$0xff]
        %v697 = vld [vmem:[%s223 + $0xe78] sm:$0xff]
        %v698 = vld [vmem:[%s223 + $0xe80] sm:$0xff]
        %v699 = vld [vmem:[%s223 + $0xe88] sm:$0xff]
        %v700 = vld [vmem:[%s223 + $0xe90] sm:$0xff]
        %v701 = vld [vmem:[%s223 + $0xe98] sm:$0xff]
        %v702 = vld [vmem:[%s223 + $0xea0] sm:$0xff]
        %v703 = vld [vmem:[%s223 + $0xea8] sm:$0xff]
        %v704 = vld [vmem:[%s223 + $0xeb0] sm:$0xff]
        %v705 = vld [vmem:[%s223 + $0xeb8] sm:$0xff]
        %v706 = vld [vmem:[%s223 + $0xec0] sm:$0xff]
        %v707 = vld [vmem:[%s223 + $0xec8] sm:$0xff]
        %v708 = vld [vmem:[%s223 + $0xed0] sm:$0xff]
        %v709 = vld [vmem:[%s223 + $0xed8] sm:$0xff]
        %v710 = vld [vmem:[%s223 + $0xee0] sm:$0xff]
        %v711 = vld [vmem:[%s223 + $0xee8] sm:$0xff]
        %v712 = vld [vmem:[%s223 + $0xef0] sm:$0xff]
        %v713 = vld [vmem:[%s223 + $0xef8] sm:$0xff]
        %v714 = vld [vmem:[%s223 + $0xf00] sm:$0xff]
        %v715 = vld [vmem:[%s223 + $0xf08] sm:$0xff]
        %v716 = vld [vmem:[%s223 + $0xf10] sm:$0xff]
        %v717 = vld [vmem:[%s223 + $0xf18] sm:$0xff]
        %v718 = vld [vmem:[%s223 + $0xf20] sm:$0xff]
        %v719 = vld [vmem:[%s223 + $0xf28] sm:$0xff]
        %v720 = vld [vmem:[%s223 + $0xf30] sm:$0xff]
        %v721 = vld [vmem:[%s223 + $0xf38] sm:$0xff]
        %v722 = vld [vmem:[%s223 + $0xf40] sm:$0xff]
        %v723 = vld [vmem:[%s223 + $0xf48] sm:$0xff]
        %v724 = vld [vmem:[%s223 + $0xf50] sm:$0xff]
        %v725 = vld [vmem:[%s223 + $0xf58] sm:$0xff]
        %v726 = vld [vmem:[%s223 + $0xf60] sm:$0xff]
        %v727 = vld [vmem:[%s223 + $0xf68] sm:$0xff]
        %v728 = vld [vmem:[%s223 + $0xf70] sm:$0xff]
        %v729 = vld [vmem:[%s223 + $0xf78] sm:$0xff]
        %v730 = vld [vmem:[%s223 + $0xf80] sm:$0xff]
        %v731 = vld [vmem:[%s223 + $0xf88] sm:$0xff]
        %v732 = vld [vmem:[%s223 + $0xf90] sm:$0xff]
        %v733 = vld [vmem:[%s223 + $0xf98] sm:$0xff]
        %v734 = vld [vmem:[%s223 + $0xfa0] sm:$0xff]
        %v735 = vld [vmem:[%s223 + $0xfa8] sm:$0xff]
        %v736 = vld [vmem:[%s223 + $0xfb0] sm:$0xff]
        %v737 = vld [vmem:[%s223 + $0xfb8] sm:$0xff]
        %v738 = vld [vmem:[%s223 + $0xfc0] sm:$0xff]
        %v739 = vld [vmem:[%s223 + $0xfc8] sm:$0xff]
        %v740 = vld [vmem:[%s223 + $0xfd0] sm:$0xff]
        %v741 = vld [vmem:[%s223 + $0xfd8] sm:$0xff]
        %v742 = vld [vmem:[%s223 + $0xfe0] sm:$0xff]
        %v743 = vld [vmem:[%s223 + $0xfe8] sm:$0xff]
        %v744 = vld [vmem:[%s223 + $0xff0] sm:$0xff]
        %v745 = vld [vmem:[%s223 + $0xff8] sm:$0xff]
        %v746 = vld [vmem:[%s223 + $0x1000] sm:$0xff]
        %v747 = vld [vmem:[%s223 + $0x1008] sm:$0xff]
        %v748 = vld [vmem:[%s223 + $0x1010] sm:$0xff]
        %v749 = vld [vmem:[%s223 + $0x1018] sm:$0xff]
        %v750 = vld [vmem:[%s223 + $0x1020] sm:$0xff]
        %v751 = vld [vmem:[%s223 + $0x1028] sm:$0xff]
        %v752 = vld [vmem:[%s223 + $0x1030] sm:$0xff]
        %v753 = vld [vmem:[%s223 + $0x1038] sm:$0xff]
        %v754 = vld [vmem:[%s223 + $0x1040] sm:$0xff]
        %v755 = vld [vmem:[%s223 + $0x1048] sm:$0xff]
        %v756 = vld [vmem:[%s223 + $0x1050] sm:$0xff]
        %v757 = vld [vmem:[%s223 + $0x1058] sm:$0xff]
        %v758 = vld [vmem:[%s223 + $0x1060] sm:$0xff]
        %v759 = vld [vmem:[%s223 + $0x1068] sm:$0xff]
        %v760 = vld [vmem:[%s223 + $0x1070] sm:$0xff]
        %v761 = vld [vmem:[%s223 + $0x1078] sm:$0xff]
        %v762 = vld [vmem:[%s223 + $0x1080] sm:$0xff]
        %v763 = vld [vmem:[%s223 + $0x1088] sm:$0xff]
        %v764 = vld [vmem:[%s223 + $0x1090] sm:$0xff]
        %v765 = vld [vmem:[%s223 + $0x1098] sm:$0xff]
        %v766 = vld [vmem:[%s223 + $0x10a0] sm:$0xff]
        %v767 = vld [vmem:[%s223 + $0x10a8] sm:$0xff]
        %v768 = vld [vmem:[%s223 + $0x10b0] sm:$0xff]
        %v769 = vld [vmem:[%s223 + $0x10b8] sm:$0xff]
        %v770 = vld [vmem:[%s223 + $0x10c0] sm:$0xff]
        %v771 = vld [vmem:[%s223 + $0x10c8] sm:$0xff]
        %v772 = vld [vmem:[%s223 + $0x10d0] sm:$0xff]
        %v773 = vld [vmem:[%s223 + $0x10d8] sm:$0xff]
        %v774 = vld [vmem:[%s223 + $0x10e0] sm:$0xff]
        %v775 = vld [vmem:[%s223 + $0x10e8] sm:$0xff]
        %v776 = vld [vmem:[%s223 + $0x10f0] sm:$0xff]
        %v777 = vld [vmem:[%s223 + $0x10f8] sm:$0xff]
        %v778 = vld [vmem:[%s223 + $0x1100] sm:$0xff]
        %v779 = vld [vmem:[%s223 + $0x1108] sm:$0xff]
        %v780 = vld [vmem:[%s223 + $0x1110] sm:$0xff]
        %v781 = vld [vmem:[%s223 + $0x1118] sm:$0xff]
        %v782 = vld [vmem:[%s223 + $0x1120] sm:$0xff]
        %v783 = vld [vmem:[%s223 + $0x1128] sm:$0xff]
        %v784 = vld [vmem:[%s223 + $0x1130] sm:$0xff]
        %v785 = vld [vmem:[%s223 + $0x1138] sm:$0xff]
        %v786 = vld [vmem:[%s223 + $0x1140] sm:$0xff]
        %v787 = vld [vmem:[%s223 + $0x1148] sm:$0xff]
        %v788 = vld [vmem:[%s223 + $0x1150] sm:$0xff]
        %v789 = vld [vmem:[%s223 + $0x1158] sm:$0xff]
        %v790 = vld [vmem:[%s223 + $0x1160] sm:$0xff]
        %v791 = vld [vmem:[%s223 + $0x1168] sm:$0xff]
        %v792 = vld [vmem:[%s223 + $0x1170] sm:$0xff]
        %v793 = vld [vmem:[%s223 + $0x1178] sm:$0xff]
        %v794 = vld [vmem:[%s223 + $0x1180] sm:$0xff]
        %v795 = vld [vmem:[%s223 + $0x1188] sm:$0xff]
        %v796 = vld [vmem:[%s2] sm:$0xff]
        %vm797 = vcmask 64512
        %v799 = vsel %vm797, %v234, 0
        %v802 = vsel %vm797, %v235, 0
        %v805 = vsel %vm797, %v236, 0
        %v808 = vsel %vm797, %v237, 0
        %v811 = vsel %vm797, %v238, 0
        %v814 = vsel %vm797, %v239, 0
        %v817 = vsel %vm797, %v240, 0
        %v820 = vsel %vm797, %v241, 0
        %v823 = vsel %vm797, %v242, 0
        %v826 = vsel %vm797, %v243, 0
        %v829 = vsel %vm797, %v244, 0
        %v832 = vsel %vm797, %v245, 0
        %v835 = vsel %vm797, %v246, 0
        %v838 = vsel %vm797, %v247, 0
        %v841 = vsel %vm797, %v248, 0
        %v844 = vsel %vm797, %v249, 0
        %v847 = vsel %vm797, %v250, 0
        %v850 = vsel %vm797, %v251, 0
        %v853 = vsel %vm797, %v252, 0
        %v856 = vsel %vm797, %v253, 0
        %v859 = vsel %vm797, %v254, 0
        %v862 = vsel %vm797, %v255, 0
        %v865 = vsel %vm797, %v256, 0
        %v868 = vsel %vm797, %v257, 0
        %v871 = vsel %vm797, %v258, 0
        %v874 = vsel %vm797, %v259, 0
        %v877 = vsel %vm797, %v260, 0
        %v880 = vsel %vm797, %v261, 0
        %v883 = vsel %vm797, %v262, 0
        %v886 = vsel %vm797, %v263, 0
        %v889 = vsel %vm797, %v264, 0
        %v892 = vsel %vm797, %v265, 0
        %v895 = vsel %vm797, %v266, 0
        %v898 = vsel %vm797, %v267, 0
        %v901 = vsel %vm797, %v268, 0
        %v904 = vsel %vm797, %v269, 0
        %v907 = vsel %vm797, %v270, 0
        %v910 = vsel %vm797, %v271, 0
        %v913 = vsel %vm797, %v272, 0
        %v916 = vsel %vm797, %v273, 0
        %v919 = vsel %vm797, %v274, 0
        %v922 = vsel %vm797, %v275, 0
        %v925 = vsel %vm797, %v276, 0
        %v928 = vsel %vm797, %v277, 0
        %v931 = vsel %vm797, %v278, 0
        %v934 = vsel %vm797, %v279, 0
        %v937 = vsel %vm797, %v280, 0
        %v940 = vsel %vm797, %v281, 0
        %v943 = vsel %vm797, %v282, 0
        %v946 = vsel %vm797, %v283, 0
        %v949 = vsel %vm797, %v284, 0
        %v952 = vsel %vm797, %v285, 0
        %v955 = vsel %vm797, %v286, 0
        %v958 = vsel %vm797, %v287, 0
        %v961 = vsel %vm797, %v288, 0
        %v964 = vsel %vm797, %v289, 0
        %v967 = vsel %vm797, %v290, 0
        %v970 = vsel %vm797, %v291, 0
        %v973 = vsel %vm797, %v292, 0
        %v976 = vsel %vm797, %v293, 0
        %v979 = vsel %vm797, %v294, 0
        %v982 = vsel %vm797, %v295, 0
        %v985 = vsel %vm797, %v296, 0
        %v988 = vsel %vm797, %v297, 0
        %v991 = vsel %vm797, %v298, 0
        %v994 = vsel %vm797, %v299, 0
        %v997 = vsel %vm797, %v300, 0
        %v1000 = vsel %vm797, %v301, 0
        %v1003 = vsel %vm797, %v302, 0
        %v1006 = vsel %vm797, %v303, 0
        %v1009 = vsel %vm797, %v304, 0
        %v1012 = vsel %vm797, %v305, 0
        %v1015 = vsel %vm797, %v306, 0
        %v1018 = vsel %vm797, %v307, 0
        %v1021 = vsel %vm797, %v308, 0
        %v1024 = vsel %vm797, %v309, 0
        %v1027 = vsel %vm797, %v310, 0
        %v1030 = vsel %vm797, %v311, 0
        %v1033 = vsel %vm797, %v312, 0
        %v1036 = vsel %vm797, %v313, 0
        %v1039 = vsel %vm797, %v314, 0
        %v1042 = vsel %vm797, %v315, 0
        %v1045 = vsel %vm797, %v316, 0
        %v1048 = vsel %vm797, %v317, 0
        %v1051 = vsel %vm797, %v318, 0
        %v1054 = vsel %vm797, %v319, 0
        %v1057 = vsel %vm797, %v320, 0
        %v1060 = vsel %vm797, %v321, 0
        %v1063 = vsel %vm797, %v322, 0
        %v1066 = vsel %vm797, %v323, 0
        %v1069 = vsel %vm797, %v324, 0
        %v1072 = vsel %vm797, %v325, 0
        %v1075 = vsel %vm797, %v326, 0
        %v1078 = vsel %vm797, %v327, 0
        %v1081 = vsel %vm797, %v328, 0
        %v1084 = vsel %vm797, %v329, 0
        %v1087 = vsel %vm797, %v330, 0
        %v1090 = vsel %vm797, %v331, 0
        %v1093 = vsel %vm797, %v332, 0
        %v1096 = vsel %vm797, %v333, 0
        %v1099 = vsel %vm797, %v334, 0
        %v1102 = vsel %vm797, %v335, 0
        %v1105 = vsel %vm797, %v336, 0
        %v1108 = vsel %vm797, %v337, 0
        %v1111 = vsel %vm797, %v338, 0
        %v1114 = vsel %vm797, %v339, 0
        %v1117 = vsel %vm797, %v340, 0
        %v1120 = vsel %vm797, %v341, 0
        %v1123 = vsel %vm797, %v342, 0
        %v1126 = vsel %vm797, %v343, 0
        %v1129 = vsel %vm797, %v344, 0
        %v1132 = vsel %vm797, %v345, 0
        %v1135 = vsel %vm797, %v346, 0
        %v1138 = vsel %vm797, %v347, 0
        %v1141 = vsel %vm797, %v348, 0
        %v1144 = vsel %vm797, %v349, 0
        %v1147 = vsel %vm797, %v350, 0
        %v1150 = vsel %vm797, %v351, 0
        %v1153 = vsel %vm797, %v352, 0
        %v1156 = vsel %vm797, %v353, 0
        %v1159 = vsel %vm797, %v354, 0
        %v1162 = vsel %vm797, %v355, 0
        %v1165 = vsel %vm797, %v356, 0
        %v1168 = vsel %vm797, %v357, 0
        %v1171 = vsel %vm797, %v358, 0
        %v1174 = vsel %vm797, %v359, 0
        %v1177 = vsel %vm797, %v360, 0
        %v1180 = vsel %vm797, %v361, 0
        %v1183 = vsel %vm797, %v362, 0
        %v1186 = vsel %vm797, %v363, 0
        %v1189 = vsel %vm797, %v364, 0
        %v1192 = vsel %vm797, %v365, 0
        %v1195 = vsel %vm797, %v366, 0
        %v1198 = vsel %vm797, %v367, 0
        %v1201 = vsel %vm797, %v368, 0
        %v1204 = vsel %vm797, %v369, 0
        %v1207 = vsel %vm797, %v370, 0
        %v1210 = vsel %vm797, %v371, 0
        %v1213 = vsel %vm797, %v372, 0
        %v1216 = vsel %vm797, %v373, 0
        %v1219 = vsel %vm797, %v374, 0
        %v1222 = vsel %vm797, %v375, 0
        %v1225 = vsel %vm797, %v376, 0
        %v1228 = vsel %vm797, %v377, 0
        %v1231 = vsel %vm797, %v378, 0
        %v1234 = vsel %vm797, %v379, 0
        %v1237 = vsel %vm797, %v380, 0
        %v1240 = vsel %vm797, %v381, 0
        %v1243 = vsel %vm797, %v382, 0
        %v1246 = vsel %vm797, %v383, 0
        %v1249 = vsel %vm797, %v384, 0
        %v1252 = vsel %vm797, %v385, 0
        %v1255 = vsel %vm797, %v386, 0
        %v1258 = vsel %vm797, %v387, 0
        %v1261 = vsel %vm797, %v388, 0
        %v1264 = vsel %vm797, %v389, 0
        %v1267 = vsel %vm797, %v390, 0
        %v1270 = vsel %vm797, %v391, 0
        %v1273 = vsel %vm797, %v392, 0
        %v1276 = vsel %vm797, %v393, 0
        %v1279 = vsel %vm797, %v394, 0
        %v1282 = vsel %vm797, %v395, 0
        %v1285 = vsel %vm797, %v396, 0
        %v1288 = vsel %vm797, %v397, 0
        %v1291 = vsel %vm797, %v398, 0
        %v1294 = vsel %vm797, %v399, 0
        %v1297 = vsel %vm797, %v400, 0
        %v1300 = vsel %vm797, %v401, 0
        %v1303 = vsel %vm797, %v402, 0
        %v1306 = vsel %vm797, %v403, 0
        %v1309 = vsel %vm797, %v404, 0
        %v1312 = vsel %vm797, %v405, 0
        %v1315 = vsel %vm797, %v406, 0
        %v1318 = vsel %vm797, %v407, 0
        %v1321 = vsel %vm797, %v408, 0
        %v1324 = vsel %vm797, %v409, 0
        %v1327 = vsel %vm797, %v410, 0
        %v1330 = vsel %vm797, %v411, 0
        %v1333 = vsel %vm797, %v412, 0
        %v1336 = vsel %vm797, %v413, 0
        %v1339 = vsel %vm797, %v414, 0
        %v1342 = vsel %vm797, %v415, 0
        %v1345 = vsel %vm797, %v416, 0
        %v1348 = vsel %vm797, %v417, 0
        %v1351 = vsel %vm797, %v418, 0
        %v1354 = vsel %vm797, %v419, 0
        %v1357 = vsel %vm797, %v420, 0
        %v1360 = vsel %vm797, %v421, 0
        %v1363 = vsel %vm797, %v422, 0
        %v1366 = vsel %vm797, %v423, 0
        %v1369 = vsel %vm797, %v424, 0
        %v1372 = vsel %vm797, %v425, 0
        %v1375 = vsel %vm797, %v426, 0
        %v1378 = vsel %vm797, %v427, 0
        %v1381 = vsel %vm797, %v428, 0
        %v1384 = vsel %vm797, %v429, 0
        %v1387 = vsel %vm797, %v430, 0
        %v1390 = vsel %vm797, %v431, 0
        %v1393 = vsel %vm797, %v432, 0
        %v1396 = vsel %vm797, %v433, 0
        %v1399 = vsel %vm797, %v434, 0
        %v1402 = vsel %vm797, %v435, 0
        %v1405 = vsel %vm797, %v436, 0
        %v1408 = vsel %vm797, %v437, 0
        %v1411 = vsel %vm797, %v438, 0
        %v1414 = vsel %vm797, %v439, 0
        %v1417 = vsel %vm797, %v440, 0
        %v1420 = vsel %vm797, %v441, 0
        %v1423 = vsel %vm797, %v442, 0
        %v1426 = vsel %vm797, %v443, 0
        %v1429 = vsel %vm797, %v444, 0
        %v1432 = vsel %vm797, %v445, 0
        %v1435 = vsel %vm797, %v446, 0
        %v1438 = vsel %vm797, %v447, 0
        %v1441 = vsel %vm797, %v448, 0
        %v1444 = vsel %vm797, %v449, 0
        %v1447 = vsel %vm797, %v450, 0
        %v1450 = vsel %vm797, %v451, 0
        %v1453 = vsel %vm797, %v452, 0
        %v1456 = vsel %vm797, %v453, 0
        %v1459 = vsel %vm797, %v454, 0
        %v1462 = vsel %vm797, %v455, 0
        %v1465 = vsel %vm797, %v456, 0
        %v1468 = vsel %vm797, %v457, 0
        %v1471 = vsel %vm797, %v458, 0
        %v1474 = vsel %vm797, %v459, 0
        %v1477 = vsel %vm797, %v460, 0
        %v1480 = vsel %vm797, %v461, 0
        %v1483 = vsel %vm797, %v462, 0
        %v1486 = vsel %vm797, %v463, 0
        %v1489 = vsel %vm797, %v464, 0
        %v1492 = vsel %vm797, %v465, 0
        %v1495 = vsel %vm797, %v466, 0
        %v1498 = vsel %vm797, %v467, 0
        %v1501 = vsel %vm797, %v468, 0
        %v1504 = vsel %vm797, %v469, 0
        %v1507 = vsel %vm797, %v470, 0
        %v1510 = vsel %vm797, %v471, 0
        %v1513 = vsel %vm797, %v472, 0
        %v1516 = vsel %vm797, %v473, 0
        %v1519 = vsel %vm797, %v474, 0
        %v1522 = vsel %vm797, %v475, 0
        %v1525 = vsel %vm797, %v476, 0
        %v1528 = vsel %vm797, %v477, 0
        %v1531 = vsel %vm797, %v478, 0
        %v1534 = vsel %vm797, %v479, 0
        %v1537 = vsel %vm797, %v480, 0
        %v1540 = vsel %vm797, %v481, 0
        %v1543 = vsel %vm797, %v482, 0
        %v1546 = vsel %vm797, %v483, 0
        %v1549 = vsel %vm797, %v484, 0
        %v1552 = vsel %vm797, %v485, 0
        %v1555 = vsel %vm797, %v486, 0
        %v1558 = vsel %vm797, %v487, 0
        %v1561 = vsel %vm797, %v488, 0
        %v1564 = vsel %vm797, %v489, 0
        %v1567 = vsel %vm797, %v490, 0
        %v1570 = vsel %vm797, %v491, 0
        %v1573 = vsel %vm797, %v492, 0
        %v1576 = vsel %vm797, %v493, 0
        %v1579 = vsel %vm797, %v494, 0
        %v1582 = vsel %vm797, %v495, 0
        %v1585 = vsel %vm797, %v496, 0
        %v1588 = vsel %vm797, %v497, 0
        %v1591 = vsel %vm797, %v498, 0
        %v1594 = vsel %vm797, %v499, 0
        %v1597 = vsel %vm797, %v500, 0
        %v1600 = vsel %vm797, %v501, 0
        %v1603 = vsel %vm797, %v502, 0
        %v1606 = vsel %vm797, %v503, 0
        %v1609 = vsel %vm797, %v504, 0
        %v1612 = vsel %vm797, %v505, 0
        %v1615 = vsel %vm797, %v506, 0
        %v1618 = vsel %vm797, %v507, 0
        %v1621 = vsel %vm797, %v508, 0
        %v1624 = vsel %vm797, %v509, 0
        %v1627 = vsel %vm797, %v510, 0
        %v1630 = vsel %vm797, %v511, 0
        %v1633 = vsel %vm797, %v512, 0
        %v1636 = vsel %vm797, %v513, 0
        %v1639 = vsel %vm797, %v514, 0
        %v1642 = vsel %vm797, %v515, 0
        %v1645 = vsel %vm797, %v516, 0
        %v1648 = vsel %vm797, %v517, 0
        %v1651 = vsel %vm797, %v518, 0
        %v1654 = vsel %vm797, %v519, 0
        %v1657 = vsel %vm797, %v520, 0
        %v1660 = vsel %vm797, %v521, 0
        %v1663 = vsel %vm797, %v522, 0
        %v1666 = vsel %vm797, %v523, 0
        %v1669 = vsel %vm797, %v524, 0
        %v1672 = vsel %vm797, %v525, 0
        %v1675 = vsel %vm797, %v526, 0
        %v1678 = vsel %vm797, %v527, 0
        %v1681 = vsel %vm797, %v528, 0
        %v1684 = vsel %vm797, %v529, 0
        %v1687 = vsel %vm797, %v530, 0
        %v1690 = vsel %vm797, %v531, 0
        %v1693 = vsel %vm797, %v532, 0
        %v1696 = vsel %vm797, %v533, 0
        %v1699 = vsel %vm797, %v534, 0
        %v1702 = vsel %vm797, %v535, 0
        %v1705 = vsel %vm797, %v536, 0
        %v1708 = vsel %vm797, %v537, 0
        %v1711 = vsel %vm797, %v538, 0
        %v1714 = vsel %vm797, %v539, 0
        %v1717 = vsel %vm797, %v540, 0
        %v1720 = vsel %vm797, %v541, 0
        %v1723 = vsel %vm797, %v542, 0
        %v1726 = vsel %vm797, %v543, 0
        %v1729 = vsel %vm797, %v544, 0
        %v1732 = vsel %vm797, %v545, 0
        %v1735 = vsel %vm797, %v546, 0
        %v1738 = vsel %vm797, %v547, 0
        %v1741 = vsel %vm797, %v548, 0
        %v1744 = vsel %vm797, %v549, 0
        %v1747 = vsel %vm797, %v550, 0
        %v1750 = vsel %vm797, %v551, 0
        %v1753 = vsel %vm797, %v552, 0
        %v1756 = vsel %vm797, %v553, 0
        %v1759 = vsel %vm797, %v554, 0
        %v1762 = vsel %vm797, %v555, 0
        %v1765 = vsel %vm797, %v556, 0
        %v1768 = vsel %vm797, %v557, 0
        %v1771 = vsel %vm797, %v558, 0
        %v1774 = vsel %vm797, %v559, 0
        %v1777 = vsel %vm797, %v560, 0
        %v1780 = vsel %vm797, %v561, 0
        %v1783 = vsel %vm797, %v562, 0
        %v1786 = vsel %vm797, %v563, 0
        %v1789 = vsel %vm797, %v564, 0
        %v1792 = vsel %vm797, %v565, 0
        %v1795 = vsel %vm797, %v566, 0
        %v1798 = vsel %vm797, %v567, 0
        %v1801 = vsel %vm797, %v568, 0
        %v1804 = vsel %vm797, %v569, 0
        %v1807 = vsel %vm797, %v570, 0
        %v1810 = vsel %vm797, %v571, 0
        %v1813 = vsel %vm797, %v572, 0
        %v1816 = vsel %vm797, %v573, 0
        %v1819 = vsel %vm797, %v574, 0
        %v1822 = vsel %vm797, %v575, 0
        %v1825 = vsel %vm797, %v576, 0
        %v1828 = vsel %vm797, %v577, 0
        %v1831 = vsel %vm797, %v578, 0
        %v1834 = vsel %vm797, %v579, 0
        %v1837 = vsel %vm797, %v580, 0
        %v1840 = vsel %vm797, %v581, 0
        %v1843 = vsel %vm797, %v582, 0
        %v1846 = vsel %vm797, %v583, 0
        %v1849 = vsel %vm797, %v584, 0
        %v1852 = vsel %vm797, %v585, 0
        %v1855 = vsel %vm797, %v586, 0
        %v1858 = vsel %vm797, %v587, 0
        %v1861 = vsel %vm797, %v588, 0
        %v1864 = vsel %vm797, %v589, 0
        %v1867 = vsel %vm797, %v590, 0
        %v1870 = vsel %vm797, %v591, 0
        %v1873 = vsel %vm797, %v592, 0
        %v1876 = vsel %vm797, %v593, 0
        %v1879 = vsel %vm797, %v594, 0
        %v1882 = vsel %vm797, %v595, 0
        %v1885 = vsel %vm797, %v596, 0
        %v1888 = vsel %vm797, %v597, 0
        %v1891 = vsel %vm797, %v598, 0
        %v1894 = vsel %vm797, %v599, 0
        %v1897 = vsel %vm797, %v600, 0
        %v1900 = vsel %vm797, %v601, 0
        %v1903 = vsel %vm797, %v602, 0
        %v1906 = vsel %vm797, %v603, 0
        %v1909 = vsel %vm797, %v604, 0
        %v1912 = vsel %vm797, %v605, 0
        %v1915 = vsel %vm797, %v606, 0
        %v1918 = vsel %vm797, %v607, 0
        %v1921 = vsel %vm797, %v608, 0
        %v1924 = vsel %vm797, %v609, 0
        %v1927 = vsel %vm797, %v610, 0
        %v1930 = vsel %vm797, %v611, 0
        %v1933 = vsel %vm797, %v612, 0
        %v1936 = vsel %vm797, %v613, 0
        %v1939 = vsel %vm797, %v614, 0
        %v1942 = vsel %vm797, %v615, 0
        %v1945 = vsel %vm797, %v616, 0
        %v1948 = vsel %vm797, %v617, 0
        %v1951 = vsel %vm797, %v618, 0
        %v1954 = vsel %vm797, %v619, 0
        %v1957 = vsel %vm797, %v620, 0
        %v1960 = vsel %vm797, %v621, 0
        %v1963 = vsel %vm797, %v622, 0
        %v1966 = vsel %vm797, %v623, 0
        %v1969 = vsel %vm797, %v624, 0
        %v1972 = vsel %vm797, %v625, 0
        %v1975 = vsel %vm797, %v626, 0
        %v1978 = vsel %vm797, %v627, 0
        %v1981 = vsel %vm797, %v628, 0
        %v1984 = vsel %vm797, %v629, 0
        %v1987 = vsel %vm797, %v630, 0
        %v1990 = vsel %vm797, %v631, 0
        %v1993 = vsel %vm797, %v632, 0
        %v1996 = vsel %vm797, %v633, 0
        %v1999 = vsel %vm797, %v634, 0
        %v2002 = vsel %vm797, %v635, 0
        %v2005 = vsel %vm797, %v636, 0
        %v2008 = vsel %vm797, %v637, 0
        %v2011 = vsel %vm797, %v638, 0
        %v2014 = vsel %vm797, %v639, 0
        %v2017 = vsel %vm797, %v640, 0
        %v2020 = vsel %vm797, %v641, 0
        %v2023 = vsel %vm797, %v642, 0
        %v2026 = vsel %vm797, %v643, 0
        %v2029 = vsel %vm797, %v644, 0
        %v2032 = vsel %vm797, %v645, 0
        %v2035 = vsel %vm797, %v646, 0
        %v2038 = vsel %vm797, %v647, 0
        %v2041 = vsel %vm797, %v648, 0
        %v2044 = vsel %vm797, %v649, 0
        %v2047 = vsel %vm797, %v650, 0
        %v2050 = vsel %vm797, %v651, 0
        %v2053 = vsel %vm797, %v652, 0
        %v2056 = vsel %vm797, %v653, 0
        %v2059 = vsel %vm797, %v654, 0
        %v2062 = vsel %vm797, %v655, 0
        %v2065 = vsel %vm797, %v656, 0
        %v2068 = vsel %vm797, %v657, 0
        %v2071 = vsel %vm797, %v658, 0
        %v2074 = vsel %vm797, %v659, 0
        %v2077 = vsel %vm797, %v660, 0
        %v2080 = vsel %vm797, %v661, 0
        %v2083 = vsel %vm797, %v662, 0
        %v2086 = vsel %vm797, %v663, 0
        %v2089 = vsel %vm797, %v664, 0
        %v2092 = vsel %vm797, %v665, 0
        %v2095 = vsel %vm797, %v666, 0
        %v2098 = vsel %vm797, %v667, 0
        %v2101 = vsel %vm797, %v668, 0
        %v2104 = vsel %vm797, %v669, 0
        %v2107 = vsel %vm797, %v670, 0
        %v2110 = vsel %vm797, %v671, 0
        %v2113 = vsel %vm797, %v672, 0
        %v2116 = vsel %vm797, %v673, 0
        %v2119 = vsel %vm797, %v674, 0
        %v2122 = vsel %vm797, %v675, 0
        %v2125 = vsel %vm797, %v676, 0
        %v2128 = vsel %vm797, %v677, 0
        %v2131 = vsel %vm797, %v678, 0
        %v2134 = vsel %vm797, %v679, 0
        %v2137 = vsel %vm797, %v680, 0
        %v2140 = vsel %vm797, %v681, 0
        %v2143 = vsel %vm797, %v682, 0
        %v2146 = vsel %vm797, %v683, 0
        %v2149 = vsel %vm797, %v684, 0
        %v2152 = vsel %vm797, %v685, 0
        %v2155 = vsel %vm797, %v686, 0
        %v2158 = vsel %vm797, %v687, 0
        %v2161 = vsel %vm797, %v688, 0
        %v2164 = vsel %vm797, %v689, 0
        %v2167 = vsel %vm797, %v690, 0
        %v2170 = vsel %vm797, %v691, 0
        %v2173 = vsel %vm797, %v692, 0
        %v2176 = vsel %vm797, %v693, 0
        %v2179 = vsel %vm797, %v694, 0
        %v2182 = vsel %vm797, %v695, 0
        %v2185 = vsel %vm797, %v696, 0
        %v2188 = vsel %vm797, %v697, 0
        %v2191 = vsel %vm797, %v698, 0
        %v2194 = vsel %vm797, %v699, 0
        %v2197 = vsel %vm797, %v700, 0
        %v2200 = vsel %vm797, %v701, 0
        %v2203 = vsel %vm797, %v702, 0
        %v2206 = vsel %vm797, %v703, 0
        %v2209 = vsel %vm797, %v704, 0
        %v2212 = vsel %vm797, %v705, 0
        %v2215 = vsel %vm797, %v706, 0
        %v2218 = vsel %vm797, %v707, 0
        %v2221 = vsel %vm797, %v708, 0
        %v2224 = vsel %vm797, %v709, 0
        %v2227 = vsel %vm797, %v710, 0
        %v2230 = vsel %vm797, %v711, 0
        %v2233 = vsel %vm797, %v712, 0
        %v2236 = vsel %vm797, %v713, 0
        %v2239 = vsel %vm797, %v714, 0
        %v2242 = vsel %vm797, %v715, 0
        %v2245 = vsel %vm797, %v716, 0
        %v2248 = vsel %vm797, %v717, 0
        %v2251 = vsel %vm797, %v718, 0
        %v2254 = vsel %vm797, %v719, 0
        %v2257 = vsel %vm797, %v720, 0
        %v2260 = vsel %vm797, %v721, 0
        %v2263 = vsel %vm797, %v722, 0
        %v2266 = vsel %vm797, %v723, 0
        %v2269 = vsel %vm797, %v724, 0
        %v2272 = vsel %vm797, %v725, 0
        %v2275 = vsel %vm797, %v726, 0
        %v2278 = vsel %vm797, %v727, 0
        %v2281 = vsel %vm797, %v728, 0
        %v2284 = vsel %vm797, %v729, 0
        %v2287 = vsel %vm797, %v730, 0
        %v2290 = vsel %vm797, %v731, 0
        %v2293 = vsel %vm797, %v732, 0
        %v2296 = vsel %vm797, %v733, 0
        %v2299 = vsel %vm797, %v734, 0
        %v2302 = vsel %vm797, %v735, 0
        %v2305 = vsel %vm797, %v736, 0
        %v2308 = vsel %vm797, %v737, 0
        %v2311 = vsel %vm797, %v738, 0
        %v2314 = vsel %vm797, %v739, 0
        %v2317 = vsel %vm797, %v740, 0
        %v2320 = vsel %vm797, %v741, 0
        %v2323 = vsel %vm797, %v742, 0
        %v2326 = vsel %vm797, %v743, 0
        %v2329 = vsel %vm797, %v744, 0
        %v2332 = vsel %vm797, %v745, 0
        %v2335 = vsel %vm797, %v746, 0
        %v2338 = vsel %vm797, %v747, 0
        %v2341 = vsel %vm797, %v748, 0
        %v2344 = vsel %vm797, %v749, 0
        %v2347 = vsel %vm797, %v750, 0
        %v2350 = vsel %vm797, %v751, 0
        %v2353 = vsel %vm797, %v752, 0
        %v2356 = vsel %vm797, %v753, 0
        %v2359 = vsel %vm797, %v754, 0
        %v2362 = vsel %vm797, %v755, 0
        %v2365 = vsel %vm797, %v756, 0
        %v2368 = vsel %vm797, %v757, 0
        %v2371 = vsel %vm797, %v758, 0
        %v2374 = vsel %vm797, %v759, 0
        %v2377 = vsel %vm797, %v760, 0
        %v2380 = vsel %vm797, %v761, 0
        %v2383 = vsel %vm797, %v762, 0
        %v2386 = vsel %vm797, %v763, 0
        %v2389 = vsel %vm797, %v764, 0
        %v2392 = vsel %vm797, %v765, 0
        %v2395 = vsel %vm797, %v766, 0
        %v2398 = vsel %vm797, %v767, 0
        %v2401 = vsel %vm797, %v768, 0
        %v2404 = vsel %vm797, %v769, 0
        %v2407 = vsel %vm797, %v770, 0
        %v2410 = vsel %vm797, %v771, 0
        %v2413 = vsel %vm797, %v772, 0
        %v2416 = vsel %vm797, %v773, 0
        %v2419 = vsel %vm797, %v774, 0
        %v2422 = vsel %vm797, %v775, 0
        %v2425 = vsel %vm797, %v776, 0
        %v2428 = vsel %vm797, %v777, 0
        %v2431 = vsel %vm797, %v778, 0
        %v2434 = vsel %vm797, %v779, 0
        %v2437 = vsel %vm797, %v780, 0
        %v2440 = vsel %vm797, %v781, 0
        %v2443 = vsel %vm797, %v782, 0
        %v2446 = vsel %vm797, %v783, 0
        %v2449 = vsel %vm797, %v784, 0
        %v2452 = vsel %vm797, %v785, 0
        %v2455 = vsel %vm797, %v786, 0
        %v2458 = vsel %vm797, %v787, 0
        %v2461 = vsel %vm797, %v788, 0
        %v2464 = vsel %vm797, %v789, 0
        %v2467 = vsel %vm797, %v790, 0
        %v2470 = vsel %vm797, %v791, 0
        %v2473 = vsel %vm797, %v792, 0
        %v2476 = vsel %vm797, %v793, 0
        %v2479 = vsel %vm797, %v794, 0
        %v2482 = vsel %vm797, %v795, 0
        %2484 = vmatprep.subr.mxu0 0.0
        %2485 = vmatpush1.msra.mxu0 0.0
        %2486 = vmatprep.subr.mxu0 0.0
        %2487 = vmatpush1.msra.mxu0 0.0
        %2488 = vmatprep.subr.mxu0 0.0
        %2489 = vmatpush1.msra.mxu0 0.0
        %2490 = vmatprep.subr.mxu0 0.0
        %2491 = vmatpush1.msra.mxu0 0.0
        %2492 = vmatprep.subr.mxu0 0.0
        %2493 = vmatpush1.msra.mxu0 0.0
        %2494 = vmatprep.subr.mxu0 0.0
        %2495 = vmatpush1.msra.mxu0 0.0
        %2496 = vmatprep.subr.mxu0 0.0
        %2497 = vmatpush1.msra.mxu0 0.0
        %2498 = vmatprep.subr.mxu0 0.0
        %2499 = vmatpush1.msra.mxu0 0.0
        %2500 = vmatprep.subr.mxu0 0.0
        %2501 = vmatpush1.msra.mxu0 0.0
        %2502 = vmatprep.subr.mxu0 0.0
        %2503 = vmatpush1.msra.mxu0 0.0
        %2504 = vmatprep.subr.mxu0 0.0
        %2505 = vmatpush1.msra.mxu0 0.0
        %2506 = vmatprep.subr.mxu0 0.0
        %2507 = vmatpush1.msra.mxu0 0.0
        %2508 = vmatprep.subr.mxu0 0.0
        %2509 = vmatpush1.msra.mxu0 0.0
        %2510 = vmatprep.subr.mxu0 0.0
        %2511 = vmatpush1.msra.mxu0 0.0
        %2512 = vmatprep.subr.mxu0 0.0
        %2513 = vmatpush1.msra.mxu0 0.0
        %2514 = vmatprep.subr.mxu0 0.0
        %2515 = vmatpush1.msra.mxu0 %v796
        %2516 = vmatprep.subr.mxu0 0.0
        %2517 = vmatpush2.msra.mxu0 0.0
        %2518 = vmatprep.subr.mxu0 0.0
        %2519 = vmatpush2.msra.mxu0 0.0
        %2520 = vmatprep.subr.mxu0 0.0
        %2521 = vmatpush2.msra.mxu0 0.0
        %2522 = vmatprep.subr.mxu0 0.0
        %2523 = vmatpush2.msra.mxu0 0.0
        %2524 = vmatprep.subr.mxu0 0.0
        %2525 = vmatpush2.msra.mxu0 0.0
        %2526 = vmatprep.subr.mxu0 0.0
        %2527 = vmatpush2.msra.mxu0 0.0
        %2528 = vmatprep.subr.mxu0 0.0
        %2529 = vmatpush2.msra.mxu0 0.0
        %2530 = vmatprep.subr.mxu0 0.0
        %2531 = vmatpush2.msra.mxu0 0.0
        %2532 = vmatprep.subr.mxu0 0.0
        %2533 = vmatpush2.msra.mxu0 0.0
        %2534 = vmatprep.subr.mxu0 0.0
        %2535 = vmatpush2.msra.mxu0 0.0
        %2536 = vmatprep.subr.mxu0 0.0
        %2537 = vmatpush2.msra.mxu0 0.0
        %2538 = vmatprep.subr.mxu0 0.0
        %2539 = vmatpush2.msra.mxu0 0.0
        %2540 = vmatprep.subr.mxu0 0.0
        %2541 = vmatpush2.msra.mxu0 0.0
        %2542 = vmatprep.subr.mxu0 0.0
        %2543 = vmatpush2.msra.mxu0 0.0
        %2544 = vmatprep.subr.mxu0 0.0
        %2545 = vmatpush2.msra.mxu0 0.0
        %2546 = vmatprep.subr.mxu0 0.0
        %2547 = vmatpush2.msra.mxu0 0.0
        %2548 = vmatprep.mubr.f32.mxu0 0.0
        %2549 = vmatmul.mubr.f32.gmra.mxu0 %v799
        %v2550 = vpop.f32.mrf.mxu0
        %v2551 = vadd.f32 0.0, %v2550
        %v2552 = vpop.f32.mrf.mxu0
        %2553 = vmatprep.mubr.f32.mxu0 0.0
        %2554 = vmatmul.mubr.f32.gmra.mxu0 %v802
        %v2555 = vpop.f32.mrf.mxu0
        %v2556 = vadd.f32 0.0, %v2555
        %v2557 = vpop.f32.mrf.mxu0
        %2558 = vmatprep.mubr.f32.mxu0 0.0
        %2559 = vmatmul.mubr.f32.gmra.mxu0 %v805
        %v2560 = vpop.f32.mrf.mxu0
        %v2561 = vadd.f32 0.0, %v2560
        %v2562 = vpop.f32.mrf.mxu0
        %2563 = vmatprep.mubr.f32.mxu0 0.0
        %2564 = vmatmul.mubr.f32.gmra.mxu0 %v808
        %v2565 = vpop.f32.mrf.mxu0
        %v2566 = vadd.f32 0.0, %v2565
        %v2567 = vpop.f32.mrf.mxu0
        %2568 = vmatprep.mubr.f32.mxu0 0.0
        %2569 = vmatmul.mubr.f32.gmra.mxu0 %v811
        %v2570 = vpop.f32.mrf.mxu0
        %v2571 = vadd.f32 0.0, %v2570
        %v2572 = vpop.f32.mrf.mxu0
        %2573 = vmatprep.mubr.f32.mxu0 0.0
        %2574 = vmatmul.mubr.f32.gmra.mxu0 %v814
        %v2575 = vpop.f32.mrf.mxu0
        %v2576 = vadd.f32 0.0, %v2575
        %v2577 = vpop.f32.mrf.mxu0
        %2578 = vmatprep.mubr.f32.mxu0 0.0
        %2579 = vmatmul.mubr.f32.gmra.mxu0 %v817
        %v2580 = vpop.f32.mrf.mxu0
        %v2581 = vadd.f32 0.0, %v2580
        %v2582 = vpop.f32.mrf.mxu0
        %2583 = vmatprep.mubr.f32.mxu0 0.0
        %2584 = vmatmul.mubr.f32.gmra.mxu0 %v820
        %v2585 = vpop.f32.mrf.mxu0
        %v2586 = vadd.f32 0.0, %v2585
        %v2587 = vpop.f32.mrf.mxu0
        %2588 = vmatprep.mubr.f32.mxu0 0.0
        %2589 = vmatmul.mubr.f32.gmra.mxu0 %v823
        %v2590 = vpop.f32.mrf.mxu0
        %v2591 = vadd.f32 0.0, %v2590
        %v2592 = vpop.f32.mrf.mxu0
        %2593 = vmatprep.mubr.f32.mxu0 0.0
        %2594 = vmatmul.mubr.f32.gmra.mxu0 %v826
        %v2595 = vpop.f32.mrf.mxu0
        %v2596 = vadd.f32 0.0, %v2595
        %v2597 = vpop.f32.mrf.mxu0
        %2598 = vmatprep.mubr.f32.mxu0 0.0
        %2599 = vmatmul.mubr.f32.gmra.mxu0 %v829
        %v2600 = vpop.f32.mrf.mxu0
        %v2601 = vadd.f32 0.0, %v2600
        %v2602 = vpop.f32.mrf.mxu0
        %2603 = vmatprep.mubr.f32.mxu0 0.0
        %2604 = vmatmul.mubr.f32.gmra.mxu0 %v832
        %v2605 = vpop.f32.mrf.mxu0
        %v2606 = vadd.f32 0.0, %v2605
        %v2607 = vpop.f32.mrf.mxu0
        %2608 = vmatprep.mubr.f32.mxu0 0.0
        %2609 = vmatmul.mubr.f32.gmra.mxu0 %v835
        %v2610 = vpop.f32.mrf.mxu0
        %v2611 = vadd.f32 0.0, %v2610
        %v2612 = vpop.f32.mrf.mxu0
        %2613 = vmatprep.mubr.f32.mxu0 0.0
        %2614 = vmatmul.mubr.f32.gmra.mxu0 %v838
        %v2615 = vpop.f32.mrf.mxu0
        %v2616 = vadd.f32 0.0, %v2615
        %v2617 = vpop.f32.mrf.mxu0
        %2618 = vmatprep.mubr.f32.mxu0 0.0
        %2619 = vmatmul.mubr.f32.gmra.mxu0 %v841
        %v2620 = vpop.f32.mrf.mxu0
        %v2621 = vadd.f32 0.0, %v2620
        %v2622 = vpop.f32.mrf.mxu0
        %2623 = vmatprep.mubr.f32.mxu0 0.0
        %2624 = vmatmul.mubr.f32.gmra.mxu0 %v844
        %v2625 = vpop.f32.mrf.mxu0
        %v2626 = vadd.f32 0.0, %v2625
        %v2627 = vpop.f32.mrf.mxu0
        %2628 = vmatprep.mubr.f32.mxu0 0.0
        %2629 = vmatmul.mubr.f32.gmra.mxu0 %v847
        %v2630 = vpop.f32.mrf.mxu0
        %v2631 = vadd.f32 0.0, %v2630
        %v2632 = vpop.f32.mrf.mxu0
        %2633 = vmatprep.mubr.f32.mxu0 0.0
        %2634 = vmatmul.mubr.f32.gmra.mxu0 %v850
        %v2635 = vpop.f32.mrf.mxu0
        %v2636 = vadd.f32 0.0, %v2635
        %v2637 = vpop.f32.mrf.mxu0
        %2638 = vmatprep.mubr.f32.mxu0 0.0
        %2639 = vmatmul.mubr.f32.gmra.mxu0 %v853
        %v2640 = vpop.f32.mrf.mxu0
        %v2641 = vadd.f32 0.0, %v2640
        %v2642 = vpop.f32.mrf.mxu0
        %2643 = vmatprep.mubr.f32.mxu0 0.0
        %2644 = vmatmul.mubr.f32.gmra.mxu0 %v856
        %v2645 = vpop.f32.mrf.mxu0
        %v2646 = vadd.f32 0.0, %v2645
        %v2647 = vpop.f32.mrf.mxu0
        %2648 = vmatprep.mubr.f32.mxu0 0.0
        %2649 = vmatmul.mubr.f32.gmra.mxu0 %v859
        %v2650 = vpop.f32.mrf.mxu0
        %v2651 = vadd.f32 0.0, %v2650
        %v2652 = vpop.f32.mrf.mxu0
        %2653 = vmatprep.mubr.f32.mxu0 0.0
        %2654 = vmatmul.mubr.f32.gmra.mxu0 %v862
        %v2655 = vpop.f32.mrf.mxu0
        %v2656 = vadd.f32 0.0, %v2655
        %v2657 = vpop.f32.mrf.mxu0
        %2658 = vmatprep.mubr.f32.mxu0 0.0
        %2659 = vmatmul.mubr.f32.gmra.mxu0 %v865
        %v2660 = vpop.f32.mrf.mxu0
        %v2661 = vadd.f32 0.0, %v2660
        %v2662 = vpop.f32.mrf.mxu0
        %2663 = vmatprep.mubr.f32.mxu0 0.0
        %2664 = vmatmul.mubr.f32.gmra.mxu0 %v868
        %v2665 = vpop.f32.mrf.mxu0
        %v2666 = vadd.f32 0.0, %v2665
        %v2667 = vpop.f32.mrf.mxu0
        %2668 = vmatprep.mubr.f32.mxu0 0.0
        %2669 = vmatmul.mubr.f32.gmra.mxu0 %v871
        %v2670 = vpop.f32.mrf.mxu0
        %v2671 = vadd.f32 0.0, %v2670
        %v2672 = vpop.f32.mrf.mxu0
        %2673 = vmatprep.mubr.f32.mxu0 0.0
        %2674 = vmatmul.mubr.f32.gmra.mxu0 %v874
        %v2675 = vpop.f32.mrf.mxu0
        %v2676 = vadd.f32 0.0, %v2675
        %v2677 = vpop.f32.mrf.mxu0
        %2678 = vmatprep.mubr.f32.mxu0 0.0
        %2679 = vmatmul.mubr.f32.gmra.mxu0 %v877
        %v2680 = vpop.f32.mrf.mxu0
        %v2681 = vadd.f32 0.0, %v2680
        %v2682 = vpop.f32.mrf.mxu0
        %2683 = vmatprep.mubr.f32.mxu0 0.0
        %2684 = vmatmul.mubr.f32.gmra.mxu0 %v880
        %v2685 = vpop.f32.mrf.mxu0
        %v2686 = vadd.f32 0.0, %v2685
        %v2687 = vpop.f32.mrf.mxu0
        %2688 = vmatprep.mubr.f32.mxu0 0.0
        %2689 = vmatmul.mubr.f32.gmra.mxu0 %v883
        %v2690 = vpop.f32.mrf.mxu0
        %v2691 = vadd.f32 0.0, %v2690
        %v2692 = vpop.f32.mrf.mxu0
        %2693 = vmatprep.mubr.f32.mxu0 0.0
        %2694 = vmatmul.mubr.f32.gmra.mxu0 %v886
        %v2695 = vpop.f32.mrf.mxu0
        %v2696 = vadd.f32 0.0, %v2695
        %v2697 = vpop.f32.mrf.mxu0
        %2698 = vmatprep.mubr.f32.mxu0 0.0
        %2699 = vmatmul.mubr.f32.gmra.mxu0 %v889
        %v2700 = vpop.f32.mrf.mxu0
        %v2701 = vadd.f32 0.0, %v2700
        %v2702 = vpop.f32.mrf.mxu0
        %2703 = vmatprep.mubr.f32.mxu0 0.0
        %2704 = vmatmul.mubr.f32.gmra.mxu0 %v892
        %v2705 = vpop.f32.mrf.mxu0
        %v2706 = vadd.f32 0.0, %v2705
        %v2707 = vpop.f32.mrf.mxu0
        %2708 = vmatprep.mubr.f32.mxu0 0.0
        %2709 = vmatmul.mubr.f32.gmra.mxu0 %v895
        %v2710 = vpop.f32.mrf.mxu0
        %v2711 = vadd.f32 0.0, %v2710
        %v2712 = vpop.f32.mrf.mxu0
        %2713 = vmatprep.mubr.f32.mxu0 0.0
        %2714 = vmatmul.mubr.f32.gmra.mxu0 %v898
        %v2715 = vpop.f32.mrf.mxu0
        %v2716 = vadd.f32 0.0, %v2715
        %v2717 = vpop.f32.mrf.mxu0
        %2718 = vmatprep.mubr.f32.mxu0 0.0
        %2719 = vmatmul.mubr.f32.gmra.mxu0 %v901
        %v2720 = vpop.f32.mrf.mxu0
        %v2721 = vadd.f32 0.0, %v2720
        %v2722 = vpop.f32.mrf.mxu0
        %2723 = vmatprep.mubr.f32.mxu0 0.0
        %2724 = vmatmul.mubr.f32.gmra.mxu0 %v904
        %v2725 = vpop.f32.mrf.mxu0
        %v2726 = vadd.f32 0.0, %v2725
        %v2727 = vpop.f32.mrf.mxu0
        %2728 = vmatprep.mubr.f32.mxu0 0.0
        %2729 = vmatmul.mubr.f32.gmra.mxu0 %v907
        %v2730 = vpop.f32.mrf.mxu0
        %v2731 = vadd.f32 0.0, %v2730
        %v2732 = vpop.f32.mrf.mxu0
        %2733 = vmatprep.mubr.f32.mxu0 0.0
        %2734 = vmatmul.mubr.f32.gmra.mxu0 %v910
        %v2735 = vpop.f32.mrf.mxu0
        %v2736 = vadd.f32 0.0, %v2735
        %v2737 = vpop.f32.mrf.mxu0
        %2738 = vmatprep.mubr.f32.mxu0 0.0
        %2739 = vmatmul.mubr.f32.gmra.mxu0 %v913
        %v2740 = vpop.f32.mrf.mxu0
        %v2741 = vadd.f32 0.0, %v2740
        %v2742 = vpop.f32.mrf.mxu0
        %2743 = vmatprep.mubr.f32.mxu0 0.0
        %2744 = vmatmul.mubr.f32.gmra.mxu0 %v916
        %v2745 = vpop.f32.mrf.mxu0
        %v2746 = vadd.f32 0.0, %v2745
        %v2747 = vpop.f32.mrf.mxu0
        %2748 = vmatprep.mubr.f32.mxu0 0.0
        %2749 = vmatmul.mubr.f32.gmra.mxu0 %v919
        %v2750 = vpop.f32.mrf.mxu0
        %v2751 = vadd.f32 0.0, %v2750
        %v2752 = vpop.f32.mrf.mxu0
        %2753 = vmatprep.mubr.f32.mxu0 0.0
        %2754 = vmatmul.mubr.f32.gmra.mxu0 %v922
        %v2755 = vpop.f32.mrf.mxu0
        %v2756 = vadd.f32 0.0, %v2755
        %v2757 = vpop.f32.mrf.mxu0
        %2758 = vmatprep.mubr.f32.mxu0 0.0
        %2759 = vmatmul.mubr.f32.gmra.mxu0 %v925
        %v2760 = vpop.f32.mrf.mxu0
        %v2761 = vadd.f32 0.0, %v2760
        %v2762 = vpop.f32.mrf.mxu0
        %2763 = vmatprep.mubr.f32.mxu0 0.0
        %2764 = vmatmul.mubr.f32.gmra.mxu0 %v928
        %v2765 = vpop.f32.mrf.mxu0
        %v2766 = vadd.f32 0.0, %v2765
        %v2767 = vpop.f32.mrf.mxu0
        %2768 = vmatprep.mubr.f32.mxu0 0.0
        %2769 = vmatmul.mubr.f32.gmra.mxu0 %v931
        %v2770 = vpop.f32.mrf.mxu0
        %v2771 = vadd.f32 0.0, %v2770
        %v2772 = vpop.f32.mrf.mxu0
        %2773 = vmatprep.mubr.f32.mxu0 0.0
        %2774 = vmatmul.mubr.f32.gmra.mxu0 %v934
        %v2775 = vpop.f32.mrf.mxu0
        %v2776 = vadd.f32 0.0, %v2775
        %v2777 = vpop.f32.mrf.mxu0
        %2778 = vmatprep.mubr.f32.mxu0 0.0
        %2779 = vmatmul.mubr.f32.gmra.mxu0 %v937
        %v2780 = vpop.f32.mrf.mxu0
        %v2781 = vadd.f32 0.0, %v2780
        %v2782 = vpop.f32.mrf.mxu0
        %2783 = vmatprep.mubr.f32.mxu0 0.0
        %2784 = vmatmul.mubr.f32.gmra.mxu0 %v940
        %v2785 = vpop.f32.mrf.mxu0
        %v2786 = vadd.f32 0.0, %v2785
        %v2787 = vpop.f32.mrf.mxu0
        %2788 = vmatprep.mubr.f32.mxu0 0.0
        %2789 = vmatmul.mubr.f32.gmra.mxu0 %v943
        %v2790 = vpop.f32.mrf.mxu0
        %v2791 = vadd.f32 0.0, %v2790
        %v2792 = vpop.f32.mrf.mxu0
        %2793 = vmatprep.mubr.f32.mxu0 0.0
        %2794 = vmatmul.mubr.f32.gmra.mxu0 %v946
        %v2795 = vpop.f32.mrf.mxu0
        %v2796 = vadd.f32 0.0, %v2795
        %v2797 = vpop.f32.mrf.mxu0
        %2798 = vmatprep.mubr.f32.mxu0 0.0
        %2799 = vmatmul.mubr.f32.gmra.mxu0 %v949
        %v2800 = vpop.f32.mrf.mxu0
        %v2801 = vadd.f32 0.0, %v2800
        %v2802 = vpop.f32.mrf.mxu0
        %2803 = vmatprep.mubr.f32.mxu0 0.0
        %2804 = vmatmul.mubr.f32.gmra.mxu0 %v952
        %v2805 = vpop.f32.mrf.mxu0
        %v2806 = vadd.f32 0.0, %v2805
        %v2807 = vpop.f32.mrf.mxu0
        %2808 = vmatprep.mubr.f32.mxu0 0.0
        %2809 = vmatmul.mubr.f32.gmra.mxu0 %v955
        %v2810 = vpop.f32.mrf.mxu0
        %v2811 = vadd.f32 0.0, %v2810
        %v2812 = vpop.f32.mrf.mxu0
        %2813 = vmatprep.mubr.f32.mxu0 0.0
        %2814 = vmatmul.mubr.f32.gmra.mxu0 %v958
        %v2815 = vpop.f32.mrf.mxu0
        %v2816 = vadd.f32 0.0, %v2815
        %v2817 = vpop.f32.mrf.mxu0
        %2818 = vmatprep.mubr.f32.mxu0 0.0
        %2819 = vmatmul.mubr.f32.gmra.mxu0 %v961
        %v2820 = vpop.f32.mrf.mxu0
        %v2821 = vadd.f32 0.0, %v2820
        %v2822 = vpop.f32.mrf.mxu0
        %2823 = vmatprep.mubr.f32.mxu0 0.0
        %2824 = vmatmul.mubr.f32.gmra.mxu0 %v964
        %v2825 = vpop.f32.mrf.mxu0
        %v2826 = vadd.f32 0.0, %v2825
        %v2827 = vpop.f32.mrf.mxu0
        %2828 = vmatprep.mubr.f32.mxu0 0.0
        %2829 = vmatmul.mubr.f32.gmra.mxu0 %v967
        %v2830 = vpop.f32.mrf.mxu0
        %v2831 = vadd.f32 0.0, %v2830
        %v2832 = vpop.f32.mrf.mxu0
        %2833 = vmatprep.mubr.f32.mxu0 0.0
        %2834 = vmatmul.mubr.f32.gmra.mxu0 %v970
        %v2835 = vpop.f32.mrf.mxu0
        %v2836 = vadd.f32 0.0, %v2835
        %v2837 = vpop.f32.mrf.mxu0
        %2838 = vmatprep.mubr.f32.mxu0 0.0
        %2839 = vmatmul.mubr.f32.gmra.mxu0 %v973
        %v2840 = vpop.f32.mrf.mxu0
        %v2841 = vadd.f32 0.0, %v2840
        %v2842 = vpop.f32.mrf.mxu0
        %2843 = vmatprep.mubr.f32.mxu0 0.0
        %2844 = vmatmul.mubr.f32.gmra.mxu0 %v976
        %v2845 = vpop.f32.mrf.mxu0
        %v2846 = vadd.f32 0.0, %v2845
        %v2847 = vpop.f32.mrf.mxu0
        %2848 = vmatprep.mubr.f32.mxu0 0.0
        %2849 = vmatmul.mubr.f32.gmra.mxu0 %v979
        %v2850 = vpop.f32.mrf.mxu0
        %v2851 = vadd.f32 0.0, %v2850
        %v2852 = vpop.f32.mrf.mxu0
        %2853 = vmatprep.mubr.f32.mxu0 0.0
        %2854 = vmatmul.mubr.f32.gmra.mxu0 %v982
        %v2855 = vpop.f32.mrf.mxu0
        %v2856 = vadd.f32 0.0, %v2855
        %v2857 = vpop.f32.mrf.mxu0
        %2858 = vmatprep.mubr.f32.mxu0 0.0
        %2859 = vmatmul.mubr.f32.gmra.mxu0 %v985
        %v2860 = vpop.f32.mrf.mxu0
        %v2861 = vadd.f32 0.0, %v2860
        %v2862 = vpop.f32.mrf.mxu0
        %2863 = vmatprep.mubr.f32.mxu0 0.0
        %2864 = vmatmul.mubr.f32.gmra.mxu0 %v988
        %v2865 = vpop.f32.mrf.mxu0
        %v2866 = vadd.f32 0.0, %v2865
        %v2867 = vpop.f32.mrf.mxu0
        %2868 = vmatprep.mubr.f32.mxu0 0.0
        %2869 = vmatmul.mubr.f32.gmra.mxu0 %v991
        %v2870 = vpop.f32.mrf.mxu0
        %v2871 = vadd.f32 0.0, %v2870
        %v2872 = vpop.f32.mrf.mxu0
        %2873 = vmatprep.mubr.f32.mxu0 0.0
        %2874 = vmatmul.mubr.f32.gmra.mxu0 %v994
        %v2875 = vpop.f32.mrf.mxu0
        %v2876 = vadd.f32 0.0, %v2875
        %v2877 = vpop.f32.mrf.mxu0
        %2878 = vmatprep.mubr.f32.mxu0 0.0
        %2879 = vmatmul.mubr.f32.gmra.mxu0 %v997
        %v2880 = vpop.f32.mrf.mxu0
        %v2881 = vadd.f32 0.0, %v2880
        %v2882 = vpop.f32.mrf.mxu0
        %2883 = vmatprep.mubr.f32.mxu0 0.0
        %2884 = vmatmul.mubr.f32.gmra.mxu0 %v1000
        %v2885 = vpop.f32.mrf.mxu0
        %v2886 = vadd.f32 0.0, %v2885
        %v2887 = vpop.f32.mrf.mxu0
        %2888 = vmatprep.mubr.f32.mxu0 0.0
        %2889 = vmatmul.mubr.f32.gmra.mxu0 %v1003
        %v2890 = vpop.f32.mrf.mxu0
        %v2891 = vadd.f32 0.0, %v2890
        %v2892 = vpop.f32.mrf.mxu0
        %2893 = vmatprep.mubr.f32.mxu0 0.0
        %2894 = vmatmul.mubr.f32.gmra.mxu0 %v1006
        %v2895 = vpop.f32.mrf.mxu0
        %v2896 = vadd.f32 0.0, %v2895
        %v2897 = vpop.f32.mrf.mxu0
        %2898 = vmatprep.mubr.f32.mxu0 0.0
        %2899 = vmatmul.mubr.f32.gmra.mxu0 %v1009
        %v2900 = vpop.f32.mrf.mxu0
        %v2901 = vadd.f32 0.0, %v2900
        %v2902 = vpop.f32.mrf.mxu0
        %2903 = vmatprep.mubr.f32.mxu0 0.0
        %2904 = vmatmul.mubr.f32.gmra.mxu0 %v1012
        %v2905 = vpop.f32.mrf.mxu0
        %v2906 = vadd.f32 0.0, %v2905
        %v2907 = vpop.f32.mrf.mxu0
        %2908 = vmatprep.mubr.f32.mxu0 0.0
        %2909 = vmatmul.mubr.f32.gmra.mxu0 %v1015
        %v2910 = vpop.f32.mrf.mxu0
        %v2911 = vadd.f32 0.0, %v2910
        %v2912 = vpop.f32.mrf.mxu0
        %2913 = vmatprep.mubr.f32.mxu0 0.0
        %2914 = vmatmul.mubr.f32.gmra.mxu0 %v1018
        %v2915 = vpop.f32.mrf.mxu0
        %v2916 = vadd.f32 0.0, %v2915
        %v2917 = vpop.f32.mrf.mxu0
        %2918 = vmatprep.mubr.f32.mxu0 0.0
        %2919 = vmatmul.mubr.f32.gmra.mxu0 %v1021
        %v2920 = vpop.f32.mrf.mxu0
        %v2921 = vadd.f32 0.0, %v2920
        %v2922 = vpop.f32.mrf.mxu0
        %2923 = vmatprep.mubr.f32.mxu0 0.0
        %2924 = vmatmul.mubr.f32.gmra.mxu0 %v1024
        %v2925 = vpop.f32.mrf.mxu0
        %v2926 = vadd.f32 0.0, %v2925
        %v2927 = vpop.f32.mrf.mxu0
        %2928 = vmatprep.mubr.f32.mxu0 0.0
        %2929 = vmatmul.mubr.f32.gmra.mxu0 %v1027
        %v2930 = vpop.f32.mrf.mxu0
        %v2931 = vadd.f32 0.0, %v2930
        %v2932 = vpop.f32.mrf.mxu0
        %2933 = vmatprep.mubr.f32.mxu0 0.0
        %2934 = vmatmul.mubr.f32.gmra.mxu0 %v1030
        %v2935 = vpop.f32.mrf.mxu0
        %v2936 = vadd.f32 0.0, %v2935
        %v2937 = vpop.f32.mrf.mxu0
        %2938 = vmatprep.mubr.f32.mxu0 0.0
        %2939 = vmatmul.mubr.f32.gmra.mxu0 %v1033
        %v2940 = vpop.f32.mrf.mxu0
        %v2941 = vadd.f32 0.0, %v2940
        %v2942 = vpop.f32.mrf.mxu0
        %2943 = vmatprep.mubr.f32.mxu0 0.0
        %2944 = vmatmul.mubr.f32.gmra.mxu0 %v1036
        %v2945 = vpop.f32.mrf.mxu0
        %v2946 = vadd.f32 0.0, %v2945
        %v2947 = vpop.f32.mrf.mxu0
        %2948 = vmatprep.mubr.f32.mxu0 0.0
        %2949 = vmatmul.mubr.f32.gmra.mxu0 %v1039
        %v2950 = vpop.f32.mrf.mxu0
        %v2951 = vadd.f32 0.0, %v2950
        %v2952 = vpop.f32.mrf.mxu0
        %2953 = vmatprep.mubr.f32.mxu0 0.0
        %2954 = vmatmul.mubr.f32.gmra.mxu0 %v1042
        %v2955 = vpop.f32.mrf.mxu0
        %v2956 = vadd.f32 0.0, %v2955
        %v2957 = vpop.f32.mrf.mxu0
        %2958 = vmatprep.mubr.f32.mxu0 0.0
        %2959 = vmatmul.mubr.f32.gmra.mxu0 %v1045
        %v2960 = vpop.f32.mrf.mxu0
        %v2961 = vadd.f32 0.0, %v2960
        %v2962 = vpop.f32.mrf.mxu0
        %2963 = vmatprep.mubr.f32.mxu0 0.0
        %2964 = vmatmul.mubr.f32.gmra.mxu0 %v1048
        %v2965 = vpop.f32.mrf.mxu0
        %v2966 = vadd.f32 0.0, %v2965
        %v2967 = vpop.f32.mrf.mxu0
        %2968 = vmatprep.mubr.f32.mxu0 0.0
        %2969 = vmatmul.mubr.f32.gmra.mxu0 %v1051
        %v2970 = vpop.f32.mrf.mxu0
        %v2971 = vadd.f32 0.0, %v2970
        %v2972 = vpop.f32.mrf.mxu0
        %2973 = vmatprep.mubr.f32.mxu0 0.0
        %2974 = vmatmul.mubr.f32.gmra.mxu0 %v1054
        %v2975 = vpop.f32.mrf.mxu0
        %v2976 = vadd.f32 0.0, %v2975
        %v2977 = vpop.f32.mrf.mxu0
        %2978 = vmatprep.mubr.f32.mxu0 0.0
        %2979 = vmatmul.mubr.f32.gmra.mxu0 %v1057
        %v2980 = vpop.f32.mrf.mxu0
        %v2981 = vadd.f32 0.0, %v2980
        %v2982 = vpop.f32.mrf.mxu0
        %2983 = vmatprep.mubr.f32.mxu0 0.0
        %2984 = vmatmul.mubr.f32.gmra.mxu0 %v1060
        %v2985 = vpop.f32.mrf.mxu0
        %v2986 = vadd.f32 0.0, %v2985
        %v2987 = vpop.f32.mrf.mxu0
        %2988 = vmatprep.mubr.f32.mxu0 0.0
        %2989 = vmatmul.mubr.f32.gmra.mxu0 %v1063
        %v2990 = vpop.f32.mrf.mxu0
        %v2991 = vadd.f32 0.0, %v2990
        %v2992 = vpop.f32.mrf.mxu0
        %2993 = vmatprep.mubr.f32.mxu0 0.0
        %2994 = vmatmul.mubr.f32.gmra.mxu0 %v1066
        %v2995 = vpop.f32.mrf.mxu0
        %v2996 = vadd.f32 0.0, %v2995
        %v2997 = vpop.f32.mrf.mxu0
        %2998 = vmatprep.mubr.f32.mxu0 0.0
        %2999 = vmatmul.mubr.f32.gmra.mxu0 %v1069
        %v3000 = vpop.f32.mrf.mxu0
        %v3001 = vadd.f32 0.0, %v3000
        %v3002 = vpop.f32.mrf.mxu0
        %3003 = vmatprep.mubr.f32.mxu0 0.0
        %3004 = vmatmul.mubr.f32.gmra.mxu0 %v1072
        %v3005 = vpop.f32.mrf.mxu0
        %v3006 = vadd.f32 0.0, %v3005
        %v3007 = vpop.f32.mrf.mxu0
        %3008 = vmatprep.mubr.f32.mxu0 0.0
        %3009 = vmatmul.mubr.f32.gmra.mxu0 %v1075
        %v3010 = vpop.f32.mrf.mxu0
        %v3011 = vadd.f32 0.0, %v3010
        %v3012 = vpop.f32.mrf.mxu0
        %3013 = vmatprep.mubr.f32.mxu0 0.0
        %3014 = vmatmul.mubr.f32.gmra.mxu0 %v1078
        %v3015 = vpop.f32.mrf.mxu0
        %v3016 = vadd.f32 0.0, %v3015
        %v3017 = vpop.f32.mrf.mxu0
        %3018 = vmatprep.mubr.f32.mxu0 0.0
        %3019 = vmatmul.mubr.f32.gmra.mxu0 %v1081
        %v3020 = vpop.f32.mrf.mxu0
        %v3021 = vadd.f32 0.0, %v3020
        %v3022 = vpop.f32.mrf.mxu0
        %3023 = vmatprep.mubr.f32.mxu0 0.0
        %3024 = vmatmul.mubr.f32.gmra.mxu0 %v1084
        %v3025 = vpop.f32.mrf.mxu0
        %v3026 = vadd.f32 0.0, %v3025
        %v3027 = vpop.f32.mrf.mxu0
        %3028 = vmatprep.mubr.f32.mxu0 0.0
        %3029 = vmatmul.mubr.f32.gmra.mxu0 %v1087
        %v3030 = vpop.f32.mrf.mxu0
        %v3031 = vadd.f32 0.0, %v3030
        %v3032 = vpop.f32.mrf.mxu0
        %3033 = vmatprep.mubr.f32.mxu0 0.0
        %3034 = vmatmul.mubr.f32.gmra.mxu0 %v1090
        %v3035 = vpop.f32.mrf.mxu0
        %v3036 = vadd.f32 0.0, %v3035
        %v3037 = vpop.f32.mrf.mxu0
        %3038 = vmatprep.mubr.f32.mxu0 0.0
        %3039 = vmatmul.mubr.f32.gmra.mxu0 %v1093
        %v3040 = vpop.f32.mrf.mxu0
        %v3041 = vadd.f32 0.0, %v3040
        %v3042 = vpop.f32.mrf.mxu0
        %3043 = vmatprep.mubr.f32.mxu0 0.0
        %3044 = vmatmul.mubr.f32.gmra.mxu0 %v1096
        %v3045 = vpop.f32.mrf.mxu0
        %v3046 = vadd.f32 0.0, %v3045
        %v3047 = vpop.f32.mrf.mxu0
        %3048 = vmatprep.mubr.f32.mxu0 0.0
        %3049 = vmatmul.mubr.f32.gmra.mxu0 %v1099
        %v3050 = vpop.f32.mrf.mxu0
        %v3051 = vadd.f32 0.0, %v3050
        %v3052 = vpop.f32.mrf.mxu0
        %3053 = vmatprep.mubr.f32.mxu0 0.0
        %3054 = vmatmul.mubr.f32.gmra.mxu0 %v1102
        %v3055 = vpop.f32.mrf.mxu0
        %v3056 = vadd.f32 0.0, %v3055
        %v3057 = vpop.f32.mrf.mxu0
        %3058 = vmatprep.mubr.f32.mxu0 0.0
        %3059 = vmatmul.mubr.f32.gmra.mxu0 %v1105
        %v3060 = vpop.f32.mrf.mxu0
        %v3061 = vadd.f32 0.0, %v3060
        %v3062 = vpop.f32.mrf.mxu0
        %3063 = vmatprep.mubr.f32.mxu0 0.0
        %3064 = vmatmul.mubr.f32.gmra.mxu0 %v1108
        %v3065 = vpop.f32.mrf.mxu0
        %v3066 = vadd.f32 0.0, %v3065
        %v3067 = vpop.f32.mrf.mxu0
        %3068 = vmatprep.mubr.f32.mxu0 0.0
        %3069 = vmatmul.mubr.f32.gmra.mxu0 %v1111
        %v3070 = vpop.f32.mrf.mxu0
        %v3071 = vadd.f32 0.0, %v3070
        %v3072 = vpop.f32.mrf.mxu0
        %3073 = vmatprep.mubr.f32.mxu0 0.0
        %3074 = vmatmul.mubr.f32.gmra.mxu0 %v1114
        %v3075 = vpop.f32.mrf.mxu0
        %v3076 = vadd.f32 0.0, %v3075
        %v3077 = vpop.f32.mrf.mxu0
        %3078 = vmatprep.mubr.f32.mxu0 0.0
        %3079 = vmatmul.mubr.f32.gmra.mxu0 %v1117
        %v3080 = vpop.f32.mrf.mxu0
        %v3081 = vadd.f32 0.0, %v3080
        %v3082 = vpop.f32.mrf.mxu0
        %3083 = vmatprep.mubr.f32.mxu0 0.0
        %3084 = vmatmul.mubr.f32.gmra.mxu0 %v1120
        %v3085 = vpop.f32.mrf.mxu0
        %v3086 = vadd.f32 0.0, %v3085
        %v3087 = vpop.f32.mrf.mxu0
        %3088 = vmatprep.mubr.f32.mxu0 0.0
        %3089 = vmatmul.mubr.f32.gmra.mxu0 %v1123
        %v3090 = vpop.f32.mrf.mxu0
        %v3091 = vadd.f32 0.0, %v3090
        %v3092 = vpop.f32.mrf.mxu0
        %3093 = vmatprep.mubr.f32.mxu0 0.0
        %3094 = vmatmul.mubr.f32.gmra.mxu0 %v1126
        %v3095 = vpop.f32.mrf.mxu0
        %v3096 = vadd.f32 0.0, %v3095
        %v3097 = vpop.f32.mrf.mxu0
        %3098 = vmatprep.mubr.f32.mxu0 0.0
        %3099 = vmatmul.mubr.f32.gmra.mxu0 %v1129
        %v3100 = vpop.f32.mrf.mxu0
        %v3101 = vadd.f32 0.0, %v3100
        %v3102 = vpop.f32.mrf.mxu0
        %3103 = vmatprep.mubr.f32.mxu0 0.0
        %3104 = vmatmul.mubr.f32.gmra.mxu0 %v1132
        %v3105 = vpop.f32.mrf.mxu0
        %v3106 = vadd.f32 0.0, %v3105
        %v3107 = vpop.f32.mrf.mxu0
        %3108 = vmatprep.mubr.f32.mxu0 0.0
        %3109 = vmatmul.mubr.f32.gmra.mxu0 %v1135
        %v3110 = vpop.f32.mrf.mxu0
        %v3111 = vadd.f32 0.0, %v3110
        %v3112 = vpop.f32.mrf.mxu0
        %3113 = vmatprep.mubr.f32.mxu0 0.0
        %3114 = vmatmul.mubr.f32.gmra.mxu0 %v1138
        %v3115 = vpop.f32.mrf.mxu0
        %v3116 = vadd.f32 0.0, %v3115
        %v3117 = vpop.f32.mrf.mxu0
        %3118 = vmatprep.mubr.f32.mxu0 0.0
        %3119 = vmatmul.mubr.f32.gmra.mxu0 %v1141
        %v3120 = vpop.f32.mrf.mxu0
        %v3121 = vadd.f32 0.0, %v3120
        %v3122 = vpop.f32.mrf.mxu0
        %3123 = vmatprep.mubr.f32.mxu0 0.0
        %3124 = vmatmul.mubr.f32.gmra.mxu0 %v1144
        %v3125 = vpop.f32.mrf.mxu0
        %v3126 = vadd.f32 0.0, %v3125
        %v3127 = vpop.f32.mrf.mxu0
        %3128 = vmatprep.mubr.f32.mxu0 0.0
        %3129 = vmatmul.mubr.f32.gmra.mxu0 %v1147
        %v3130 = vpop.f32.mrf.mxu0
        %v3131 = vadd.f32 0.0, %v3130
        %v3132 = vpop.f32.mrf.mxu0
        %3133 = vmatprep.mubr.f32.mxu0 0.0
        %3134 = vmatmul.mubr.f32.gmra.mxu0 %v1150
        %v3135 = vpop.f32.mrf.mxu0
        %v3136 = vadd.f32 0.0, %v3135
        %v3137 = vpop.f32.mrf.mxu0
        %3138 = vmatprep.mubr.f32.mxu0 0.0
        %3139 = vmatmul.mubr.f32.gmra.mxu0 %v1153
        %v3140 = vpop.f32.mrf.mxu0
        %v3141 = vadd.f32 0.0, %v3140
        %v3142 = vpop.f32.mrf.mxu0
        %3143 = vmatprep.mubr.f32.mxu0 0.0
        %3144 = vmatmul.mubr.f32.gmra.mxu0 %v1156
        %v3145 = vpop.f32.mrf.mxu0
        %v3146 = vadd.f32 0.0, %v3145
        %v3147 = vpop.f32.mrf.mxu0
        %3148 = vmatprep.mubr.f32.mxu0 0.0
        %3149 = vmatmul.mubr.f32.gmra.mxu0 %v1159
        %v3150 = vpop.f32.mrf.mxu0
        %v3151 = vadd.f32 0.0, %v3150
        %v3152 = vpop.f32.mrf.mxu0
        %3153 = vmatprep.mubr.f32.mxu0 0.0
        %3154 = vmatmul.mubr.f32.gmra.mxu0 %v1162
        %v3155 = vpop.f32.mrf.mxu0
        %v3156 = vadd.f32 0.0, %v3155
        %v3157 = vpop.f32.mrf.mxu0
        %3158 = vmatprep.mubr.f32.mxu0 0.0
        %3159 = vmatmul.mubr.f32.gmra.mxu0 %v1165
        %v3160 = vpop.f32.mrf.mxu0
        %v3161 = vadd.f32 0.0, %v3160
        %v3162 = vpop.f32.mrf.mxu0
        %3163 = vmatprep.mubr.f32.mxu0 0.0
        %3164 = vmatmul.mubr.f32.gmra.mxu0 %v1168
        %v3165 = vpop.f32.mrf.mxu0
        %v3166 = vadd.f32 0.0, %v3165
        %v3167 = vpop.f32.mrf.mxu0
        %3168 = vmatprep.mubr.f32.mxu0 0.0
        %3169 = vmatmul.mubr.f32.gmra.mxu0 %v1171
        %v3170 = vpop.f32.mrf.mxu0
        %v3171 = vadd.f32 0.0, %v3170
        %v3172 = vpop.f32.mrf.mxu0
        %3173 = vmatprep.mubr.f32.mxu0 0.0
        %3174 = vmatmul.mubr.f32.gmra.mxu0 %v1174
        %v3175 = vpop.f32.mrf.mxu0
        %v3176 = vadd.f32 0.0, %v3175
        %v3177 = vpop.f32.mrf.mxu0
        %3178 = vmatprep.mubr.f32.mxu0 0.0
        %3179 = vmatmul.mubr.f32.gmra.mxu0 %v1177
        %v3180 = vpop.f32.mrf.mxu0
        %v3181 = vadd.f32 0.0, %v3180
        %v3182 = vpop.f32.mrf.mxu0
        %3183 = vmatprep.mubr.f32.mxu0 0.0
        %3184 = vmatmul.mubr.f32.gmra.mxu0 %v1180
        %v3185 = vpop.f32.mrf.mxu0
        %v3186 = vadd.f32 0.0, %v3185
        %v3187 = vpop.f32.mrf.mxu0
        %3188 = vmatprep.mubr.f32.mxu0 0.0
        %3189 = vmatmul.mubr.f32.gmra.mxu0 %v1183
        %v3190 = vpop.f32.mrf.mxu0
        %v3191 = vadd.f32 0.0, %v3190
        %v3192 = vpop.f32.mrf.mxu0
        %3193 = vmatprep.mubr.f32.mxu0 0.0
        %3194 = vmatmul.mubr.f32.gmra.mxu0 %v1186
        %v3195 = vpop.f32.mrf.mxu0
        %v3196 = vadd.f32 0.0, %v3195
        %v3197 = vpop.f32.mrf.mxu0
        %3198 = vmatprep.mubr.f32.mxu0 0.0
        %3199 = vmatmul.mubr.f32.gmra.mxu0 %v1189
        %v3200 = vpop.f32.mrf.mxu0
        %v3201 = vadd.f32 0.0, %v3200
        %v3202 = vpop.f32.mrf.mxu0
        %3203 = vmatprep.mubr.f32.mxu0 0.0
        %3204 = vmatmul.mubr.f32.gmra.mxu0 %v1192
        %v3205 = vpop.f32.mrf.mxu0
        %v3206 = vadd.f32 0.0, %v3205
        %v3207 = vpop.f32.mrf.mxu0
        %3208 = vmatprep.mubr.f32.mxu0 0.0
        %3209 = vmatmul.mubr.f32.gmra.mxu0 %v1195
        %v3210 = vpop.f32.mrf.mxu0
        %v3211 = vadd.f32 0.0, %v3210
        %v3212 = vpop.f32.mrf.mxu0
        %3213 = vmatprep.mubr.f32.mxu0 0.0
        %3214 = vmatmul.mubr.f32.gmra.mxu0 %v1198
        %v3215 = vpop.f32.mrf.mxu0
        %v3216 = vadd.f32 0.0, %v3215
        %v3217 = vpop.f32.mrf.mxu0
        %3218 = vmatprep.mubr.f32.mxu0 0.0
        %3219 = vmatmul.mubr.f32.gmra.mxu0 %v1201
        %v3220 = vpop.f32.mrf.mxu0
        %v3221 = vadd.f32 0.0, %v3220
        %v3222 = vpop.f32.mrf.mxu0
        %3223 = vmatprep.mubr.f32.mxu0 0.0
        %3224 = vmatmul.mubr.f32.gmra.mxu0 %v1204
        %v3225 = vpop.f32.mrf.mxu0
        %v3226 = vadd.f32 0.0, %v3225
        %v3227 = vpop.f32.mrf.mxu0
        %3228 = vmatprep.mubr.f32.mxu0 0.0
        %3229 = vmatmul.mubr.f32.gmra.mxu0 %v1207
        %v3230 = vpop.f32.mrf.mxu0
        %v3231 = vadd.f32 0.0, %v3230
        %v3232 = vpop.f32.mrf.mxu0
        %3233 = vmatprep.mubr.f32.mxu0 0.0
        %3234 = vmatmul.mubr.f32.gmra.mxu0 %v1210
        %v3235 = vpop.f32.mrf.mxu0
        %v3236 = vadd.f32 0.0, %v3235
        %v3237 = vpop.f32.mrf.mxu0
        %3238 = vmatprep.mubr.f32.mxu0 0.0
        %3239 = vmatmul.mubr.f32.gmra.mxu0 %v1213
        %v3240 = vpop.f32.mrf.mxu0
        %v3241 = vadd.f32 0.0, %v3240
        %v3242 = vpop.f32.mrf.mxu0
        %3243 = vmatprep.mubr.f32.mxu0 0.0
        %3244 = vmatmul.mubr.f32.gmra.mxu0 %v1216
        %v3245 = vpop.f32.mrf.mxu0
        %v3246 = vadd.f32 0.0, %v3245
        %v3247 = vpop.f32.mrf.mxu0
        %3248 = vmatprep.mubr.f32.mxu0 0.0
        %3249 = vmatmul.mubr.f32.gmra.mxu0 %v1219
        %v3250 = vpop.f32.mrf.mxu0
        %v3251 = vadd.f32 0.0, %v3250
        %v3252 = vpop.f32.mrf.mxu0
        %3253 = vmatprep.mubr.f32.mxu0 0.0
        %3254 = vmatmul.mubr.f32.gmra.mxu0 %v1222
        %v3255 = vpop.f32.mrf.mxu0
        %v3256 = vadd.f32 0.0, %v3255
        %v3257 = vpop.f32.mrf.mxu0
        %3258 = vmatprep.mubr.f32.mxu0 0.0
        %3259 = vmatmul.mubr.f32.gmra.mxu0 %v1225
        %v3260 = vpop.f32.mrf.mxu0
        %v3261 = vadd.f32 0.0, %v3260
        %v3262 = vpop.f32.mrf.mxu0
        %3263 = vmatprep.mubr.f32.mxu0 0.0
        %3264 = vmatmul.mubr.f32.gmra.mxu0 %v1228
        %v3265 = vpop.f32.mrf.mxu0
        %v3266 = vadd.f32 0.0, %v3265
        %v3267 = vpop.f32.mrf.mxu0
        %3268 = vmatprep.mubr.f32.mxu0 0.0
        %3269 = vmatmul.mubr.f32.gmra.mxu0 %v1231
        %v3270 = vpop.f32.mrf.mxu0
        %v3271 = vadd.f32 0.0, %v3270
        %v3272 = vpop.f32.mrf.mxu0
        %3273 = vmatprep.mubr.f32.mxu0 0.0
        %3274 = vmatmul.mubr.f32.gmra.mxu0 %v1234
        %v3275 = vpop.f32.mrf.mxu0
        %v3276 = vadd.f32 0.0, %v3275
        %v3277 = vpop.f32.mrf.mxu0
        %3278 = vmatprep.mubr.f32.mxu0 0.0
        %3279 = vmatmul.mubr.f32.gmra.mxu0 %v1237
        %v3280 = vpop.f32.mrf.mxu0
        %v3281 = vadd.f32 0.0, %v3280
        %v3282 = vpop.f32.mrf.mxu0
        %3283 = vmatprep.mubr.f32.mxu0 0.0
        %3284 = vmatmul.mubr.f32.gmra.mxu0 %v1240
        %v3285 = vpop.f32.mrf.mxu0
        %v3286 = vadd.f32 0.0, %v3285
        %v3287 = vpop.f32.mrf.mxu0
        %3288 = vmatprep.mubr.f32.mxu0 0.0
        %3289 = vmatmul.mubr.f32.gmra.mxu0 %v1243
        %v3290 = vpop.f32.mrf.mxu0
        %v3291 = vadd.f32 0.0, %v3290
        %v3292 = vpop.f32.mrf.mxu0
        %3293 = vmatprep.mubr.f32.mxu0 0.0
        %3294 = vmatmul.mubr.f32.gmra.mxu0 %v1246
        %v3295 = vpop.f32.mrf.mxu0
        %v3296 = vadd.f32 0.0, %v3295
        %v3297 = vpop.f32.mrf.mxu0
        %3298 = vmatprep.mubr.f32.mxu0 0.0
        %3299 = vmatmul.mubr.f32.gmra.mxu0 %v1249
        %v3300 = vpop.f32.mrf.mxu0
        %v3301 = vadd.f32 0.0, %v3300
        %v3302 = vpop.f32.mrf.mxu0
        %3303 = vmatprep.mubr.f32.mxu0 0.0
        %3304 = vmatmul.mubr.f32.gmra.mxu0 %v1252
        %v3305 = vpop.f32.mrf.mxu0
        %v3306 = vadd.f32 0.0, %v3305
        %v3307 = vpop.f32.mrf.mxu0
        %3308 = vmatprep.mubr.f32.mxu0 0.0
        %3309 = vmatmul.mubr.f32.gmra.mxu0 %v1255
        %v3310 = vpop.f32.mrf.mxu0
        %v3311 = vadd.f32 0.0, %v3310
        %v3312 = vpop.f32.mrf.mxu0
        %3313 = vmatprep.mubr.f32.mxu0 0.0
        %3314 = vmatmul.mubr.f32.gmra.mxu0 %v1258
        %v3315 = vpop.f32.mrf.mxu0
        %v3316 = vadd.f32 0.0, %v3315
        %v3317 = vpop.f32.mrf.mxu0
        %3318 = vmatprep.mubr.f32.mxu0 0.0
        %3319 = vmatmul.mubr.f32.gmra.mxu0 %v1261
        %v3320 = vpop.f32.mrf.mxu0
        %v3321 = vadd.f32 0.0, %v3320
        %v3322 = vpop.f32.mrf.mxu0
        %3323 = vmatprep.mubr.f32.mxu0 0.0
        %3324 = vmatmul.mubr.f32.gmra.mxu0 %v1264
        %v3325 = vpop.f32.mrf.mxu0
        %v3326 = vadd.f32 0.0, %v3325
        %v3327 = vpop.f32.mrf.mxu0
        %3328 = vmatprep.mubr.f32.mxu0 0.0
        %3329 = vmatmul.mubr.f32.gmra.mxu0 %v1267
        %v3330 = vpop.f32.mrf.mxu0
        %v3331 = vadd.f32 0.0, %v3330
        %v3332 = vpop.f32.mrf.mxu0
        %3333 = vmatprep.mubr.f32.mxu0 0.0
        %3334 = vmatmul.mubr.f32.gmra.mxu0 %v1270
        %v3335 = vpop.f32.mrf.mxu0
        %v3336 = vadd.f32 0.0, %v3335
        %v3337 = vpop.f32.mrf.mxu0
        %3338 = vmatprep.mubr.f32.mxu0 0.0
        %3339 = vmatmul.mubr.f32.gmra.mxu0 %v1273
        %v3340 = vpop.f32.mrf.mxu0
        %v3341 = vadd.f32 0.0, %v3340
        %v3342 = vpop.f32.mrf.mxu0
        %3343 = vmatprep.mubr.f32.mxu0 0.0
        %3344 = vmatmul.mubr.f32.gmra.mxu0 %v1276
        %v3345 = vpop.f32.mrf.mxu0
        %v3346 = vadd.f32 0.0, %v3345
        %v3347 = vpop.f32.mrf.mxu0
        %3348 = vmatprep.mubr.f32.mxu0 0.0
        %3349 = vmatmul.mubr.f32.gmra.mxu0 %v1279
        %v3350 = vpop.f32.mrf.mxu0
        %v3351 = vadd.f32 0.0, %v3350
        %v3352 = vpop.f32.mrf.mxu0
        %3353 = vmatprep.mubr.f32.mxu0 0.0
        %3354 = vmatmul.mubr.f32.gmra.mxu0 %v1282
        %v3355 = vpop.f32.mrf.mxu0
        %v3356 = vadd.f32 0.0, %v3355
        %v3357 = vpop.f32.mrf.mxu0
        %3358 = vmatprep.mubr.f32.mxu0 0.0
        %3359 = vmatmul.mubr.f32.gmra.mxu0 %v1285
        %v3360 = vpop.f32.mrf.mxu0
        %v3361 = vadd.f32 0.0, %v3360
        %v3362 = vpop.f32.mrf.mxu0
        %3363 = vmatprep.mubr.f32.mxu0 0.0
        %3364 = vmatmul.mubr.f32.gmra.mxu0 %v1288
        %v3365 = vpop.f32.mrf.mxu0
        %v3366 = vadd.f32 0.0, %v3365
        %v3367 = vpop.f32.mrf.mxu0
        %3368 = vmatprep.mubr.f32.mxu0 0.0
        %3369 = vmatmul.mubr.f32.gmra.mxu0 %v1291
        %v3370 = vpop.f32.mrf.mxu0
        %v3371 = vadd.f32 0.0, %v3370
        %v3372 = vpop.f32.mrf.mxu0
        %3373 = vmatprep.mubr.f32.mxu0 0.0
        %3374 = vmatmul.mubr.f32.gmra.mxu0 %v1294
        %v3375 = vpop.f32.mrf.mxu0
        %v3376 = vadd.f32 0.0, %v3375
        %v3377 = vpop.f32.mrf.mxu0
        %3378 = vmatprep.mubr.f32.mxu0 0.0
        %3379 = vmatmul.mubr.f32.gmra.mxu0 %v1297
        %v3380 = vpop.f32.mrf.mxu0
        %v3381 = vadd.f32 0.0, %v3380
        %v3382 = vpop.f32.mrf.mxu0
        %3383 = vmatprep.mubr.f32.mxu0 0.0
        %3384 = vmatmul.mubr.f32.gmra.mxu0 %v1300
        %v3385 = vpop.f32.mrf.mxu0
        %v3386 = vadd.f32 0.0, %v3385
        %v3387 = vpop.f32.mrf.mxu0
        %3388 = vmatprep.mubr.f32.mxu0 0.0
        %3389 = vmatmul.mubr.f32.gmra.mxu0 %v1303
        %v3390 = vpop.f32.mrf.mxu0
        %v3391 = vadd.f32 0.0, %v3390
        %v3392 = vpop.f32.mrf.mxu0
        %3393 = vmatprep.mubr.f32.mxu0 0.0
        %3394 = vmatmul.mubr.f32.gmra.mxu0 %v1306
        %v3395 = vpop.f32.mrf.mxu0
        %v3396 = vadd.f32 0.0, %v3395
        %v3397 = vpop.f32.mrf.mxu0
        %3398 = vmatprep.mubr.f32.mxu0 0.0
        %3399 = vmatmul.mubr.f32.gmra.mxu0 %v1309
        %v3400 = vpop.f32.mrf.mxu0
        %v3401 = vadd.f32 0.0, %v3400
        %v3402 = vpop.f32.mrf.mxu0
        %3403 = vmatprep.mubr.f32.mxu0 0.0
        %3404 = vmatmul.mubr.f32.gmra.mxu0 %v1312
        %v3405 = vpop.f32.mrf.mxu0
        %v3406 = vadd.f32 0.0, %v3405
        %v3407 = vpop.f32.mrf.mxu0
        %3408 = vmatprep.mubr.f32.mxu0 0.0
        %3409 = vmatmul.mubr.f32.gmra.mxu0 %v1315
        %v3410 = vpop.f32.mrf.mxu0
        %v3411 = vadd.f32 0.0, %v3410
        %v3412 = vpop.f32.mrf.mxu0
        %3413 = vmatprep.mubr.f32.mxu0 0.0
        %3414 = vmatmul.mubr.f32.gmra.mxu0 %v1318
        %v3415 = vpop.f32.mrf.mxu0
        %v3416 = vadd.f32 0.0, %v3415
        %v3417 = vpop.f32.mrf.mxu0
        %3418 = vmatprep.mubr.f32.mxu0 0.0
        %3419 = vmatmul.mubr.f32.gmra.mxu0 %v1321
        %v3420 = vpop.f32.mrf.mxu0
        %v3421 = vadd.f32 0.0, %v3420
        %v3422 = vpop.f32.mrf.mxu0
        %3423 = vmatprep.mubr.f32.mxu0 0.0
        %3424 = vmatmul.mubr.f32.gmra.mxu0 %v1324
        %v3425 = vpop.f32.mrf.mxu0
        %v3426 = vadd.f32 0.0, %v3425
        %v3427 = vpop.f32.mrf.mxu0
        %3428 = vmatprep.mubr.f32.mxu0 0.0
        %3429 = vmatmul.mubr.f32.gmra.mxu0 %v1327
        %v3430 = vpop.f32.mrf.mxu0
        %v3431 = vadd.f32 0.0, %v3430
        %v3432 = vpop.f32.mrf.mxu0
        %3433 = vmatprep.mubr.f32.mxu0 0.0
        %3434 = vmatmul.mubr.f32.gmra.mxu0 %v1330
        %v3435 = vpop.f32.mrf.mxu0
        %v3436 = vadd.f32 0.0, %v3435
        %v3437 = vpop.f32.mrf.mxu0
        %3438 = vmatprep.mubr.f32.mxu0 0.0
        %3439 = vmatmul.mubr.f32.gmra.mxu0 %v1333
        %v3440 = vpop.f32.mrf.mxu0
        %v3441 = vadd.f32 0.0, %v3440
        %v3442 = vpop.f32.mrf.mxu0
        %3443 = vmatprep.mubr.f32.mxu0 0.0
        %3444 = vmatmul.mubr.f32.gmra.mxu0 %v1336
        %v3445 = vpop.f32.mrf.mxu0
        %v3446 = vadd.f32 0.0, %v3445
        %v3447 = vpop.f32.mrf.mxu0
        %3448 = vmatprep.mubr.f32.mxu0 0.0
        %3449 = vmatmul.mubr.f32.gmra.mxu0 %v1339
        %v3450 = vpop.f32.mrf.mxu0
        %v3451 = vadd.f32 0.0, %v3450
        %v3452 = vpop.f32.mrf.mxu0
        %3453 = vmatprep.mubr.f32.mxu0 0.0
        %3454 = vmatmul.mubr.f32.gmra.mxu0 %v1342
        %v3455 = vpop.f32.mrf.mxu0
        %v3456 = vadd.f32 0.0, %v3455
        %v3457 = vpop.f32.mrf.mxu0
        %3458 = vmatprep.mubr.f32.mxu0 0.0
        %3459 = vmatmul.mubr.f32.gmra.mxu0 %v1345
        %v3460 = vpop.f32.mrf.mxu0
        %v3461 = vadd.f32 0.0, %v3460
        %v3462 = vpop.f32.mrf.mxu0
        %3463 = vmatprep.mubr.f32.mxu0 0.0
        %3464 = vmatmul.mubr.f32.gmra.mxu0 %v1348
        %v3465 = vpop.f32.mrf.mxu0
        %v3466 = vadd.f32 0.0, %v3465
        %v3467 = vpop.f32.mrf.mxu0
        %3468 = vmatprep.mubr.f32.mxu0 0.0
        %3469 = vmatmul.mubr.f32.gmra.mxu0 %v1351
        %v3470 = vpop.f32.mrf.mxu0
        %v3471 = vadd.f32 0.0, %v3470
        %v3472 = vpop.f32.mrf.mxu0
        %3473 = vmatprep.mubr.f32.mxu0 0.0
        %3474 = vmatmul.mubr.f32.gmra.mxu0 %v1354
        %v3475 = vpop.f32.mrf.mxu0
        %v3476 = vadd.f32 0.0, %v3475
        %v3477 = vpop.f32.mrf.mxu0
        %3478 = vmatprep.mubr.f32.mxu0 0.0
        %3479 = vmatmul.mubr.f32.gmra.mxu0 %v1357
        %v3480 = vpop.f32.mrf.mxu0
        %v3481 = vadd.f32 0.0, %v3480
        %v3482 = vpop.f32.mrf.mxu0
        %3483 = vmatprep.mubr.f32.mxu0 0.0
        %3484 = vmatmul.mubr.f32.gmra.mxu0 %v1360
        %v3485 = vpop.f32.mrf.mxu0
        %v3486 = vadd.f32 0.0, %v3485
        %v3487 = vpop.f32.mrf.mxu0
        %3488 = vmatprep.mubr.f32.mxu0 0.0
        %3489 = vmatmul.mubr.f32.gmra.mxu0 %v1363
        %v3490 = vpop.f32.mrf.mxu0
        %v3491 = vadd.f32 0.0, %v3490
        %v3492 = vpop.f32.mrf.mxu0
        %3493 = vmatprep.mubr.f32.mxu0 0.0
        %3494 = vmatmul.mubr.f32.gmra.mxu0 %v1366
        %v3495 = vpop.f32.mrf.mxu0
        %v3496 = vadd.f32 0.0, %v3495
        %v3497 = vpop.f32.mrf.mxu0
        %3498 = vmatprep.mubr.f32.mxu0 0.0
        %3499 = vmatmul.mubr.f32.gmra.mxu0 %v1369
        %v3500 = vpop.f32.mrf.mxu0
        %v3501 = vadd.f32 0.0, %v3500
        %v3502 = vpop.f32.mrf.mxu0
        %3503 = vmatprep.mubr.f32.mxu0 0.0
        %3504 = vmatmul.mubr.f32.gmra.mxu0 %v1372
        %v3505 = vpop.f32.mrf.mxu0
        %v3506 = vadd.f32 0.0, %v3505
        %v3507 = vpop.f32.mrf.mxu0
        %3508 = vmatprep.mubr.f32.mxu0 0.0
        %3509 = vmatmul.mubr.f32.gmra.mxu0 %v1375
        %v3510 = vpop.f32.mrf.mxu0
        %v3511 = vadd.f32 0.0, %v3510
        %v3512 = vpop.f32.mrf.mxu0
        %3513 = vmatprep.mubr.f32.mxu0 0.0
        %3514 = vmatmul.mubr.f32.gmra.mxu0 %v1378
        %v3515 = vpop.f32.mrf.mxu0
        %v3516 = vadd.f32 0.0, %v3515
        %v3517 = vpop.f32.mrf.mxu0
        %3518 = vmatprep.mubr.f32.mxu0 0.0
        %3519 = vmatmul.mubr.f32.gmra.mxu0 %v1381
        %v3520 = vpop.f32.mrf.mxu0
        %v3521 = vadd.f32 0.0, %v3520
        %v3522 = vpop.f32.mrf.mxu0
        %3523 = vmatprep.mubr.f32.mxu0 0.0
        %3524 = vmatmul.mubr.f32.gmra.mxu0 %v1384
        %v3525 = vpop.f32.mrf.mxu0
        %v3526 = vadd.f32 0.0, %v3525
        %v3527 = vpop.f32.mrf.mxu0
        %3528 = vmatprep.mubr.f32.mxu0 0.0
        %3529 = vmatmul.mubr.f32.gmra.mxu0 %v1387
        %v3530 = vpop.f32.mrf.mxu0
        %v3531 = vadd.f32 0.0, %v3530
        %v3532 = vpop.f32.mrf.mxu0
        %3533 = vmatprep.mubr.f32.mxu0 0.0
        %3534 = vmatmul.mubr.f32.gmra.mxu0 %v1390
        %v3535 = vpop.f32.mrf.mxu0
        %v3536 = vadd.f32 0.0, %v3535
        %v3537 = vpop.f32.mrf.mxu0
        %3538 = vmatprep.mubr.f32.mxu0 0.0
        %3539 = vmatmul.mubr.f32.gmra.mxu0 %v1393
        %v3540 = vpop.f32.mrf.mxu0
        %v3541 = vadd.f32 0.0, %v3540
        %v3542 = vpop.f32.mrf.mxu0
        %3543 = vmatprep.mubr.f32.mxu0 0.0
        %3544 = vmatmul.mubr.f32.gmra.mxu0 %v1396
        %v3545 = vpop.f32.mrf.mxu0
        %v3546 = vadd.f32 0.0, %v3545
        %v3547 = vpop.f32.mrf.mxu0
        %3548 = vmatprep.mubr.f32.mxu0 0.0
        %3549 = vmatmul.mubr.f32.gmra.mxu0 %v1399
        %v3550 = vpop.f32.mrf.mxu0
        %v3551 = vadd.f32 0.0, %v3550
        %v3552 = vpop.f32.mrf.mxu0
        %3553 = vmatprep.mubr.f32.mxu0 0.0
        %3554 = vmatmul.mubr.f32.gmra.mxu0 %v1402
        %v3555 = vpop.f32.mrf.mxu0
        %v3556 = vadd.f32 0.0, %v3555
        %v3557 = vpop.f32.mrf.mxu0
        %3558 = vmatprep.mubr.f32.mxu0 0.0
        %3559 = vmatmul.mubr.f32.gmra.mxu0 %v1405
        %v3560 = vpop.f32.mrf.mxu0
        %v3561 = vadd.f32 0.0, %v3560
        %v3562 = vpop.f32.mrf.mxu0
        %3563 = vmatprep.mubr.f32.mxu0 0.0
        %3564 = vmatmul.mubr.f32.gmra.mxu0 %v1408
        %v3565 = vpop.f32.mrf.mxu0
        %v3566 = vadd.f32 0.0, %v3565
        %v3567 = vpop.f32.mrf.mxu0
        %3568 = vmatprep.mubr.f32.mxu0 0.0
        %3569 = vmatmul.mubr.f32.gmra.mxu0 %v1411
        %v3570 = vpop.f32.mrf.mxu0
        %v3571 = vadd.f32 0.0, %v3570
        %v3572 = vpop.f32.mrf.mxu0
        %3573 = vmatprep.mubr.f32.mxu0 0.0
        %3574 = vmatmul.mubr.f32.gmra.mxu0 %v1414
        %v3575 = vpop.f32.mrf.mxu0
        %v3576 = vadd.f32 0.0, %v3575
        %v3577 = vpop.f32.mrf.mxu0
        %3578 = vmatprep.mubr.f32.mxu0 0.0
        %3579 = vmatmul.mubr.f32.gmra.mxu0 %v1417
        %v3580 = vpop.f32.mrf.mxu0
        %v3581 = vadd.f32 0.0, %v3580
        %v3582 = vpop.f32.mrf.mxu0
        %3583 = vmatprep.mubr.f32.mxu0 0.0
        %3584 = vmatmul.mubr.f32.gmra.mxu0 %v1420
        %v3585 = vpop.f32.mrf.mxu0
        %v3586 = vadd.f32 0.0, %v3585
        %v3587 = vpop.f32.mrf.mxu0
        %3588 = vmatprep.mubr.f32.mxu0 0.0
        %3589 = vmatmul.mubr.f32.gmra.mxu0 %v1423
        %v3590 = vpop.f32.mrf.mxu0
        %v3591 = vadd.f32 0.0, %v3590
        %v3592 = vpop.f32.mrf.mxu0
        %3593 = vmatprep.mubr.f32.mxu0 0.0
        %3594 = vmatmul.mubr.f32.gmra.mxu0 %v1426
        %v3595 = vpop.f32.mrf.mxu0
        %v3596 = vadd.f32 0.0, %v3595
        %v3597 = vpop.f32.mrf.mxu0
        %3598 = vmatprep.mubr.f32.mxu0 0.0
        %3599 = vmatmul.mubr.f32.gmra.mxu0 %v1429
        %v3600 = vpop.f32.mrf.mxu0
        %v3601 = vadd.f32 0.0, %v3600
        %v3602 = vpop.f32.mrf.mxu0
        %3603 = vmatprep.mubr.f32.mxu0 0.0
        %3604 = vmatmul.mubr.f32.gmra.mxu0 %v1432
        %v3605 = vpop.f32.mrf.mxu0
        %v3606 = vadd.f32 0.0, %v3605
        %v3607 = vpop.f32.mrf.mxu0
        %3608 = vmatprep.mubr.f32.mxu0 0.0
        %3609 = vmatmul.mubr.f32.gmra.mxu0 %v1435
        %v3610 = vpop.f32.mrf.mxu0
        %v3611 = vadd.f32 0.0, %v3610
        %v3612 = vpop.f32.mrf.mxu0
        %3613 = vmatprep.mubr.f32.mxu0 0.0
        %3614 = vmatmul.mubr.f32.gmra.mxu0 %v1438
        %v3615 = vpop.f32.mrf.mxu0
        %v3616 = vadd.f32 0.0, %v3615
        %v3617 = vpop.f32.mrf.mxu0
        %3618 = vmatprep.mubr.f32.mxu0 0.0
        %3619 = vmatmul.mubr.f32.gmra.mxu0 %v1441
        %v3620 = vpop.f32.mrf.mxu0
        %v3621 = vadd.f32 0.0, %v3620
        %v3622 = vpop.f32.mrf.mxu0
        %3623 = vmatprep.mubr.f32.mxu0 0.0
        %3624 = vmatmul.mubr.f32.gmra.mxu0 %v1444
        %v3625 = vpop.f32.mrf.mxu0
        %v3626 = vadd.f32 0.0, %v3625
        %v3627 = vpop.f32.mrf.mxu0
        %3628 = vmatprep.mubr.f32.mxu0 0.0
        %3629 = vmatmul.mubr.f32.gmra.mxu0 %v1447
        %v3630 = vpop.f32.mrf.mxu0
        %v3631 = vadd.f32 0.0, %v3630
        %v3632 = vpop.f32.mrf.mxu0
        %3633 = vmatprep.mubr.f32.mxu0 0.0
        %3634 = vmatmul.mubr.f32.gmra.mxu0 %v1450
        %v3635 = vpop.f32.mrf.mxu0
        %v3636 = vadd.f32 0.0, %v3635
        %v3637 = vpop.f32.mrf.mxu0
        %3638 = vmatprep.mubr.f32.mxu0 0.0
        %3639 = vmatmul.mubr.f32.gmra.mxu0 %v1453
        %v3640 = vpop.f32.mrf.mxu0
        %v3641 = vadd.f32 0.0, %v3640
        %v3642 = vpop.f32.mrf.mxu0
        %3643 = vmatprep.mubr.f32.mxu0 0.0
        %3644 = vmatmul.mubr.f32.gmra.mxu0 %v1456
        %v3645 = vpop.f32.mrf.mxu0
        %v3646 = vadd.f32 0.0, %v3645
        %v3647 = vpop.f32.mrf.mxu0
        %3648 = vmatprep.mubr.f32.mxu0 0.0
        %3649 = vmatmul.mubr.f32.gmra.mxu0 %v1459
        %v3650 = vpop.f32.mrf.mxu0
        %v3651 = vadd.f32 0.0, %v3650
        %v3652 = vpop.f32.mrf.mxu0
        %3653 = vmatprep.mubr.f32.mxu0 0.0
        %3654 = vmatmul.mubr.f32.gmra.mxu0 %v1462
        %v3655 = vpop.f32.mrf.mxu0
        %v3656 = vadd.f32 0.0, %v3655
        %v3657 = vpop.f32.mrf.mxu0
        %3658 = vmatprep.mubr.f32.mxu0 0.0
        %3659 = vmatmul.mubr.f32.gmra.mxu0 %v1465
        %v3660 = vpop.f32.mrf.mxu0
        %v3661 = vadd.f32 0.0, %v3660
        %v3662 = vpop.f32.mrf.mxu0
        %3663 = vmatprep.mubr.f32.mxu0 0.0
        %3664 = vmatmul.mubr.f32.gmra.mxu0 %v1468
        %v3665 = vpop.f32.mrf.mxu0
        %v3666 = vadd.f32 0.0, %v3665
        %v3667 = vpop.f32.mrf.mxu0
        %3668 = vmatprep.mubr.f32.mxu0 0.0
        %3669 = vmatmul.mubr.f32.gmra.mxu0 %v1471
        %v3670 = vpop.f32.mrf.mxu0
        %v3671 = vadd.f32 0.0, %v3670
        %v3672 = vpop.f32.mrf.mxu0
        %3673 = vmatprep.mubr.f32.mxu0 0.0
        %3674 = vmatmul.mubr.f32.gmra.mxu0 %v1474
        %v3675 = vpop.f32.mrf.mxu0
        %v3676 = vadd.f32 0.0, %v3675
        %v3677 = vpop.f32.mrf.mxu0
        %3678 = vmatprep.mubr.f32.mxu0 0.0
        %3679 = vmatmul.mubr.f32.gmra.mxu0 %v1477
        %v3680 = vpop.f32.mrf.mxu0
        %v3681 = vadd.f32 0.0, %v3680
        %v3682 = vpop.f32.mrf.mxu0
        %3683 = vmatprep.mubr.f32.mxu0 0.0
        %3684 = vmatmul.mubr.f32.gmra.mxu0 %v1480
        %v3685 = vpop.f32.mrf.mxu0
        %v3686 = vadd.f32 0.0, %v3685
        %v3687 = vpop.f32.mrf.mxu0
        %3688 = vmatprep.mubr.f32.mxu0 0.0
        %3689 = vmatmul.mubr.f32.gmra.mxu0 %v1483
        %v3690 = vpop.f32.mrf.mxu0
        %v3691 = vadd.f32 0.0, %v3690
        %v3692 = vpop.f32.mrf.mxu0
        %3693 = vmatprep.mubr.f32.mxu0 0.0
        %3694 = vmatmul.mubr.f32.gmra.mxu0 %v1486
        %v3695 = vpop.f32.mrf.mxu0
        %v3696 = vadd.f32 0.0, %v3695
        %v3697 = vpop.f32.mrf.mxu0
        %3698 = vmatprep.mubr.f32.mxu0 0.0
        %3699 = vmatmul.mubr.f32.gmra.mxu0 %v1489
        %v3700 = vpop.f32.mrf.mxu0
        %v3701 = vadd.f32 0.0, %v3700
        %v3702 = vpop.f32.mrf.mxu0
        %3703 = vmatprep.mubr.f32.mxu0 0.0
        %3704 = vmatmul.mubr.f32.gmra.mxu0 %v1492
        %v3705 = vpop.f32.mrf.mxu0
        %v3706 = vadd.f32 0.0, %v3705
        %v3707 = vpop.f32.mrf.mxu0
        %3708 = vmatprep.mubr.f32.mxu0 0.0
        %3709 = vmatmul.mubr.f32.gmra.mxu0 %v1495
        %v3710 = vpop.f32.mrf.mxu0
        %v3711 = vadd.f32 0.0, %v3710
        %v3712 = vpop.f32.mrf.mxu0
        %3713 = vmatprep.mubr.f32.mxu0 0.0
        %3714 = vmatmul.mubr.f32.gmra.mxu0 %v1498
        %v3715 = vpop.f32.mrf.mxu0
        %v3716 = vadd.f32 0.0, %v3715
        %v3717 = vpop.f32.mrf.mxu0
        %3718 = vmatprep.mubr.f32.mxu0 0.0
        %3719 = vmatmul.mubr.f32.gmra.mxu0 %v1501
        %v3720 = vpop.f32.mrf.mxu0
        %v3721 = vadd.f32 0.0, %v3720
        %v3722 = vpop.f32.mrf.mxu0
        %3723 = vmatprep.mubr.f32.mxu0 0.0
        %3724 = vmatmul.mubr.f32.gmra.mxu0 %v1504
        %v3725 = vpop.f32.mrf.mxu0
        %v3726 = vadd.f32 0.0, %v3725
        %v3727 = vpop.f32.mrf.mxu0
        %3728 = vmatprep.mubr.f32.mxu0 0.0
        %3729 = vmatmul.mubr.f32.gmra.mxu0 %v1507
        %v3730 = vpop.f32.mrf.mxu0
        %v3731 = vadd.f32 0.0, %v3730
        %v3732 = vpop.f32.mrf.mxu0
        %3733 = vmatprep.mubr.f32.mxu0 0.0
        %3734 = vmatmul.mubr.f32.gmra.mxu0 %v1510
        %v3735 = vpop.f32.mrf.mxu0
        %v3736 = vadd.f32 0.0, %v3735
        %v3737 = vpop.f32.mrf.mxu0
        %3738 = vmatprep.mubr.f32.mxu0 0.0
        %3739 = vmatmul.mubr.f32.gmra.mxu0 %v1513
        %v3740 = vpop.f32.mrf.mxu0
        %v3741 = vadd.f32 0.0, %v3740
        %v3742 = vpop.f32.mrf.mxu0
        %3743 = vmatprep.mubr.f32.mxu0 0.0
        %3744 = vmatmul.mubr.f32.gmra.mxu0 %v1516
        %v3745 = vpop.f32.mrf.mxu0
        %v3746 = vadd.f32 0.0, %v3745
        %v3747 = vpop.f32.mrf.mxu0
        %3748 = vmatprep.mubr.f32.mxu0 0.0
        %3749 = vmatmul.mubr.f32.gmra.mxu0 %v1519
        %v3750 = vpop.f32.mrf.mxu0
        %v3751 = vadd.f32 0.0, %v3750
        %v3752 = vpop.f32.mrf.mxu0
        %3753 = vmatprep.mubr.f32.mxu0 0.0
        %3754 = vmatmul.mubr.f32.gmra.mxu0 %v1522
        %v3755 = vpop.f32.mrf.mxu0
        %v3756 = vadd.f32 0.0, %v3755
        %v3757 = vpop.f32.mrf.mxu0
        %3758 = vmatprep.mubr.f32.mxu0 0.0
        %3759 = vmatmul.mubr.f32.gmra.mxu0 %v1525
        %v3760 = vpop.f32.mrf.mxu0
        %v3761 = vadd.f32 0.0, %v3760
        %v3762 = vpop.f32.mrf.mxu0
        %3763 = vmatprep.mubr.f32.mxu0 0.0
        %3764 = vmatmul.mubr.f32.gmra.mxu0 %v1528
        %v3765 = vpop.f32.mrf.mxu0
        %v3766 = vadd.f32 0.0, %v3765
        %v3767 = vpop.f32.mrf.mxu0
        %3768 = vmatprep.mubr.f32.mxu0 0.0
        %3769 = vmatmul.mubr.f32.gmra.mxu0 %v1531
        %v3770 = vpop.f32.mrf.mxu0
        %v3771 = vadd.f32 0.0, %v3770
        %v3772 = vpop.f32.mrf.mxu0
        %3773 = vmatprep.mubr.f32.mxu0 0.0
        %3774 = vmatmul.mubr.f32.gmra.mxu0 %v1534
        %v3775 = vpop.f32.mrf.mxu0
        %v3776 = vadd.f32 0.0, %v3775
        %v3777 = vpop.f32.mrf.mxu0
        %3778 = vmatprep.mubr.f32.mxu0 0.0
        %3779 = vmatmul.mubr.f32.gmra.mxu0 %v1537
        %v3780 = vpop.f32.mrf.mxu0
        %v3781 = vadd.f32 0.0, %v3780
        %v3782 = vpop.f32.mrf.mxu0
        %3783 = vmatprep.mubr.f32.mxu0 0.0
        %3784 = vmatmul.mubr.f32.gmra.mxu0 %v1540
        %v3785 = vpop.f32.mrf.mxu0
        %v3786 = vadd.f32 0.0, %v3785
        %v3787 = vpop.f32.mrf.mxu0
        %3788 = vmatprep.mubr.f32.mxu0 0.0
        %3789 = vmatmul.mubr.f32.gmra.mxu0 %v1543
        %v3790 = vpop.f32.mrf.mxu0
        %v3791 = vadd.f32 0.0, %v3790
        %v3792 = vpop.f32.mrf.mxu0
        %3793 = vmatprep.mubr.f32.mxu0 0.0
        %3794 = vmatmul.mubr.f32.gmra.mxu0 %v1546
        %v3795 = vpop.f32.mrf.mxu0
        %v3796 = vadd.f32 0.0, %v3795
        %v3797 = vpop.f32.mrf.mxu0
        %3798 = vmatprep.mubr.f32.mxu0 0.0
        %3799 = vmatmul.mubr.f32.gmra.mxu0 %v1549
        %v3800 = vpop.f32.mrf.mxu0
        %v3801 = vadd.f32 0.0, %v3800
        %v3802 = vpop.f32.mrf.mxu0
        %3803 = vmatprep.mubr.f32.mxu0 0.0
        %3804 = vmatmul.mubr.f32.gmra.mxu0 %v1552
        %v3805 = vpop.f32.mrf.mxu0
        %v3806 = vadd.f32 0.0, %v3805
        %v3807 = vpop.f32.mrf.mxu0
        %3808 = vmatprep.mubr.f32.mxu0 0.0
        %3809 = vmatmul.mubr.f32.gmra.mxu0 %v1555
        %v3810 = vpop.f32.mrf.mxu0
        %v3811 = vadd.f32 0.0, %v3810
        %v3812 = vpop.f32.mrf.mxu0
        %3813 = vmatprep.mubr.f32.mxu0 0.0
        %3814 = vmatmul.mubr.f32.gmra.mxu0 %v1558
        %v3815 = vpop.f32.mrf.mxu0
        %v3816 = vadd.f32 0.0, %v3815
        %v3817 = vpop.f32.mrf.mxu0
        %3818 = vmatprep.mubr.f32.mxu0 0.0
        %3819 = vmatmul.mubr.f32.gmra.mxu0 %v1561
        %v3820 = vpop.f32.mrf.mxu0
        %v3821 = vadd.f32 0.0, %v3820
        %v3822 = vpop.f32.mrf.mxu0
        %3823 = vmatprep.mubr.f32.mxu0 0.0
        %3824 = vmatmul.mubr.f32.gmra.mxu0 %v1564
        %v3825 = vpop.f32.mrf.mxu0
        %v3826 = vadd.f32 0.0, %v3825
        %v3827 = vpop.f32.mrf.mxu0
        %3828 = vmatprep.mubr.f32.mxu0 0.0
        %3829 = vmatmul.mubr.f32.gmra.mxu0 %v1567
        %v3830 = vpop.f32.mrf.mxu0
        %v3831 = vadd.f32 0.0, %v3830
        %v3832 = vpop.f32.mrf.mxu0
        %3833 = vmatprep.mubr.f32.mxu0 0.0
        %3834 = vmatmul.mubr.f32.gmra.mxu0 %v1570
        %v3835 = vpop.f32.mrf.mxu0
        %v3836 = vadd.f32 0.0, %v3835
        %v3837 = vpop.f32.mrf.mxu0
        %3838 = vmatprep.mubr.f32.mxu0 0.0
        %3839 = vmatmul.mubr.f32.gmra.mxu0 %v1573
        %v3840 = vpop.f32.mrf.mxu0
        %v3841 = vadd.f32 0.0, %v3840
        %v3842 = vpop.f32.mrf.mxu0
        %3843 = vmatprep.mubr.f32.mxu0 0.0
        %3844 = vmatmul.mubr.f32.gmra.mxu0 %v1576
        %v3845 = vpop.f32.mrf.mxu0
        %v3846 = vadd.f32 0.0, %v3845
        %v3847 = vpop.f32.mrf.mxu0
        %3848 = vmatprep.mubr.f32.mxu0 0.0
        %3849 = vmatmul.mubr.f32.gmra.mxu0 %v1579
        %v3850 = vpop.f32.mrf.mxu0
        %v3851 = vadd.f32 0.0, %v3850
        %v3852 = vpop.f32.mrf.mxu0
        %3853 = vmatprep.mubr.f32.mxu0 0.0
        %3854 = vmatmul.mubr.f32.gmra.mxu0 %v1582
        %v3855 = vpop.f32.mrf.mxu0
        %v3856 = vadd.f32 0.0, %v3855
        %v3857 = vpop.f32.mrf.mxu0
        %3858 = vmatprep.mubr.f32.mxu0 0.0
        %3859 = vmatmul.mubr.f32.gmra.mxu0 %v1585
        %v3860 = vpop.f32.mrf.mxu0
        %v3861 = vadd.f32 0.0, %v3860
        %v3862 = vpop.f32.mrf.mxu0
        %3863 = vmatprep.mubr.f32.mxu0 0.0
        %3864 = vmatmul.mubr.f32.gmra.mxu0 %v1588
        %v3865 = vpop.f32.mrf.mxu0
        %v3866 = vadd.f32 0.0, %v3865
        %v3867 = vpop.f32.mrf.mxu0
        %3868 = vmatprep.mubr.f32.mxu0 0.0
        %3869 = vmatmul.mubr.f32.gmra.mxu0 %v1591
        %v3870 = vpop.f32.mrf.mxu0
        %v3871 = vadd.f32 0.0, %v3870
        %v3872 = vpop.f32.mrf.mxu0
        %3873 = vmatprep.mubr.f32.mxu0 0.0
        %3874 = vmatmul.mubr.f32.gmra.mxu0 %v1594
        %v3875 = vpop.f32.mrf.mxu0
        %v3876 = vadd.f32 0.0, %v3875
        %v3877 = vpop.f32.mrf.mxu0
        %3878 = vmatprep.mubr.f32.mxu0 0.0
        %3879 = vmatmul.mubr.f32.gmra.mxu0 %v1597
        %v3880 = vpop.f32.mrf.mxu0
        %v3881 = vadd.f32 0.0, %v3880
        %v3882 = vpop.f32.mrf.mxu0
        %3883 = vmatprep.mubr.f32.mxu0 0.0
        %3884 = vmatmul.mubr.f32.gmra.mxu0 %v1600
        %v3885 = vpop.f32.mrf.mxu0
        %v3886 = vadd.f32 0.0, %v3885
        %v3887 = vpop.f32.mrf.mxu0
        %3888 = vmatprep.mubr.f32.mxu0 0.0
        %3889 = vmatmul.mubr.f32.gmra.mxu0 %v1603
        %v3890 = vpop.f32.mrf.mxu0
        %v3891 = vadd.f32 0.0, %v3890
        %v3892 = vpop.f32.mrf.mxu0
        %3893 = vmatprep.mubr.f32.mxu0 0.0
        %3894 = vmatmul.mubr.f32.gmra.mxu0 %v1606
        %v3895 = vpop.f32.mrf.mxu0
        %v3896 = vadd.f32 0.0, %v3895
        %v3897 = vpop.f32.mrf.mxu0
        %3898 = vmatprep.mubr.f32.mxu0 0.0
        %3899 = vmatmul.mubr.f32.gmra.mxu0 %v1609
        %v3900 = vpop.f32.mrf.mxu0
        %v3901 = vadd.f32 0.0, %v3900
        %v3902 = vpop.f32.mrf.mxu0
        %3903 = vmatprep.mubr.f32.mxu0 0.0
        %3904 = vmatmul.mubr.f32.gmra.mxu0 %v1612
        %v3905 = vpop.f32.mrf.mxu0
        %v3906 = vadd.f32 0.0, %v3905
        %v3907 = vpop.f32.mrf.mxu0
        %3908 = vmatprep.mubr.f32.mxu0 0.0
        %3909 = vmatmul.mubr.f32.gmra.mxu0 %v1615
        %v3910 = vpop.f32.mrf.mxu0
        %v3911 = vadd.f32 0.0, %v3910
        %v3912 = vpop.f32.mrf.mxu0
        %3913 = vmatprep.mubr.f32.mxu0 0.0
        %3914 = vmatmul.mubr.f32.gmra.mxu0 %v1618
        %v3915 = vpop.f32.mrf.mxu0
        %v3916 = vadd.f32 0.0, %v3915
        %v3917 = vpop.f32.mrf.mxu0
        %3918 = vmatprep.mubr.f32.mxu0 0.0
        %3919 = vmatmul.mubr.f32.gmra.mxu0 %v1621
        %v3920 = vpop.f32.mrf.mxu0
        %v3921 = vadd.f32 0.0, %v3920
        %v3922 = vpop.f32.mrf.mxu0
        %3923 = vmatprep.mubr.f32.mxu0 0.0
        %3924 = vmatmul.mubr.f32.gmra.mxu0 %v1624
        %v3925 = vpop.f32.mrf.mxu0
        %v3926 = vadd.f32 0.0, %v3925
        %v3927 = vpop.f32.mrf.mxu0
        %3928 = vmatprep.mubr.f32.mxu0 0.0
        %3929 = vmatmul.mubr.f32.gmra.mxu0 %v1627
        %v3930 = vpop.f32.mrf.mxu0
        %v3931 = vadd.f32 0.0, %v3930
        %v3932 = vpop.f32.mrf.mxu0
        %3933 = vmatprep.mubr.f32.mxu0 0.0
        %3934 = vmatmul.mubr.f32.gmra.mxu0 %v1630
        %v3935 = vpop.f32.mrf.mxu0
        %v3936 = vadd.f32 0.0, %v3935
        %v3937 = vpop.f32.mrf.mxu0
        %3938 = vmatprep.mubr.f32.mxu0 0.0
        %3939 = vmatmul.mubr.f32.gmra.mxu0 %v1633
        %v3940 = vpop.f32.mrf.mxu0
        %v3941 = vadd.f32 0.0, %v3940
        %v3942 = vpop.f32.mrf.mxu0
        %3943 = vmatprep.mubr.f32.mxu0 0.0
        %3944 = vmatmul.mubr.f32.gmra.mxu0 %v1636
        %v3945 = vpop.f32.mrf.mxu0
        %v3946 = vadd.f32 0.0, %v3945
        %v3947 = vpop.f32.mrf.mxu0
        %3948 = vmatprep.mubr.f32.mxu0 0.0
        %3949 = vmatmul.mubr.f32.gmra.mxu0 %v1639
        %v3950 = vpop.f32.mrf.mxu0
        %v3951 = vadd.f32 0.0, %v3950
        %v3952 = vpop.f32.mrf.mxu0
        %3953 = vmatprep.mubr.f32.mxu0 0.0
        %3954 = vmatmul.mubr.f32.gmra.mxu0 %v1642
        %v3955 = vpop.f32.mrf.mxu0
        %v3956 = vadd.f32 0.0, %v3955
        %v3957 = vpop.f32.mrf.mxu0
        %3958 = vmatprep.mubr.f32.mxu0 0.0
        %3959 = vmatmul.mubr.f32.gmra.mxu0 %v1645
        %v3960 = vpop.f32.mrf.mxu0
        %v3961 = vadd.f32 0.0, %v3960
        %v3962 = vpop.f32.mrf.mxu0
        %3963 = vmatprep.mubr.f32.mxu0 0.0
        %3964 = vmatmul.mubr.f32.gmra.mxu0 %v1648
        %v3965 = vpop.f32.mrf.mxu0
        %v3966 = vadd.f32 0.0, %v3965
        %v3967 = vpop.f32.mrf.mxu0
        %3968 = vmatprep.mubr.f32.mxu0 0.0
        %3969 = vmatmul.mubr.f32.gmra.mxu0 %v1651
        %v3970 = vpop.f32.mrf.mxu0
        %v3971 = vadd.f32 0.0, %v3970
        %v3972 = vpop.f32.mrf.mxu0
        %3973 = vmatprep.mubr.f32.mxu0 0.0
        %3974 = vmatmul.mubr.f32.gmra.mxu0 %v1654
        %v3975 = vpop.f32.mrf.mxu0
        %v3976 = vadd.f32 0.0, %v3975
        %v3977 = vpop.f32.mrf.mxu0
        %3978 = vmatprep.mubr.f32.mxu0 0.0
        %3979 = vmatmul.mubr.f32.gmra.mxu0 %v1657
        %v3980 = vpop.f32.mrf.mxu0
        %v3981 = vadd.f32 0.0, %v3980
        %v3982 = vpop.f32.mrf.mxu0
        %3983 = vmatprep.mubr.f32.mxu0 0.0
        %3984 = vmatmul.mubr.f32.gmra.mxu0 %v1660
        %v3985 = vpop.f32.mrf.mxu0
        %v3986 = vadd.f32 0.0, %v3985
        %v3987 = vpop.f32.mrf.mxu0
        %3988 = vmatprep.mubr.f32.mxu0 0.0
        %3989 = vmatmul.mubr.f32.gmra.mxu0 %v1663
        %v3990 = vpop.f32.mrf.mxu0
        %v3991 = vadd.f32 0.0, %v3990
        %v3992 = vpop.f32.mrf.mxu0
        %3993 = vmatprep.mubr.f32.mxu0 0.0
        %3994 = vmatmul.mubr.f32.gmra.mxu0 %v1666
        %v3995 = vpop.f32.mrf.mxu0
        %v3996 = vadd.f32 0.0, %v3995
        %v3997 = vpop.f32.mrf.mxu0
        %3998 = vmatprep.mubr.f32.mxu0 0.0
        %3999 = vmatmul.mubr.f32.gmra.mxu0 %v1669
        %v4000 = vpop.f32.mrf.mxu0
        %v4001 = vadd.f32 0.0, %v4000
        %v4002 = vpop.f32.mrf.mxu0
        %4003 = vmatprep.mubr.f32.mxu0 0.0
        %4004 = vmatmul.mubr.f32.gmra.mxu0 %v1672
        %v4005 = vpop.f32.mrf.mxu0
        %v4006 = vadd.f32 0.0, %v4005
        %v4007 = vpop.f32.mrf.mxu0
        %4008 = vmatprep.mubr.f32.mxu0 0.0
        %4009 = vmatmul.mubr.f32.gmra.mxu0 %v1675
        %v4010 = vpop.f32.mrf.mxu0
        %v4011 = vadd.f32 0.0, %v4010
        %v4012 = vpop.f32.mrf.mxu0
        %4013 = vmatprep.mubr.f32.mxu0 0.0
        %4014 = vmatmul.mubr.f32.gmra.mxu0 %v1678
        %v4015 = vpop.f32.mrf.mxu0
        %v4016 = vadd.f32 0.0, %v4015
        %v4017 = vpop.f32.mrf.mxu0
        %4018 = vmatprep.mubr.f32.mxu0 0.0
        %4019 = vmatmul.mubr.f32.gmra.mxu0 %v1681
        %v4020 = vpop.f32.mrf.mxu0
        %v4021 = vadd.f32 0.0, %v4020
        %v4022 = vpop.f32.mrf.mxu0
        %4023 = vmatprep.mubr.f32.mxu0 0.0
        %4024 = vmatmul.mubr.f32.gmra.mxu0 %v1684
        %v4025 = vpop.f32.mrf.mxu0
        %v4026 = vadd.f32 0.0, %v4025
        %v4027 = vpop.f32.mrf.mxu0
        %4028 = vmatprep.mubr.f32.mxu0 0.0
        %4029 = vmatmul.mubr.f32.gmra.mxu0 %v1687
        %v4030 = vpop.f32.mrf.mxu0
        %v4031 = vadd.f32 0.0, %v4030
        %v4032 = vpop.f32.mrf.mxu0
        %4033 = vmatprep.mubr.f32.mxu0 0.0
        %4034 = vmatmul.mubr.f32.gmra.mxu0 %v1690
        %v4035 = vpop.f32.mrf.mxu0
        %v4036 = vadd.f32 0.0, %v4035
        %v4037 = vpop.f32.mrf.mxu0
        %4038 = vmatprep.mubr.f32.mxu0 0.0
        %4039 = vmatmul.mubr.f32.gmra.mxu0 %v1693
        %v4040 = vpop.f32.mrf.mxu0
        %v4041 = vadd.f32 0.0, %v4040
        %v4042 = vpop.f32.mrf.mxu0
        %4043 = vmatprep.mubr.f32.mxu0 0.0
        %4044 = vmatmul.mubr.f32.gmra.mxu0 %v1696
        %v4045 = vpop.f32.mrf.mxu0
        %v4046 = vadd.f32 0.0, %v4045
        %v4047 = vpop.f32.mrf.mxu0
        %4048 = vmatprep.mubr.f32.mxu0 0.0
        %4049 = vmatmul.mubr.f32.gmra.mxu0 %v1699
        %v4050 = vpop.f32.mrf.mxu0
        %v4051 = vadd.f32 0.0, %v4050
        %v4052 = vpop.f32.mrf.mxu0
        %4053 = vmatprep.mubr.f32.mxu0 0.0
        %4054 = vmatmul.mubr.f32.gmra.mxu0 %v1702
        %v4055 = vpop.f32.mrf.mxu0
        %v4056 = vadd.f32 0.0, %v4055
        %v4057 = vpop.f32.mrf.mxu0
        %4058 = vmatprep.mubr.f32.mxu0 0.0
        %4059 = vmatmul.mubr.f32.gmra.mxu0 %v1705
        %v4060 = vpop.f32.mrf.mxu0
        %v4061 = vadd.f32 0.0, %v4060
        %v4062 = vpop.f32.mrf.mxu0
        %4063 = vmatprep.mubr.f32.mxu0 0.0
        %4064 = vmatmul.mubr.f32.gmra.mxu0 %v1708
        %v4065 = vpop.f32.mrf.mxu0
        %v4066 = vadd.f32 0.0, %v4065
        %v4067 = vpop.f32.mrf.mxu0
        %4068 = vmatprep.mubr.f32.mxu0 0.0
        %4069 = vmatmul.mubr.f32.gmra.mxu0 %v1711
        %v4070 = vpop.f32.mrf.mxu0
        %v4071 = vadd.f32 0.0, %v4070
        %v4072 = vpop.f32.mrf.mxu0
        %4073 = vmatprep.mubr.f32.mxu0 0.0
        %4074 = vmatmul.mubr.f32.gmra.mxu0 %v1714
        %v4075 = vpop.f32.mrf.mxu0
        %v4076 = vadd.f32 0.0, %v4075
        %v4077 = vpop.f32.mrf.mxu0
        %4078 = vmatprep.mubr.f32.mxu0 0.0
        %4079 = vmatmul.mubr.f32.gmra.mxu0 %v1717
        %v4080 = vpop.f32.mrf.mxu0
        %v4081 = vadd.f32 0.0, %v4080
        %v4082 = vpop.f32.mrf.mxu0
        %4083 = vmatprep.mubr.f32.mxu0 0.0
        %4084 = vmatmul.mubr.f32.gmra.mxu0 %v1720
        %v4085 = vpop.f32.mrf.mxu0
        %v4086 = vadd.f32 0.0, %v4085
        %v4087 = vpop.f32.mrf.mxu0
        %4088 = vmatprep.mubr.f32.mxu0 0.0
        %4089 = vmatmul.mubr.f32.gmra.mxu0 %v1723
        %v4090 = vpop.f32.mrf.mxu0
        %v4091 = vadd.f32 0.0, %v4090
        %v4092 = vpop.f32.mrf.mxu0
        %4093 = vmatprep.mubr.f32.mxu0 0.0
        %4094 = vmatmul.mubr.f32.gmra.mxu0 %v1726
        %v4095 = vpop.f32.mrf.mxu0
        %v4096 = vadd.f32 0.0, %v4095
        %v4097 = vpop.f32.mrf.mxu0
        %4098 = vmatprep.mubr.f32.mxu0 0.0
        %4099 = vmatmul.mubr.f32.gmra.mxu0 %v1729
        %v4100 = vpop.f32.mrf.mxu0
        %v4101 = vadd.f32 0.0, %v4100
        %v4102 = vpop.f32.mrf.mxu0
        %4103 = vmatprep.mubr.f32.mxu0 0.0
        %4104 = vmatmul.mubr.f32.gmra.mxu0 %v1732
        %v4105 = vpop.f32.mrf.mxu0
        %v4106 = vadd.f32 0.0, %v4105
        %v4107 = vpop.f32.mrf.mxu0
        %4108 = vmatprep.mubr.f32.mxu0 0.0
        %4109 = vmatmul.mubr.f32.gmra.mxu0 %v1735
        %v4110 = vpop.f32.mrf.mxu0
        %v4111 = vadd.f32 0.0, %v4110
        %v4112 = vpop.f32.mrf.mxu0
        %4113 = vmatprep.mubr.f32.mxu0 0.0
        %4114 = vmatmul.mubr.f32.gmra.mxu0 %v1738
        %v4115 = vpop.f32.mrf.mxu0
        %v4116 = vadd.f32 0.0, %v4115
        %v4117 = vpop.f32.mrf.mxu0
        %4118 = vmatprep.mubr.f32.mxu0 0.0
        %4119 = vmatmul.mubr.f32.gmra.mxu0 %v1741
        %v4120 = vpop.f32.mrf.mxu0
        %v4121 = vadd.f32 0.0, %v4120
        %v4122 = vpop.f32.mrf.mxu0
        %4123 = vmatprep.mubr.f32.mxu0 0.0
        %4124 = vmatmul.mubr.f32.gmra.mxu0 %v1744
        %v4125 = vpop.f32.mrf.mxu0
        %v4126 = vadd.f32 0.0, %v4125
        %v4127 = vpop.f32.mrf.mxu0
        %4128 = vmatprep.mubr.f32.mxu0 0.0
        %4129 = vmatmul.mubr.f32.gmra.mxu0 %v1747
        %v4130 = vpop.f32.mrf.mxu0
        %v4131 = vadd.f32 0.0, %v4130
        %v4132 = vpop.f32.mrf.mxu0
        %4133 = vmatprep.mubr.f32.mxu0 0.0
        %4134 = vmatmul.mubr.f32.gmra.mxu0 %v1750
        %v4135 = vpop.f32.mrf.mxu0
        %v4136 = vadd.f32 0.0, %v4135
        %v4137 = vpop.f32.mrf.mxu0
        %4138 = vmatprep.mubr.f32.mxu0 0.0
        %4139 = vmatmul.mubr.f32.gmra.mxu0 %v1753
        %v4140 = vpop.f32.mrf.mxu0
        %v4141 = vadd.f32 0.0, %v4140
        %v4142 = vpop.f32.mrf.mxu0
        %4143 = vmatprep.mubr.f32.mxu0 0.0
        %4144 = vmatmul.mubr.f32.gmra.mxu0 %v1756
        %v4145 = vpop.f32.mrf.mxu0
        %v4146 = vadd.f32 0.0, %v4145
        %v4147 = vpop.f32.mrf.mxu0
        %4148 = vmatprep.mubr.f32.mxu0 0.0
        %4149 = vmatmul.mubr.f32.gmra.mxu0 %v1759
        %v4150 = vpop.f32.mrf.mxu0
        %v4151 = vadd.f32 0.0, %v4150
        %v4152 = vpop.f32.mrf.mxu0
        %4153 = vmatprep.mubr.f32.mxu0 0.0
        %4154 = vmatmul.mubr.f32.gmra.mxu0 %v1762
        %v4155 = vpop.f32.mrf.mxu0
        %v4156 = vadd.f32 0.0, %v4155
        %v4157 = vpop.f32.mrf.mxu0
        %4158 = vmatprep.mubr.f32.mxu0 0.0
        %4159 = vmatmul.mubr.f32.gmra.mxu0 %v1765
        %v4160 = vpop.f32.mrf.mxu0
        %v4161 = vadd.f32 0.0, %v4160
        %v4162 = vpop.f32.mrf.mxu0
        %4163 = vmatprep.mubr.f32.mxu0 0.0
        %4164 = vmatmul.mubr.f32.gmra.mxu0 %v1768
        %v4165 = vpop.f32.mrf.mxu0
        %v4166 = vadd.f32 0.0, %v4165
        %v4167 = vpop.f32.mrf.mxu0
        %4168 = vmatprep.mubr.f32.mxu0 0.0
        %4169 = vmatmul.mubr.f32.gmra.mxu0 %v1771
        %v4170 = vpop.f32.mrf.mxu0
        %v4171 = vadd.f32 0.0, %v4170
        %v4172 = vpop.f32.mrf.mxu0
        %4173 = vmatprep.mubr.f32.mxu0 0.0
        %4174 = vmatmul.mubr.f32.gmra.mxu0 %v1774
        %v4175 = vpop.f32.mrf.mxu0
        %v4176 = vadd.f32 0.0, %v4175
        %v4177 = vpop.f32.mrf.mxu0
        %4178 = vmatprep.mubr.f32.mxu0 0.0
        %4179 = vmatmul.mubr.f32.gmra.mxu0 %v1777
        %v4180 = vpop.f32.mrf.mxu0
        %v4181 = vadd.f32 0.0, %v4180
        %v4182 = vpop.f32.mrf.mxu0
        %4183 = vmatprep.mubr.f32.mxu0 0.0
        %4184 = vmatmul.mubr.f32.gmra.mxu0 %v1780
        %v4185 = vpop.f32.mrf.mxu0
        %v4186 = vadd.f32 0.0, %v4185
        %v4187 = vpop.f32.mrf.mxu0
        %4188 = vmatprep.mubr.f32.mxu0 0.0
        %4189 = vmatmul.mubr.f32.gmra.mxu0 %v1783
        %v4190 = vpop.f32.mrf.mxu0
        %v4191 = vadd.f32 0.0, %v4190
        %v4192 = vpop.f32.mrf.mxu0
        %4193 = vmatprep.mubr.f32.mxu0 0.0
        %4194 = vmatmul.mubr.f32.gmra.mxu0 %v1786
        %v4195 = vpop.f32.mrf.mxu0
        %v4196 = vadd.f32 0.0, %v4195
        %v4197 = vpop.f32.mrf.mxu0
        %4198 = vmatprep.mubr.f32.mxu0 0.0
        %4199 = vmatmul.mubr.f32.gmra.mxu0 %v1789
        %v4200 = vpop.f32.mrf.mxu0
        %v4201 = vadd.f32 0.0, %v4200
        %v4202 = vpop.f32.mrf.mxu0
        %4203 = vmatprep.mubr.f32.mxu0 0.0
        %4204 = vmatmul.mubr.f32.gmra.mxu0 %v1792
        %v4205 = vpop.f32.mrf.mxu0
        %v4206 = vadd.f32 0.0, %v4205
        %v4207 = vpop.f32.mrf.mxu0
        %4208 = vmatprep.mubr.f32.mxu0 0.0
        %4209 = vmatmul.mubr.f32.gmra.mxu0 %v1795
        %v4210 = vpop.f32.mrf.mxu0
        %v4211 = vadd.f32 0.0, %v4210
        %v4212 = vpop.f32.mrf.mxu0
        %4213 = vmatprep.mubr.f32.mxu0 0.0
        %4214 = vmatmul.mubr.f32.gmra.mxu0 %v1798
        %v4215 = vpop.f32.mrf.mxu0
        %v4216 = vadd.f32 0.0, %v4215
        %v4217 = vpop.f32.mrf.mxu0
        %4218 = vmatprep.mubr.f32.mxu0 0.0
        %4219 = vmatmul.mubr.f32.gmra.mxu0 %v1801
        %v4220 = vpop.f32.mrf.mxu0
        %v4221 = vadd.f32 0.0, %v4220
        %v4222 = vpop.f32.mrf.mxu0
        %4223 = vmatprep.mubr.f32.mxu0 0.0
        %4224 = vmatmul.mubr.f32.gmra.mxu0 %v1804
        %v4225 = vpop.f32.mrf.mxu0
        %v4226 = vadd.f32 0.0, %v4225
        %v4227 = vpop.f32.mrf.mxu0
        %4228 = vmatprep.mubr.f32.mxu0 0.0
        %4229 = vmatmul.mubr.f32.gmra.mxu0 %v1807
        %v4230 = vpop.f32.mrf.mxu0
        %v4231 = vadd.f32 0.0, %v4230
        %v4232 = vpop.f32.mrf.mxu0
        %4233 = vmatprep.mubr.f32.mxu0 0.0
        %4234 = vmatmul.mubr.f32.gmra.mxu0 %v1810
        %v4235 = vpop.f32.mrf.mxu0
        %v4236 = vadd.f32 0.0, %v4235
        %v4237 = vpop.f32.mrf.mxu0
        %4238 = vmatprep.mubr.f32.mxu0 0.0
        %4239 = vmatmul.mubr.f32.gmra.mxu0 %v1813
        %v4240 = vpop.f32.mrf.mxu0
        %v4241 = vadd.f32 0.0, %v4240
        %v4242 = vpop.f32.mrf.mxu0
        %4243 = vmatprep.mubr.f32.mxu0 0.0
        %4244 = vmatmul.mubr.f32.gmra.mxu0 %v1816
        %v4245 = vpop.f32.mrf.mxu0
        %v4246 = vadd.f32 0.0, %v4245
        %v4247 = vpop.f32.mrf.mxu0
        %4248 = vmatprep.mubr.f32.mxu0 0.0
        %4249 = vmatmul.mubr.f32.gmra.mxu0 %v1819
        %v4250 = vpop.f32.mrf.mxu0
        %v4251 = vadd.f32 0.0, %v4250
        %v4252 = vpop.f32.mrf.mxu0
        %4253 = vmatprep.mubr.f32.mxu0 0.0
        %4254 = vmatmul.mubr.f32.gmra.mxu0 %v1822
        %v4255 = vpop.f32.mrf.mxu0
        %v4256 = vadd.f32 0.0, %v4255
        %v4257 = vpop.f32.mrf.mxu0
        %4258 = vmatprep.mubr.f32.mxu0 0.0
        %4259 = vmatmul.mubr.f32.gmra.mxu0 %v1825
        %v4260 = vpop.f32.mrf.mxu0
        %v4261 = vadd.f32 0.0, %v4260
        %v4262 = vpop.f32.mrf.mxu0
        %4263 = vmatprep.mubr.f32.mxu0 0.0
        %4264 = vmatmul.mubr.f32.gmra.mxu0 %v1828
        %v4265 = vpop.f32.mrf.mxu0
        %v4266 = vadd.f32 0.0, %v4265
        %v4267 = vpop.f32.mrf.mxu0
        %4268 = vmatprep.mubr.f32.mxu0 0.0
        %4269 = vmatmul.mubr.f32.gmra.mxu0 %v1831
        %v4270 = vpop.f32.mrf.mxu0
        %v4271 = vadd.f32 0.0, %v4270
        %v4272 = vpop.f32.mrf.mxu0
        %4273 = vmatprep.mubr.f32.mxu0 0.0
        %4274 = vmatmul.mubr.f32.gmra.mxu0 %v1834
        %v4275 = vpop.f32.mrf.mxu0
        %v4276 = vadd.f32 0.0, %v4275
        %v4277 = vpop.f32.mrf.mxu0
        %4278 = vmatprep.mubr.f32.mxu0 0.0
        %4279 = vmatmul.mubr.f32.gmra.mxu0 %v1837
        %v4280 = vpop.f32.mrf.mxu0
        %v4281 = vadd.f32 0.0, %v4280
        %v4282 = vpop.f32.mrf.mxu0
        %4283 = vmatprep.mubr.f32.mxu0 0.0
        %4284 = vmatmul.mubr.f32.gmra.mxu0 %v1840
        %v4285 = vpop.f32.mrf.mxu0
        %v4286 = vadd.f32 0.0, %v4285
        %v4287 = vpop.f32.mrf.mxu0
        %4288 = vmatprep.mubr.f32.mxu0 0.0
        %4289 = vmatmul.mubr.f32.gmra.mxu0 %v1843
        %v4290 = vpop.f32.mrf.mxu0
        %v4291 = vadd.f32 0.0, %v4290
        %v4292 = vpop.f32.mrf.mxu0
        %4293 = vmatprep.mubr.f32.mxu0 0.0
        %4294 = vmatmul.mubr.f32.gmra.mxu0 %v1846
        %v4295 = vpop.f32.mrf.mxu0
        %v4296 = vadd.f32 0.0, %v4295
        %v4297 = vpop.f32.mrf.mxu0
        %4298 = vmatprep.mubr.f32.mxu0 0.0
        %4299 = vmatmul.mubr.f32.gmra.mxu0 %v1849
        %v4300 = vpop.f32.mrf.mxu0
        %v4301 = vadd.f32 0.0, %v4300
        %v4302 = vpop.f32.mrf.mxu0
        %4303 = vmatprep.mubr.f32.mxu0 0.0
        %4304 = vmatmul.mubr.f32.gmra.mxu0 %v1852
        %v4305 = vpop.f32.mrf.mxu0
        %v4306 = vadd.f32 0.0, %v4305
        %v4307 = vpop.f32.mrf.mxu0
        %4308 = vmatprep.mubr.f32.mxu0 0.0
        %4309 = vmatmul.mubr.f32.gmra.mxu0 %v1855
        %v4310 = vpop.f32.mrf.mxu0
        %v4311 = vadd.f32 0.0, %v4310
        %v4312 = vpop.f32.mrf.mxu0
        %4313 = vmatprep.mubr.f32.mxu0 0.0
        %4314 = vmatmul.mubr.f32.gmra.mxu0 %v1858
        %v4315 = vpop.f32.mrf.mxu0
        %v4316 = vadd.f32 0.0, %v4315
        %v4317 = vpop.f32.mrf.mxu0
        %4318 = vmatprep.mubr.f32.mxu0 0.0
        %4319 = vmatmul.mubr.f32.gmra.mxu0 %v1861
        %v4320 = vpop.f32.mrf.mxu0
        %v4321 = vadd.f32 0.0, %v4320
        %v4322 = vpop.f32.mrf.mxu0
        %4323 = vmatprep.mubr.f32.mxu0 0.0
        %4324 = vmatmul.mubr.f32.gmra.mxu0 %v1864
        %v4325 = vpop.f32.mrf.mxu0
        %v4326 = vadd.f32 0.0, %v4325
        %v4327 = vpop.f32.mrf.mxu0
        %4328 = vmatprep.mubr.f32.mxu0 0.0
        %4329 = vmatmul.mubr.f32.gmra.mxu0 %v1867
        %v4330 = vpop.f32.mrf.mxu0
        %v4331 = vadd.f32 0.0, %v4330
        %v4332 = vpop.f32.mrf.mxu0
        %4333 = vmatprep.mubr.f32.mxu0 0.0
        %4334 = vmatmul.mubr.f32.gmra.mxu0 %v1870
        %v4335 = vpop.f32.mrf.mxu0
        %v4336 = vadd.f32 0.0, %v4335
        %v4337 = vpop.f32.mrf.mxu0
        %4338 = vmatprep.mubr.f32.mxu0 0.0
        %4339 = vmatmul.mubr.f32.gmra.mxu0 %v1873
        %v4340 = vpop.f32.mrf.mxu0
        %v4341 = vadd.f32 0.0, %v4340
        %v4342 = vpop.f32.mrf.mxu0
        %4343 = vmatprep.mubr.f32.mxu0 0.0
        %4344 = vmatmul.mubr.f32.gmra.mxu0 %v1876
        %v4345 = vpop.f32.mrf.mxu0
        %v4346 = vadd.f32 0.0, %v4345
        %v4347 = vpop.f32.mrf.mxu0
        %4348 = vmatprep.mubr.f32.mxu0 0.0
        %4349 = vmatmul.mubr.f32.gmra.mxu0 %v1879
        %v4350 = vpop.f32.mrf.mxu0
        %v4351 = vadd.f32 0.0, %v4350
        %v4352 = vpop.f32.mrf.mxu0
        %4353 = vmatprep.mubr.f32.mxu0 0.0
        %4354 = vmatmul.mubr.f32.gmra.mxu0 %v1882
        %v4355 = vpop.f32.mrf.mxu0
        %v4356 = vadd.f32 0.0, %v4355
        %v4357 = vpop.f32.mrf.mxu0
        %4358 = vmatprep.mubr.f32.mxu0 0.0
        %4359 = vmatmul.mubr.f32.gmra.mxu0 %v1885
        %v4360 = vpop.f32.mrf.mxu0
        %v4361 = vadd.f32 0.0, %v4360
        %v4362 = vpop.f32.mrf.mxu0
        %4363 = vmatprep.mubr.f32.mxu0 0.0
        %4364 = vmatmul.mubr.f32.gmra.mxu0 %v1888
        %v4365 = vpop.f32.mrf.mxu0
        %v4366 = vadd.f32 0.0, %v4365
        %v4367 = vpop.f32.mrf.mxu0
        %4368 = vmatprep.mubr.f32.mxu0 0.0
        %4369 = vmatmul.mubr.f32.gmra.mxu0 %v1891
        %v4370 = vpop.f32.mrf.mxu0
        %v4371 = vadd.f32 0.0, %v4370
        %v4372 = vpop.f32.mrf.mxu0
        %4373 = vmatprep.mubr.f32.mxu0 0.0
        %4374 = vmatmul.mubr.f32.gmra.mxu0 %v1894
        %v4375 = vpop.f32.mrf.mxu0
        %v4376 = vadd.f32 0.0, %v4375
        %v4377 = vpop.f32.mrf.mxu0
        %4378 = vmatprep.mubr.f32.mxu0 0.0
        %4379 = vmatmul.mubr.f32.gmra.mxu0 %v1897
        %v4380 = vpop.f32.mrf.mxu0
        %v4381 = vadd.f32 0.0, %v4380
        %v4382 = vpop.f32.mrf.mxu0
        %4383 = vmatprep.mubr.f32.mxu0 0.0
        %4384 = vmatmul.mubr.f32.gmra.mxu0 %v1900
        %v4385 = vpop.f32.mrf.mxu0
        %v4386 = vadd.f32 0.0, %v4385
        %v4387 = vpop.f32.mrf.mxu0
        %4388 = vmatprep.mubr.f32.mxu0 0.0
        %4389 = vmatmul.mubr.f32.gmra.mxu0 %v1903
        %v4390 = vpop.f32.mrf.mxu0
        %v4391 = vadd.f32 0.0, %v4390
        %v4392 = vpop.f32.mrf.mxu0
        %4393 = vmatprep.mubr.f32.mxu0 0.0
        %4394 = vmatmul.mubr.f32.gmra.mxu0 %v1906
        %v4395 = vpop.f32.mrf.mxu0
        %v4396 = vadd.f32 0.0, %v4395
        %v4397 = vpop.f32.mrf.mxu0
        %4398 = vmatprep.mubr.f32.mxu0 0.0
        %4399 = vmatmul.mubr.f32.gmra.mxu0 %v1909
        %v4400 = vpop.f32.mrf.mxu0
        %v4401 = vadd.f32 0.0, %v4400
        %v4402 = vpop.f32.mrf.mxu0
        %4403 = vmatprep.mubr.f32.mxu0 0.0
        %4404 = vmatmul.mubr.f32.gmra.mxu0 %v1912
        %v4405 = vpop.f32.mrf.mxu0
        %v4406 = vadd.f32 0.0, %v4405
        %v4407 = vpop.f32.mrf.mxu0
        %4408 = vmatprep.mubr.f32.mxu0 0.0
        %4409 = vmatmul.mubr.f32.gmra.mxu0 %v1915
        %v4410 = vpop.f32.mrf.mxu0
        %v4411 = vadd.f32 0.0, %v4410
        %v4412 = vpop.f32.mrf.mxu0
        %4413 = vmatprep.mubr.f32.mxu0 0.0
        %4414 = vmatmul.mubr.f32.gmra.mxu0 %v1918
        %v4415 = vpop.f32.mrf.mxu0
        %v4416 = vadd.f32 0.0, %v4415
        %v4417 = vpop.f32.mrf.mxu0
        %4418 = vmatprep.mubr.f32.mxu0 0.0
        %4419 = vmatmul.mubr.f32.gmra.mxu0 %v1921
        %v4420 = vpop.f32.mrf.mxu0
        %v4421 = vadd.f32 0.0, %v4420
        %v4422 = vpop.f32.mrf.mxu0
        %4423 = vmatprep.mubr.f32.mxu0 0.0
        %4424 = vmatmul.mubr.f32.gmra.mxu0 %v1924
        %v4425 = vpop.f32.mrf.mxu0
        %v4426 = vadd.f32 0.0, %v4425
        %v4427 = vpop.f32.mrf.mxu0
        %4428 = vmatprep.mubr.f32.mxu0 0.0
        %4429 = vmatmul.mubr.f32.gmra.mxu0 %v1927
        %v4430 = vpop.f32.mrf.mxu0
        %v4431 = vadd.f32 0.0, %v4430
        %v4432 = vpop.f32.mrf.mxu0
        %4433 = vmatprep.mubr.f32.mxu0 0.0
        %4434 = vmatmul.mubr.f32.gmra.mxu0 %v1930
        %v4435 = vpop.f32.mrf.mxu0
        %v4436 = vadd.f32 0.0, %v4435
        %v4437 = vpop.f32.mrf.mxu0
        %4438 = vmatprep.mubr.f32.mxu0 0.0
        %4439 = vmatmul.mubr.f32.gmra.mxu0 %v1933
        %v4440 = vpop.f32.mrf.mxu0
        %v4441 = vadd.f32 0.0, %v4440
        %v4442 = vpop.f32.mrf.mxu0
        %4443 = vmatprep.mubr.f32.mxu0 0.0
        %4444 = vmatmul.mubr.f32.gmra.mxu0 %v1936
        %v4445 = vpop.f32.mrf.mxu0
        %v4446 = vadd.f32 0.0, %v4445
        %v4447 = vpop.f32.mrf.mxu0
        %4448 = vmatprep.mubr.f32.mxu0 0.0
        %4449 = vmatmul.mubr.f32.gmra.mxu0 %v1939
        %v4450 = vpop.f32.mrf.mxu0
        %v4451 = vadd.f32 0.0, %v4450
        %v4452 = vpop.f32.mrf.mxu0
        %4453 = vmatprep.mubr.f32.mxu0 0.0
        %4454 = vmatmul.mubr.f32.gmra.mxu0 %v1942
        %v4455 = vpop.f32.mrf.mxu0
        %v4456 = vadd.f32 0.0, %v4455
        %v4457 = vpop.f32.mrf.mxu0
        %4458 = vmatprep.mubr.f32.mxu0 0.0
        %4459 = vmatmul.mubr.f32.gmra.mxu0 %v1945
        %v4460 = vpop.f32.mrf.mxu0
        %v4461 = vadd.f32 0.0, %v4460
        %v4462 = vpop.f32.mrf.mxu0
        %4463 = vmatprep.mubr.f32.mxu0 0.0
        %4464 = vmatmul.mubr.f32.gmra.mxu0 %v1948
        %v4465 = vpop.f32.mrf.mxu0
        %v4466 = vadd.f32 0.0, %v4465
        %v4467 = vpop.f32.mrf.mxu0
        %4468 = vmatprep.mubr.f32.mxu0 0.0
        %4469 = vmatmul.mubr.f32.gmra.mxu0 %v1951
        %v4470 = vpop.f32.mrf.mxu0
        %v4471 = vadd.f32 0.0, %v4470
        %v4472 = vpop.f32.mrf.mxu0
        %4473 = vmatprep.mubr.f32.mxu0 0.0
        %4474 = vmatmul.mubr.f32.gmra.mxu0 %v1954
        %v4475 = vpop.f32.mrf.mxu0
        %v4476 = vadd.f32 0.0, %v4475
        %v4477 = vpop.f32.mrf.mxu0
        %4478 = vmatprep.mubr.f32.mxu0 0.0
        %4479 = vmatmul.mubr.f32.gmra.mxu0 %v1957
        %v4480 = vpop.f32.mrf.mxu0
        %v4481 = vadd.f32 0.0, %v4480
        %v4482 = vpop.f32.mrf.mxu0
        %4483 = vmatprep.mubr.f32.mxu0 0.0
        %4484 = vmatmul.mubr.f32.gmra.mxu0 %v1960
        %v4485 = vpop.f32.mrf.mxu0
        %v4486 = vadd.f32 0.0, %v4485
        %v4487 = vpop.f32.mrf.mxu0
        %4488 = vmatprep.mubr.f32.mxu0 0.0
        %4489 = vmatmul.mubr.f32.gmra.mxu0 %v1963
        %v4490 = vpop.f32.mrf.mxu0
        %v4491 = vadd.f32 0.0, %v4490
        %v4492 = vpop.f32.mrf.mxu0
        %4493 = vmatprep.mubr.f32.mxu0 0.0
        %4494 = vmatmul.mubr.f32.gmra.mxu0 %v1966
        %v4495 = vpop.f32.mrf.mxu0
        %v4496 = vadd.f32 0.0, %v4495
        %v4497 = vpop.f32.mrf.mxu0
        %4498 = vmatprep.mubr.f32.mxu0 0.0
        %4499 = vmatmul.mubr.f32.gmra.mxu0 %v1969
        %v4500 = vpop.f32.mrf.mxu0
        %v4501 = vadd.f32 0.0, %v4500
        %v4502 = vpop.f32.mrf.mxu0
        %4503 = vmatprep.mubr.f32.mxu0 0.0
        %4504 = vmatmul.mubr.f32.gmra.mxu0 %v1972
        %v4505 = vpop.f32.mrf.mxu0
        %v4506 = vadd.f32 0.0, %v4505
        %v4507 = vpop.f32.mrf.mxu0
        %4508 = vmatprep.mubr.f32.mxu0 0.0
        %4509 = vmatmul.mubr.f32.gmra.mxu0 %v1975
        %v4510 = vpop.f32.mrf.mxu0
        %v4511 = vadd.f32 0.0, %v4510
        %v4512 = vpop.f32.mrf.mxu0
        %4513 = vmatprep.mubr.f32.mxu0 0.0
        %4514 = vmatmul.mubr.f32.gmra.mxu0 %v1978
        %v4515 = vpop.f32.mrf.mxu0
        %v4516 = vadd.f32 0.0, %v4515
        %v4517 = vpop.f32.mrf.mxu0
        %4518 = vmatprep.mubr.f32.mxu0 0.0
        %4519 = vmatmul.mubr.f32.gmra.mxu0 %v1981
        %v4520 = vpop.f32.mrf.mxu0
        %v4521 = vadd.f32 0.0, %v4520
        %v4522 = vpop.f32.mrf.mxu0
        %4523 = vmatprep.mubr.f32.mxu0 0.0
        %4524 = vmatmul.mubr.f32.gmra.mxu0 %v1984
        %v4525 = vpop.f32.mrf.mxu0
        %v4526 = vadd.f32 0.0, %v4525
        %v4527 = vpop.f32.mrf.mxu0
        %4528 = vmatprep.mubr.f32.mxu0 0.0
        %4529 = vmatmul.mubr.f32.gmra.mxu0 %v1987
        %v4530 = vpop.f32.mrf.mxu0
        %v4531 = vadd.f32 0.0, %v4530
        %v4532 = vpop.f32.mrf.mxu0
        %4533 = vmatprep.mubr.f32.mxu0 0.0
        %4534 = vmatmul.mubr.f32.gmra.mxu0 %v1990
        %v4535 = vpop.f32.mrf.mxu0
        %v4536 = vadd.f32 0.0, %v4535
        %v4537 = vpop.f32.mrf.mxu0
        %4538 = vmatprep.mubr.f32.mxu0 0.0
        %4539 = vmatmul.mubr.f32.gmra.mxu0 %v1993
        %v4540 = vpop.f32.mrf.mxu0
        %v4541 = vadd.f32 0.0, %v4540
        %v4542 = vpop.f32.mrf.mxu0
        %4543 = vmatprep.mubr.f32.mxu0 0.0
        %4544 = vmatmul.mubr.f32.gmra.mxu0 %v1996
        %v4545 = vpop.f32.mrf.mxu0
        %v4546 = vadd.f32 0.0, %v4545
        %v4547 = vpop.f32.mrf.mxu0
        %4548 = vmatprep.mubr.f32.mxu0 0.0
        %4549 = vmatmul.mubr.f32.gmra.mxu0 %v1999
        %v4550 = vpop.f32.mrf.mxu0
        %v4551 = vadd.f32 0.0, %v4550
        %v4552 = vpop.f32.mrf.mxu0
        %4553 = vmatprep.mubr.f32.mxu0 0.0
        %4554 = vmatmul.mubr.f32.gmra.mxu0 %v2002
        %v4555 = vpop.f32.mrf.mxu0
        %v4556 = vadd.f32 0.0, %v4555
        %v4557 = vpop.f32.mrf.mxu0
        %4558 = vmatprep.mubr.f32.mxu0 0.0
        %4559 = vmatmul.mubr.f32.gmra.mxu0 %v2005
        %v4560 = vpop.f32.mrf.mxu0
        %v4561 = vadd.f32 0.0, %v4560
        %v4562 = vpop.f32.mrf.mxu0
        %4563 = vmatprep.mubr.f32.mxu0 0.0
        %4564 = vmatmul.mubr.f32.gmra.mxu0 %v2008
        %v4565 = vpop.f32.mrf.mxu0
        %v4566 = vadd.f32 0.0, %v4565
        %v4567 = vpop.f32.mrf.mxu0
        %4568 = vmatprep.mubr.f32.mxu0 0.0
        %4569 = vmatmul.mubr.f32.gmra.mxu0 %v2011
        %v4570 = vpop.f32.mrf.mxu0
        %v4571 = vadd.f32 0.0, %v4570
        %v4572 = vpop.f32.mrf.mxu0
        %4573 = vmatprep.mubr.f32.mxu0 0.0
        %4574 = vmatmul.mubr.f32.gmra.mxu0 %v2014
        %v4575 = vpop.f32.mrf.mxu0
        %v4576 = vadd.f32 0.0, %v4575
        %v4577 = vpop.f32.mrf.mxu0
        %4578 = vmatprep.mubr.f32.mxu0 0.0
        %4579 = vmatmul.mubr.f32.gmra.mxu0 %v2017
        %v4580 = vpop.f32.mrf.mxu0
        %v4581 = vadd.f32 0.0, %v4580
        %v4582 = vpop.f32.mrf.mxu0
        %4583 = vmatprep.mubr.f32.mxu0 0.0
        %4584 = vmatmul.mubr.f32.gmra.mxu0 %v2020
        %v4585 = vpop.f32.mrf.mxu0
        %v4586 = vadd.f32 0.0, %v4585
        %v4587 = vpop.f32.mrf.mxu0
        %4588 = vmatprep.mubr.f32.mxu0 0.0
        %4589 = vmatmul.mubr.f32.gmra.mxu0 %v2023
        %v4590 = vpop.f32.mrf.mxu0
        %v4591 = vadd.f32 0.0, %v4590
        %v4592 = vpop.f32.mrf.mxu0
        %4593 = vmatprep.mubr.f32.mxu0 0.0
        %4594 = vmatmul.mubr.f32.gmra.mxu0 %v2026
        %v4595 = vpop.f32.mrf.mxu0
        %v4596 = vadd.f32 0.0, %v4595
        %v4597 = vpop.f32.mrf.mxu0
        %4598 = vmatprep.mubr.f32.mxu0 0.0
        %4599 = vmatmul.mubr.f32.gmra.mxu0 %v2029
        %v4600 = vpop.f32.mrf.mxu0
        %v4601 = vadd.f32 0.0, %v4600
        %v4602 = vpop.f32.mrf.mxu0
        %4603 = vmatprep.mubr.f32.mxu0 0.0
        %4604 = vmatmul.mubr.f32.gmra.mxu0 %v2032
        %v4605 = vpop.f32.mrf.mxu0
        %v4606 = vadd.f32 0.0, %v4605
        %v4607 = vpop.f32.mrf.mxu0
        %4608 = vmatprep.mubr.f32.mxu0 0.0
        %4609 = vmatmul.mubr.f32.gmra.mxu0 %v2035
        %v4610 = vpop.f32.mrf.mxu0
        %v4611 = vadd.f32 0.0, %v4610
        %v4612 = vpop.f32.mrf.mxu0
        %4613 = vmatprep.mubr.f32.mxu0 0.0
        %4614 = vmatmul.mubr.f32.gmra.mxu0 %v2038
        %v4615 = vpop.f32.mrf.mxu0
        %v4616 = vadd.f32 0.0, %v4615
        %v4617 = vpop.f32.mrf.mxu0
        %4618 = vmatprep.mubr.f32.mxu0 0.0
        %4619 = vmatmul.mubr.f32.gmra.mxu0 %v2041
        %v4620 = vpop.f32.mrf.mxu0
        %v4621 = vadd.f32 0.0, %v4620
        %v4622 = vpop.f32.mrf.mxu0
        %4623 = vmatprep.mubr.f32.mxu0 0.0
        %4624 = vmatmul.mubr.f32.gmra.mxu0 %v2044
        %v4625 = vpop.f32.mrf.mxu0
        %v4626 = vadd.f32 0.0, %v4625
        %v4627 = vpop.f32.mrf.mxu0
        %4628 = vmatprep.mubr.f32.mxu0 0.0
        %4629 = vmatmul.mubr.f32.gmra.mxu0 %v2047
        %v4630 = vpop.f32.mrf.mxu0
        %v4631 = vadd.f32 0.0, %v4630
        %v4632 = vpop.f32.mrf.mxu0
        %4633 = vmatprep.mubr.f32.mxu0 0.0
        %4634 = vmatmul.mubr.f32.gmra.mxu0 %v2050
        %v4635 = vpop.f32.mrf.mxu0
        %v4636 = vadd.f32 0.0, %v4635
        %v4637 = vpop.f32.mrf.mxu0
        %4638 = vmatprep.mubr.f32.mxu0 0.0
        %4639 = vmatmul.mubr.f32.gmra.mxu0 %v2053
        %v4640 = vpop.f32.mrf.mxu0
        %v4641 = vadd.f32 0.0, %v4640
        %v4642 = vpop.f32.mrf.mxu0
        %4643 = vmatprep.mubr.f32.mxu0 0.0
        %4644 = vmatmul.mubr.f32.gmra.mxu0 %v2056
        %v4645 = vpop.f32.mrf.mxu0
        %v4646 = vadd.f32 0.0, %v4645
        %v4647 = vpop.f32.mrf.mxu0
        %4648 = vmatprep.mubr.f32.mxu0 0.0
        %4649 = vmatmul.mubr.f32.gmra.mxu0 %v2059
        %v4650 = vpop.f32.mrf.mxu0
        %v4651 = vadd.f32 0.0, %v4650
        %v4652 = vpop.f32.mrf.mxu0
        %4653 = vmatprep.mubr.f32.mxu0 0.0
        %4654 = vmatmul.mubr.f32.gmra.mxu0 %v2062
        %v4655 = vpop.f32.mrf.mxu0
        %v4656 = vadd.f32 0.0, %v4655
        %v4657 = vpop.f32.mrf.mxu0
        %4658 = vmatprep.mubr.f32.mxu0 0.0
        %4659 = vmatmul.mubr.f32.gmra.mxu0 %v2065
        %v4660 = vpop.f32.mrf.mxu0
        %v4661 = vadd.f32 0.0, %v4660
        %v4662 = vpop.f32.mrf.mxu0
        %4663 = vmatprep.mubr.f32.mxu0 0.0
        %4664 = vmatmul.mubr.f32.gmra.mxu0 %v2068
        %v4665 = vpop.f32.mrf.mxu0
        %v4666 = vadd.f32 0.0, %v4665
        %v4667 = vpop.f32.mrf.mxu0
        %4668 = vmatprep.mubr.f32.mxu0 0.0
        %4669 = vmatmul.mubr.f32.gmra.mxu0 %v2071
        %v4670 = vpop.f32.mrf.mxu0
        %v4671 = vadd.f32 0.0, %v4670
        %v4672 = vpop.f32.mrf.mxu0
        %4673 = vmatprep.mubr.f32.mxu0 0.0
        %4674 = vmatmul.mubr.f32.gmra.mxu0 %v2074
        %v4675 = vpop.f32.mrf.mxu0
        %v4676 = vadd.f32 0.0, %v4675
        %v4677 = vpop.f32.mrf.mxu0
        %4678 = vmatprep.mubr.f32.mxu0 0.0
        %4679 = vmatmul.mubr.f32.gmra.mxu0 %v2077
        %v4680 = vpop.f32.mrf.mxu0
        %v4681 = vadd.f32 0.0, %v4680
        %v4682 = vpop.f32.mrf.mxu0
        %4683 = vmatprep.mubr.f32.mxu0 0.0
        %4684 = vmatmul.mubr.f32.gmra.mxu0 %v2080
        %v4685 = vpop.f32.mrf.mxu0
        %v4686 = vadd.f32 0.0, %v4685
        %v4687 = vpop.f32.mrf.mxu0
        %4688 = vmatprep.mubr.f32.mxu0 0.0
        %4689 = vmatmul.mubr.f32.gmra.mxu0 %v2083
        %v4690 = vpop.f32.mrf.mxu0
        %v4691 = vadd.f32 0.0, %v4690
        %v4692 = vpop.f32.mrf.mxu0
        %4693 = vmatprep.mubr.f32.mxu0 0.0
        %4694 = vmatmul.mubr.f32.gmra.mxu0 %v2086
        %v4695 = vpop.f32.mrf.mxu0
        %v4696 = vadd.f32 0.0, %v4695
        %v4697 = vpop.f32.mrf.mxu0
        %4698 = vmatprep.mubr.f32.mxu0 0.0
        %4699 = vmatmul.mubr.f32.gmra.mxu0 %v2089
        %v4700 = vpop.f32.mrf.mxu0
        %v4701 = vadd.f32 0.0, %v4700
        %v4702 = vpop.f32.mrf.mxu0
        %4703 = vmatprep.mubr.f32.mxu0 0.0
        %4704 = vmatmul.mubr.f32.gmra.mxu0 %v2092
        %v4705 = vpop.f32.mrf.mxu0
        %v4706 = vadd.f32 0.0, %v4705
        %v4707 = vpop.f32.mrf.mxu0
        %4708 = vmatprep.mubr.f32.mxu0 0.0
        %4709 = vmatmul.mubr.f32.gmra.mxu0 %v2095
        %v4710 = vpop.f32.mrf.mxu0
        %v4711 = vadd.f32 0.0, %v4710
        %v4712 = vpop.f32.mrf.mxu0
        %4713 = vmatprep.mubr.f32.mxu0 0.0
        %4714 = vmatmul.mubr.f32.gmra.mxu0 %v2098
        %v4715 = vpop.f32.mrf.mxu0
        %v4716 = vadd.f32 0.0, %v4715
        %v4717 = vpop.f32.mrf.mxu0
        %4718 = vmatprep.mubr.f32.mxu0 0.0
        %4719 = vmatmul.mubr.f32.gmra.mxu0 %v2101
        %v4720 = vpop.f32.mrf.mxu0
        %v4721 = vadd.f32 0.0, %v4720
        %v4722 = vpop.f32.mrf.mxu0
        %4723 = vmatprep.mubr.f32.mxu0 0.0
        %4724 = vmatmul.mubr.f32.gmra.mxu0 %v2104
        %v4725 = vpop.f32.mrf.mxu0
        %v4726 = vadd.f32 0.0, %v4725
        %v4727 = vpop.f32.mrf.mxu0
        %4728 = vmatprep.mubr.f32.mxu0 0.0
        %4729 = vmatmul.mubr.f32.gmra.mxu0 %v2107
        %v4730 = vpop.f32.mrf.mxu0
        %v4731 = vadd.f32 0.0, %v4730
        %v4732 = vpop.f32.mrf.mxu0
        %4733 = vmatprep.mubr.f32.mxu0 0.0
        %4734 = vmatmul.mubr.f32.gmra.mxu0 %v2110
        %v4735 = vpop.f32.mrf.mxu0
        %v4736 = vadd.f32 0.0, %v4735
        %v4737 = vpop.f32.mrf.mxu0
        %4738 = vmatprep.mubr.f32.mxu0 0.0
        %4739 = vmatmul.mubr.f32.gmra.mxu0 %v2113
        %v4740 = vpop.f32.mrf.mxu0
        %v4741 = vadd.f32 0.0, %v4740
        %v4742 = vpop.f32.mrf.mxu0
        %4743 = vmatprep.mubr.f32.mxu0 0.0
        %4744 = vmatmul.mubr.f32.gmra.mxu0 %v2116
        %v4745 = vpop.f32.mrf.mxu0
        %v4746 = vadd.f32 0.0, %v4745
        %v4747 = vpop.f32.mrf.mxu0
        %4748 = vmatprep.mubr.f32.mxu0 0.0
        %4749 = vmatmul.mubr.f32.gmra.mxu0 %v2119
        %v4750 = vpop.f32.mrf.mxu0
        %v4751 = vadd.f32 0.0, %v4750
        %v4752 = vpop.f32.mrf.mxu0
        %4753 = vmatprep.mubr.f32.mxu0 0.0
        %4754 = vmatmul.mubr.f32.gmra.mxu0 %v2122
        %v4755 = vpop.f32.mrf.mxu0
        %v4756 = vadd.f32 0.0, %v4755
        %v4757 = vpop.f32.mrf.mxu0
        %4758 = vmatprep.mubr.f32.mxu0 0.0
        %4759 = vmatmul.mubr.f32.gmra.mxu0 %v2125
        %v4760 = vpop.f32.mrf.mxu0
        %v4761 = vadd.f32 0.0, %v4760
        %v4762 = vpop.f32.mrf.mxu0
        %4763 = vmatprep.mubr.f32.mxu0 0.0
        %4764 = vmatmul.mubr.f32.gmra.mxu0 %v2128
        %v4765 = vpop.f32.mrf.mxu0
        %v4766 = vadd.f32 0.0, %v4765
        %v4767 = vpop.f32.mrf.mxu0
        %4768 = vmatprep.mubr.f32.mxu0 0.0
        %4769 = vmatmul.mubr.f32.gmra.mxu0 %v2131
        %v4770 = vpop.f32.mrf.mxu0
        %v4771 = vadd.f32 0.0, %v4770
        %v4772 = vpop.f32.mrf.mxu0
        %4773 = vmatprep.mubr.f32.mxu0 0.0
        %4774 = vmatmul.mubr.f32.gmra.mxu0 %v2134
        %v4775 = vpop.f32.mrf.mxu0
        %v4776 = vadd.f32 0.0, %v4775
        %v4777 = vpop.f32.mrf.mxu0
        %4778 = vmatprep.mubr.f32.mxu0 0.0
        %4779 = vmatmul.mubr.f32.gmra.mxu0 %v2137
        %v4780 = vpop.f32.mrf.mxu0
        %v4781 = vadd.f32 0.0, %v4780
        %v4782 = vpop.f32.mrf.mxu0
        %4783 = vmatprep.mubr.f32.mxu0 0.0
        %4784 = vmatmul.mubr.f32.gmra.mxu0 %v2140
        %v4785 = vpop.f32.mrf.mxu0
        %v4786 = vadd.f32 0.0, %v4785
        %v4787 = vpop.f32.mrf.mxu0
        %4788 = vmatprep.mubr.f32.mxu0 0.0
        %4789 = vmatmul.mubr.f32.gmra.mxu0 %v2143
        %v4790 = vpop.f32.mrf.mxu0
        %v4791 = vadd.f32 0.0, %v4790
        %v4792 = vpop.f32.mrf.mxu0
        %4793 = vmatprep.mubr.f32.mxu0 0.0
        %4794 = vmatmul.mubr.f32.gmra.mxu0 %v2146
        %v4795 = vpop.f32.mrf.mxu0
        %v4796 = vadd.f32 0.0, %v4795
        %v4797 = vpop.f32.mrf.mxu0
        %4798 = vmatprep.mubr.f32.mxu0 0.0
        %4799 = vmatmul.mubr.f32.gmra.mxu0 %v2149
        %v4800 = vpop.f32.mrf.mxu0
        %v4801 = vadd.f32 0.0, %v4800
        %v4802 = vpop.f32.mrf.mxu0
        %4803 = vmatprep.mubr.f32.mxu0 0.0
        %4804 = vmatmul.mubr.f32.gmra.mxu0 %v2152
        %v4805 = vpop.f32.mrf.mxu0
        %v4806 = vadd.f32 0.0, %v4805
        %v4807 = vpop.f32.mrf.mxu0
        %4808 = vmatprep.mubr.f32.mxu0 0.0
        %4809 = vmatmul.mubr.f32.gmra.mxu0 %v2155
        %v4810 = vpop.f32.mrf.mxu0
        %v4811 = vadd.f32 0.0, %v4810
        %v4812 = vpop.f32.mrf.mxu0
        %4813 = vmatprep.mubr.f32.mxu0 0.0
        %4814 = vmatmul.mubr.f32.gmra.mxu0 %v2158
        %v4815 = vpop.f32.mrf.mxu0
        %v4816 = vadd.f32 0.0, %v4815
        %v4817 = vpop.f32.mrf.mxu0
        %4818 = vmatprep.mubr.f32.mxu0 0.0
        %4819 = vmatmul.mubr.f32.gmra.mxu0 %v2161
        %v4820 = vpop.f32.mrf.mxu0
        %v4821 = vadd.f32 0.0, %v4820
        %v4822 = vpop.f32.mrf.mxu0
        %4823 = vmatprep.mubr.f32.mxu0 0.0
        %4824 = vmatmul.mubr.f32.gmra.mxu0 %v2164
        %v4825 = vpop.f32.mrf.mxu0
        %v4826 = vadd.f32 0.0, %v4825
        %v4827 = vpop.f32.mrf.mxu0
        %4828 = vmatprep.mubr.f32.mxu0 0.0
        %4829 = vmatmul.mubr.f32.gmra.mxu0 %v2167
        %v4830 = vpop.f32.mrf.mxu0
        %v4831 = vadd.f32 0.0, %v4830
        %v4832 = vpop.f32.mrf.mxu0
        %4833 = vmatprep.mubr.f32.mxu0 0.0
        %4834 = vmatmul.mubr.f32.gmra.mxu0 %v2170
        %v4835 = vpop.f32.mrf.mxu0
        %v4836 = vadd.f32 0.0, %v4835
        %v4837 = vpop.f32.mrf.mxu0
        %4838 = vmatprep.mubr.f32.mxu0 0.0
        %4839 = vmatmul.mubr.f32.gmra.mxu0 %v2173
        %v4840 = vpop.f32.mrf.mxu0
        %v4841 = vadd.f32 0.0, %v4840
        %v4842 = vpop.f32.mrf.mxu0
        %4843 = vmatprep.mubr.f32.mxu0 0.0
        %4844 = vmatmul.mubr.f32.gmra.mxu0 %v2176
        %v4845 = vpop.f32.mrf.mxu0
        %v4846 = vadd.f32 0.0, %v4845
        %v4847 = vpop.f32.mrf.mxu0
        %4848 = vmatprep.mubr.f32.mxu0 0.0
        %4849 = vmatmul.mubr.f32.gmra.mxu0 %v2179
        %v4850 = vpop.f32.mrf.mxu0
        %v4851 = vadd.f32 0.0, %v4850
        %v4852 = vpop.f32.mrf.mxu0
        %4853 = vmatprep.mubr.f32.mxu0 0.0
        %4854 = vmatmul.mubr.f32.gmra.mxu0 %v2182
        %v4855 = vpop.f32.mrf.mxu0
        %v4856 = vadd.f32 0.0, %v4855
        %v4857 = vpop.f32.mrf.mxu0
        %4858 = vmatprep.mubr.f32.mxu0 0.0
        %4859 = vmatmul.mubr.f32.gmra.mxu0 %v2185
        %v4860 = vpop.f32.mrf.mxu0
        %v4861 = vadd.f32 0.0, %v4860
        %v4862 = vpop.f32.mrf.mxu0
        %4863 = vmatprep.mubr.f32.mxu0 0.0
        %4864 = vmatmul.mubr.f32.gmra.mxu0 %v2188
        %v4865 = vpop.f32.mrf.mxu0
        %v4866 = vadd.f32 0.0, %v4865
        %v4867 = vpop.f32.mrf.mxu0
        %4868 = vmatprep.mubr.f32.mxu0 0.0
        %4869 = vmatmul.mubr.f32.gmra.mxu0 %v2191
        %v4870 = vpop.f32.mrf.mxu0
        %v4871 = vadd.f32 0.0, %v4870
        %v4872 = vpop.f32.mrf.mxu0
        %4873 = vmatprep.mubr.f32.mxu0 0.0
        %4874 = vmatmul.mubr.f32.gmra.mxu0 %v2194
        %v4875 = vpop.f32.mrf.mxu0
        %v4876 = vadd.f32 0.0, %v4875
        %v4877 = vpop.f32.mrf.mxu0
        %4878 = vmatprep.mubr.f32.mxu0 0.0
        %4879 = vmatmul.mubr.f32.gmra.mxu0 %v2197
        %v4880 = vpop.f32.mrf.mxu0
        %v4881 = vadd.f32 0.0, %v4880
        %v4882 = vpop.f32.mrf.mxu0
        %4883 = vmatprep.mubr.f32.mxu0 0.0
        %4884 = vmatmul.mubr.f32.gmra.mxu0 %v2200
        %v4885 = vpop.f32.mrf.mxu0
        %v4886 = vadd.f32 0.0, %v4885
        %v4887 = vpop.f32.mrf.mxu0
        %4888 = vmatprep.mubr.f32.mxu0 0.0
        %4889 = vmatmul.mubr.f32.gmra.mxu0 %v2203
        %v4890 = vpop.f32.mrf.mxu0
        %v4891 = vadd.f32 0.0, %v4890
        %v4892 = vpop.f32.mrf.mxu0
        %4893 = vmatprep.mubr.f32.mxu0 0.0
        %4894 = vmatmul.mubr.f32.gmra.mxu0 %v2206
        %v4895 = vpop.f32.mrf.mxu0
        %v4896 = vadd.f32 0.0, %v4895
        %v4897 = vpop.f32.mrf.mxu0
        %4898 = vmatprep.mubr.f32.mxu0 0.0
        %4899 = vmatmul.mubr.f32.gmra.mxu0 %v2209
        %v4900 = vpop.f32.mrf.mxu0
        %v4901 = vadd.f32 0.0, %v4900
        %v4902 = vpop.f32.mrf.mxu0
        %4903 = vmatprep.mubr.f32.mxu0 0.0
        %4904 = vmatmul.mubr.f32.gmra.mxu0 %v2212
        %v4905 = vpop.f32.mrf.mxu0
        %v4906 = vadd.f32 0.0, %v4905
        %v4907 = vpop.f32.mrf.mxu0
        %4908 = vmatprep.mubr.f32.mxu0 0.0
        %4909 = vmatmul.mubr.f32.gmra.mxu0 %v2215
        %v4910 = vpop.f32.mrf.mxu0
        %v4911 = vadd.f32 0.0, %v4910
        %v4912 = vpop.f32.mrf.mxu0
        %4913 = vmatprep.mubr.f32.mxu0 0.0
        %4914 = vmatmul.mubr.f32.gmra.mxu0 %v2218
        %v4915 = vpop.f32.mrf.mxu0
        %v4916 = vadd.f32 0.0, %v4915
        %v4917 = vpop.f32.mrf.mxu0
        %4918 = vmatprep.mubr.f32.mxu0 0.0
        %4919 = vmatmul.mubr.f32.gmra.mxu0 %v2221
        %v4920 = vpop.f32.mrf.mxu0
        %v4921 = vadd.f32 0.0, %v4920
        %v4922 = vpop.f32.mrf.mxu0
        %4923 = vmatprep.mubr.f32.mxu0 0.0
        %4924 = vmatmul.mubr.f32.gmra.mxu0 %v2224
        %v4925 = vpop.f32.mrf.mxu0
        %v4926 = vadd.f32 0.0, %v4925
        %v4927 = vpop.f32.mrf.mxu0
        %4928 = vmatprep.mubr.f32.mxu0 0.0
        %4929 = vmatmul.mubr.f32.gmra.mxu0 %v2227
        %v4930 = vpop.f32.mrf.mxu0
        %v4931 = vadd.f32 0.0, %v4930
        %v4932 = vpop.f32.mrf.mxu0
        %4933 = vmatprep.mubr.f32.mxu0 0.0
        %4934 = vmatmul.mubr.f32.gmra.mxu0 %v2230
        %v4935 = vpop.f32.mrf.mxu0
        %v4936 = vadd.f32 0.0, %v4935
        %v4937 = vpop.f32.mrf.mxu0
        %4938 = vmatprep.mubr.f32.mxu0 0.0
        %4939 = vmatmul.mubr.f32.gmra.mxu0 %v2233
        %v4940 = vpop.f32.mrf.mxu0
        %v4941 = vadd.f32 0.0, %v4940
        %v4942 = vpop.f32.mrf.mxu0
        %4943 = vmatprep.mubr.f32.mxu0 0.0
        %4944 = vmatmul.mubr.f32.gmra.mxu0 %v2236
        %v4945 = vpop.f32.mrf.mxu0
        %v4946 = vadd.f32 0.0, %v4945
        %v4947 = vpop.f32.mrf.mxu0
        %4948 = vmatprep.mubr.f32.mxu0 0.0
        %4949 = vmatmul.mubr.f32.gmra.mxu0 %v2239
        %v4950 = vpop.f32.mrf.mxu0
        %v4951 = vadd.f32 0.0, %v4950
        %v4952 = vpop.f32.mrf.mxu0
        %4953 = vmatprep.mubr.f32.mxu0 0.0
        %4954 = vmatmul.mubr.f32.gmra.mxu0 %v2242
        %v4955 = vpop.f32.mrf.mxu0
        %v4956 = vadd.f32 0.0, %v4955
        %v4957 = vpop.f32.mrf.mxu0
        %4958 = vmatprep.mubr.f32.mxu0 0.0
        %4959 = vmatmul.mubr.f32.gmra.mxu0 %v2245
        %v4960 = vpop.f32.mrf.mxu0
        %v4961 = vadd.f32 0.0, %v4960
        %v4962 = vpop.f32.mrf.mxu0
        %4963 = vmatprep.mubr.f32.mxu0 0.0
        %4964 = vmatmul.mubr.f32.gmra.mxu0 %v2248
        %v4965 = vpop.f32.mrf.mxu0
        %v4966 = vadd.f32 0.0, %v4965
        %v4967 = vpop.f32.mrf.mxu0
        %4968 = vmatprep.mubr.f32.mxu0 0.0
        %4969 = vmatmul.mubr.f32.gmra.mxu0 %v2251
        %v4970 = vpop.f32.mrf.mxu0
        %v4971 = vadd.f32 0.0, %v4970
        %v4972 = vpop.f32.mrf.mxu0
        %4973 = vmatprep.mubr.f32.mxu0 0.0
        %4974 = vmatmul.mubr.f32.gmra.mxu0 %v2254
        %v4975 = vpop.f32.mrf.mxu0
        %v4976 = vadd.f32 0.0, %v4975
        %v4977 = vpop.f32.mrf.mxu0
        %4978 = vmatprep.mubr.f32.mxu0 0.0
        %4979 = vmatmul.mubr.f32.gmra.mxu0 %v2257
        %v4980 = vpop.f32.mrf.mxu0
        %v4981 = vadd.f32 0.0, %v4980
        %v4982 = vpop.f32.mrf.mxu0
        %4983 = vmatprep.mubr.f32.mxu0 0.0
        %4984 = vmatmul.mubr.f32.gmra.mxu0 %v2260
        %v4985 = vpop.f32.mrf.mxu0
        %v4986 = vadd.f32 0.0, %v4985
        %v4987 = vpop.f32.mrf.mxu0
        %4988 = vmatprep.mubr.f32.mxu0 0.0
        %4989 = vmatmul.mubr.f32.gmra.mxu0 %v2263
        %v4990 = vpop.f32.mrf.mxu0
        %v4991 = vadd.f32 0.0, %v4990
        %v4992 = vpop.f32.mrf.mxu0
        %4993 = vmatprep.mubr.f32.mxu0 0.0
        %4994 = vmatmul.mubr.f32.gmra.mxu0 %v2266
        %v4995 = vpop.f32.mrf.mxu0
        %v4996 = vadd.f32 0.0, %v4995
        %v4997 = vpop.f32.mrf.mxu0
        %4998 = vmatprep.mubr.f32.mxu0 0.0
        %4999 = vmatmul.mubr.f32.gmra.mxu0 %v2269
        %v5000 = vpop.f32.mrf.mxu0
        %v5001 = vadd.f32 0.0, %v5000
        %v5002 = vpop.f32.mrf.mxu0
        %5003 = vmatprep.mubr.f32.mxu0 0.0
        %5004 = vmatmul.mubr.f32.gmra.mxu0 %v2272
        %v5005 = vpop.f32.mrf.mxu0
        %v5006 = vadd.f32 0.0, %v5005
        %v5007 = vpop.f32.mrf.mxu0
        %5008 = vmatprep.mubr.f32.mxu0 0.0
        %5009 = vmatmul.mubr.f32.gmra.mxu0 %v2275
        %v5010 = vpop.f32.mrf.mxu0
        %v5011 = vadd.f32 0.0, %v5010
        %v5012 = vpop.f32.mrf.mxu0
        %5013 = vmatprep.mubr.f32.mxu0 0.0
        %5014 = vmatmul.mubr.f32.gmra.mxu0 %v2278
        %v5015 = vpop.f32.mrf.mxu0
        %v5016 = vadd.f32 0.0, %v5015
        %v5017 = vpop.f32.mrf.mxu0
        %5018 = vmatprep.mubr.f32.mxu0 0.0
        %5019 = vmatmul.mubr.f32.gmra.mxu0 %v2281
        %v5020 = vpop.f32.mrf.mxu0
        %v5021 = vadd.f32 0.0, %v5020
        %v5022 = vpop.f32.mrf.mxu0
        %5023 = vmatprep.mubr.f32.mxu0 0.0
        %5024 = vmatmul.mubr.f32.gmra.mxu0 %v2284
        %v5025 = vpop.f32.mrf.mxu0
        %v5026 = vadd.f32 0.0, %v5025
        %v5027 = vpop.f32.mrf.mxu0
        %5028 = vmatprep.mubr.f32.mxu0 0.0
        %5029 = vmatmul.mubr.f32.gmra.mxu0 %v2287
        %v5030 = vpop.f32.mrf.mxu0
        %v5031 = vadd.f32 0.0, %v5030
        %v5032 = vpop.f32.mrf.mxu0
        %5033 = vmatprep.mubr.f32.mxu0 0.0
        %5034 = vmatmul.mubr.f32.gmra.mxu0 %v2290
        %v5035 = vpop.f32.mrf.mxu0
        %v5036 = vadd.f32 0.0, %v5035
        %v5037 = vpop.f32.mrf.mxu0
        %5038 = vmatprep.mubr.f32.mxu0 0.0
        %5039 = vmatmul.mubr.f32.gmra.mxu0 %v2293
        %v5040 = vpop.f32.mrf.mxu0
        %v5041 = vadd.f32 0.0, %v5040
        %v5042 = vpop.f32.mrf.mxu0
        %5043 = vmatprep.mubr.f32.mxu0 0.0
        %5044 = vmatmul.mubr.f32.gmra.mxu0 %v2296
        %v5045 = vpop.f32.mrf.mxu0
        %v5046 = vadd.f32 0.0, %v5045
        %v5047 = vpop.f32.mrf.mxu0
        %5048 = vmatprep.mubr.f32.mxu0 0.0
        %5049 = vmatmul.mubr.f32.gmra.mxu0 %v2299
        %v5050 = vpop.f32.mrf.mxu0
        %v5051 = vadd.f32 0.0, %v5050
        %v5052 = vpop.f32.mrf.mxu0
        %5053 = vmatprep.mubr.f32.mxu0 0.0
        %5054 = vmatmul.mubr.f32.gmra.mxu0 %v2302
        %v5055 = vpop.f32.mrf.mxu0
        %v5056 = vadd.f32 0.0, %v5055
        %v5057 = vpop.f32.mrf.mxu0
        %5058 = vmatprep.mubr.f32.mxu0 0.0
        %5059 = vmatmul.mubr.f32.gmra.mxu0 %v2305
        %v5060 = vpop.f32.mrf.mxu0
        %v5061 = vadd.f32 0.0, %v5060
        %v5062 = vpop.f32.mrf.mxu0
        %5063 = vmatprep.mubr.f32.mxu0 0.0
        %5064 = vmatmul.mubr.f32.gmra.mxu0 %v2308
        %v5065 = vpop.f32.mrf.mxu0
        %v5066 = vadd.f32 0.0, %v5065
        %v5067 = vpop.f32.mrf.mxu0
        %5068 = vmatprep.mubr.f32.mxu0 0.0
        %5069 = vmatmul.mubr.f32.gmra.mxu0 %v2311
        %v5070 = vpop.f32.mrf.mxu0
        %v5071 = vadd.f32 0.0, %v5070
        %v5072 = vpop.f32.mrf.mxu0
        %5073 = vmatprep.mubr.f32.mxu0 0.0
        %5074 = vmatmul.mubr.f32.gmra.mxu0 %v2314
        %v5075 = vpop.f32.mrf.mxu0
        %v5076 = vadd.f32 0.0, %v5075
        %v5077 = vpop.f32.mrf.mxu0
        %5078 = vmatprep.mubr.f32.mxu0 0.0
        %5079 = vmatmul.mubr.f32.gmra.mxu0 %v2317
        %v5080 = vpop.f32.mrf.mxu0
        %v5081 = vadd.f32 0.0, %v5080
        %v5082 = vpop.f32.mrf.mxu0
        %5083 = vmatprep.mubr.f32.mxu0 0.0
        %5084 = vmatmul.mubr.f32.gmra.mxu0 %v2320
        %v5085 = vpop.f32.mrf.mxu0
        %v5086 = vadd.f32 0.0, %v5085
        %v5087 = vpop.f32.mrf.mxu0
        %5088 = vmatprep.mubr.f32.mxu0 0.0
        %5089 = vmatmul.mubr.f32.gmra.mxu0 %v2323
        %v5090 = vpop.f32.mrf.mxu0
        %v5091 = vadd.f32 0.0, %v5090
        %v5092 = vpop.f32.mrf.mxu0
        %5093 = vmatprep.mubr.f32.mxu0 0.0
        %5094 = vmatmul.mubr.f32.gmra.mxu0 %v2326
        %v5095 = vpop.f32.mrf.mxu0
        %v5096 = vadd.f32 0.0, %v5095
        %v5097 = vpop.f32.mrf.mxu0
        %5098 = vmatprep.mubr.f32.mxu0 0.0
        %5099 = vmatmul.mubr.f32.gmra.mxu0 %v2329
        %v5100 = vpop.f32.mrf.mxu0
        %v5101 = vadd.f32 0.0, %v5100
        %v5102 = vpop.f32.mrf.mxu0
        %5103 = vmatprep.mubr.f32.mxu0 0.0
        %5104 = vmatmul.mubr.f32.gmra.mxu0 %v2332
        %v5105 = vpop.f32.mrf.mxu0
        %v5106 = vadd.f32 0.0, %v5105
        %v5107 = vpop.f32.mrf.mxu0
        %5108 = vmatprep.mubr.f32.mxu0 0.0
        %5109 = vmatmul.mubr.f32.gmra.mxu0 %v2335
        %v5110 = vpop.f32.mrf.mxu0
        %v5111 = vadd.f32 0.0, %v5110
        %v5112 = vpop.f32.mrf.mxu0
        %5113 = vmatprep.mubr.f32.mxu0 0.0
        %5114 = vmatmul.mubr.f32.gmra.mxu0 %v2338
        %v5115 = vpop.f32.mrf.mxu0
        %v5116 = vadd.f32 0.0, %v5115
        %v5117 = vpop.f32.mrf.mxu0
        %5118 = vmatprep.mubr.f32.mxu0 0.0
        %5119 = vmatmul.mubr.f32.gmra.mxu0 %v2341
        %v5120 = vpop.f32.mrf.mxu0
        %v5121 = vadd.f32 0.0, %v5120
        %v5122 = vpop.f32.mrf.mxu0
        %5123 = vmatprep.mubr.f32.mxu0 0.0
        %5124 = vmatmul.mubr.f32.gmra.mxu0 %v2344
        %v5125 = vpop.f32.mrf.mxu0
        %v5126 = vadd.f32 0.0, %v5125
        %v5127 = vpop.f32.mrf.mxu0
        %5128 = vmatprep.mubr.f32.mxu0 0.0
        %5129 = vmatmul.mubr.f32.gmra.mxu0 %v2347
        %v5130 = vpop.f32.mrf.mxu0
        %v5131 = vadd.f32 0.0, %v5130
        %v5132 = vpop.f32.mrf.mxu0
        %5133 = vmatprep.mubr.f32.mxu0 0.0
        %5134 = vmatmul.mubr.f32.gmra.mxu0 %v2350
        %v5135 = vpop.f32.mrf.mxu0
        %v5136 = vadd.f32 0.0, %v5135
        %v5137 = vpop.f32.mrf.mxu0
        %5138 = vmatprep.mubr.f32.mxu0 0.0
        %5139 = vmatmul.mubr.f32.gmra.mxu0 %v2353
        %v5140 = vpop.f32.mrf.mxu0
        %v5141 = vadd.f32 0.0, %v5140
        %v5142 = vpop.f32.mrf.mxu0
        %5143 = vmatprep.mubr.f32.mxu0 0.0
        %5144 = vmatmul.mubr.f32.gmra.mxu0 %v2356
        %v5145 = vpop.f32.mrf.mxu0
        %v5146 = vadd.f32 0.0, %v5145
        %v5147 = vpop.f32.mrf.mxu0
        %5148 = vmatprep.mubr.f32.mxu0 0.0
        %5149 = vmatmul.mubr.f32.gmra.mxu0 %v2359
        %v5150 = vpop.f32.mrf.mxu0
        %v5151 = vadd.f32 0.0, %v5150
        %v5152 = vpop.f32.mrf.mxu0
        %5153 = vmatprep.mubr.f32.mxu0 0.0
        %5154 = vmatmul.mubr.f32.gmra.mxu0 %v2362
        %v5155 = vpop.f32.mrf.mxu0
        %v5156 = vadd.f32 0.0, %v5155
        %v5157 = vpop.f32.mrf.mxu0
        %5158 = vmatprep.mubr.f32.mxu0 0.0
        %5159 = vmatmul.mubr.f32.gmra.mxu0 %v2365
        %v5160 = vpop.f32.mrf.mxu0
        %v5161 = vadd.f32 0.0, %v5160
        %v5162 = vpop.f32.mrf.mxu0
        %5163 = vmatprep.mubr.f32.mxu0 0.0
        %5164 = vmatmul.mubr.f32.gmra.mxu0 %v2368
        %v5165 = vpop.f32.mrf.mxu0
        %v5166 = vadd.f32 0.0, %v5165
        %v5167 = vpop.f32.mrf.mxu0
        %5168 = vmatprep.mubr.f32.mxu0 0.0
        %5169 = vmatmul.mubr.f32.gmra.mxu0 %v2371
        %v5170 = vpop.f32.mrf.mxu0
        %v5171 = vadd.f32 0.0, %v5170
        %v5172 = vpop.f32.mrf.mxu0
        %5173 = vmatprep.mubr.f32.mxu0 0.0
        %5174 = vmatmul.mubr.f32.gmra.mxu0 %v2374
        %v5175 = vpop.f32.mrf.mxu0
        %v5176 = vadd.f32 0.0, %v5175
        %v5177 = vpop.f32.mrf.mxu0
        %5178 = vmatprep.mubr.f32.mxu0 0.0
        %5179 = vmatmul.mubr.f32.gmra.mxu0 %v2377
        %v5180 = vpop.f32.mrf.mxu0
        %v5181 = vadd.f32 0.0, %v5180
        %v5182 = vpop.f32.mrf.mxu0
        %5183 = vmatprep.mubr.f32.mxu0 0.0
        %5184 = vmatmul.mubr.f32.gmra.mxu0 %v2380
        %v5185 = vpop.f32.mrf.mxu0
        %v5186 = vadd.f32 0.0, %v5185
        %v5187 = vpop.f32.mrf.mxu0
        %5188 = vmatprep.mubr.f32.mxu0 0.0
        %5189 = vmatmul.mubr.f32.gmra.mxu0 %v2383
        %v5190 = vpop.f32.mrf.mxu0
        %v5191 = vadd.f32 0.0, %v5190
        %v5192 = vpop.f32.mrf.mxu0
        %5193 = vmatprep.mubr.f32.mxu0 0.0
        %5194 = vmatmul.mubr.f32.gmra.mxu0 %v2386
        %v5195 = vpop.f32.mrf.mxu0
        %v5196 = vadd.f32 0.0, %v5195
        %v5197 = vpop.f32.mrf.mxu0
        %5198 = vmatprep.mubr.f32.mxu0 0.0
        %5199 = vmatmul.mubr.f32.gmra.mxu0 %v2389
        %v5200 = vpop.f32.mrf.mxu0
        %v5201 = vadd.f32 0.0, %v5200
        %v5202 = vpop.f32.mrf.mxu0
        %5203 = vmatprep.mubr.f32.mxu0 0.0
        %5204 = vmatmul.mubr.f32.gmra.mxu0 %v2392
        %v5205 = vpop.f32.mrf.mxu0
        %v5206 = vadd.f32 0.0, %v5205
        %v5207 = vpop.f32.mrf.mxu0
        %5208 = vmatprep.mubr.f32.mxu0 0.0
        %5209 = vmatmul.mubr.f32.gmra.mxu0 %v2395
        %v5210 = vpop.f32.mrf.mxu0
        %v5211 = vadd.f32 0.0, %v5210
        %v5212 = vpop.f32.mrf.mxu0
        %5213 = vmatprep.mubr.f32.mxu0 0.0
        %5214 = vmatmul.mubr.f32.gmra.mxu0 %v2398
        %v5215 = vpop.f32.mrf.mxu0
        %v5216 = vadd.f32 0.0, %v5215
        %v5217 = vpop.f32.mrf.mxu0
        %5218 = vmatprep.mubr.f32.mxu0 0.0
        %5219 = vmatmul.mubr.f32.gmra.mxu0 %v2401
        %v5220 = vpop.f32.mrf.mxu0
        %v5221 = vadd.f32 0.0, %v5220
        %v5222 = vpop.f32.mrf.mxu0
        %5223 = vmatprep.mubr.f32.mxu0 0.0
        %5224 = vmatmul.mubr.f32.gmra.mxu0 %v2404
        %v5225 = vpop.f32.mrf.mxu0
        %v5226 = vadd.f32 0.0, %v5225
        %v5227 = vpop.f32.mrf.mxu0
        %5228 = vmatprep.mubr.f32.mxu0 0.0
        %5229 = vmatmul.mubr.f32.gmra.mxu0 %v2407
        %v5230 = vpop.f32.mrf.mxu0
        %v5231 = vadd.f32 0.0, %v5230
        %v5232 = vpop.f32.mrf.mxu0
        %5233 = vmatprep.mubr.f32.mxu0 0.0
        %5234 = vmatmul.mubr.f32.gmra.mxu0 %v2410
        %v5235 = vpop.f32.mrf.mxu0
        %v5236 = vadd.f32 0.0, %v5235
        %v5237 = vpop.f32.mrf.mxu0
        %5238 = vmatprep.mubr.f32.mxu0 0.0
        %5239 = vmatmul.mubr.f32.gmra.mxu0 %v2413
        %v5240 = vpop.f32.mrf.mxu0
        %v5241 = vadd.f32 0.0, %v5240
        %v5242 = vpop.f32.mrf.mxu0
        %5243 = vmatprep.mubr.f32.mxu0 0.0
        %5244 = vmatmul.mubr.f32.gmra.mxu0 %v2416
        %v5245 = vpop.f32.mrf.mxu0
        %v5246 = vadd.f32 0.0, %v5245
        %v5247 = vpop.f32.mrf.mxu0
        %5248 = vmatprep.mubr.f32.mxu0 0.0
        %5249 = vmatmul.mubr.f32.gmra.mxu0 %v2419
        %v5250 = vpop.f32.mrf.mxu0
        %v5251 = vadd.f32 0.0, %v5250
        %v5252 = vpop.f32.mrf.mxu0
        %5253 = vmatprep.mubr.f32.mxu0 0.0
        %5254 = vmatmul.mubr.f32.gmra.mxu0 %v2422
        %v5255 = vpop.f32.mrf.mxu0
        %v5256 = vadd.f32 0.0, %v5255
        %v5257 = vpop.f32.mrf.mxu0
        %5258 = vmatprep.mubr.f32.mxu0 0.0
        %5259 = vmatmul.mubr.f32.gmra.mxu0 %v2425
        %v5260 = vpop.f32.mrf.mxu0
        %v5261 = vadd.f32 0.0, %v5260
        %v5262 = vpop.f32.mrf.mxu0
        %5263 = vmatprep.mubr.f32.mxu0 0.0
        %5264 = vmatmul.mubr.f32.gmra.mxu0 %v2428
        %v5265 = vpop.f32.mrf.mxu0
        %v5266 = vadd.f32 0.0, %v5265
        %v5267 = vpop.f32.mrf.mxu0
        %5268 = vmatprep.mubr.f32.mxu0 0.0
        %5269 = vmatmul.mubr.f32.gmra.mxu0 %v2431
        %v5270 = vpop.f32.mrf.mxu0
        %v5271 = vadd.f32 0.0, %v5270
        %v5272 = vpop.f32.mrf.mxu0
        %5273 = vmatprep.mubr.f32.mxu0 0.0
        %5274 = vmatmul.mubr.f32.gmra.mxu0 %v2434
        %v5275 = vpop.f32.mrf.mxu0
        %v5276 = vadd.f32 0.0, %v5275
        %v5277 = vpop.f32.mrf.mxu0
        %5278 = vmatprep.mubr.f32.mxu0 0.0
        %5279 = vmatmul.mubr.f32.gmra.mxu0 %v2437
        %v5280 = vpop.f32.mrf.mxu0
        %v5281 = vadd.f32 0.0, %v5280
        %v5282 = vpop.f32.mrf.mxu0
        %5283 = vmatprep.mubr.f32.mxu0 0.0
        %5284 = vmatmul.mubr.f32.gmra.mxu0 %v2440
        %v5285 = vpop.f32.mrf.mxu0
        %v5286 = vadd.f32 0.0, %v5285
        %v5287 = vpop.f32.mrf.mxu0
        %5288 = vmatprep.mubr.f32.mxu0 0.0
        %5289 = vmatmul.mubr.f32.gmra.mxu0 %v2443
        %v5290 = vpop.f32.mrf.mxu0
        %v5291 = vadd.f32 0.0, %v5290
        %v5292 = vpop.f32.mrf.mxu0
        %5293 = vmatprep.mubr.f32.mxu0 0.0
        %5294 = vmatmul.mubr.f32.gmra.mxu0 %v2446
        %v5295 = vpop.f32.mrf.mxu0
        %v5296 = vadd.f32 0.0, %v5295
        %v5297 = vpop.f32.mrf.mxu0
        %5298 = vmatprep.mubr.f32.mxu0 0.0
        %5299 = vmatmul.mubr.f32.gmra.mxu0 %v2449
        %v5300 = vpop.f32.mrf.mxu0
        %v5301 = vadd.f32 0.0, %v5300
        %v5302 = vpop.f32.mrf.mxu0
        %5303 = vmatprep.mubr.f32.mxu0 0.0
        %5304 = vmatmul.mubr.f32.gmra.mxu0 %v2452
        %v5305 = vpop.f32.mrf.mxu0
        %v5306 = vadd.f32 0.0, %v5305
        %v5307 = vpop.f32.mrf.mxu0
        %5308 = vmatprep.mubr.f32.mxu0 0.0
        %5309 = vmatmul.mubr.f32.gmra.mxu0 %v2455
        %v5310 = vpop.f32.mrf.mxu0
        %v5311 = vadd.f32 0.0, %v5310
        %v5312 = vpop.f32.mrf.mxu0
        %5313 = vmatprep.mubr.f32.mxu0 0.0
        %5314 = vmatmul.mubr.f32.gmra.mxu0 %v2458
        %v5315 = vpop.f32.mrf.mxu0
        %v5316 = vadd.f32 0.0, %v5315
        %v5317 = vpop.f32.mrf.mxu0
        %5318 = vmatprep.mubr.f32.mxu0 0.0
        %5319 = vmatmul.mubr.f32.gmra.mxu0 %v2461
        %v5320 = vpop.f32.mrf.mxu0
        %v5321 = vadd.f32 0.0, %v5320
        %v5322 = vpop.f32.mrf.mxu0
        %5323 = vmatprep.mubr.f32.mxu0 0.0
        %5324 = vmatmul.mubr.f32.gmra.mxu0 %v2464
        %v5325 = vpop.f32.mrf.mxu0
        %v5326 = vadd.f32 0.0, %v5325
        %v5327 = vpop.f32.mrf.mxu0
        %5328 = vmatprep.mubr.f32.mxu0 0.0
        %5329 = vmatmul.mubr.f32.gmra.mxu0 %v2467
        %v5330 = vpop.f32.mrf.mxu0
        %v5331 = vadd.f32 0.0, %v5330
        %v5332 = vpop.f32.mrf.mxu0
        %5333 = vmatprep.mubr.f32.mxu0 0.0
        %5334 = vmatmul.mubr.f32.gmra.mxu0 %v2470
        %v5335 = vpop.f32.mrf.mxu0
        %v5336 = vadd.f32 0.0, %v5335
        %v5337 = vpop.f32.mrf.mxu0
        %5338 = vmatprep.mubr.f32.mxu0 0.0
        %5339 = vmatmul.mubr.f32.gmra.mxu0 %v2473
        %v5340 = vpop.f32.mrf.mxu0
        %v5341 = vadd.f32 0.0, %v5340
        %v5342 = vpop.f32.mrf.mxu0
        %5343 = vmatprep.mubr.f32.mxu0 0.0
        %5344 = vmatmul.mubr.f32.gmra.mxu0 %v2476
        %v5345 = vpop.f32.mrf.mxu0
        %v5346 = vadd.f32 0.0, %v5345
        %v5347 = vpop.f32.mrf.mxu0
        %5348 = vmatprep.mubr.f32.mxu0 0.0
        %5349 = vmatmul.mubr.f32.gmra.mxu0 %v2479
        %v5350 = vpop.f32.mrf.mxu0
        %v5351 = vadd.f32 0.0, %v5350
        %v5352 = vpop.f32.mrf.mxu0
        %5353 = vmatprep.mubr.f32.mxu0 0.0
        %5354 = vmatmul.mubr.f32.gmra.mxu0 %v2482
        %v5355 = vpop.f32.mrf.mxu0
        %v5356 = vadd.f32 0.0, %v5355
        %v5357 = vpop.f32.mrf.mxu0
        %5358 = vdwg.mxu0
        %v5359 = vld [vmem:[%s209] sm:$0xff]
        %v5360 = vld [vmem:[%s209 + $0x8] sm:$0xff]
        %v5361 = vld [vmem:[%s209 + $0x10] sm:$0xff]
        %v5362 = vld [vmem:[%s209 + $0x18] sm:$0xff]
        %v5363 = vld [vmem:[%s209 + $0x20] sm:$0xff]
        %v5364 = vld [vmem:[%s209 + $0x28] sm:$0xff]
        %v5365 = vld [vmem:[%s209 + $0x30] sm:$0xff]
        %v5366 = vld [vmem:[%s209 + $0x38] sm:$0xff]
        %v5367 = vld [vmem:[%s209 + $0x40] sm:$0xff]
        %v5368 = vld [vmem:[%s209 + $0x48] sm:$0xff]
        %v5369 = vld [vmem:[%s209 + $0x50] sm:$0xff]
        %v5370 = vld [vmem:[%s209 + $0x58] sm:$0xff]
        %v5371 = vld [vmem:[%s209 + $0x60] sm:$0xff]
        %v5372 = vld [vmem:[%s209 + $0x68] sm:$0xff]
        %v5373 = vld [vmem:[%s209 + $0x70] sm:$0xff]
        %v5374 = vld [vmem:[%s209 + $0x78] sm:$0xff]
        %v5375 = vld [vmem:[%s209 + $0x80] sm:$0xff]
        %v5376 = vld [vmem:[%s209 + $0x88] sm:$0xff]
        %v5377 = vld [vmem:[%s209 + $0x90] sm:$0xff]
        %v5378 = vld [vmem:[%s209 + $0x98] sm:$0xff]
        %v5379 = vld [vmem:[%s209 + $0xa0] sm:$0xff]
        %v5380 = vld [vmem:[%s209 + $0xa8] sm:$0xff]
        %v5381 = vld [vmem:[%s209 + $0xb0] sm:$0xff]
        %v5382 = vld [vmem:[%s209 + $0xb8] sm:$0xff]
        %v5383 = vld [vmem:[%s209 + $0xc0] sm:$0xff]
        %v5384 = vld [vmem:[%s209 + $0xc8] sm:$0xff]
        %v5385 = vld [vmem:[%s209 + $0xd0] sm:$0xff]
        %v5386 = vld [vmem:[%s209 + $0xd8] sm:$0xff]
        %v5387 = vld [vmem:[%s209 + $0xe0] sm:$0xff]
        %v5388 = vld [vmem:[%s209 + $0xe8] sm:$0xff]
        %v5389 = vld [vmem:[%s209 + $0xf0] sm:$0xff]
        %v5390 = vld [vmem:[%s209 + $0xf8] sm:$0xff]
        %v5391 = vld [vmem:[%s209 + $0x100] sm:$0xff]
        %v5392 = vld [vmem:[%s209 + $0x108] sm:$0xff]
        %v5393 = vld [vmem:[%s209 + $0x110] sm:$0xff]
        %v5394 = vld [vmem:[%s209 + $0x118] sm:$0xff]
        %v5395 = vld [vmem:[%s209 + $0x120] sm:$0xff]
        %v5396 = vld [vmem:[%s209 + $0x128] sm:$0xff]
        %v5397 = vld [vmem:[%s209 + $0x130] sm:$0xff]
        %v5398 = vld [vmem:[%s209 + $0x138] sm:$0xff]
        %v5399 = vld [vmem:[%s209 + $0x140] sm:$0xff]
        %v5400 = vld [vmem:[%s209 + $0x148] sm:$0xff]
        %v5401 = vld [vmem:[%s209 + $0x150] sm:$0xff]
        %v5402 = vld [vmem:[%s209 + $0x158] sm:$0xff]
        %v5403 = vld [vmem:[%s209 + $0x160] sm:$0xff]
        %v5404 = vld [vmem:[%s209 + $0x168] sm:$0xff]
        %v5405 = vld [vmem:[%s209 + $0x170] sm:$0xff]
        %v5406 = vld [vmem:[%s209 + $0x178] sm:$0xff]
        %v5407 = vld [vmem:[%s209 + $0x180] sm:$0xff]
        %v5408 = vld [vmem:[%s209 + $0x188] sm:$0xff]
        %v5409 = vld [vmem:[%s209 + $0x190] sm:$0xff]
        %v5410 = vld [vmem:[%s209 + $0x198] sm:$0xff]
        %v5411 = vld [vmem:[%s209 + $0x1a0] sm:$0xff]
        %v5412 = vld [vmem:[%s209 + $0x1a8] sm:$0xff]
        %v5413 = vld [vmem:[%s209 + $0x1b0] sm:$0xff]
        %v5414 = vld [vmem:[%s209 + $0x1b8] sm:$0xff]
        %v5415 = vld [vmem:[%s209 + $0x1c0] sm:$0xff]
        %v5416 = vld [vmem:[%s209 + $0x1c8] sm:$0xff]
        %v5417 = vld [vmem:[%s209 + $0x1d0] sm:$0xff]
        %v5418 = vld [vmem:[%s209 + $0x1d8] sm:$0xff]
        %v5419 = vld [vmem:[%s209 + $0x1e0] sm:$0xff]
        %v5420 = vld [vmem:[%s209 + $0x1e8] sm:$0xff]
        %v5421 = vld [vmem:[%s209 + $0x1f0] sm:$0xff]
        %v5422 = vld [vmem:[%s209 + $0x1f8] sm:$0xff]
        %v5423 = vld [vmem:[%s209 + $0x200] sm:$0xff]
        %v5424 = vld [vmem:[%s209 + $0x208] sm:$0xff]
        %v5425 = vld [vmem:[%s209 + $0x210] sm:$0xff]
        %v5426 = vld [vmem:[%s209 + $0x218] sm:$0xff]
        %v5427 = vld [vmem:[%s209 + $0x220] sm:$0xff]
        %v5428 = vld [vmem:[%s209 + $0x228] sm:$0xff]
        %v5429 = vld [vmem:[%s209 + $0x230] sm:$0xff]
        %v5430 = vld [vmem:[%s209 + $0x238] sm:$0xff]
        %v5431 = vld [vmem:[%s209 + $0x240] sm:$0xff]
        %v5432 = vld [vmem:[%s209 + $0x248] sm:$0xff]
        %v5433 = vld [vmem:[%s209 + $0x250] sm:$0xff]
        %v5434 = vld [vmem:[%s209 + $0x258] sm:$0xff]
        %v5435 = vld [vmem:[%s209 + $0x260] sm:$0xff]
        %v5436 = vld [vmem:[%s209 + $0x268] sm:$0xff]
        %v5437 = vld [vmem:[%s209 + $0x270] sm:$0xff]
        %v5438 = vld [vmem:[%s209 + $0x278] sm:$0xff]
        %v5439 = vld [vmem:[%s209 + $0x280] sm:$0xff]
        %v5440 = vld [vmem:[%s209 + $0x288] sm:$0xff]
        %v5441 = vld [vmem:[%s209 + $0x290] sm:$0xff]
        %v5442 = vld [vmem:[%s209 + $0x298] sm:$0xff]
        %v5443 = vld [vmem:[%s209 + $0x2a0] sm:$0xff]
        %v5444 = vld [vmem:[%s209 + $0x2a8] sm:$0xff]
        %v5445 = vld [vmem:[%s209 + $0x2b0] sm:$0xff]
        %v5446 = vld [vmem:[%s209 + $0x2b8] sm:$0xff]
        %v5447 = vld [vmem:[%s209 + $0x2c0] sm:$0xff]
        %v5448 = vld [vmem:[%s209 + $0x2c8] sm:$0xff]
        %v5449 = vld [vmem:[%s209 + $0x2d0] sm:$0xff]
        %v5450 = vld [vmem:[%s209 + $0x2d8] sm:$0xff]
        %v5451 = vld [vmem:[%s209 + $0x2e0] sm:$0xff]
        %v5452 = vld [vmem:[%s209 + $0x2e8] sm:$0xff]
        %v5453 = vld [vmem:[%s209 + $0x2f0] sm:$0xff]
        %v5454 = vld [vmem:[%s209 + $0x2f8] sm:$0xff]
        %v5455 = vld [vmem:[%s209 + $0x300] sm:$0xff]
        %v5456 = vld [vmem:[%s209 + $0x308] sm:$0xff]
        %v5457 = vld [vmem:[%s209 + $0x310] sm:$0xff]
        %v5458 = vld [vmem:[%s209 + $0x318] sm:$0xff]
        %v5459 = vld [vmem:[%s209 + $0x320] sm:$0xff]
        %v5460 = vld [vmem:[%s209 + $0x328] sm:$0xff]
        %v5461 = vld [vmem:[%s209 + $0x330] sm:$0xff]
        %v5462 = vld [vmem:[%s209 + $0x338] sm:$0xff]
        %v5463 = vld [vmem:[%s209 + $0x340] sm:$0xff]
        %v5464 = vld [vmem:[%s209 + $0x348] sm:$0xff]
        %v5465 = vld [vmem:[%s209 + $0x350] sm:$0xff]
        %v5466 = vld [vmem:[%s209 + $0x358] sm:$0xff]
        %v5467 = vld [vmem:[%s209 + $0x360] sm:$0xff]
        %v5468 = vld [vmem:[%s209 + $0x368] sm:$0xff]
        %v5469 = vld [vmem:[%s209 + $0x370] sm:$0xff]
        %v5470 = vld [vmem:[%s209 + $0x378] sm:$0xff]
        %v5471 = vld [vmem:[%s209 + $0x380] sm:$0xff]
        %v5472 = vld [vmem:[%s209 + $0x388] sm:$0xff]
        %v5473 = vld [vmem:[%s209 + $0x390] sm:$0xff]
        %v5474 = vld [vmem:[%s209 + $0x398] sm:$0xff]
        %v5475 = vld [vmem:[%s209 + $0x3a0] sm:$0xff]
        %v5476 = vld [vmem:[%s209 + $0x3a8] sm:$0xff]
        %v5477 = vld [vmem:[%s209 + $0x3b0] sm:$0xff]
        %v5478 = vld [vmem:[%s209 + $0x3b8] sm:$0xff]
        %v5479 = vld [vmem:[%s209 + $0x3c0] sm:$0xff]
        %v5480 = vld [vmem:[%s209 + $0x3c8] sm:$0xff]
        %v5481 = vld [vmem:[%s209 + $0x3d0] sm:$0xff]
        %v5482 = vld [vmem:[%s209 + $0x3d8] sm:$0xff]
        %v5483 = vld [vmem:[%s209 + $0x3e0] sm:$0xff]
        %v5484 = vld [vmem:[%s209 + $0x3e8] sm:$0xff]
        %v5485 = vld [vmem:[%s209 + $0x3f0] sm:$0xff]
        %v5486 = vld [vmem:[%s209 + $0x3f8] sm:$0xff]
        %v5487 = vld [vmem:[%s209 + $0x400] sm:$0xff]
        %v5488 = vld [vmem:[%s209 + $0x408] sm:$0xff]
        %v5489 = vld [vmem:[%s209 + $0x410] sm:$0xff]
        %v5490 = vld [vmem:[%s209 + $0x418] sm:$0xff]
        %v5491 = vld [vmem:[%s209 + $0x420] sm:$0xff]
        %v5492 = vld [vmem:[%s209 + $0x428] sm:$0xff]
        %v5493 = vld [vmem:[%s209 + $0x430] sm:$0xff]
        %v5494 = vld [vmem:[%s209 + $0x438] sm:$0xff]
        %v5495 = vld [vmem:[%s209 + $0x440] sm:$0xff]
        %v5496 = vld [vmem:[%s209 + $0x448] sm:$0xff]
        %v5497 = vld [vmem:[%s209 + $0x450] sm:$0xff]
        %v5498 = vld [vmem:[%s209 + $0x458] sm:$0xff]
        %v5499 = vld [vmem:[%s209 + $0x460] sm:$0xff]
        %v5500 = vld [vmem:[%s209 + $0x468] sm:$0xff]
        %v5501 = vld [vmem:[%s209 + $0x470] sm:$0xff]
        %v5502 = vld [vmem:[%s209 + $0x478] sm:$0xff]
        %v5503 = vld [vmem:[%s209 + $0x480] sm:$0xff]
        %v5504 = vld [vmem:[%s209 + $0x488] sm:$0xff]
        %v5505 = vld [vmem:[%s209 + $0x490] sm:$0xff]
        %v5506 = vld [vmem:[%s209 + $0x498] sm:$0xff]
        %v5507 = vld [vmem:[%s209 + $0x4a0] sm:$0xff]
        %v5508 = vld [vmem:[%s209 + $0x4a8] sm:$0xff]
        %v5509 = vld [vmem:[%s209 + $0x4b0] sm:$0xff]
        %v5510 = vld [vmem:[%s209 + $0x4b8] sm:$0xff]
        %v5511 = vld [vmem:[%s209 + $0x4c0] sm:$0xff]
        %v5512 = vld [vmem:[%s209 + $0x4c8] sm:$0xff]
        %v5513 = vld [vmem:[%s209 + $0x4d0] sm:$0xff]
        %v5514 = vld [vmem:[%s209 + $0x4d8] sm:$0xff]
        %v5515 = vld [vmem:[%s209 + $0x4e0] sm:$0xff]
        %v5516 = vld [vmem:[%s209 + $0x4e8] sm:$0xff]
        %v5517 = vld [vmem:[%s209 + $0x4f0] sm:$0xff]
        %v5518 = vld [vmem:[%s209 + $0x4f8] sm:$0xff]
        %v5519 = vld [vmem:[%s209 + $0x500] sm:$0xff]
        %v5520 = vld [vmem:[%s209 + $0x508] sm:$0xff]
        %v5521 = vld [vmem:[%s209 + $0x510] sm:$0xff]
        %v5522 = vld [vmem:[%s209 + $0x518] sm:$0xff]
        %v5523 = vld [vmem:[%s209 + $0x520] sm:$0xff]
        %v5524 = vld [vmem:[%s209 + $0x528] sm:$0xff]
        %v5525 = vld [vmem:[%s209 + $0x530] sm:$0xff]
        %v5526 = vld [vmem:[%s209 + $0x538] sm:$0xff]
        %v5527 = vld [vmem:[%s209 + $0x540] sm:$0xff]
        %v5528 = vld [vmem:[%s209 + $0x548] sm:$0xff]
        %v5529 = vld [vmem:[%s209 + $0x550] sm:$0xff]
        %v5530 = vld [vmem:[%s209 + $0x558] sm:$0xff]
        %v5531 = vld [vmem:[%s209 + $0x560] sm:$0xff]
        %v5532 = vld [vmem:[%s209 + $0x568] sm:$0xff]
        %v5533 = vld [vmem:[%s209 + $0x570] sm:$0xff]
        %v5534 = vld [vmem:[%s209 + $0x578] sm:$0xff]
        %v5535 = vld [vmem:[%s209 + $0x580] sm:$0xff]
        %v5536 = vld [vmem:[%s209 + $0x588] sm:$0xff]
        %v5537 = vld [vmem:[%s209 + $0x590] sm:$0xff]
        %v5538 = vld [vmem:[%s209 + $0x598] sm:$0xff]
        %v5539 = vld [vmem:[%s209 + $0x5a0] sm:$0xff]
        %v5540 = vld [vmem:[%s209 + $0x5a8] sm:$0xff]
        %v5541 = vld [vmem:[%s209 + $0x5b0] sm:$0xff]
        %v5542 = vld [vmem:[%s209 + $0x5b8] sm:$0xff]
        %v5543 = vld [vmem:[%s209 + $0x5c0] sm:$0xff]
        %v5544 = vld [vmem:[%s209 + $0x5c8] sm:$0xff]
        %v5545 = vld [vmem:[%s209 + $0x5d0] sm:$0xff]
        %v5546 = vld [vmem:[%s209 + $0x5d8] sm:$0xff]
        %v5547 = vld [vmem:[%s209 + $0x5e0] sm:$0xff]
        %v5548 = vld [vmem:[%s209 + $0x5e8] sm:$0xff]
        %v5549 = vld [vmem:[%s209 + $0x5f0] sm:$0xff]
        %v5550 = vld [vmem:[%s209 + $0x5f8] sm:$0xff]
        %v5551 = vld [vmem:[%s209 + $0x600] sm:$0xff]
        %v5552 = vld [vmem:[%s209 + $0x608] sm:$0xff]
        %v5553 = vld [vmem:[%s209 + $0x610] sm:$0xff]
        %v5554 = vld [vmem:[%s209 + $0x618] sm:$0xff]
        %v5555 = vld [vmem:[%s209 + $0x620] sm:$0xff]
        %v5556 = vld [vmem:[%s209 + $0x628] sm:$0xff]
        %v5557 = vld [vmem:[%s209 + $0x630] sm:$0xff]
        %v5558 = vld [vmem:[%s209 + $0x638] sm:$0xff]
        %v5559 = vld [vmem:[%s209 + $0x640] sm:$0xff]
        %v5560 = vld [vmem:[%s209 + $0x648] sm:$0xff]
        %v5561 = vld [vmem:[%s209 + $0x650] sm:$0xff]
        %v5562 = vld [vmem:[%s209 + $0x658] sm:$0xff]
        %v5563 = vld [vmem:[%s209 + $0x660] sm:$0xff]
        %v5564 = vld [vmem:[%s209 + $0x668] sm:$0xff]
        %v5565 = vld [vmem:[%s209 + $0x670] sm:$0xff]
        %v5566 = vld [vmem:[%s209 + $0x678] sm:$0xff]
        %v5567 = vld [vmem:[%s209 + $0x680] sm:$0xff]
        %v5568 = vld [vmem:[%s209 + $0x688] sm:$0xff]
        %v5569 = vld [vmem:[%s209 + $0x690] sm:$0xff]
        %v5570 = vld [vmem:[%s209 + $0x698] sm:$0xff]
        %v5571 = vld [vmem:[%s209 + $0x6a0] sm:$0xff]
        %v5572 = vld [vmem:[%s209 + $0x6a8] sm:$0xff]
        %v5573 = vld [vmem:[%s209 + $0x6b0] sm:$0xff]
        %v5574 = vld [vmem:[%s209 + $0x6b8] sm:$0xff]
        %v5575 = vld [vmem:[%s209 + $0x6c0] sm:$0xff]
        %v5576 = vld [vmem:[%s209 + $0x6c8] sm:$0xff]
        %v5577 = vld [vmem:[%s209 + $0x6d0] sm:$0xff]
        %v5578 = vld [vmem:[%s209 + $0x6d8] sm:$0xff]
        %v5579 = vld [vmem:[%s209 + $0x6e0] sm:$0xff]
        %v5580 = vld [vmem:[%s209 + $0x6e8] sm:$0xff]
        %v5581 = vld [vmem:[%s209 + $0x6f0] sm:$0xff]
        %v5582 = vld [vmem:[%s209 + $0x6f8] sm:$0xff]
        %v5583 = vld [vmem:[%s209 + $0x700] sm:$0xff]
        %v5584 = vld [vmem:[%s209 + $0x708] sm:$0xff]
        %v5585 = vld [vmem:[%s209 + $0x710] sm:$0xff]
        %v5586 = vld [vmem:[%s209 + $0x718] sm:$0xff]
        %v5587 = vld [vmem:[%s209 + $0x720] sm:$0xff]
        %v5588 = vld [vmem:[%s209 + $0x728] sm:$0xff]
        %v5589 = vld [vmem:[%s209 + $0x730] sm:$0xff]
        %v5590 = vld [vmem:[%s209 + $0x738] sm:$0xff]
        %v5591 = vld [vmem:[%s209 + $0x740] sm:$0xff]
        %v5592 = vld [vmem:[%s209 + $0x748] sm:$0xff]
        %v5593 = vld [vmem:[%s209 + $0x750] sm:$0xff]
        %v5594 = vld [vmem:[%s209 + $0x758] sm:$0xff]
        %v5595 = vld [vmem:[%s209 + $0x760] sm:$0xff]
        %v5596 = vld [vmem:[%s209 + $0x768] sm:$0xff]
        %v5597 = vld [vmem:[%s209 + $0x770] sm:$0xff]
        %v5598 = vld [vmem:[%s209 + $0x778] sm:$0xff]
        %v5599 = vld [vmem:[%s209 + $0x780] sm:$0xff]
        %v5600 = vld [vmem:[%s209 + $0x788] sm:$0xff]
        %v5601 = vld [vmem:[%s209 + $0x790] sm:$0xff]
        %v5602 = vld [vmem:[%s209 + $0x798] sm:$0xff]
        %v5603 = vld [vmem:[%s209 + $0x7a0] sm:$0xff]
        %v5604 = vld [vmem:[%s209 + $0x7a8] sm:$0xff]
        %v5605 = vld [vmem:[%s209 + $0x7b0] sm:$0xff]
        %v5606 = vld [vmem:[%s209 + $0x7b8] sm:$0xff]
        %v5607 = vld [vmem:[%s209 + $0x7c0] sm:$0xff]
        %v5608 = vld [vmem:[%s209 + $0x7c8] sm:$0xff]
        %v5609 = vld [vmem:[%s209 + $0x7d0] sm:$0xff]
        %v5610 = vld [vmem:[%s209 + $0x7d8] sm:$0xff]
        %v5611 = vld [vmem:[%s209 + $0x7e0] sm:$0xff]
        %v5612 = vld [vmem:[%s209 + $0x7e8] sm:$0xff]
        %v5613 = vld [vmem:[%s209 + $0x7f0] sm:$0xff]
        %v5614 = vld [vmem:[%s209 + $0x7f8] sm:$0xff]
        %v5615 = vld [vmem:[%s209 + $0x800] sm:$0xff]
        %v5616 = vld [vmem:[%s209 + $0x808] sm:$0xff]
        %v5617 = vld [vmem:[%s209 + $0x810] sm:$0xff]
        %v5618 = vld [vmem:[%s209 + $0x818] sm:$0xff]
        %v5619 = vld [vmem:[%s209 + $0x820] sm:$0xff]
        %v5620 = vld [vmem:[%s209 + $0x828] sm:$0xff]
        %v5621 = vld [vmem:[%s209 + $0x830] sm:$0xff]
        %v5622 = vld [vmem:[%s209 + $0x838] sm:$0xff]
        %v5623 = vld [vmem:[%s209 + $0x840] sm:$0xff]
        %v5624 = vld [vmem:[%s209 + $0x848] sm:$0xff]
        %v5625 = vld [vmem:[%s209 + $0x850] sm:$0xff]
        %v5626 = vld [vmem:[%s209 + $0x858] sm:$0xff]
        %v5627 = vld [vmem:[%s209 + $0x860] sm:$0xff]
        %v5628 = vld [vmem:[%s209 + $0x868] sm:$0xff]
        %v5629 = vld [vmem:[%s209 + $0x870] sm:$0xff]
        %v5630 = vld [vmem:[%s209 + $0x878] sm:$0xff]
        %v5631 = vld [vmem:[%s209 + $0x880] sm:$0xff]
        %v5632 = vld [vmem:[%s209 + $0x888] sm:$0xff]
        %v5633 = vld [vmem:[%s209 + $0x890] sm:$0xff]
        %v5634 = vld [vmem:[%s209 + $0x898] sm:$0xff]
        %v5635 = vld [vmem:[%s209 + $0x8a0] sm:$0xff]
        %v5636 = vld [vmem:[%s209 + $0x8a8] sm:$0xff]
        %v5637 = vld [vmem:[%s209 + $0x8b0] sm:$0xff]
        %v5638 = vld [vmem:[%s209 + $0x8b8] sm:$0xff]
        %v5639 = vld [vmem:[%s209 + $0x8c0] sm:$0xff]
        %v5640 = vld [vmem:[%s209 + $0x8c8] sm:$0xff]
        %v5641 = vld [vmem:[%s209 + $0x8d0] sm:$0xff]
        %v5642 = vld [vmem:[%s209 + $0x8d8] sm:$0xff]
        %v5643 = vld [vmem:[%s209 + $0x8e0] sm:$0xff]
        %v5644 = vld [vmem:[%s209 + $0x8e8] sm:$0xff]
        %v5645 = vld [vmem:[%s209 + $0x8f0] sm:$0xff]
        %v5646 = vld [vmem:[%s209 + $0x8f8] sm:$0xff]
        %v5647 = vld [vmem:[%s209 + $0x900] sm:$0xff]
        %v5648 = vld [vmem:[%s209 + $0x908] sm:$0xff]
        %v5649 = vld [vmem:[%s209 + $0x910] sm:$0xff]
        %v5650 = vld [vmem:[%s209 + $0x918] sm:$0xff]
        %v5651 = vld [vmem:[%s209 + $0x920] sm:$0xff]
        %v5652 = vld [vmem:[%s209 + $0x928] sm:$0xff]
        %v5653 = vld [vmem:[%s209 + $0x930] sm:$0xff]
        %v5654 = vld [vmem:[%s209 + $0x938] sm:$0xff]
        %v5655 = vld [vmem:[%s209 + $0x940] sm:$0xff]
        %v5656 = vld [vmem:[%s209 + $0x948] sm:$0xff]
        %v5657 = vld [vmem:[%s209 + $0x950] sm:$0xff]
        %v5658 = vld [vmem:[%s209 + $0x958] sm:$0xff]
        %v5659 = vld [vmem:[%s209 + $0x960] sm:$0xff]
        %v5660 = vld [vmem:[%s209 + $0x968] sm:$0xff]
        %v5661 = vld [vmem:[%s209 + $0x970] sm:$0xff]
        %v5662 = vld [vmem:[%s209 + $0x978] sm:$0xff]
        %v5663 = vld [vmem:[%s209 + $0x980] sm:$0xff]
        %v5664 = vld [vmem:[%s209 + $0x988] sm:$0xff]
        %v5665 = vld [vmem:[%s209 + $0x990] sm:$0xff]
        %v5666 = vld [vmem:[%s209 + $0x998] sm:$0xff]
        %v5667 = vld [vmem:[%s209 + $0x9a0] sm:$0xff]
        %v5668 = vld [vmem:[%s209 + $0x9a8] sm:$0xff]
        %v5669 = vld [vmem:[%s209 + $0x9b0] sm:$0xff]
        %v5670 = vld [vmem:[%s209 + $0x9b8] sm:$0xff]
        %v5671 = vld [vmem:[%s209 + $0x9c0] sm:$0xff]
        %v5672 = vld [vmem:[%s209 + $0x9c8] sm:$0xff]
        %v5673 = vld [vmem:[%s209 + $0x9d0] sm:$0xff]
        %v5674 = vld [vmem:[%s209 + $0x9d8] sm:$0xff]
        %v5675 = vld [vmem:[%s209 + $0x9e0] sm:$0xff]
        %v5676 = vld [vmem:[%s209 + $0x9e8] sm:$0xff]
        %v5677 = vld [vmem:[%s209 + $0x9f0] sm:$0xff]
        %v5678 = vld [vmem:[%s209 + $0x9f8] sm:$0xff]
        %v5679 = vld [vmem:[%s209 + $0xa00] sm:$0xff]
        %v5680 = vld [vmem:[%s209 + $0xa08] sm:$0xff]
        %v5681 = vld [vmem:[%s209 + $0xa10] sm:$0xff]
        %v5682 = vld [vmem:[%s209 + $0xa18] sm:$0xff]
        %v5683 = vld [vmem:[%s209 + $0xa20] sm:$0xff]
        %v5684 = vld [vmem:[%s209 + $0xa28] sm:$0xff]
        %v5685 = vld [vmem:[%s209 + $0xa30] sm:$0xff]
        %v5686 = vld [vmem:[%s209 + $0xa38] sm:$0xff]
        %v5687 = vld [vmem:[%s209 + $0xa40] sm:$0xff]
        %v5688 = vld [vmem:[%s209 + $0xa48] sm:$0xff]
        %v5689 = vld [vmem:[%s209 + $0xa50] sm:$0xff]
        %v5690 = vld [vmem:[%s209 + $0xa58] sm:$0xff]
        %v5691 = vld [vmem:[%s209 + $0xa60] sm:$0xff]
        %v5692 = vld [vmem:[%s209 + $0xa68] sm:$0xff]
        %v5693 = vld [vmem:[%s209 + $0xa70] sm:$0xff]
        %v5694 = vld [vmem:[%s209 + $0xa78] sm:$0xff]
        %v5695 = vld [vmem:[%s209 + $0xa80] sm:$0xff]
        %v5696 = vld [vmem:[%s209 + $0xa88] sm:$0xff]
        %v5697 = vld [vmem:[%s209 + $0xa90] sm:$0xff]
        %v5698 = vld [vmem:[%s209 + $0xa98] sm:$0xff]
        %v5699 = vld [vmem:[%s209 + $0xaa0] sm:$0xff]
        %v5700 = vld [vmem:[%s209 + $0xaa8] sm:$0xff]
        %v5701 = vld [vmem:[%s209 + $0xab0] sm:$0xff]
        %v5702 = vld [vmem:[%s209 + $0xab8] sm:$0xff]
        %v5703 = vld [vmem:[%s209 + $0xac0] sm:$0xff]
        %v5704 = vld [vmem:[%s209 + $0xac8] sm:$0xff]
        %v5705 = vld [vmem:[%s209 + $0xad0] sm:$0xff]
        %v5706 = vld [vmem:[%s209 + $0xad8] sm:$0xff]
        %v5707 = vld [vmem:[%s209 + $0xae0] sm:$0xff]
        %v5708 = vld [vmem:[%s209 + $0xae8] sm:$0xff]
        %v5709 = vld [vmem:[%s209 + $0xaf0] sm:$0xff]
        %v5710 = vld [vmem:[%s209 + $0xaf8] sm:$0xff]
        %v5711 = vld [vmem:[%s209 + $0xb00] sm:$0xff]
        %v5712 = vld [vmem:[%s209 + $0xb08] sm:$0xff]
        %v5713 = vld [vmem:[%s209 + $0xb10] sm:$0xff]
        %v5714 = vld [vmem:[%s209 + $0xb18] sm:$0xff]
        %v5715 = vld [vmem:[%s209 + $0xb20] sm:$0xff]
        %v5716 = vld [vmem:[%s209 + $0xb28] sm:$0xff]
        %v5717 = vld [vmem:[%s209 + $0xb30] sm:$0xff]
        %v5718 = vld [vmem:[%s209 + $0xb38] sm:$0xff]
        %v5719 = vld [vmem:[%s209 + $0xb40] sm:$0xff]
        %v5720 = vld [vmem:[%s209 + $0xb48] sm:$0xff]
        %v5721 = vld [vmem:[%s209 + $0xb50] sm:$0xff]
        %v5722 = vld [vmem:[%s209 + $0xb58] sm:$0xff]
        %v5723 = vld [vmem:[%s209 + $0xb60] sm:$0xff]
        %v5724 = vld [vmem:[%s209 + $0xb68] sm:$0xff]
        %v5725 = vld [vmem:[%s209 + $0xb70] sm:$0xff]
        %v5726 = vld [vmem:[%s209 + $0xb78] sm:$0xff]
        %v5727 = vld [vmem:[%s209 + $0xb80] sm:$0xff]
        %v5728 = vld [vmem:[%s209 + $0xb88] sm:$0xff]
        %v5729 = vld [vmem:[%s209 + $0xb90] sm:$0xff]
        %v5730 = vld [vmem:[%s209 + $0xb98] sm:$0xff]
        %v5731 = vld [vmem:[%s209 + $0xba0] sm:$0xff]
        %v5732 = vld [vmem:[%s209 + $0xba8] sm:$0xff]
        %v5733 = vld [vmem:[%s209 + $0xbb0] sm:$0xff]
        %v5734 = vld [vmem:[%s209 + $0xbb8] sm:$0xff]
        %v5735 = vld [vmem:[%s209 + $0xbc0] sm:$0xff]
        %v5736 = vld [vmem:[%s209 + $0xbc8] sm:$0xff]
        %v5737 = vld [vmem:[%s209 + $0xbd0] sm:$0xff]
        %v5738 = vld [vmem:[%s209 + $0xbd8] sm:$0xff]
        %v5739 = vld [vmem:[%s209 + $0xbe0] sm:$0xff]
        %v5740 = vld [vmem:[%s209 + $0xbe8] sm:$0xff]
        %v5741 = vld [vmem:[%s209 + $0xbf0] sm:$0xff]
        %v5742 = vld [vmem:[%s209 + $0xbf8] sm:$0xff]
        %v5743 = vld [vmem:[%s209 + $0xc00] sm:$0xff]
        %v5744 = vld [vmem:[%s209 + $0xc08] sm:$0xff]
        %v5745 = vld [vmem:[%s209 + $0xc10] sm:$0xff]
        %v5746 = vld [vmem:[%s209 + $0xc18] sm:$0xff]
        %v5747 = vld [vmem:[%s209 + $0xc20] sm:$0xff]
        %v5748 = vld [vmem:[%s209 + $0xc28] sm:$0xff]
        %v5749 = vld [vmem:[%s209 + $0xc30] sm:$0xff]
        %v5750 = vld [vmem:[%s209 + $0xc38] sm:$0xff]
        %v5751 = vld [vmem:[%s209 + $0xc40] sm:$0xff]
        %v5752 = vld [vmem:[%s209 + $0xc48] sm:$0xff]
        %v5753 = vld [vmem:[%s209 + $0xc50] sm:$0xff]
        %v5754 = vld [vmem:[%s209 + $0xc58] sm:$0xff]
        %v5755 = vld [vmem:[%s209 + $0xc60] sm:$0xff]
        %v5756 = vld [vmem:[%s209 + $0xc68] sm:$0xff]
        %v5757 = vld [vmem:[%s209 + $0xc70] sm:$0xff]
        %v5758 = vld [vmem:[%s209 + $0xc78] sm:$0xff]
        %v5759 = vld [vmem:[%s209 + $0xc80] sm:$0xff]
        %v5760 = vld [vmem:[%s209 + $0xc88] sm:$0xff]
        %v5761 = vld [vmem:[%s209 + $0xc90] sm:$0xff]
        %v5762 = vld [vmem:[%s209 + $0xc98] sm:$0xff]
        %v5763 = vld [vmem:[%s209 + $0xca0] sm:$0xff]
        %v5764 = vld [vmem:[%s209 + $0xca8] sm:$0xff]
        %v5765 = vld [vmem:[%s209 + $0xcb0] sm:$0xff]
        %v5766 = vld [vmem:[%s209 + $0xcb8] sm:$0xff]
        %v5767 = vld [vmem:[%s209 + $0xcc0] sm:$0xff]
        %v5768 = vld [vmem:[%s209 + $0xcc8] sm:$0xff]
        %v5769 = vld [vmem:[%s209 + $0xcd0] sm:$0xff]
        %v5770 = vld [vmem:[%s209 + $0xcd8] sm:$0xff]
        %v5771 = vld [vmem:[%s209 + $0xce0] sm:$0xff]
        %v5772 = vld [vmem:[%s209 + $0xce8] sm:$0xff]
        %v5773 = vld [vmem:[%s209 + $0xcf0] sm:$0xff]
        %v5774 = vld [vmem:[%s209 + $0xcf8] sm:$0xff]
        %v5775 = vld [vmem:[%s209 + $0xd00] sm:$0xff]
        %v5776 = vld [vmem:[%s209 + $0xd08] sm:$0xff]
        %v5777 = vld [vmem:[%s209 + $0xd10] sm:$0xff]
        %v5778 = vld [vmem:[%s209 + $0xd18] sm:$0xff]
        %v5779 = vld [vmem:[%s209 + $0xd20] sm:$0xff]
        %v5780 = vld [vmem:[%s209 + $0xd28] sm:$0xff]
        %v5781 = vld [vmem:[%s209 + $0xd30] sm:$0xff]
        %v5782 = vld [vmem:[%s209 + $0xd38] sm:$0xff]
        %v5783 = vld [vmem:[%s209 + $0xd40] sm:$0xff]
        %v5784 = vld [vmem:[%s209 + $0xd48] sm:$0xff]
        %v5785 = vld [vmem:[%s209 + $0xd50] sm:$0xff]
        %v5786 = vld [vmem:[%s209 + $0xd58] sm:$0xff]
        %v5787 = vld [vmem:[%s209 + $0xd60] sm:$0xff]
        %v5788 = vld [vmem:[%s209 + $0xd68] sm:$0xff]
        %v5789 = vld [vmem:[%s209 + $0xd70] sm:$0xff]
        %v5790 = vld [vmem:[%s209 + $0xd78] sm:$0xff]
        %v5791 = vld [vmem:[%s209 + $0xd80] sm:$0xff]
        %v5792 = vld [vmem:[%s209 + $0xd88] sm:$0xff]
        %v5793 = vld [vmem:[%s209 + $0xd90] sm:$0xff]
        %v5794 = vld [vmem:[%s209 + $0xd98] sm:$0xff]
        %v5795 = vld [vmem:[%s209 + $0xda0] sm:$0xff]
        %v5796 = vld [vmem:[%s209 + $0xda8] sm:$0xff]
        %v5797 = vld [vmem:[%s209 + $0xdb0] sm:$0xff]
        %v5798 = vld [vmem:[%s209 + $0xdb8] sm:$0xff]
        %v5799 = vld [vmem:[%s209 + $0xdc0] sm:$0xff]
        %v5800 = vld [vmem:[%s209 + $0xdc8] sm:$0xff]
        %v5801 = vld [vmem:[%s209 + $0xdd0] sm:$0xff]
        %v5802 = vld [vmem:[%s209 + $0xdd8] sm:$0xff]
        %v5803 = vld [vmem:[%s209 + $0xde0] sm:$0xff]
        %v5804 = vld [vmem:[%s209 + $0xde8] sm:$0xff]
        %v5805 = vld [vmem:[%s209 + $0xdf0] sm:$0xff]
        %v5806 = vld [vmem:[%s209 + $0xdf8] sm:$0xff]
        %v5807 = vld [vmem:[%s209 + $0xe00] sm:$0xff]
        %v5808 = vld [vmem:[%s209 + $0xe08] sm:$0xff]
        %v5809 = vld [vmem:[%s209 + $0xe10] sm:$0xff]
        %v5810 = vld [vmem:[%s209 + $0xe18] sm:$0xff]
        %v5811 = vld [vmem:[%s209 + $0xe20] sm:$0xff]
        %v5812 = vld [vmem:[%s209 + $0xe28] sm:$0xff]
        %v5813 = vld [vmem:[%s209 + $0xe30] sm:$0xff]
        %v5814 = vld [vmem:[%s209 + $0xe38] sm:$0xff]
        %v5815 = vld [vmem:[%s209 + $0xe40] sm:$0xff]
        %v5816 = vld [vmem:[%s209 + $0xe48] sm:$0xff]
        %v5817 = vld [vmem:[%s209 + $0xe50] sm:$0xff]
        %v5818 = vld [vmem:[%s209 + $0xe58] sm:$0xff]
        %v5819 = vld [vmem:[%s209 + $0xe60] sm:$0xff]
        %v5820 = vld [vmem:[%s209 + $0xe68] sm:$0xff]
        %v5821 = vld [vmem:[%s209 + $0xe70] sm:$0xff]
        %v5822 = vld [vmem:[%s209 + $0xe78] sm:$0xff]
        %v5823 = vld [vmem:[%s209 + $0xe80] sm:$0xff]
        %v5824 = vld [vmem:[%s209 + $0xe88] sm:$0xff]
        %v5825 = vld [vmem:[%s209 + $0xe90] sm:$0xff]
        %v5826 = vld [vmem:[%s209 + $0xe98] sm:$0xff]
        %v5827 = vld [vmem:[%s209 + $0xea0] sm:$0xff]
        %v5828 = vld [vmem:[%s209 + $0xea8] sm:$0xff]
        %v5829 = vld [vmem:[%s209 + $0xeb0] sm:$0xff]
        %v5830 = vld [vmem:[%s209 + $0xeb8] sm:$0xff]
        %v5831 = vld [vmem:[%s209 + $0xec0] sm:$0xff]
        %v5832 = vld [vmem:[%s209 + $0xec8] sm:$0xff]
        %v5833 = vld [vmem:[%s209 + $0xed0] sm:$0xff]
        %v5834 = vld [vmem:[%s209 + $0xed8] sm:$0xff]
        %v5835 = vld [vmem:[%s209 + $0xee0] sm:$0xff]
        %v5836 = vld [vmem:[%s209 + $0xee8] sm:$0xff]
        %v5837 = vld [vmem:[%s209 + $0xef0] sm:$0xff]
        %v5838 = vld [vmem:[%s209 + $0xef8] sm:$0xff]
        %v5839 = vld [vmem:[%s209 + $0xf00] sm:$0xff]
        %v5840 = vld [vmem:[%s209 + $0xf08] sm:$0xff]
        %v5841 = vld [vmem:[%s209 + $0xf10] sm:$0xff]
        %v5842 = vld [vmem:[%s209 + $0xf18] sm:$0xff]
        %v5843 = vld [vmem:[%s209 + $0xf20] sm:$0xff]
        %v5844 = vld [vmem:[%s209 + $0xf28] sm:$0xff]
        %v5845 = vld [vmem:[%s209 + $0xf30] sm:$0xff]
        %v5846 = vld [vmem:[%s209 + $0xf38] sm:$0xff]
        %v5847 = vld [vmem:[%s209 + $0xf40] sm:$0xff]
        %v5848 = vld [vmem:[%s209 + $0xf48] sm:$0xff]
        %v5849 = vld [vmem:[%s209 + $0xf50] sm:$0xff]
        %v5850 = vld [vmem:[%s209 + $0xf58] sm:$0xff]
        %v5851 = vld [vmem:[%s209 + $0xf60] sm:$0xff]
        %v5852 = vld [vmem:[%s209 + $0xf68] sm:$0xff]
        %v5853 = vld [vmem:[%s209 + $0xf70] sm:$0xff]
        %v5854 = vld [vmem:[%s209 + $0xf78] sm:$0xff]
        %v5855 = vld [vmem:[%s209 + $0xf80] sm:$0xff]
        %v5856 = vld [vmem:[%s209 + $0xf88] sm:$0xff]
        %v5857 = vld [vmem:[%s209 + $0xf90] sm:$0xff]
        %v5858 = vld [vmem:[%s209 + $0xf98] sm:$0xff]
        %v5859 = vld [vmem:[%s209 + $0xfa0] sm:$0xff]
        %v5860 = vld [vmem:[%s209 + $0xfa8] sm:$0xff]
        %v5861 = vld [vmem:[%s209 + $0xfb0] sm:$0xff]
        %v5862 = vld [vmem:[%s209 + $0xfb8] sm:$0xff]
        %v5863 = vld [vmem:[%s209 + $0xfc0] sm:$0xff]
        %v5864 = vld [vmem:[%s209 + $0xfc8] sm:$0xff]
        %v5865 = vld [vmem:[%s209 + $0xfd0] sm:$0xff]
        %v5866 = vld [vmem:[%s209 + $0xfd8] sm:$0xff]
        %v5867 = vld [vmem:[%s209 + $0xfe0] sm:$0xff]
        %v5868 = vld [vmem:[%s209 + $0xfe8] sm:$0xff]
        %v5869 = vld [vmem:[%s209 + $0xff0] sm:$0xff]
        %v5870 = vld [vmem:[%s209 + $0xff8] sm:$0xff]
        %v5871 = vld [vmem:[%s209 + $0x1000] sm:$0xff]
        %v5872 = vld [vmem:[%s209 + $0x1008] sm:$0xff]
        %v5873 = vld [vmem:[%s209 + $0x1010] sm:$0xff]
        %v5874 = vld [vmem:[%s209 + $0x1018] sm:$0xff]
        %v5875 = vld [vmem:[%s209 + $0x1020] sm:$0xff]
        %v5876 = vld [vmem:[%s209 + $0x1028] sm:$0xff]
        %v5877 = vld [vmem:[%s209 + $0x1030] sm:$0xff]
        %v5878 = vld [vmem:[%s209 + $0x1038] sm:$0xff]
        %v5879 = vld [vmem:[%s209 + $0x1040] sm:$0xff]
        %v5880 = vld [vmem:[%s209 + $0x1048] sm:$0xff]
        %v5881 = vld [vmem:[%s209 + $0x1050] sm:$0xff]
        %v5882 = vld [vmem:[%s209 + $0x1058] sm:$0xff]
        %v5883 = vld [vmem:[%s209 + $0x1060] sm:$0xff]
        %v5884 = vld [vmem:[%s209 + $0x1068] sm:$0xff]
        %v5885 = vld [vmem:[%s209 + $0x1070] sm:$0xff]
        %v5886 = vld [vmem:[%s209 + $0x1078] sm:$0xff]
        %v5887 = vld [vmem:[%s209 + $0x1080] sm:$0xff]
        %v5888 = vld [vmem:[%s209 + $0x1088] sm:$0xff]
        %v5889 = vld [vmem:[%s209 + $0x1090] sm:$0xff]
        %v5890 = vld [vmem:[%s209 + $0x1098] sm:$0xff]
        %v5891 = vld [vmem:[%s209 + $0x10a0] sm:$0xff]
        %v5892 = vld [vmem:[%s209 + $0x10a8] sm:$0xff]
        %v5893 = vld [vmem:[%s209 + $0x10b0] sm:$0xff]
        %v5894 = vld [vmem:[%s209 + $0x10b8] sm:$0xff]
        %v5895 = vld [vmem:[%s209 + $0x10c0] sm:$0xff]
        %v5896 = vld [vmem:[%s209 + $0x10c8] sm:$0xff]
        %v5897 = vld [vmem:[%s209 + $0x10d0] sm:$0xff]
        %v5898 = vld [vmem:[%s209 + $0x10d8] sm:$0xff]
        %v5899 = vld [vmem:[%s209 + $0x10e0] sm:$0xff]
        %v5900 = vld [vmem:[%s209 + $0x10e8] sm:$0xff]
        %v5901 = vld [vmem:[%s209 + $0x10f0] sm:$0xff]
        %v5902 = vld [vmem:[%s209 + $0x10f8] sm:$0xff]
        %v5903 = vld [vmem:[%s209 + $0x1100] sm:$0xff]
        %v5904 = vld [vmem:[%s209 + $0x1108] sm:$0xff]
        %v5905 = vld [vmem:[%s209 + $0x1110] sm:$0xff]
        %v5906 = vld [vmem:[%s209 + $0x1118] sm:$0xff]
        %v5907 = vld [vmem:[%s209 + $0x1120] sm:$0xff]
        %v5908 = vld [vmem:[%s209 + $0x1128] sm:$0xff]
        %v5909 = vld [vmem:[%s209 + $0x1130] sm:$0xff]
        %v5910 = vld [vmem:[%s209 + $0x1138] sm:$0xff]
        %v5911 = vld [vmem:[%s209 + $0x1140] sm:$0xff]
        %v5912 = vld [vmem:[%s209 + $0x1148] sm:$0xff]
        %v5913 = vld [vmem:[%s209 + $0x1150] sm:$0xff]
        %v5914 = vld [vmem:[%s209 + $0x1158] sm:$0xff]
        %v5915 = vld [vmem:[%s209 + $0x1160] sm:$0xff]
        %v5916 = vld [vmem:[%s209 + $0x1168] sm:$0xff]
        %v5917 = vld [vmem:[%s209 + $0x1170] sm:$0xff]
        %v5918 = vld [vmem:[%s209 + $0x1178] sm:$0xff]
        %v5919 = vld [vmem:[%s209 + $0x1180] sm:$0xff]
        %v5920 = vld [vmem:[%s209 + $0x1188] sm:$0xff]
        %vm5921 = vcmask 261120
        %5922 = vst.msk [vmem:[%s200] sm:$0xff] %vm5921, %v5359
        %5923 = vst.msk [vmem:[%s200 + $0x8] sm:$0xff] %vm5921, %v5360
        %5924 = vst.msk [vmem:[%s200 + $0x10] sm:$0xff] %vm5921, %v5361
        %5925 = vst.msk [vmem:[%s200 + $0x18] sm:$0xff] %vm5921, %v5362
        %5926 = vst.msk [vmem:[%s200 + $0x20] sm:$0xff] %vm5921, %v5363
        %5927 = vst.msk [vmem:[%s200 + $0x28] sm:$0xff] %vm5921, %v5364
        %5928 = vst.msk [vmem:[%s200 + $0x30] sm:$0xff] %vm5921, %v5365
        %5929 = vst.msk [vmem:[%s200 + $0x38] sm:$0xff] %vm5921, %v5366
        %5930 = vst.msk [vmem:[%s200 + $0x40] sm:$0xff] %vm5921, %v5367
        %5931 = vst.msk [vmem:[%s200 + $0x48] sm:$0xff] %vm5921, %v5368
        %5932 = vst.msk [vmem:[%s200 + $0x50] sm:$0xff] %vm5921, %v5369
        %5933 = vst.msk [vmem:[%s200 + $0x58] sm:$0xff] %vm5921, %v5370
        %5934 = vst.msk [vmem:[%s200 + $0x60] sm:$0xff] %vm5921, %v5371
        %5935 = vst.msk [vmem:[%s200 + $0x68] sm:$0xff] %vm5921, %v5372
        %5936 = vst.msk [vmem:[%s200 + $0x70] sm:$0xff] %vm5921, %v5373
        %5937 = vst.msk [vmem:[%s200 + $0x78] sm:$0xff] %vm5921, %v5374
        %5938 = vst.msk [vmem:[%s200 + $0x80] sm:$0xff] %vm5921, %v5375
        %5939 = vst.msk [vmem:[%s200 + $0x88] sm:$0xff] %vm5921, %v5376
        %5940 = vst.msk [vmem:[%s200 + $0x90] sm:$0xff] %vm5921, %v5377
        %5941 = vst.msk [vmem:[%s200 + $0x98] sm:$0xff] %vm5921, %v5378
        %5942 = vst.msk [vmem:[%s200 + $0xa0] sm:$0xff] %vm5921, %v5379
        %5943 = vst.msk [vmem:[%s200 + $0xa8] sm:$0xff] %vm5921, %v5380
        %5944 = vst.msk [vmem:[%s200 + $0xb0] sm:$0xff] %vm5921, %v5381
        %5945 = vst.msk [vmem:[%s200 + $0xb8] sm:$0xff] %vm5921, %v5382
        %5946 = vst.msk [vmem:[%s200 + $0xc0] sm:$0xff] %vm5921, %v5383
        %5947 = vst.msk [vmem:[%s200 + $0xc8] sm:$0xff] %vm5921, %v5384
        %5948 = vst.msk [vmem:[%s200 + $0xd0] sm:$0xff] %vm5921, %v5385
        %5949 = vst.msk [vmem:[%s200 + $0xd8] sm:$0xff] %vm5921, %v5386
        %5950 = vst.msk [vmem:[%s200 + $0xe0] sm:$0xff] %vm5921, %v5387
        %5951 = vst.msk [vmem:[%s200 + $0xe8] sm:$0xff] %vm5921, %v5388
        %5952 = vst.msk [vmem:[%s200 + $0xf0] sm:$0xff] %vm5921, %v5389
        %5953 = vst.msk [vmem:[%s200 + $0xf8] sm:$0xff] %vm5921, %v5390
        %5954 = vst.msk [vmem:[%s200 + $0x100] sm:$0xff] %vm5921, %v5391
        %5955 = vst.msk [vmem:[%s200 + $0x108] sm:$0xff] %vm5921, %v5392
        %5956 = vst.msk [vmem:[%s200 + $0x110] sm:$0xff] %vm5921, %v5393
        %5957 = vst.msk [vmem:[%s200 + $0x118] sm:$0xff] %vm5921, %v5394
        %5958 = vst.msk [vmem:[%s200 + $0x120] sm:$0xff] %vm5921, %v5395
        %5959 = vst.msk [vmem:[%s200 + $0x128] sm:$0xff] %vm5921, %v5396
        %5960 = vst.msk [vmem:[%s200 + $0x130] sm:$0xff] %vm5921, %v5397
        %5961 = vst.msk [vmem:[%s200 + $0x138] sm:$0xff] %vm5921, %v5398
        %5962 = vst.msk [vmem:[%s200 + $0x140] sm:$0xff] %vm5921, %v5399
        %5963 = vst.msk [vmem:[%s200 + $0x148] sm:$0xff] %vm5921, %v5400
        %5964 = vst.msk [vmem:[%s200 + $0x150] sm:$0xff] %vm5921, %v5401
        %5965 = vst.msk [vmem:[%s200 + $0x158] sm:$0xff] %vm5921, %v5402
        %5966 = vst.msk [vmem:[%s200 + $0x160] sm:$0xff] %vm5921, %v5403
        %5967 = vst.msk [vmem:[%s200 + $0x168] sm:$0xff] %vm5921, %v5404
        %5968 = vst.msk [vmem:[%s200 + $0x170] sm:$0xff] %vm5921, %v5405
        %5969 = vst.msk [vmem:[%s200 + $0x178] sm:$0xff] %vm5921, %v5406
        %5970 = vst.msk [vmem:[%s200 + $0x180] sm:$0xff] %vm5921, %v5407
        %5971 = vst.msk [vmem:[%s200 + $0x188] sm:$0xff] %vm5921, %v5408
        %5972 = vst.msk [vmem:[%s200 + $0x190] sm:$0xff] %vm5921, %v5409
        %5973 = vst.msk [vmem:[%s200 + $0x198] sm:$0xff] %vm5921, %v5410
        %5974 = vst.msk [vmem:[%s200 + $0x1a0] sm:$0xff] %vm5921, %v5411
        %5975 = vst.msk [vmem:[%s200 + $0x1a8] sm:$0xff] %vm5921, %v5412
        %5976 = vst.msk [vmem:[%s200 + $0x1b0] sm:$0xff] %vm5921, %v5413
        %5977 = vst.msk [vmem:[%s200 + $0x1b8] sm:$0xff] %vm5921, %v5414
        %5978 = vst.msk [vmem:[%s200 + $0x1c0] sm:$0xff] %vm5921, %v5415
        %5979 = vst.msk [vmem:[%s200 + $0x1c8] sm:$0xff] %vm5921, %v5416
        %5980 = vst.msk [vmem:[%s200 + $0x1d0] sm:$0xff] %vm5921, %v5417
        %5981 = vst.msk [vmem:[%s200 + $0x1d8] sm:$0xff] %vm5921, %v5418
        %5982 = vst.msk [vmem:[%s200 + $0x1e0] sm:$0xff] %vm5921, %v5419
        %5983 = vst.msk [vmem:[%s200 + $0x1e8] sm:$0xff] %vm5921, %v5420
        %5984 = vst.msk [vmem:[%s200 + $0x1f0] sm:$0xff] %vm5921, %v5421
        %5985 = vst.msk [vmem:[%s200 + $0x1f8] sm:$0xff] %vm5921, %v5422
        %5986 = vst.msk [vmem:[%s200 + $0x200] sm:$0xff] %vm5921, %v5423
        %5987 = vst.msk [vmem:[%s200 + $0x208] sm:$0xff] %vm5921, %v5424
        %5988 = vst.msk [vmem:[%s200 + $0x210] sm:$0xff] %vm5921, %v5425
        %5989 = vst.msk [vmem:[%s200 + $0x218] sm:$0xff] %vm5921, %v5426
        %5990 = vst.msk [vmem:[%s200 + $0x220] sm:$0xff] %vm5921, %v5427
        %5991 = vst.msk [vmem:[%s200 + $0x228] sm:$0xff] %vm5921, %v5428
        %5992 = vst.msk [vmem:[%s200 + $0x230] sm:$0xff] %vm5921, %v5429
        %5993 = vst.msk [vmem:[%s200 + $0x238] sm:$0xff] %vm5921, %v5430
        %5994 = vst.msk [vmem:[%s200 + $0x240] sm:$0xff] %vm5921, %v5431
        %5995 = vst.msk [vmem:[%s200 + $0x248] sm:$0xff] %vm5921, %v5432
        %5996 = vst.msk [vmem:[%s200 + $0x250] sm:$0xff] %vm5921, %v5433
        %5997 = vst.msk [vmem:[%s200 + $0x258] sm:$0xff] %vm5921, %v5434
        %5998 = vst.msk [vmem:[%s200 + $0x260] sm:$0xff] %vm5921, %v5435
        %5999 = vst.msk [vmem:[%s200 + $0x268] sm:$0xff] %vm5921, %v5436
        %6000 = vst.msk [vmem:[%s200 + $0x270] sm:$0xff] %vm5921, %v5437
        %6001 = vst.msk [vmem:[%s200 + $0x278] sm:$0xff] %vm5921, %v5438
        %6002 = vst.msk [vmem:[%s200 + $0x280] sm:$0xff] %vm5921, %v5439
        %6003 = vst.msk [vmem:[%s200 + $0x288] sm:$0xff] %vm5921, %v5440
        %6004 = vst.msk [vmem:[%s200 + $0x290] sm:$0xff] %vm5921, %v5441
        %6005 = vst.msk [vmem:[%s200 + $0x298] sm:$0xff] %vm5921, %v5442
        %6006 = vst.msk [vmem:[%s200 + $0x2a0] sm:$0xff] %vm5921, %v5443
        %6007 = vst.msk [vmem:[%s200 + $0x2a8] sm:$0xff] %vm5921, %v5444
        %6008 = vst.msk [vmem:[%s200 + $0x2b0] sm:$0xff] %vm5921, %v5445
        %6009 = vst.msk [vmem:[%s200 + $0x2b8] sm:$0xff] %vm5921, %v5446
        %6010 = vst.msk [vmem:[%s200 + $0x2c0] sm:$0xff] %vm5921, %v5447
        %6011 = vst.msk [vmem:[%s200 + $0x2c8] sm:$0xff] %vm5921, %v5448
        %6012 = vst.msk [vmem:[%s200 + $0x2d0] sm:$0xff] %vm5921, %v5449
        %6013 = vst.msk [vmem:[%s200 + $0x2d8] sm:$0xff] %vm5921, %v5450
        %6014 = vst.msk [vmem:[%s200 + $0x2e0] sm:$0xff] %vm5921, %v5451
        %6015 = vst.msk [vmem:[%s200 + $0x2e8] sm:$0xff] %vm5921, %v5452
        %6016 = vst.msk [vmem:[%s200 + $0x2f0] sm:$0xff] %vm5921, %v5453
        %6017 = vst.msk [vmem:[%s200 + $0x2f8] sm:$0xff] %vm5921, %v5454
        %6018 = vst.msk [vmem:[%s200 + $0x300] sm:$0xff] %vm5921, %v5455
        %6019 = vst.msk [vmem:[%s200 + $0x308] sm:$0xff] %vm5921, %v5456
        %6020 = vst.msk [vmem:[%s200 + $0x310] sm:$0xff] %vm5921, %v5457
        %6021 = vst.msk [vmem:[%s200 + $0x318] sm:$0xff] %vm5921, %v5458
        %6022 = vst.msk [vmem:[%s200 + $0x320] sm:$0xff] %vm5921, %v5459
        %6023 = vst.msk [vmem:[%s200 + $0x328] sm:$0xff] %vm5921, %v5460
        %6024 = vst.msk [vmem:[%s200 + $0x330] sm:$0xff] %vm5921, %v5461
        %6025 = vst.msk [vmem:[%s200 + $0x338] sm:$0xff] %vm5921, %v5462
        %6026 = vst.msk [vmem:[%s200 + $0x340] sm:$0xff] %vm5921, %v5463
        %6027 = vst.msk [vmem:[%s200 + $0x348] sm:$0xff] %vm5921, %v5464
        %6028 = vst.msk [vmem:[%s200 + $0x350] sm:$0xff] %vm5921, %v5465
        %6029 = vst.msk [vmem:[%s200 + $0x358] sm:$0xff] %vm5921, %v5466
        %6030 = vst.msk [vmem:[%s200 + $0x360] sm:$0xff] %vm5921, %v5467
        %6031 = vst.msk [vmem:[%s200 + $0x368] sm:$0xff] %vm5921, %v5468
        %6032 = vst.msk [vmem:[%s200 + $0x370] sm:$0xff] %vm5921, %v5469
        %6033 = vst.msk [vmem:[%s200 + $0x378] sm:$0xff] %vm5921, %v5470
        %6034 = vst.msk [vmem:[%s200 + $0x380] sm:$0xff] %vm5921, %v5471
        %6035 = vst.msk [vmem:[%s200 + $0x388] sm:$0xff] %vm5921, %v5472
        %6036 = vst.msk [vmem:[%s200 + $0x390] sm:$0xff] %vm5921, %v5473
        %6037 = vst.msk [vmem:[%s200 + $0x398] sm:$0xff] %vm5921, %v5474
        %6038 = vst.msk [vmem:[%s200 + $0x3a0] sm:$0xff] %vm5921, %v5475
        %6039 = vst.msk [vmem:[%s200 + $0x3a8] sm:$0xff] %vm5921, %v5476
        %6040 = vst.msk [vmem:[%s200 + $0x3b0] sm:$0xff] %vm5921, %v5477
        %6041 = vst.msk [vmem:[%s200 + $0x3b8] sm:$0xff] %vm5921, %v5478
        %6042 = vst.msk [vmem:[%s200 + $0x3c0] sm:$0xff] %vm5921, %v5479
        %6043 = vst.msk [vmem:[%s200 + $0x3c8] sm:$0xff] %vm5921, %v5480
        %6044 = vst.msk [vmem:[%s200 + $0x3d0] sm:$0xff] %vm5921, %v5481
        %6045 = vst.msk [vmem:[%s200 + $0x3d8] sm:$0xff] %vm5921, %v5482
        %6046 = vst.msk [vmem:[%s200 + $0x3e0] sm:$0xff] %vm5921, %v5483
        %6047 = vst.msk [vmem:[%s200 + $0x3e8] sm:$0xff] %vm5921, %v5484
        %6048 = vst.msk [vmem:[%s200 + $0x3f0] sm:$0xff] %vm5921, %v5485
        %6049 = vst.msk [vmem:[%s200 + $0x3f8] sm:$0xff] %vm5921, %v5486
        %6050 = vst.msk [vmem:[%s200 + $0x400] sm:$0xff] %vm5921, %v5487
        %6051 = vst.msk [vmem:[%s200 + $0x408] sm:$0xff] %vm5921, %v5488
        %6052 = vst.msk [vmem:[%s200 + $0x410] sm:$0xff] %vm5921, %v5489
        %6053 = vst.msk [vmem:[%s200 + $0x418] sm:$0xff] %vm5921, %v5490
        %6054 = vst.msk [vmem:[%s200 + $0x420] sm:$0xff] %vm5921, %v5491
        %6055 = vst.msk [vmem:[%s200 + $0x428] sm:$0xff] %vm5921, %v5492
        %6056 = vst.msk [vmem:[%s200 + $0x430] sm:$0xff] %vm5921, %v5493
        %6057 = vst.msk [vmem:[%s200 + $0x438] sm:$0xff] %vm5921, %v5494
        %6058 = vst.msk [vmem:[%s200 + $0x440] sm:$0xff] %vm5921, %v5495
        %6059 = vst.msk [vmem:[%s200 + $0x448] sm:$0xff] %vm5921, %v5496
        %6060 = vst.msk [vmem:[%s200 + $0x450] sm:$0xff] %vm5921, %v5497
        %6061 = vst.msk [vmem:[%s200 + $0x458] sm:$0xff] %vm5921, %v5498
        %6062 = vst.msk [vmem:[%s200 + $0x460] sm:$0xff] %vm5921, %v5499
        %6063 = vst.msk [vmem:[%s200 + $0x468] sm:$0xff] %vm5921, %v5500
        %6064 = vst.msk [vmem:[%s200 + $0x470] sm:$0xff] %vm5921, %v5501
        %6065 = vst.msk [vmem:[%s200 + $0x478] sm:$0xff] %vm5921, %v5502
        %6066 = vst.msk [vmem:[%s200 + $0x480] sm:$0xff] %vm5921, %v5503
        %6067 = vst.msk [vmem:[%s200 + $0x488] sm:$0xff] %vm5921, %v5504
        %6068 = vst.msk [vmem:[%s200 + $0x490] sm:$0xff] %vm5921, %v5505
        %6069 = vst.msk [vmem:[%s200 + $0x498] sm:$0xff] %vm5921, %v5506
        %6070 = vst.msk [vmem:[%s200 + $0x4a0] sm:$0xff] %vm5921, %v5507
        %6071 = vst.msk [vmem:[%s200 + $0x4a8] sm:$0xff] %vm5921, %v5508
        %6072 = vst.msk [vmem:[%s200 + $0x4b0] sm:$0xff] %vm5921, %v5509
        %6073 = vst.msk [vmem:[%s200 + $0x4b8] sm:$0xff] %vm5921, %v5510
        %6074 = vst.msk [vmem:[%s200 + $0x4c0] sm:$0xff] %vm5921, %v5511
        %6075 = vst.msk [vmem:[%s200 + $0x4c8] sm:$0xff] %vm5921, %v5512
        %6076 = vst.msk [vmem:[%s200 + $0x4d0] sm:$0xff] %vm5921, %v5513
        %6077 = vst.msk [vmem:[%s200 + $0x4d8] sm:$0xff] %vm5921, %v5514
        %6078 = vst.msk [vmem:[%s200 + $0x4e0] sm:$0xff] %vm5921, %v5515
        %6079 = vst.msk [vmem:[%s200 + $0x4e8] sm:$0xff] %vm5921, %v5516
        %6080 = vst.msk [vmem:[%s200 + $0x4f0] sm:$0xff] %vm5921, %v5517
        %6081 = vst.msk [vmem:[%s200 + $0x4f8] sm:$0xff] %vm5921, %v5518
        %6082 = vst.msk [vmem:[%s200 + $0x500] sm:$0xff] %vm5921, %v5519
        %6083 = vst.msk [vmem:[%s200 + $0x508] sm:$0xff] %vm5921, %v5520
        %6084 = vst.msk [vmem:[%s200 + $0x510] sm:$0xff] %vm5921, %v5521
        %6085 = vst.msk [vmem:[%s200 + $0x518] sm:$0xff] %vm5921, %v5522
        %6086 = vst.msk [vmem:[%s200 + $0x520] sm:$0xff] %vm5921, %v5523
        %6087 = vst.msk [vmem:[%s200 + $0x528] sm:$0xff] %vm5921, %v5524
        %6088 = vst.msk [vmem:[%s200 + $0x530] sm:$0xff] %vm5921, %v5525
        %6089 = vst.msk [vmem:[%s200 + $0x538] sm:$0xff] %vm5921, %v5526
        %6090 = vst.msk [vmem:[%s200 + $0x540] sm:$0xff] %vm5921, %v5527
        %6091 = vst.msk [vmem:[%s200 + $0x548] sm:$0xff] %vm5921, %v5528
        %6092 = vst.msk [vmem:[%s200 + $0x550] sm:$0xff] %vm5921, %v5529
        %6093 = vst.msk [vmem:[%s200 + $0x558] sm:$0xff] %vm5921, %v5530
        %6094 = vst.msk [vmem:[%s200 + $0x560] sm:$0xff] %vm5921, %v5531
        %6095 = vst.msk [vmem:[%s200 + $0x568] sm:$0xff] %vm5921, %v5532
        %6096 = vst.msk [vmem:[%s200 + $0x570] sm:$0xff] %vm5921, %v5533
        %6097 = vst.msk [vmem:[%s200 + $0x578] sm:$0xff] %vm5921, %v5534
        %6098 = vst.msk [vmem:[%s200 + $0x580] sm:$0xff] %vm5921, %v5535
        %6099 = vst.msk [vmem:[%s200 + $0x588] sm:$0xff] %vm5921, %v5536
        %6100 = vst.msk [vmem:[%s200 + $0x590] sm:$0xff] %vm5921, %v5537
        %6101 = vst.msk [vmem:[%s200 + $0x598] sm:$0xff] %vm5921, %v5538
        %6102 = vst.msk [vmem:[%s200 + $0x5a0] sm:$0xff] %vm5921, %v5539
        %6103 = vst.msk [vmem:[%s200 + $0x5a8] sm:$0xff] %vm5921, %v5540
        %6104 = vst.msk [vmem:[%s200 + $0x5b0] sm:$0xff] %vm5921, %v5541
        %6105 = vst.msk [vmem:[%s200 + $0x5b8] sm:$0xff] %vm5921, %v5542
        %6106 = vst.msk [vmem:[%s200 + $0x5c0] sm:$0xff] %vm5921, %v5543
        %6107 = vst.msk [vmem:[%s200 + $0x5c8] sm:$0xff] %vm5921, %v5544
        %6108 = vst.msk [vmem:[%s200 + $0x5d0] sm:$0xff] %vm5921, %v5545
        %6109 = vst.msk [vmem:[%s200 + $0x5d8] sm:$0xff] %vm5921, %v5546
        %6110 = vst.msk [vmem:[%s200 + $0x5e0] sm:$0xff] %vm5921, %v5547
        %6111 = vst.msk [vmem:[%s200 + $0x5e8] sm:$0xff] %vm5921, %v5548
        %6112 = vst.msk [vmem:[%s200 + $0x5f0] sm:$0xff] %vm5921, %v5549
        %6113 = vst.msk [vmem:[%s200 + $0x5f8] sm:$0xff] %vm5921, %v5550
        %6114 = vst.msk [vmem:[%s200 + $0x600] sm:$0xff] %vm5921, %v5551
        %6115 = vst.msk [vmem:[%s200 + $0x608] sm:$0xff] %vm5921, %v5552
        %6116 = vst.msk [vmem:[%s200 + $0x610] sm:$0xff] %vm5921, %v5553
        %6117 = vst.msk [vmem:[%s200 + $0x618] sm:$0xff] %vm5921, %v5554
        %6118 = vst.msk [vmem:[%s200 + $0x620] sm:$0xff] %vm5921, %v5555
        %6119 = vst.msk [vmem:[%s200 + $0x628] sm:$0xff] %vm5921, %v5556
        %6120 = vst.msk [vmem:[%s200 + $0x630] sm:$0xff] %vm5921, %v5557
        %6121 = vst.msk [vmem:[%s200 + $0x638] sm:$0xff] %vm5921, %v5558
        %6122 = vst.msk [vmem:[%s200 + $0x640] sm:$0xff] %vm5921, %v5559
        %6123 = vst.msk [vmem:[%s200 + $0x648] sm:$0xff] %vm5921, %v5560
        %6124 = vst.msk [vmem:[%s200 + $0x650] sm:$0xff] %vm5921, %v5561
        %6125 = vst.msk [vmem:[%s200 + $0x658] sm:$0xff] %vm5921, %v5562
        %6126 = vst.msk [vmem:[%s200 + $0x660] sm:$0xff] %vm5921, %v5563
        %6127 = vst.msk [vmem:[%s200 + $0x668] sm:$0xff] %vm5921, %v5564
        %6128 = vst.msk [vmem:[%s200 + $0x670] sm:$0xff] %vm5921, %v5565
        %6129 = vst.msk [vmem:[%s200 + $0x678] sm:$0xff] %vm5921, %v5566
        %6130 = vst.msk [vmem:[%s200 + $0x680] sm:$0xff] %vm5921, %v5567
        %6131 = vst.msk [vmem:[%s200 + $0x688] sm:$0xff] %vm5921, %v5568
        %6132 = vst.msk [vmem:[%s200 + $0x690] sm:$0xff] %vm5921, %v5569
        %6133 = vst.msk [vmem:[%s200 + $0x698] sm:$0xff] %vm5921, %v5570
        %6134 = vst.msk [vmem:[%s200 + $0x6a0] sm:$0xff] %vm5921, %v5571
        %6135 = vst.msk [vmem:[%s200 + $0x6a8] sm:$0xff] %vm5921, %v5572
        %6136 = vst.msk [vmem:[%s200 + $0x6b0] sm:$0xff] %vm5921, %v5573
        %6137 = vst.msk [vmem:[%s200 + $0x6b8] sm:$0xff] %vm5921, %v5574
        %6138 = vst.msk [vmem:[%s200 + $0x6c0] sm:$0xff] %vm5921, %v5575
        %6139 = vst.msk [vmem:[%s200 + $0x6c8] sm:$0xff] %vm5921, %v5576
        %6140 = vst.msk [vmem:[%s200 + $0x6d0] sm:$0xff] %vm5921, %v5577
        %6141 = vst.msk [vmem:[%s200 + $0x6d8] sm:$0xff] %vm5921, %v5578
        %6142 = vst.msk [vmem:[%s200 + $0x6e0] sm:$0xff] %vm5921, %v5579
        %6143 = vst.msk [vmem:[%s200 + $0x6e8] sm:$0xff] %vm5921, %v5580
        %6144 = vst.msk [vmem:[%s200 + $0x6f0] sm:$0xff] %vm5921, %v5581
        %6145 = vst.msk [vmem:[%s200 + $0x6f8] sm:$0xff] %vm5921, %v5582
        %6146 = vst.msk [vmem:[%s200 + $0x700] sm:$0xff] %vm5921, %v5583
        %6147 = vst.msk [vmem:[%s200 + $0x708] sm:$0xff] %vm5921, %v5584
        %6148 = vst.msk [vmem:[%s200 + $0x710] sm:$0xff] %vm5921, %v5585
        %6149 = vst.msk [vmem:[%s200 + $0x718] sm:$0xff] %vm5921, %v5586
        %6150 = vst.msk [vmem:[%s200 + $0x720] sm:$0xff] %vm5921, %v5587
        %6151 = vst.msk [vmem:[%s200 + $0x728] sm:$0xff] %vm5921, %v5588
        %6152 = vst.msk [vmem:[%s200 + $0x730] sm:$0xff] %vm5921, %v5589
        %6153 = vst.msk [vmem:[%s200 + $0x738] sm:$0xff] %vm5921, %v5590
        %6154 = vst.msk [vmem:[%s200 + $0x740] sm:$0xff] %vm5921, %v5591
        %6155 = vst.msk [vmem:[%s200 + $0x748] sm:$0xff] %vm5921, %v5592
        %6156 = vst.msk [vmem:[%s200 + $0x750] sm:$0xff] %vm5921, %v5593
        %6157 = vst.msk [vmem:[%s200 + $0x758] sm:$0xff] %vm5921, %v5594
        %6158 = vst.msk [vmem:[%s200 + $0x760] sm:$0xff] %vm5921, %v5595
        %6159 = vst.msk [vmem:[%s200 + $0x768] sm:$0xff] %vm5921, %v5596
        %6160 = vst.msk [vmem:[%s200 + $0x770] sm:$0xff] %vm5921, %v5597
        %6161 = vst.msk [vmem:[%s200 + $0x778] sm:$0xff] %vm5921, %v5598
        %6162 = vst.msk [vmem:[%s200 + $0x780] sm:$0xff] %vm5921, %v5599
        %6163 = vst.msk [vmem:[%s200 + $0x788] sm:$0xff] %vm5921, %v5600
        %6164 = vst.msk [vmem:[%s200 + $0x790] sm:$0xff] %vm5921, %v5601
        %6165 = vst.msk [vmem:[%s200 + $0x798] sm:$0xff] %vm5921, %v5602
        %6166 = vst.msk [vmem:[%s200 + $0x7a0] sm:$0xff] %vm5921, %v5603
        %6167 = vst.msk [vmem:[%s200 + $0x7a8] sm:$0xff] %vm5921, %v5604
        %6168 = vst.msk [vmem:[%s200 + $0x7b0] sm:$0xff] %vm5921, %v5605
        %6169 = vst.msk [vmem:[%s200 + $0x7b8] sm:$0xff] %vm5921, %v5606
        %6170 = vst.msk [vmem:[%s200 + $0x7c0] sm:$0xff] %vm5921, %v5607
        %6171 = vst.msk [vmem:[%s200 + $0x7c8] sm:$0xff] %vm5921, %v5608
        %6172 = vst.msk [vmem:[%s200 + $0x7d0] sm:$0xff] %vm5921, %v5609
        %6173 = vst.msk [vmem:[%s200 + $0x7d8] sm:$0xff] %vm5921, %v5610
        %6174 = vst.msk [vmem:[%s200 + $0x7e0] sm:$0xff] %vm5921, %v5611
        %6175 = vst.msk [vmem:[%s200 + $0x7e8] sm:$0xff] %vm5921, %v5612
        %6176 = vst.msk [vmem:[%s200 + $0x7f0] sm:$0xff] %vm5921, %v5613
        %6177 = vst.msk [vmem:[%s200 + $0x7f8] sm:$0xff] %vm5921, %v5614
        %6178 = vst.msk [vmem:[%s200 + $0x800] sm:$0xff] %vm5921, %v5615
        %6179 = vst.msk [vmem:[%s200 + $0x808] sm:$0xff] %vm5921, %v5616
        %6180 = vst.msk [vmem:[%s200 + $0x810] sm:$0xff] %vm5921, %v5617
        %6181 = vst.msk [vmem:[%s200 + $0x818] sm:$0xff] %vm5921, %v5618
        %6182 = vst.msk [vmem:[%s200 + $0x820] sm:$0xff] %vm5921, %v5619
        %6183 = vst.msk [vmem:[%s200 + $0x828] sm:$0xff] %vm5921, %v5620
        %6184 = vst.msk [vmem:[%s200 + $0x830] sm:$0xff] %vm5921, %v5621
        %6185 = vst.msk [vmem:[%s200 + $0x838] sm:$0xff] %vm5921, %v5622
        %6186 = vst.msk [vmem:[%s200 + $0x840] sm:$0xff] %vm5921, %v5623
        %6187 = vst.msk [vmem:[%s200 + $0x848] sm:$0xff] %vm5921, %v5624
        %6188 = vst.msk [vmem:[%s200 + $0x850] sm:$0xff] %vm5921, %v5625
        %6189 = vst.msk [vmem:[%s200 + $0x858] sm:$0xff] %vm5921, %v5626
        %6190 = vst.msk [vmem:[%s200 + $0x860] sm:$0xff] %vm5921, %v5627
        %6191 = vst.msk [vmem:[%s200 + $0x868] sm:$0xff] %vm5921, %v5628
        %6192 = vst.msk [vmem:[%s200 + $0x870] sm:$0xff] %vm5921, %v5629
        %6193 = vst.msk [vmem:[%s200 + $0x878] sm:$0xff] %vm5921, %v5630
        %6194 = vst.msk [vmem:[%s200 + $0x880] sm:$0xff] %vm5921, %v5631
        %6195 = vst.msk [vmem:[%s200 + $0x888] sm:$0xff] %vm5921, %v5632
        %6196 = vst.msk [vmem:[%s200 + $0x890] sm:$0xff] %vm5921, %v5633
        %6197 = vst.msk [vmem:[%s200 + $0x898] sm:$0xff] %vm5921, %v5634
        %6198 = vst.msk [vmem:[%s200 + $0x8a0] sm:$0xff] %vm5921, %v5635
        %6199 = vst.msk [vmem:[%s200 + $0x8a8] sm:$0xff] %vm5921, %v5636
        %6200 = vst.msk [vmem:[%s200 + $0x8b0] sm:$0xff] %vm5921, %v5637
        %6201 = vst.msk [vmem:[%s200 + $0x8b8] sm:$0xff] %vm5921, %v5638
        %6202 = vst.msk [vmem:[%s200 + $0x8c0] sm:$0xff] %vm5921, %v5639
        %6203 = vst.msk [vmem:[%s200 + $0x8c8] sm:$0xff] %vm5921, %v5640
        %6204 = vst.msk [vmem:[%s200 + $0x8d0] sm:$0xff] %vm5921, %v5641
        %6205 = vst.msk [vmem:[%s200 + $0x8d8] sm:$0xff] %vm5921, %v5642
        %6206 = vst.msk [vmem:[%s200 + $0x8e0] sm:$0xff] %vm5921, %v5643
        %6207 = vst.msk [vmem:[%s200 + $0x8e8] sm:$0xff] %vm5921, %v5644
        %6208 = vst.msk [vmem:[%s200 + $0x8f0] sm:$0xff] %vm5921, %v5645
        %6209 = vst.msk [vmem:[%s200 + $0x8f8] sm:$0xff] %vm5921, %v5646
        %6210 = vst.msk [vmem:[%s200 + $0x900] sm:$0xff] %vm5921, %v5647
        %6211 = vst.msk [vmem:[%s200 + $0x908] sm:$0xff] %vm5921, %v5648
        %6212 = vst.msk [vmem:[%s200 + $0x910] sm:$0xff] %vm5921, %v5649
        %6213 = vst.msk [vmem:[%s200 + $0x918] sm:$0xff] %vm5921, %v5650
        %6214 = vst.msk [vmem:[%s200 + $0x920] sm:$0xff] %vm5921, %v5651
        %6215 = vst.msk [vmem:[%s200 + $0x928] sm:$0xff] %vm5921, %v5652
        %6216 = vst.msk [vmem:[%s200 + $0x930] sm:$0xff] %vm5921, %v5653
        %6217 = vst.msk [vmem:[%s200 + $0x938] sm:$0xff] %vm5921, %v5654
        %6218 = vst.msk [vmem:[%s200 + $0x940] sm:$0xff] %vm5921, %v5655
        %6219 = vst.msk [vmem:[%s200 + $0x948] sm:$0xff] %vm5921, %v5656
        %6220 = vst.msk [vmem:[%s200 + $0x950] sm:$0xff] %vm5921, %v5657
        %6221 = vst.msk [vmem:[%s200 + $0x958] sm:$0xff] %vm5921, %v5658
        %6222 = vst.msk [vmem:[%s200 + $0x960] sm:$0xff] %vm5921, %v5659
        %6223 = vst.msk [vmem:[%s200 + $0x968] sm:$0xff] %vm5921, %v5660
        %6224 = vst.msk [vmem:[%s200 + $0x970] sm:$0xff] %vm5921, %v5661
        %6225 = vst.msk [vmem:[%s200 + $0x978] sm:$0xff] %vm5921, %v5662
        %6226 = vst.msk [vmem:[%s200 + $0x980] sm:$0xff] %vm5921, %v5663
        %6227 = vst.msk [vmem:[%s200 + $0x988] sm:$0xff] %vm5921, %v5664
        %6228 = vst.msk [vmem:[%s200 + $0x990] sm:$0xff] %vm5921, %v5665
        %6229 = vst.msk [vmem:[%s200 + $0x998] sm:$0xff] %vm5921, %v5666
        %6230 = vst.msk [vmem:[%s200 + $0x9a0] sm:$0xff] %vm5921, %v5667
        %6231 = vst.msk [vmem:[%s200 + $0x9a8] sm:$0xff] %vm5921, %v5668
        %6232 = vst.msk [vmem:[%s200 + $0x9b0] sm:$0xff] %vm5921, %v5669
        %6233 = vst.msk [vmem:[%s200 + $0x9b8] sm:$0xff] %vm5921, %v5670
        %6234 = vst.msk [vmem:[%s200 + $0x9c0] sm:$0xff] %vm5921, %v5671
        %6235 = vst.msk [vmem:[%s200 + $0x9c8] sm:$0xff] %vm5921, %v5672
        %6236 = vst.msk [vmem:[%s200 + $0x9d0] sm:$0xff] %vm5921, %v5673
        %6237 = vst.msk [vmem:[%s200 + $0x9d8] sm:$0xff] %vm5921, %v5674
        %6238 = vst.msk [vmem:[%s200 + $0x9e0] sm:$0xff] %vm5921, %v5675
        %6239 = vst.msk [vmem:[%s200 + $0x9e8] sm:$0xff] %vm5921, %v5676
        %6240 = vst.msk [vmem:[%s200 + $0x9f0] sm:$0xff] %vm5921, %v5677
        %6241 = vst.msk [vmem:[%s200 + $0x9f8] sm:$0xff] %vm5921, %v5678
        %6242 = vst.msk [vmem:[%s200 + $0xa00] sm:$0xff] %vm5921, %v5679
        %6243 = vst.msk [vmem:[%s200 + $0xa08] sm:$0xff] %vm5921, %v5680
        %6244 = vst.msk [vmem:[%s200 + $0xa10] sm:$0xff] %vm5921, %v5681
        %6245 = vst.msk [vmem:[%s200 + $0xa18] sm:$0xff] %vm5921, %v5682
        %6246 = vst.msk [vmem:[%s200 + $0xa20] sm:$0xff] %vm5921, %v5683
        %6247 = vst.msk [vmem:[%s200 + $0xa28] sm:$0xff] %vm5921, %v5684
        %6248 = vst.msk [vmem:[%s200 + $0xa30] sm:$0xff] %vm5921, %v5685
        %6249 = vst.msk [vmem:[%s200 + $0xa38] sm:$0xff] %vm5921, %v5686
        %6250 = vst.msk [vmem:[%s200 + $0xa40] sm:$0xff] %vm5921, %v5687
        %6251 = vst.msk [vmem:[%s200 + $0xa48] sm:$0xff] %vm5921, %v5688
        %6252 = vst.msk [vmem:[%s200 + $0xa50] sm:$0xff] %vm5921, %v5689
        %6253 = vst.msk [vmem:[%s200 + $0xa58] sm:$0xff] %vm5921, %v5690
        %6254 = vst.msk [vmem:[%s200 + $0xa60] sm:$0xff] %vm5921, %v5691
        %6255 = vst.msk [vmem:[%s200 + $0xa68] sm:$0xff] %vm5921, %v5692
        %6256 = vst.msk [vmem:[%s200 + $0xa70] sm:$0xff] %vm5921, %v5693
        %6257 = vst.msk [vmem:[%s200 + $0xa78] sm:$0xff] %vm5921, %v5694
        %6258 = vst.msk [vmem:[%s200 + $0xa80] sm:$0xff] %vm5921, %v5695
        %6259 = vst.msk [vmem:[%s200 + $0xa88] sm:$0xff] %vm5921, %v5696
        %6260 = vst.msk [vmem:[%s200 + $0xa90] sm:$0xff] %vm5921, %v5697
        %6261 = vst.msk [vmem:[%s200 + $0xa98] sm:$0xff] %vm5921, %v5698
        %6262 = vst.msk [vmem:[%s200 + $0xaa0] sm:$0xff] %vm5921, %v5699
        %6263 = vst.msk [vmem:[%s200 + $0xaa8] sm:$0xff] %vm5921, %v5700
        %6264 = vst.msk [vmem:[%s200 + $0xab0] sm:$0xff] %vm5921, %v5701
        %6265 = vst.msk [vmem:[%s200 + $0xab8] sm:$0xff] %vm5921, %v5702
        %6266 = vst.msk [vmem:[%s200 + $0xac0] sm:$0xff] %vm5921, %v5703
        %6267 = vst.msk [vmem:[%s200 + $0xac8] sm:$0xff] %vm5921, %v5704
        %6268 = vst.msk [vmem:[%s200 + $0xad0] sm:$0xff] %vm5921, %v5705
        %6269 = vst.msk [vmem:[%s200 + $0xad8] sm:$0xff] %vm5921, %v5706
        %6270 = vst.msk [vmem:[%s200 + $0xae0] sm:$0xff] %vm5921, %v5707
        %6271 = vst.msk [vmem:[%s200 + $0xae8] sm:$0xff] %vm5921, %v5708
        %6272 = vst.msk [vmem:[%s200 + $0xaf0] sm:$0xff] %vm5921, %v5709
        %6273 = vst.msk [vmem:[%s200 + $0xaf8] sm:$0xff] %vm5921, %v5710
        %6274 = vst.msk [vmem:[%s200 + $0xb00] sm:$0xff] %vm5921, %v5711
        %6275 = vst.msk [vmem:[%s200 + $0xb08] sm:$0xff] %vm5921, %v5712
        %6276 = vst.msk [vmem:[%s200 + $0xb10] sm:$0xff] %vm5921, %v5713
        %6277 = vst.msk [vmem:[%s200 + $0xb18] sm:$0xff] %vm5921, %v5714
        %6278 = vst.msk [vmem:[%s200 + $0xb20] sm:$0xff] %vm5921, %v5715
        %6279 = vst.msk [vmem:[%s200 + $0xb28] sm:$0xff] %vm5921, %v5716
        %6280 = vst.msk [vmem:[%s200 + $0xb30] sm:$0xff] %vm5921, %v5717
        %6281 = vst.msk [vmem:[%s200 + $0xb38] sm:$0xff] %vm5921, %v5718
        %6282 = vst.msk [vmem:[%s200 + $0xb40] sm:$0xff] %vm5921, %v5719
        %6283 = vst.msk [vmem:[%s200 + $0xb48] sm:$0xff] %vm5921, %v5720
        %6284 = vst.msk [vmem:[%s200 + $0xb50] sm:$0xff] %vm5921, %v5721
        %6285 = vst.msk [vmem:[%s200 + $0xb58] sm:$0xff] %vm5921, %v5722
        %6286 = vst.msk [vmem:[%s200 + $0xb60] sm:$0xff] %vm5921, %v5723
        %6287 = vst.msk [vmem:[%s200 + $0xb68] sm:$0xff] %vm5921, %v5724
        %6288 = vst.msk [vmem:[%s200 + $0xb70] sm:$0xff] %vm5921, %v5725
        %6289 = vst.msk [vmem:[%s200 + $0xb78] sm:$0xff] %vm5921, %v5726
        %6290 = vst.msk [vmem:[%s200 + $0xb80] sm:$0xff] %vm5921, %v5727
        %6291 = vst.msk [vmem:[%s200 + $0xb88] sm:$0xff] %vm5921, %v5728
        %6292 = vst.msk [vmem:[%s200 + $0xb90] sm:$0xff] %vm5921, %v5729
        %6293 = vst.msk [vmem:[%s200 + $0xb98] sm:$0xff] %vm5921, %v5730
        %6294 = vst.msk [vmem:[%s200 + $0xba0] sm:$0xff] %vm5921, %v5731
        %6295 = vst.msk [vmem:[%s200 + $0xba8] sm:$0xff] %vm5921, %v5732
        %6296 = vst.msk [vmem:[%s200 + $0xbb0] sm:$0xff] %vm5921, %v5733
        %6297 = vst.msk [vmem:[%s200 + $0xbb8] sm:$0xff] %vm5921, %v5734
        %6298 = vst.msk [vmem:[%s200 + $0xbc0] sm:$0xff] %vm5921, %v5735
        %6299 = vst.msk [vmem:[%s200 + $0xbc8] sm:$0xff] %vm5921, %v5736
        %6300 = vst.msk [vmem:[%s200 + $0xbd0] sm:$0xff] %vm5921, %v5737
        %6301 = vst.msk [vmem:[%s200 + $0xbd8] sm:$0xff] %vm5921, %v5738
        %6302 = vst.msk [vmem:[%s200 + $0xbe0] sm:$0xff] %vm5921, %v5739
        %6303 = vst.msk [vmem:[%s200 + $0xbe8] sm:$0xff] %vm5921, %v5740
        %6304 = vst.msk [vmem:[%s200 + $0xbf0] sm:$0xff] %vm5921, %v5741
        %6305 = vst.msk [vmem:[%s200 + $0xbf8] sm:$0xff] %vm5921, %v5742
        %6306 = vst.msk [vmem:[%s200 + $0xc00] sm:$0xff] %vm5921, %v5743
        %6307 = vst.msk [vmem:[%s200 + $0xc08] sm:$0xff] %vm5921, %v5744
        %6308 = vst.msk [vmem:[%s200 + $0xc10] sm:$0xff] %vm5921, %v5745
        %6309 = vst.msk [vmem:[%s200 + $0xc18] sm:$0xff] %vm5921, %v5746
        %6310 = vst.msk [vmem:[%s200 + $0xc20] sm:$0xff] %vm5921, %v5747
        %6311 = vst.msk [vmem:[%s200 + $0xc28] sm:$0xff] %vm5921, %v5748
        %6312 = vst.msk [vmem:[%s200 + $0xc30] sm:$0xff] %vm5921, %v5749
        %6313 = vst.msk [vmem:[%s200 + $0xc38] sm:$0xff] %vm5921, %v5750
        %6314 = vst.msk [vmem:[%s200 + $0xc40] sm:$0xff] %vm5921, %v5751
        %6315 = vst.msk [vmem:[%s200 + $0xc48] sm:$0xff] %vm5921, %v5752
        %6316 = vst.msk [vmem:[%s200 + $0xc50] sm:$0xff] %vm5921, %v5753
        %6317 = vst.msk [vmem:[%s200 + $0xc58] sm:$0xff] %vm5921, %v5754
        %6318 = vst.msk [vmem:[%s200 + $0xc60] sm:$0xff] %vm5921, %v5755
        %6319 = vst.msk [vmem:[%s200 + $0xc68] sm:$0xff] %vm5921, %v5756
        %6320 = vst.msk [vmem:[%s200 + $0xc70] sm:$0xff] %vm5921, %v5757
        %6321 = vst.msk [vmem:[%s200 + $0xc78] sm:$0xff] %vm5921, %v5758
        %6322 = vst.msk [vmem:[%s200 + $0xc80] sm:$0xff] %vm5921, %v5759
        %6323 = vst.msk [vmem:[%s200 + $0xc88] sm:$0xff] %vm5921, %v5760
        %6324 = vst.msk [vmem:[%s200 + $0xc90] sm:$0xff] %vm5921, %v5761
        %6325 = vst.msk [vmem:[%s200 + $0xc98] sm:$0xff] %vm5921, %v5762
        %6326 = vst.msk [vmem:[%s200 + $0xca0] sm:$0xff] %vm5921, %v5763
        %6327 = vst.msk [vmem:[%s200 + $0xca8] sm:$0xff] %vm5921, %v5764
        %6328 = vst.msk [vmem:[%s200 + $0xcb0] sm:$0xff] %vm5921, %v5765
        %6329 = vst.msk [vmem:[%s200 + $0xcb8] sm:$0xff] %vm5921, %v5766
        %6330 = vst.msk [vmem:[%s200 + $0xcc0] sm:$0xff] %vm5921, %v5767
        %6331 = vst.msk [vmem:[%s200 + $0xcc8] sm:$0xff] %vm5921, %v5768
        %6332 = vst.msk [vmem:[%s200 + $0xcd0] sm:$0xff] %vm5921, %v5769
        %6333 = vst.msk [vmem:[%s200 + $0xcd8] sm:$0xff] %vm5921, %v5770
        %6334 = vst.msk [vmem:[%s200 + $0xce0] sm:$0xff] %vm5921, %v5771
        %6335 = vst.msk [vmem:[%s200 + $0xce8] sm:$0xff] %vm5921, %v5772
        %6336 = vst.msk [vmem:[%s200 + $0xcf0] sm:$0xff] %vm5921, %v5773
        %6337 = vst.msk [vmem:[%s200 + $0xcf8] sm:$0xff] %vm5921, %v5774
        %6338 = vst.msk [vmem:[%s200 + $0xd00] sm:$0xff] %vm5921, %v5775
        %6339 = vst.msk [vmem:[%s200 + $0xd08] sm:$0xff] %vm5921, %v5776
        %6340 = vst.msk [vmem:[%s200 + $0xd10] sm:$0xff] %vm5921, %v5777
        %6341 = vst.msk [vmem:[%s200 + $0xd18] sm:$0xff] %vm5921, %v5778
        %6342 = vst.msk [vmem:[%s200 + $0xd20] sm:$0xff] %vm5921, %v5779
        %6343 = vst.msk [vmem:[%s200 + $0xd28] sm:$0xff] %vm5921, %v5780
        %6344 = vst.msk [vmem:[%s200 + $0xd30] sm:$0xff] %vm5921, %v5781
        %6345 = vst.msk [vmem:[%s200 + $0xd38] sm:$0xff] %vm5921, %v5782
        %6346 = vst.msk [vmem:[%s200 + $0xd40] sm:$0xff] %vm5921, %v5783
        %6347 = vst.msk [vmem:[%s200 + $0xd48] sm:$0xff] %vm5921, %v5784
        %6348 = vst.msk [vmem:[%s200 + $0xd50] sm:$0xff] %vm5921, %v5785
        %6349 = vst.msk [vmem:[%s200 + $0xd58] sm:$0xff] %vm5921, %v5786
        %6350 = vst.msk [vmem:[%s200 + $0xd60] sm:$0xff] %vm5921, %v5787
        %6351 = vst.msk [vmem:[%s200 + $0xd68] sm:$0xff] %vm5921, %v5788
        %6352 = vst.msk [vmem:[%s200 + $0xd70] sm:$0xff] %vm5921, %v5789
        %6353 = vst.msk [vmem:[%s200 + $0xd78] sm:$0xff] %vm5921, %v5790
        %6354 = vst.msk [vmem:[%s200 + $0xd80] sm:$0xff] %vm5921, %v5791
        %6355 = vst.msk [vmem:[%s200 + $0xd88] sm:$0xff] %vm5921, %v5792
        %6356 = vst.msk [vmem:[%s200 + $0xd90] sm:$0xff] %vm5921, %v5793
        %6357 = vst.msk [vmem:[%s200 + $0xd98] sm:$0xff] %vm5921, %v5794
        %6358 = vst.msk [vmem:[%s200 + $0xda0] sm:$0xff] %vm5921, %v5795
        %6359 = vst.msk [vmem:[%s200 + $0xda8] sm:$0xff] %vm5921, %v5796
        %6360 = vst.msk [vmem:[%s200 + $0xdb0] sm:$0xff] %vm5921, %v5797
        %6361 = vst.msk [vmem:[%s200 + $0xdb8] sm:$0xff] %vm5921, %v5798
        %6362 = vst.msk [vmem:[%s200 + $0xdc0] sm:$0xff] %vm5921, %v5799
        %6363 = vst.msk [vmem:[%s200 + $0xdc8] sm:$0xff] %vm5921, %v5800
        %6364 = vst.msk [vmem:[%s200 + $0xdd0] sm:$0xff] %vm5921, %v5801
        %6365 = vst.msk [vmem:[%s200 + $0xdd8] sm:$0xff] %vm5921, %v5802
        %6366 = vst.msk [vmem:[%s200 + $0xde0] sm:$0xff] %vm5921, %v5803
        %6367 = vst.msk [vmem:[%s200 + $0xde8] sm:$0xff] %vm5921, %v5804
        %6368 = vst.msk [vmem:[%s200 + $0xdf0] sm:$0xff] %vm5921, %v5805
        %6369 = vst.msk [vmem:[%s200 + $0xdf8] sm:$0xff] %vm5921, %v5806
        %6370 = vst.msk [vmem:[%s200 + $0xe00] sm:$0xff] %vm5921, %v5807
        %6371 = vst.msk [vmem:[%s200 + $0xe08] sm:$0xff] %vm5921, %v5808
        %6372 = vst.msk [vmem:[%s200 + $0xe10] sm:$0xff] %vm5921, %v5809
        %6373 = vst.msk [vmem:[%s200 + $0xe18] sm:$0xff] %vm5921, %v5810
        %6374 = vst.msk [vmem:[%s200 + $0xe20] sm:$0xff] %vm5921, %v5811
        %6375 = vst.msk [vmem:[%s200 + $0xe28] sm:$0xff] %vm5921, %v5812
        %6376 = vst.msk [vmem:[%s200 + $0xe30] sm:$0xff] %vm5921, %v5813
        %6377 = vst.msk [vmem:[%s200 + $0xe38] sm:$0xff] %vm5921, %v5814
        %6378 = vst.msk [vmem:[%s200 + $0xe40] sm:$0xff] %vm5921, %v5815
        %6379 = vst.msk [vmem:[%s200 + $0xe48] sm:$0xff] %vm5921, %v5816
        %6380 = vst.msk [vmem:[%s200 + $0xe50] sm:$0xff] %vm5921, %v5817
        %6381 = vst.msk [vmem:[%s200 + $0xe58] sm:$0xff] %vm5921, %v5818
        %6382 = vst.msk [vmem:[%s200 + $0xe60] sm:$0xff] %vm5921, %v5819
        %6383 = vst.msk [vmem:[%s200 + $0xe68] sm:$0xff] %vm5921, %v5820
        %6384 = vst.msk [vmem:[%s200 + $0xe70] sm:$0xff] %vm5921, %v5821
        %6385 = vst.msk [vmem:[%s200 + $0xe78] sm:$0xff] %vm5921, %v5822
        %6386 = vst.msk [vmem:[%s200 + $0xe80] sm:$0xff] %vm5921, %v5823
        %6387 = vst.msk [vmem:[%s200 + $0xe88] sm:$0xff] %vm5921, %v5824
        %6388 = vst.msk [vmem:[%s200 + $0xe90] sm:$0xff] %vm5921, %v5825
        %6389 = vst.msk [vmem:[%s200 + $0xe98] sm:$0xff] %vm5921, %v5826
        %6390 = vst.msk [vmem:[%s200 + $0xea0] sm:$0xff] %vm5921, %v5827
        %6391 = vst.msk [vmem:[%s200 + $0xea8] sm:$0xff] %vm5921, %v5828
        %6392 = vst.msk [vmem:[%s200 + $0xeb0] sm:$0xff] %vm5921, %v5829
        %6393 = vst.msk [vmem:[%s200 + $0xeb8] sm:$0xff] %vm5921, %v5830
        %6394 = vst.msk [vmem:[%s200 + $0xec0] sm:$0xff] %vm5921, %v5831
        %6395 = vst.msk [vmem:[%s200 + $0xec8] sm:$0xff] %vm5921, %v5832
        %6396 = vst.msk [vmem:[%s200 + $0xed0] sm:$0xff] %vm5921, %v5833
        %6397 = vst.msk [vmem:[%s200 + $0xed8] sm:$0xff] %vm5921, %v5834
        %6398 = vst.msk [vmem:[%s200 + $0xee0] sm:$0xff] %vm5921, %v5835
        %6399 = vst.msk [vmem:[%s200 + $0xee8] sm:$0xff] %vm5921, %v5836
        %6400 = vst.msk [vmem:[%s200 + $0xef0] sm:$0xff] %vm5921, %v5837
        %6401 = vst.msk [vmem:[%s200 + $0xef8] sm:$0xff] %vm5921, %v5838
        %6402 = vst.msk [vmem:[%s200 + $0xf00] sm:$0xff] %vm5921, %v5839
        %6403 = vst.msk [vmem:[%s200 + $0xf08] sm:$0xff] %vm5921, %v5840
        %6404 = vst.msk [vmem:[%s200 + $0xf10] sm:$0xff] %vm5921, %v5841
        %6405 = vst.msk [vmem:[%s200 + $0xf18] sm:$0xff] %vm5921, %v5842
        %6406 = vst.msk [vmem:[%s200 + $0xf20] sm:$0xff] %vm5921, %v5843
        %6407 = vst.msk [vmem:[%s200 + $0xf28] sm:$0xff] %vm5921, %v5844
        %6408 = vst.msk [vmem:[%s200 + $0xf30] sm:$0xff] %vm5921, %v5845
        %6409 = vst.msk [vmem:[%s200 + $0xf38] sm:$0xff] %vm5921, %v5846
        %6410 = vst.msk [vmem:[%s200 + $0xf40] sm:$0xff] %vm5921, %v5847
        %6411 = vst.msk [vmem:[%s200 + $0xf48] sm:$0xff] %vm5921, %v5848
        %6412 = vst.msk [vmem:[%s200 + $0xf50] sm:$0xff] %vm5921, %v5849
        %6413 = vst.msk [vmem:[%s200 + $0xf58] sm:$0xff] %vm5921, %v5850
        %6414 = vst.msk [vmem:[%s200 + $0xf60] sm:$0xff] %vm5921, %v5851
        %6415 = vst.msk [vmem:[%s200 + $0xf68] sm:$0xff] %vm5921, %v5852
        %6416 = vst.msk [vmem:[%s200 + $0xf70] sm:$0xff] %vm5921, %v5853
        %6417 = vst.msk [vmem:[%s200 + $0xf78] sm:$0xff] %vm5921, %v5854
        %6418 = vst.msk [vmem:[%s200 + $0xf80] sm:$0xff] %vm5921, %v5855
        %6419 = vst.msk [vmem:[%s200 + $0xf88] sm:$0xff] %vm5921, %v5856
        %6420 = vst.msk [vmem:[%s200 + $0xf90] sm:$0xff] %vm5921, %v5857
        %6421 = vst.msk [vmem:[%s200 + $0xf98] sm:$0xff] %vm5921, %v5858
        %6422 = vst.msk [vmem:[%s200 + $0xfa0] sm:$0xff] %vm5921, %v5859
        %6423 = vst.msk [vmem:[%s200 + $0xfa8] sm:$0xff] %vm5921, %v5860
        %6424 = vst.msk [vmem:[%s200 + $0xfb0] sm:$0xff] %vm5921, %v5861
        %6425 = vst.msk [vmem:[%s200 + $0xfb8] sm:$0xff] %vm5921, %v5862
        %6426 = vst.msk [vmem:[%s200 + $0xfc0] sm:$0xff] %vm5921, %v5863
        %6427 = vst.msk [vmem:[%s200 + $0xfc8] sm:$0xff] %vm5921, %v5864
        %6428 = vst.msk [vmem:[%s200 + $0xfd0] sm:$0xff] %vm5921, %v5865
        %6429 = vst.msk [vmem:[%s200 + $0xfd8] sm:$0xff] %vm5921, %v5866
        %6430 = vst.msk [vmem:[%s200 + $0xfe0] sm:$0xff] %vm5921, %v5867
        %6431 = vst.msk [vmem:[%s200 + $0xfe8] sm:$0xff] %vm5921, %v5868
        %6432 = vst.msk [vmem:[%s200 + $0xff0] sm:$0xff] %vm5921, %v5869
        %6433 = vst.msk [vmem:[%s200 + $0xff8] sm:$0xff] %vm5921, %v5870
        %6434 = vst.msk [vmem:[%s200 + $0x1000] sm:$0xff] %vm5921, %v5871
        %6435 = vst.msk [vmem:[%s200 + $0x1008] sm:$0xff] %vm5921, %v5872
        %6436 = vst.msk [vmem:[%s200 + $0x1010] sm:$0xff] %vm5921, %v5873
        %6437 = vst.msk [vmem:[%s200 + $0x1018] sm:$0xff] %vm5921, %v5874
        %6438 = vst.msk [vmem:[%s200 + $0x1020] sm:$0xff] %vm5921, %v5875
        %6439 = vst.msk [vmem:[%s200 + $0x1028] sm:$0xff] %vm5921, %v5876
        %6440 = vst.msk [vmem:[%s200 + $0x1030] sm:$0xff] %vm5921, %v5877
        %6441 = vst.msk [vmem:[%s200 + $0x1038] sm:$0xff] %vm5921, %v5878
        %6442 = vst.msk [vmem:[%s200 + $0x1040] sm:$0xff] %vm5921, %v5879
        %6443 = vst.msk [vmem:[%s200 + $0x1048] sm:$0xff] %vm5921, %v5880
        %6444 = vst.msk [vmem:[%s200 + $0x1050] sm:$0xff] %vm5921, %v5881
        %6445 = vst.msk [vmem:[%s200 + $0x1058] sm:$0xff] %vm5921, %v5882
        %6446 = vst.msk [vmem:[%s200 + $0x1060] sm:$0xff] %vm5921, %v5883
        %6447 = vst.msk [vmem:[%s200 + $0x1068] sm:$0xff] %vm5921, %v5884
        %6448 = vst.msk [vmem:[%s200 + $0x1070] sm:$0xff] %vm5921, %v5885
        %6449 = vst.msk [vmem:[%s200 + $0x1078] sm:$0xff] %vm5921, %v5886
        %6450 = vst.msk [vmem:[%s200 + $0x1080] sm:$0xff] %vm5921, %v5887
        %6451 = vst.msk [vmem:[%s200 + $0x1088] sm:$0xff] %vm5921, %v5888
        %6452 = vst.msk [vmem:[%s200 + $0x1090] sm:$0xff] %vm5921, %v5889
        %6453 = vst.msk [vmem:[%s200 + $0x1098] sm:$0xff] %vm5921, %v5890
        %6454 = vst.msk [vmem:[%s200 + $0x10a0] sm:$0xff] %vm5921, %v5891
        %6455 = vst.msk [vmem:[%s200 + $0x10a8] sm:$0xff] %vm5921, %v5892
        %6456 = vst.msk [vmem:[%s200 + $0x10b0] sm:$0xff] %vm5921, %v5893
        %6457 = vst.msk [vmem:[%s200 + $0x10b8] sm:$0xff] %vm5921, %v5894
        %6458 = vst.msk [vmem:[%s200 + $0x10c0] sm:$0xff] %vm5921, %v5895
        %6459 = vst.msk [vmem:[%s200 + $0x10c8] sm:$0xff] %vm5921, %v5896
        %6460 = vst.msk [vmem:[%s200 + $0x10d0] sm:$0xff] %vm5921, %v5897
        %6461 = vst.msk [vmem:[%s200 + $0x10d8] sm:$0xff] %vm5921, %v5898
        %6462 = vst.msk [vmem:[%s200 + $0x10e0] sm:$0xff] %vm5921, %v5899
        %6463 = vst.msk [vmem:[%s200 + $0x10e8] sm:$0xff] %vm5921, %v5900
        %6464 = vst.msk [vmem:[%s200 + $0x10f0] sm:$0xff] %vm5921, %v5901
        %6465 = vst.msk [vmem:[%s200 + $0x10f8] sm:$0xff] %vm5921, %v5902
        %6466 = vst.msk [vmem:[%s200 + $0x1100] sm:$0xff] %vm5921, %v5903
        %6467 = vst.msk [vmem:[%s200 + $0x1108] sm:$0xff] %vm5921, %v5904
        %6468 = vst.msk [vmem:[%s200 + $0x1110] sm:$0xff] %vm5921, %v5905
        %6469 = vst.msk [vmem:[%s200 + $0x1118] sm:$0xff] %vm5921, %v5906
        %6470 = vst.msk [vmem:[%s200 + $0x1120] sm:$0xff] %vm5921, %v5907
        %6471 = vst.msk [vmem:[%s200 + $0x1128] sm:$0xff] %vm5921, %v5908
        %6472 = vst.msk [vmem:[%s200 + $0x1130] sm:$0xff] %vm5921, %v5909
        %6473 = vst.msk [vmem:[%s200 + $0x1138] sm:$0xff] %vm5921, %v5910
        %6474 = vst.msk [vmem:[%s200 + $0x1140] sm:$0xff] %vm5921, %v5911
        %6475 = vst.msk [vmem:[%s200 + $0x1148] sm:$0xff] %vm5921, %v5912
        %6476 = vst.msk [vmem:[%s200 + $0x1150] sm:$0xff] %vm5921, %v5913
        %6477 = vst.msk [vmem:[%s200 + $0x1158] sm:$0xff] %vm5921, %v5914
        %6478 = vst.msk [vmem:[%s200 + $0x1160] sm:$0xff] %vm5921, %v5915
        %6479 = vst.msk [vmem:[%s200 + $0x1168] sm:$0xff] %vm5921, %v5916
        %6480 = vst.msk [vmem:[%s200 + $0x1170] sm:$0xff] %vm5921, %v5917
        %6481 = vst.msk [vmem:[%s200 + $0x1178] sm:$0xff] %vm5921, %v5918
        %6482 = vst.msk [vmem:[%s200 + $0x1180] sm:$0xff] %vm5921, %v5919
        %6483 = vst.msk [vmem:[%s200 + $0x1188] sm:$0xff] %vm5921, %v5920
        %7046 = vrot.lane.b32.xlu0 %v2551, 32
        %v7047 = vpop.permute.xlu0 %7046
        %7048 = vrot.lane.b32.xlu0 %v2556, 32
        %v7049 = vpop.permute.xlu0 %7048
        %7050 = vrot.lane.b32.xlu0 %v2561, 32
        %v7051 = vpop.permute.xlu0 %7050
        %7052 = vrot.lane.b32.xlu0 %v2566, 32
        %v7053 = vpop.permute.xlu0 %7052
        %7054 = vrot.lane.b32.xlu0 %v2571, 32
        %v7055 = vpop.permute.xlu0 %7054
        %7056 = vrot.lane.b32.xlu0 %v2576, 32
        %v7057 = vpop.permute.xlu0 %7056
        %7058 = vrot.lane.b32.xlu0 %v2581, 32
        %v7059 = vpop.permute.xlu0 %7058
        %7060 = vrot.lane.b32.xlu0 %v2586, 32
        %v7061 = vpop.permute.xlu0 %7060
        %7062 = vrot.lane.b32.xlu0 %v2591, 32
        %v7063 = vpop.permute.xlu0 %7062
        %7064 = vrot.lane.b32.xlu0 %v2596, 32
        %v7065 = vpop.permute.xlu0 %7064
        %7066 = vrot.lane.b32.xlu0 %v2601, 32
        %v7067 = vpop.permute.xlu0 %7066
        %7068 = vrot.lane.b32.xlu0 %v2606, 32
        %v7069 = vpop.permute.xlu0 %7068
        %7070 = vrot.lane.b32.xlu0 %v2611, 32
        %v7071 = vpop.permute.xlu0 %7070
        %7072 = vrot.lane.b32.xlu0 %v2616, 32
        %v7073 = vpop.permute.xlu0 %7072
        %7074 = vrot.lane.b32.xlu0 %v2621, 32
        %v7075 = vpop.permute.xlu0 %7074
        %7076 = vrot.lane.b32.xlu0 %v2626, 32
        %v7077 = vpop.permute.xlu0 %7076
        %7078 = vrot.lane.b32.xlu0 %v2631, 32
        %v7079 = vpop.permute.xlu0 %7078
        %7080 = vrot.lane.b32.xlu0 %v2636, 32
        %v7081 = vpop.permute.xlu0 %7080
        %7082 = vrot.lane.b32.xlu0 %v2641, 32
        %v7083 = vpop.permute.xlu0 %7082
        %7084 = vrot.lane.b32.xlu0 %v2646, 32
        %v7085 = vpop.permute.xlu0 %7084
        %7086 = vrot.lane.b32.xlu0 %v2651, 32
        %v7087 = vpop.permute.xlu0 %7086
        %7088 = vrot.lane.b32.xlu0 %v2656, 32
        %v7089 = vpop.permute.xlu0 %7088
        %7090 = vrot.lane.b32.xlu0 %v2661, 32
        %v7091 = vpop.permute.xlu0 %7090
        %7092 = vrot.lane.b32.xlu0 %v2666, 32
        %v7093 = vpop.permute.xlu0 %7092
        %7094 = vrot.lane.b32.xlu0 %v2671, 32
        %v7095 = vpop.permute.xlu0 %7094
        %7096 = vrot.lane.b32.xlu0 %v2676, 32
        %v7097 = vpop.permute.xlu0 %7096
        %7098 = vrot.lane.b32.xlu0 %v2681, 32
        %v7099 = vpop.permute.xlu0 %7098
        %7100 = vrot.lane.b32.xlu0 %v2686, 32
        %v7101 = vpop.permute.xlu0 %7100
        %7102 = vrot.lane.b32.xlu0 %v2691, 32
        %v7103 = vpop.permute.xlu0 %7102
        %7104 = vrot.lane.b32.xlu0 %v2696, 32
        %v7105 = vpop.permute.xlu0 %7104
        %7106 = vrot.lane.b32.xlu0 %v2701, 32
        %v7107 = vpop.permute.xlu0 %7106
        %7108 = vrot.lane.b32.xlu0 %v2706, 32
        %v7109 = vpop.permute.xlu0 %7108
        %7110 = vrot.lane.b32.xlu0 %v2711, 32
        %v7111 = vpop.permute.xlu0 %7110
        %7112 = vrot.lane.b32.xlu0 %v2716, 32
        %v7113 = vpop.permute.xlu0 %7112
        %7114 = vrot.lane.b32.xlu0 %v2721, 32
        %v7115 = vpop.permute.xlu0 %7114
        %7116 = vrot.lane.b32.xlu0 %v2726, 32
        %v7117 = vpop.permute.xlu0 %7116
        %7118 = vrot.lane.b32.xlu0 %v2731, 32
        %v7119 = vpop.permute.xlu0 %7118
        %7120 = vrot.lane.b32.xlu0 %v2736, 32
        %v7121 = vpop.permute.xlu0 %7120
        %7122 = vrot.lane.b32.xlu0 %v2741, 32
        %v7123 = vpop.permute.xlu0 %7122
        %7124 = vrot.lane.b32.xlu0 %v2746, 32
        %v7125 = vpop.permute.xlu0 %7124
        %7126 = vrot.lane.b32.xlu0 %v2751, 32
        %v7127 = vpop.permute.xlu0 %7126
        %7128 = vrot.lane.b32.xlu0 %v2756, 32
        %v7129 = vpop.permute.xlu0 %7128
        %7130 = vrot.lane.b32.xlu0 %v2761, 32
        %v7131 = vpop.permute.xlu0 %7130
        %7132 = vrot.lane.b32.xlu0 %v2766, 32
        %v7133 = vpop.permute.xlu0 %7132
        %7134 = vrot.lane.b32.xlu0 %v2771, 32
        %v7135 = vpop.permute.xlu0 %7134
        %7136 = vrot.lane.b32.xlu0 %v2776, 32
        %v7137 = vpop.permute.xlu0 %7136
        %7138 = vrot.lane.b32.xlu0 %v2781, 32
        %v7139 = vpop.permute.xlu0 %7138
        %7140 = vrot.lane.b32.xlu0 %v2786, 32
        %v7141 = vpop.permute.xlu0 %7140
        %7142 = vrot.lane.b32.xlu0 %v2791, 32
        %v7143 = vpop.permute.xlu0 %7142
        %7144 = vrot.lane.b32.xlu0 %v2796, 32
        %v7145 = vpop.permute.xlu0 %7144
        %7146 = vrot.lane.b32.xlu0 %v2801, 32
        %v7147 = vpop.permute.xlu0 %7146
        %7148 = vrot.lane.b32.xlu0 %v2806, 32
        %v7149 = vpop.permute.xlu0 %7148
        %7150 = vrot.lane.b32.xlu0 %v2811, 32
        %v7151 = vpop.permute.xlu0 %7150
        %7152 = vrot.lane.b32.xlu0 %v2816, 32
        %v7153 = vpop.permute.xlu0 %7152
        %7154 = vrot.lane.b32.xlu0 %v2821, 32
        %v7155 = vpop.permute.xlu0 %7154
        %7156 = vrot.lane.b32.xlu0 %v2826, 32
        %v7157 = vpop.permute.xlu0 %7156
        %7158 = vrot.lane.b32.xlu0 %v2831, 32
        %v7159 = vpop.permute.xlu0 %7158
        %7160 = vrot.lane.b32.xlu0 %v2836, 32
        %v7161 = vpop.permute.xlu0 %7160
        %7162 = vrot.lane.b32.xlu0 %v2841, 32
        %v7163 = vpop.permute.xlu0 %7162
        %7164 = vrot.lane.b32.xlu0 %v2846, 32
        %v7165 = vpop.permute.xlu0 %7164
        %7166 = vrot.lane.b32.xlu0 %v2851, 32
        %v7167 = vpop.permute.xlu0 %7166
        %7168 = vrot.lane.b32.xlu0 %v2856, 32
        %v7169 = vpop.permute.xlu0 %7168
        %7170 = vrot.lane.b32.xlu0 %v2861, 32
        %v7171 = vpop.permute.xlu0 %7170
        %7172 = vrot.lane.b32.xlu0 %v2866, 32
        %v7173 = vpop.permute.xlu0 %7172
        %7174 = vrot.lane.b32.xlu0 %v2871, 32
        %v7175 = vpop.permute.xlu0 %7174
        %7176 = vrot.lane.b32.xlu0 %v2876, 32
        %v7177 = vpop.permute.xlu0 %7176
        %7178 = vrot.lane.b32.xlu0 %v2881, 32
        %v7179 = vpop.permute.xlu0 %7178
        %7180 = vrot.lane.b32.xlu0 %v2886, 32
        %v7181 = vpop.permute.xlu0 %7180
        %7182 = vrot.lane.b32.xlu0 %v2891, 32
        %v7183 = vpop.permute.xlu0 %7182
        %7184 = vrot.lane.b32.xlu0 %v2896, 32
        %v7185 = vpop.permute.xlu0 %7184
        %7186 = vrot.lane.b32.xlu0 %v2901, 32
        %v7187 = vpop.permute.xlu0 %7186
        %7188 = vrot.lane.b32.xlu0 %v2906, 32
        %v7189 = vpop.permute.xlu0 %7188
        %7190 = vrot.lane.b32.xlu0 %v2911, 32
        %v7191 = vpop.permute.xlu0 %7190
        %7192 = vrot.lane.b32.xlu0 %v2916, 32
        %v7193 = vpop.permute.xlu0 %7192
        %7194 = vrot.lane.b32.xlu0 %v2921, 32
        %v7195 = vpop.permute.xlu0 %7194
        %7196 = vrot.lane.b32.xlu0 %v2926, 32
        %v7197 = vpop.permute.xlu0 %7196
        %7198 = vrot.lane.b32.xlu0 %v2931, 32
        %v7199 = vpop.permute.xlu0 %7198
        %7200 = vrot.lane.b32.xlu0 %v2936, 32
        %v7201 = vpop.permute.xlu0 %7200
        %7202 = vrot.lane.b32.xlu0 %v2941, 32
        %v7203 = vpop.permute.xlu0 %7202
        %7204 = vrot.lane.b32.xlu0 %v2946, 32
        %v7205 = vpop.permute.xlu0 %7204
        %7206 = vrot.lane.b32.xlu0 %v2951, 32
        %v7207 = vpop.permute.xlu0 %7206
        %7208 = vrot.lane.b32.xlu0 %v2956, 32
        %v7209 = vpop.permute.xlu0 %7208
        %7210 = vrot.lane.b32.xlu0 %v2961, 32
        %v7211 = vpop.permute.xlu0 %7210
        %7212 = vrot.lane.b32.xlu0 %v2966, 32
        %v7213 = vpop.permute.xlu0 %7212
        %7214 = vrot.lane.b32.xlu0 %v2971, 32
        %v7215 = vpop.permute.xlu0 %7214
        %7216 = vrot.lane.b32.xlu0 %v2976, 32
        %v7217 = vpop.permute.xlu0 %7216
        %7218 = vrot.lane.b32.xlu0 %v2981, 32
        %v7219 = vpop.permute.xlu0 %7218
        %7220 = vrot.lane.b32.xlu0 %v2986, 32
        %v7221 = vpop.permute.xlu0 %7220
        %7222 = vrot.lane.b32.xlu0 %v2991, 32
        %v7223 = vpop.permute.xlu0 %7222
        %7224 = vrot.lane.b32.xlu0 %v2996, 32
        %v7225 = vpop.permute.xlu0 %7224
        %7226 = vrot.lane.b32.xlu0 %v3001, 32
        %v7227 = vpop.permute.xlu0 %7226
        %7228 = vrot.lane.b32.xlu0 %v3006, 32
        %v7229 = vpop.permute.xlu0 %7228
        %7230 = vrot.lane.b32.xlu0 %v3011, 32
        %v7231 = vpop.permute.xlu0 %7230
        %7232 = vrot.lane.b32.xlu0 %v3016, 32
        %v7233 = vpop.permute.xlu0 %7232
        %7234 = vrot.lane.b32.xlu0 %v3021, 32
        %v7235 = vpop.permute.xlu0 %7234
        %7236 = vrot.lane.b32.xlu0 %v3026, 32
        %v7237 = vpop.permute.xlu0 %7236
        %7238 = vrot.lane.b32.xlu0 %v3031, 32
        %v7239 = vpop.permute.xlu0 %7238
        %7240 = vrot.lane.b32.xlu0 %v3036, 32
        %v7241 = vpop.permute.xlu0 %7240
        %7242 = vrot.lane.b32.xlu0 %v3041, 32
        %v7243 = vpop.permute.xlu0 %7242
        %7244 = vrot.lane.b32.xlu0 %v3046, 32
        %v7245 = vpop.permute.xlu0 %7244
        %7246 = vrot.lane.b32.xlu0 %v3051, 32
        %v7247 = vpop.permute.xlu0 %7246
        %7248 = vrot.lane.b32.xlu0 %v3056, 32
        %v7249 = vpop.permute.xlu0 %7248
        %7250 = vrot.lane.b32.xlu0 %v3061, 32
        %v7251 = vpop.permute.xlu0 %7250
        %7252 = vrot.lane.b32.xlu0 %v3066, 32
        %v7253 = vpop.permute.xlu0 %7252
        %7254 = vrot.lane.b32.xlu0 %v3071, 32
        %v7255 = vpop.permute.xlu0 %7254
        %7256 = vrot.lane.b32.xlu0 %v3076, 32
        %v7257 = vpop.permute.xlu0 %7256
        %7258 = vrot.lane.b32.xlu0 %v3081, 32
        %v7259 = vpop.permute.xlu0 %7258
        %7260 = vrot.lane.b32.xlu0 %v3086, 32
        %v7261 = vpop.permute.xlu0 %7260
        %7262 = vrot.lane.b32.xlu0 %v3091, 32
        %v7263 = vpop.permute.xlu0 %7262
        %7264 = vrot.lane.b32.xlu0 %v3096, 32
        %v7265 = vpop.permute.xlu0 %7264
        %7266 = vrot.lane.b32.xlu0 %v3101, 32
        %v7267 = vpop.permute.xlu0 %7266
        %7268 = vrot.lane.b32.xlu0 %v3106, 32
        %v7269 = vpop.permute.xlu0 %7268
        %7270 = vrot.lane.b32.xlu0 %v3111, 32
        %v7271 = vpop.permute.xlu0 %7270
        %7272 = vrot.lane.b32.xlu0 %v3116, 32
        %v7273 = vpop.permute.xlu0 %7272
        %7274 = vrot.lane.b32.xlu0 %v3121, 32
        %v7275 = vpop.permute.xlu0 %7274
        %7276 = vrot.lane.b32.xlu0 %v3126, 32
        %v7277 = vpop.permute.xlu0 %7276
        %7278 = vrot.lane.b32.xlu0 %v3131, 32
        %v7279 = vpop.permute.xlu0 %7278
        %7280 = vrot.lane.b32.xlu0 %v3136, 32
        %v7281 = vpop.permute.xlu0 %7280
        %7282 = vrot.lane.b32.xlu0 %v3141, 32
        %v7283 = vpop.permute.xlu0 %7282
        %7284 = vrot.lane.b32.xlu0 %v3146, 32
        %v7285 = vpop.permute.xlu0 %7284
        %7286 = vrot.lane.b32.xlu0 %v3151, 32
        %v7287 = vpop.permute.xlu0 %7286
        %7288 = vrot.lane.b32.xlu0 %v3156, 32
        %v7289 = vpop.permute.xlu0 %7288
        %7290 = vrot.lane.b32.xlu0 %v3161, 32
        %v7291 = vpop.permute.xlu0 %7290
        %7292 = vrot.lane.b32.xlu0 %v3166, 32
        %v7293 = vpop.permute.xlu0 %7292
        %7294 = vrot.lane.b32.xlu0 %v3171, 32
        %v7295 = vpop.permute.xlu0 %7294
        %7296 = vrot.lane.b32.xlu0 %v3176, 32
        %v7297 = vpop.permute.xlu0 %7296
        %7298 = vrot.lane.b32.xlu0 %v3181, 32
        %v7299 = vpop.permute.xlu0 %7298
        %7300 = vrot.lane.b32.xlu0 %v3186, 32
        %v7301 = vpop.permute.xlu0 %7300
        %7302 = vrot.lane.b32.xlu0 %v3191, 32
        %v7303 = vpop.permute.xlu0 %7302
        %7304 = vrot.lane.b32.xlu0 %v3196, 32
        %v7305 = vpop.permute.xlu0 %7304
        %7306 = vrot.lane.b32.xlu0 %v3201, 32
        %v7307 = vpop.permute.xlu0 %7306
        %7308 = vrot.lane.b32.xlu0 %v3206, 32
        %v7309 = vpop.permute.xlu0 %7308
        %7310 = vrot.lane.b32.xlu0 %v3211, 32
        %v7311 = vpop.permute.xlu0 %7310
        %7312 = vrot.lane.b32.xlu0 %v3216, 32
        %v7313 = vpop.permute.xlu0 %7312
        %7314 = vrot.lane.b32.xlu0 %v3221, 32
        %v7315 = vpop.permute.xlu0 %7314
        %7316 = vrot.lane.b32.xlu0 %v3226, 32
        %v7317 = vpop.permute.xlu0 %7316
        %7318 = vrot.lane.b32.xlu0 %v3231, 32
        %v7319 = vpop.permute.xlu0 %7318
        %7320 = vrot.lane.b32.xlu0 %v3236, 32
        %v7321 = vpop.permute.xlu0 %7320
        %7322 = vrot.lane.b32.xlu0 %v3241, 32
        %v7323 = vpop.permute.xlu0 %7322
        %7324 = vrot.lane.b32.xlu0 %v3246, 32
        %v7325 = vpop.permute.xlu0 %7324
        %7326 = vrot.lane.b32.xlu0 %v3251, 32
        %v7327 = vpop.permute.xlu0 %7326
        %7328 = vrot.lane.b32.xlu0 %v3256, 32
        %v7329 = vpop.permute.xlu0 %7328
        %7330 = vrot.lane.b32.xlu0 %v3261, 32
        %v7331 = vpop.permute.xlu0 %7330
        %7332 = vrot.lane.b32.xlu0 %v3266, 32
        %v7333 = vpop.permute.xlu0 %7332
        %7334 = vrot.lane.b32.xlu0 %v3271, 32
        %v7335 = vpop.permute.xlu0 %7334
        %7336 = vrot.lane.b32.xlu0 %v3276, 32
        %v7337 = vpop.permute.xlu0 %7336
        %7338 = vrot.lane.b32.xlu0 %v3281, 32
        %v7339 = vpop.permute.xlu0 %7338
        %7340 = vrot.lane.b32.xlu0 %v3286, 32
        %v7341 = vpop.permute.xlu0 %7340
        %7342 = vrot.lane.b32.xlu0 %v3291, 32
        %v7343 = vpop.permute.xlu0 %7342
        %7344 = vrot.lane.b32.xlu0 %v3296, 32
        %v7345 = vpop.permute.xlu0 %7344
        %7346 = vrot.lane.b32.xlu0 %v3301, 32
        %v7347 = vpop.permute.xlu0 %7346
        %7348 = vrot.lane.b32.xlu0 %v3306, 32
        %v7349 = vpop.permute.xlu0 %7348
        %7350 = vrot.lane.b32.xlu0 %v3311, 32
        %v7351 = vpop.permute.xlu0 %7350
        %7352 = vrot.lane.b32.xlu0 %v3316, 32
        %v7353 = vpop.permute.xlu0 %7352
        %7354 = vrot.lane.b32.xlu0 %v3321, 32
        %v7355 = vpop.permute.xlu0 %7354
        %7356 = vrot.lane.b32.xlu0 %v3326, 32
        %v7357 = vpop.permute.xlu0 %7356
        %7358 = vrot.lane.b32.xlu0 %v3331, 32
        %v7359 = vpop.permute.xlu0 %7358
        %7360 = vrot.lane.b32.xlu0 %v3336, 32
        %v7361 = vpop.permute.xlu0 %7360
        %7362 = vrot.lane.b32.xlu0 %v3341, 32
        %v7363 = vpop.permute.xlu0 %7362
        %7364 = vrot.lane.b32.xlu0 %v3346, 32
        %v7365 = vpop.permute.xlu0 %7364
        %7366 = vrot.lane.b32.xlu0 %v3351, 32
        %v7367 = vpop.permute.xlu0 %7366
        %7368 = vrot.lane.b32.xlu0 %v3356, 32
        %v7369 = vpop.permute.xlu0 %7368
        %7370 = vrot.lane.b32.xlu0 %v3361, 32
        %v7371 = vpop.permute.xlu0 %7370
        %7372 = vrot.lane.b32.xlu0 %v3366, 32
        %v7373 = vpop.permute.xlu0 %7372
        %7374 = vrot.lane.b32.xlu0 %v3371, 32
        %v7375 = vpop.permute.xlu0 %7374
        %7376 = vrot.lane.b32.xlu0 %v3376, 32
        %v7377 = vpop.permute.xlu0 %7376
        %7378 = vrot.lane.b32.xlu0 %v3381, 32
        %v7379 = vpop.permute.xlu0 %7378
        %7380 = vrot.lane.b32.xlu0 %v3386, 32
        %v7381 = vpop.permute.xlu0 %7380
        %7382 = vrot.lane.b32.xlu0 %v3391, 32
        %v7383 = vpop.permute.xlu0 %7382
        %7384 = vrot.lane.b32.xlu0 %v3396, 32
        %v7385 = vpop.permute.xlu0 %7384
        %7386 = vrot.lane.b32.xlu0 %v3401, 32
        %v7387 = vpop.permute.xlu0 %7386
        %7388 = vrot.lane.b32.xlu0 %v3406, 32
        %v7389 = vpop.permute.xlu0 %7388
        %7390 = vrot.lane.b32.xlu0 %v3411, 32
        %v7391 = vpop.permute.xlu0 %7390
        %7392 = vrot.lane.b32.xlu0 %v3416, 32
        %v7393 = vpop.permute.xlu0 %7392
        %7394 = vrot.lane.b32.xlu0 %v3421, 32
        %v7395 = vpop.permute.xlu0 %7394
        %7396 = vrot.lane.b32.xlu0 %v3426, 32
        %v7397 = vpop.permute.xlu0 %7396
        %7398 = vrot.lane.b32.xlu0 %v3431, 32
        %v7399 = vpop.permute.xlu0 %7398
        %7400 = vrot.lane.b32.xlu0 %v3436, 32
        %v7401 = vpop.permute.xlu0 %7400
        %7402 = vrot.lane.b32.xlu0 %v3441, 32
        %v7403 = vpop.permute.xlu0 %7402
        %7404 = vrot.lane.b32.xlu0 %v3446, 32
        %v7405 = vpop.permute.xlu0 %7404
        %7406 = vrot.lane.b32.xlu0 %v3451, 32
        %v7407 = vpop.permute.xlu0 %7406
        %7408 = vrot.lane.b32.xlu0 %v3456, 32
        %v7409 = vpop.permute.xlu0 %7408
        %7410 = vrot.lane.b32.xlu0 %v3461, 32
        %v7411 = vpop.permute.xlu0 %7410
        %7412 = vrot.lane.b32.xlu0 %v3466, 32
        %v7413 = vpop.permute.xlu0 %7412
        %7414 = vrot.lane.b32.xlu0 %v3471, 32
        %v7415 = vpop.permute.xlu0 %7414
        %7416 = vrot.lane.b32.xlu0 %v3476, 32
        %v7417 = vpop.permute.xlu0 %7416
        %7418 = vrot.lane.b32.xlu0 %v3481, 32
        %v7419 = vpop.permute.xlu0 %7418
        %7420 = vrot.lane.b32.xlu0 %v3486, 32
        %v7421 = vpop.permute.xlu0 %7420
        %7422 = vrot.lane.b32.xlu0 %v3491, 32
        %v7423 = vpop.permute.xlu0 %7422
        %7424 = vrot.lane.b32.xlu0 %v3496, 32
        %v7425 = vpop.permute.xlu0 %7424
        %7426 = vrot.lane.b32.xlu0 %v3501, 32
        %v7427 = vpop.permute.xlu0 %7426
        %7428 = vrot.lane.b32.xlu0 %v3506, 32
        %v7429 = vpop.permute.xlu0 %7428
        %7430 = vrot.lane.b32.xlu0 %v3511, 32
        %v7431 = vpop.permute.xlu0 %7430
        %7432 = vrot.lane.b32.xlu0 %v3516, 32
        %v7433 = vpop.permute.xlu0 %7432
        %7434 = vrot.lane.b32.xlu0 %v3521, 32
        %v7435 = vpop.permute.xlu0 %7434
        %7436 = vrot.lane.b32.xlu0 %v3526, 32
        %v7437 = vpop.permute.xlu0 %7436
        %7438 = vrot.lane.b32.xlu0 %v3531, 32
        %v7439 = vpop.permute.xlu0 %7438
        %7440 = vrot.lane.b32.xlu0 %v3536, 32
        %v7441 = vpop.permute.xlu0 %7440
        %7442 = vrot.lane.b32.xlu0 %v3541, 32
        %v7443 = vpop.permute.xlu0 %7442
        %7444 = vrot.lane.b32.xlu0 %v3546, 32
        %v7445 = vpop.permute.xlu0 %7444
        %7446 = vrot.lane.b32.xlu0 %v3551, 32
        %v7447 = vpop.permute.xlu0 %7446
        %7448 = vrot.lane.b32.xlu0 %v3556, 32
        %v7449 = vpop.permute.xlu0 %7448
        %7450 = vrot.lane.b32.xlu0 %v3561, 32
        %v7451 = vpop.permute.xlu0 %7450
        %7452 = vrot.lane.b32.xlu0 %v3566, 32
        %v7453 = vpop.permute.xlu0 %7452
        %7454 = vrot.lane.b32.xlu0 %v3571, 32
        %v7455 = vpop.permute.xlu0 %7454
        %7456 = vrot.lane.b32.xlu0 %v3576, 32
        %v7457 = vpop.permute.xlu0 %7456
        %7458 = vrot.lane.b32.xlu0 %v3581, 32
        %v7459 = vpop.permute.xlu0 %7458
        %7460 = vrot.lane.b32.xlu0 %v3586, 32
        %v7461 = vpop.permute.xlu0 %7460
        %7462 = vrot.lane.b32.xlu0 %v3591, 32
        %v7463 = vpop.permute.xlu0 %7462
        %7464 = vrot.lane.b32.xlu0 %v3596, 32
        %v7465 = vpop.permute.xlu0 %7464
        %7466 = vrot.lane.b32.xlu0 %v3601, 32
        %v7467 = vpop.permute.xlu0 %7466
        %7468 = vrot.lane.b32.xlu0 %v3606, 32
        %v7469 = vpop.permute.xlu0 %7468
        %7470 = vrot.lane.b32.xlu0 %v3611, 32
        %v7471 = vpop.permute.xlu0 %7470
        %7472 = vrot.lane.b32.xlu0 %v3616, 32
        %v7473 = vpop.permute.xlu0 %7472
        %7474 = vrot.lane.b32.xlu0 %v3621, 32
        %v7475 = vpop.permute.xlu0 %7474
        %7476 = vrot.lane.b32.xlu0 %v3626, 32
        %v7477 = vpop.permute.xlu0 %7476
        %7478 = vrot.lane.b32.xlu0 %v3631, 32
        %v7479 = vpop.permute.xlu0 %7478
        %7480 = vrot.lane.b32.xlu0 %v3636, 32
        %v7481 = vpop.permute.xlu0 %7480
        %7482 = vrot.lane.b32.xlu0 %v3641, 32
        %v7483 = vpop.permute.xlu0 %7482
        %7484 = vrot.lane.b32.xlu0 %v3646, 32
        %v7485 = vpop.permute.xlu0 %7484
        %7486 = vrot.lane.b32.xlu0 %v3651, 32
        %v7487 = vpop.permute.xlu0 %7486
        %7488 = vrot.lane.b32.xlu0 %v3656, 32
        %v7489 = vpop.permute.xlu0 %7488
        %7490 = vrot.lane.b32.xlu0 %v3661, 32
        %v7491 = vpop.permute.xlu0 %7490
        %7492 = vrot.lane.b32.xlu0 %v3666, 32
        %v7493 = vpop.permute.xlu0 %7492
        %7494 = vrot.lane.b32.xlu0 %v3671, 32
        %v7495 = vpop.permute.xlu0 %7494
        %7496 = vrot.lane.b32.xlu0 %v3676, 32
        %v7497 = vpop.permute.xlu0 %7496
        %7498 = vrot.lane.b32.xlu0 %v3681, 32
        %v7499 = vpop.permute.xlu0 %7498
        %7500 = vrot.lane.b32.xlu0 %v3686, 32
        %v7501 = vpop.permute.xlu0 %7500
        %7502 = vrot.lane.b32.xlu0 %v3691, 32
        %v7503 = vpop.permute.xlu0 %7502
        %7504 = vrot.lane.b32.xlu0 %v3696, 32
        %v7505 = vpop.permute.xlu0 %7504
        %7506 = vrot.lane.b32.xlu0 %v3701, 32
        %v7507 = vpop.permute.xlu0 %7506
        %7508 = vrot.lane.b32.xlu0 %v3706, 32
        %v7509 = vpop.permute.xlu0 %7508
        %7510 = vrot.lane.b32.xlu0 %v3711, 32
        %v7511 = vpop.permute.xlu0 %7510
        %7512 = vrot.lane.b32.xlu0 %v3716, 32
        %v7513 = vpop.permute.xlu0 %7512
        %7514 = vrot.lane.b32.xlu0 %v3721, 32
        %v7515 = vpop.permute.xlu0 %7514
        %7516 = vrot.lane.b32.xlu0 %v3726, 32
        %v7517 = vpop.permute.xlu0 %7516
        %7518 = vrot.lane.b32.xlu0 %v3731, 32
        %v7519 = vpop.permute.xlu0 %7518
        %7520 = vrot.lane.b32.xlu0 %v3736, 32
        %v7521 = vpop.permute.xlu0 %7520
        %7522 = vrot.lane.b32.xlu0 %v3741, 32
        %v7523 = vpop.permute.xlu0 %7522
        %7524 = vrot.lane.b32.xlu0 %v3746, 32
        %v7525 = vpop.permute.xlu0 %7524
        %7526 = vrot.lane.b32.xlu0 %v3751, 32
        %v7527 = vpop.permute.xlu0 %7526
        %7528 = vrot.lane.b32.xlu0 %v3756, 32
        %v7529 = vpop.permute.xlu0 %7528
        %7530 = vrot.lane.b32.xlu0 %v3761, 32
        %v7531 = vpop.permute.xlu0 %7530
        %7532 = vrot.lane.b32.xlu0 %v3766, 32
        %v7533 = vpop.permute.xlu0 %7532
        %7534 = vrot.lane.b32.xlu0 %v3771, 32
        %v7535 = vpop.permute.xlu0 %7534
        %7536 = vrot.lane.b32.xlu0 %v3776, 32
        %v7537 = vpop.permute.xlu0 %7536
        %7538 = vrot.lane.b32.xlu0 %v3781, 32
        %v7539 = vpop.permute.xlu0 %7538
        %7540 = vrot.lane.b32.xlu0 %v3786, 32
        %v7541 = vpop.permute.xlu0 %7540
        %7542 = vrot.lane.b32.xlu0 %v3791, 32
        %v7543 = vpop.permute.xlu0 %7542
        %7544 = vrot.lane.b32.xlu0 %v3796, 32
        %v7545 = vpop.permute.xlu0 %7544
        %7546 = vrot.lane.b32.xlu0 %v3801, 32
        %v7547 = vpop.permute.xlu0 %7546
        %7548 = vrot.lane.b32.xlu0 %v3806, 32
        %v7549 = vpop.permute.xlu0 %7548
        %7550 = vrot.lane.b32.xlu0 %v3811, 32
        %v7551 = vpop.permute.xlu0 %7550
        %7552 = vrot.lane.b32.xlu0 %v3816, 32
        %v7553 = vpop.permute.xlu0 %7552
        %7554 = vrot.lane.b32.xlu0 %v3821, 32
        %v7555 = vpop.permute.xlu0 %7554
        %7556 = vrot.lane.b32.xlu0 %v3826, 32
        %v7557 = vpop.permute.xlu0 %7556
        %7558 = vrot.lane.b32.xlu0 %v3831, 32
        %v7559 = vpop.permute.xlu0 %7558
        %7560 = vrot.lane.b32.xlu0 %v3836, 32
        %v7561 = vpop.permute.xlu0 %7560
        %7562 = vrot.lane.b32.xlu0 %v3841, 32
        %v7563 = vpop.permute.xlu0 %7562
        %7564 = vrot.lane.b32.xlu0 %v3846, 32
        %v7565 = vpop.permute.xlu0 %7564
        %7566 = vrot.lane.b32.xlu0 %v3851, 32
        %v7567 = vpop.permute.xlu0 %7566
        %7568 = vrot.lane.b32.xlu0 %v3856, 32
        %v7569 = vpop.permute.xlu0 %7568
        %7570 = vrot.lane.b32.xlu0 %v3861, 32
        %v7571 = vpop.permute.xlu0 %7570
        %7572 = vrot.lane.b32.xlu0 %v3866, 32
        %v7573 = vpop.permute.xlu0 %7572
        %7574 = vrot.lane.b32.xlu0 %v3871, 32
        %v7575 = vpop.permute.xlu0 %7574
        %7576 = vrot.lane.b32.xlu0 %v3876, 32
        %v7577 = vpop.permute.xlu0 %7576
        %7578 = vrot.lane.b32.xlu0 %v3881, 32
        %v7579 = vpop.permute.xlu0 %7578
        %7580 = vrot.lane.b32.xlu0 %v3886, 32
        %v7581 = vpop.permute.xlu0 %7580
        %7582 = vrot.lane.b32.xlu0 %v3891, 32
        %v7583 = vpop.permute.xlu0 %7582
        %7584 = vrot.lane.b32.xlu0 %v3896, 32
        %v7585 = vpop.permute.xlu0 %7584
        %7586 = vrot.lane.b32.xlu0 %v3901, 32
        %v7587 = vpop.permute.xlu0 %7586
        %7588 = vrot.lane.b32.xlu0 %v3906, 32
        %v7589 = vpop.permute.xlu0 %7588
        %7590 = vrot.lane.b32.xlu0 %v3911, 32
        %v7591 = vpop.permute.xlu0 %7590
        %7592 = vrot.lane.b32.xlu0 %v3916, 32
        %v7593 = vpop.permute.xlu0 %7592
        %7594 = vrot.lane.b32.xlu0 %v3921, 32
        %v7595 = vpop.permute.xlu0 %7594
        %7596 = vrot.lane.b32.xlu0 %v3926, 32
        %v7597 = vpop.permute.xlu0 %7596
        %7598 = vrot.lane.b32.xlu0 %v3931, 32
        %v7599 = vpop.permute.xlu0 %7598
        %7600 = vrot.lane.b32.xlu0 %v3936, 32
        %v7601 = vpop.permute.xlu0 %7600
        %7602 = vrot.lane.b32.xlu0 %v3941, 32
        %v7603 = vpop.permute.xlu0 %7602
        %7604 = vrot.lane.b32.xlu0 %v3946, 32
        %v7605 = vpop.permute.xlu0 %7604
        %7606 = vrot.lane.b32.xlu0 %v3951, 32
        %v7607 = vpop.permute.xlu0 %7606
        %7608 = vrot.lane.b32.xlu0 %v3956, 32
        %v7609 = vpop.permute.xlu0 %7608
        %7610 = vrot.lane.b32.xlu0 %v3961, 32
        %v7611 = vpop.permute.xlu0 %7610
        %7612 = vrot.lane.b32.xlu0 %v3966, 32
        %v7613 = vpop.permute.xlu0 %7612
        %7614 = vrot.lane.b32.xlu0 %v3971, 32
        %v7615 = vpop.permute.xlu0 %7614
        %7616 = vrot.lane.b32.xlu0 %v3976, 32
        %v7617 = vpop.permute.xlu0 %7616
        %7618 = vrot.lane.b32.xlu0 %v3981, 32
        %v7619 = vpop.permute.xlu0 %7618
        %7620 = vrot.lane.b32.xlu0 %v3986, 32
        %v7621 = vpop.permute.xlu0 %7620
        %7622 = vrot.lane.b32.xlu0 %v3991, 32
        %v7623 = vpop.permute.xlu0 %7622
        %7624 = vrot.lane.b32.xlu0 %v3996, 32
        %v7625 = vpop.permute.xlu0 %7624
        %7626 = vrot.lane.b32.xlu0 %v4001, 32
        %v7627 = vpop.permute.xlu0 %7626
        %7628 = vrot.lane.b32.xlu0 %v4006, 32
        %v7629 = vpop.permute.xlu0 %7628
        %7630 = vrot.lane.b32.xlu0 %v4011, 32
        %v7631 = vpop.permute.xlu0 %7630
        %7632 = vrot.lane.b32.xlu0 %v4016, 32
        %v7633 = vpop.permute.xlu0 %7632
        %7634 = vrot.lane.b32.xlu0 %v4021, 32
        %v7635 = vpop.permute.xlu0 %7634
        %7636 = vrot.lane.b32.xlu0 %v4026, 32
        %v7637 = vpop.permute.xlu0 %7636
        %7638 = vrot.lane.b32.xlu0 %v4031, 32
        %v7639 = vpop.permute.xlu0 %7638
        %7640 = vrot.lane.b32.xlu0 %v4036, 32
        %v7641 = vpop.permute.xlu0 %7640
        %7642 = vrot.lane.b32.xlu0 %v4041, 32
        %v7643 = vpop.permute.xlu0 %7642
        %7644 = vrot.lane.b32.xlu0 %v4046, 32
        %v7645 = vpop.permute.xlu0 %7644
        %7646 = vrot.lane.b32.xlu0 %v4051, 32
        %v7647 = vpop.permute.xlu0 %7646
        %7648 = vrot.lane.b32.xlu0 %v4056, 32
        %v7649 = vpop.permute.xlu0 %7648
        %7650 = vrot.lane.b32.xlu0 %v4061, 32
        %v7651 = vpop.permute.xlu0 %7650
        %7652 = vrot.lane.b32.xlu0 %v4066, 32
        %v7653 = vpop.permute.xlu0 %7652
        %7654 = vrot.lane.b32.xlu0 %v4071, 32
        %v7655 = vpop.permute.xlu0 %7654
        %7656 = vrot.lane.b32.xlu0 %v4076, 32
        %v7657 = vpop.permute.xlu0 %7656
        %7658 = vrot.lane.b32.xlu0 %v4081, 32
        %v7659 = vpop.permute.xlu0 %7658
        %7660 = vrot.lane.b32.xlu0 %v4086, 32
        %v7661 = vpop.permute.xlu0 %7660
        %7662 = vrot.lane.b32.xlu0 %v4091, 32
        %v7663 = vpop.permute.xlu0 %7662
        %7664 = vrot.lane.b32.xlu0 %v4096, 32
        %v7665 = vpop.permute.xlu0 %7664
        %7666 = vrot.lane.b32.xlu0 %v4101, 32
        %v7667 = vpop.permute.xlu0 %7666
        %7668 = vrot.lane.b32.xlu0 %v4106, 32
        %v7669 = vpop.permute.xlu0 %7668
        %7670 = vrot.lane.b32.xlu0 %v4111, 32
        %v7671 = vpop.permute.xlu0 %7670
        %7672 = vrot.lane.b32.xlu0 %v4116, 32
        %v7673 = vpop.permute.xlu0 %7672
        %7674 = vrot.lane.b32.xlu0 %v4121, 32
        %v7675 = vpop.permute.xlu0 %7674
        %7676 = vrot.lane.b32.xlu0 %v4126, 32
        %v7677 = vpop.permute.xlu0 %7676
        %7678 = vrot.lane.b32.xlu0 %v4131, 32
        %v7679 = vpop.permute.xlu0 %7678
        %7680 = vrot.lane.b32.xlu0 %v4136, 32
        %v7681 = vpop.permute.xlu0 %7680
        %7682 = vrot.lane.b32.xlu0 %v4141, 32
        %v7683 = vpop.permute.xlu0 %7682
        %7684 = vrot.lane.b32.xlu0 %v4146, 32
        %v7685 = vpop.permute.xlu0 %7684
        %7686 = vrot.lane.b32.xlu0 %v4151, 32
        %v7687 = vpop.permute.xlu0 %7686
        %7688 = vrot.lane.b32.xlu0 %v4156, 32
        %v7689 = vpop.permute.xlu0 %7688
        %7690 = vrot.lane.b32.xlu0 %v4161, 32
        %v7691 = vpop.permute.xlu0 %7690
        %7692 = vrot.lane.b32.xlu0 %v4166, 32
        %v7693 = vpop.permute.xlu0 %7692
        %7694 = vrot.lane.b32.xlu0 %v4171, 32
        %v7695 = vpop.permute.xlu0 %7694
        %7696 = vrot.lane.b32.xlu0 %v4176, 32
        %v7697 = vpop.permute.xlu0 %7696
        %7698 = vrot.lane.b32.xlu0 %v4181, 32
        %v7699 = vpop.permute.xlu0 %7698
        %7700 = vrot.lane.b32.xlu0 %v4186, 32
        %v7701 = vpop.permute.xlu0 %7700
        %7702 = vrot.lane.b32.xlu0 %v4191, 32
        %v7703 = vpop.permute.xlu0 %7702
        %7704 = vrot.lane.b32.xlu0 %v4196, 32
        %v7705 = vpop.permute.xlu0 %7704
        %7706 = vrot.lane.b32.xlu0 %v4201, 32
        %v7707 = vpop.permute.xlu0 %7706
        %7708 = vrot.lane.b32.xlu0 %v4206, 32
        %v7709 = vpop.permute.xlu0 %7708
        %7710 = vrot.lane.b32.xlu0 %v4211, 32
        %v7711 = vpop.permute.xlu0 %7710
        %7712 = vrot.lane.b32.xlu0 %v4216, 32
        %v7713 = vpop.permute.xlu0 %7712
        %7714 = vrot.lane.b32.xlu0 %v4221, 32
        %v7715 = vpop.permute.xlu0 %7714
        %7716 = vrot.lane.b32.xlu0 %v4226, 32
        %v7717 = vpop.permute.xlu0 %7716
        %7718 = vrot.lane.b32.xlu0 %v4231, 32
        %v7719 = vpop.permute.xlu0 %7718
        %7720 = vrot.lane.b32.xlu0 %v4236, 32
        %v7721 = vpop.permute.xlu0 %7720
        %7722 = vrot.lane.b32.xlu0 %v4241, 32
        %v7723 = vpop.permute.xlu0 %7722
        %7724 = vrot.lane.b32.xlu0 %v4246, 32
        %v7725 = vpop.permute.xlu0 %7724
        %7726 = vrot.lane.b32.xlu0 %v4251, 32
        %v7727 = vpop.permute.xlu0 %7726
        %7728 = vrot.lane.b32.xlu0 %v4256, 32
        %v7729 = vpop.permute.xlu0 %7728
        %7730 = vrot.lane.b32.xlu0 %v4261, 32
        %v7731 = vpop.permute.xlu0 %7730
        %7732 = vrot.lane.b32.xlu0 %v4266, 32
        %v7733 = vpop.permute.xlu0 %7732
        %7734 = vrot.lane.b32.xlu0 %v4271, 32
        %v7735 = vpop.permute.xlu0 %7734
        %7736 = vrot.lane.b32.xlu0 %v4276, 32
        %v7737 = vpop.permute.xlu0 %7736
        %7738 = vrot.lane.b32.xlu0 %v4281, 32
        %v7739 = vpop.permute.xlu0 %7738
        %7740 = vrot.lane.b32.xlu0 %v4286, 32
        %v7741 = vpop.permute.xlu0 %7740
        %7742 = vrot.lane.b32.xlu0 %v4291, 32
        %v7743 = vpop.permute.xlu0 %7742
        %7744 = vrot.lane.b32.xlu0 %v4296, 32
        %v7745 = vpop.permute.xlu0 %7744
        %7746 = vrot.lane.b32.xlu0 %v4301, 32
        %v7747 = vpop.permute.xlu0 %7746
        %7748 = vrot.lane.b32.xlu0 %v4306, 32
        %v7749 = vpop.permute.xlu0 %7748
        %7750 = vrot.lane.b32.xlu0 %v4311, 32
        %v7751 = vpop.permute.xlu0 %7750
        %7752 = vrot.lane.b32.xlu0 %v4316, 32
        %v7753 = vpop.permute.xlu0 %7752
        %7754 = vrot.lane.b32.xlu0 %v4321, 32
        %v7755 = vpop.permute.xlu0 %7754
        %7756 = vrot.lane.b32.xlu0 %v4326, 32
        %v7757 = vpop.permute.xlu0 %7756
        %7758 = vrot.lane.b32.xlu0 %v4331, 32
        %v7759 = vpop.permute.xlu0 %7758
        %7760 = vrot.lane.b32.xlu0 %v4336, 32
        %v7761 = vpop.permute.xlu0 %7760
        %7762 = vrot.lane.b32.xlu0 %v4341, 32
        %v7763 = vpop.permute.xlu0 %7762
        %7764 = vrot.lane.b32.xlu0 %v4346, 32
        %v7765 = vpop.permute.xlu0 %7764
        %7766 = vrot.lane.b32.xlu0 %v4351, 32
        %v7767 = vpop.permute.xlu0 %7766
        %7768 = vrot.lane.b32.xlu0 %v4356, 32
        %v7769 = vpop.permute.xlu0 %7768
        %7770 = vrot.lane.b32.xlu0 %v4361, 32
        %v7771 = vpop.permute.xlu0 %7770
        %7772 = vrot.lane.b32.xlu0 %v4366, 32
        %v7773 = vpop.permute.xlu0 %7772
        %7774 = vrot.lane.b32.xlu0 %v4371, 32
        %v7775 = vpop.permute.xlu0 %7774
        %7776 = vrot.lane.b32.xlu0 %v4376, 32
        %v7777 = vpop.permute.xlu0 %7776
        %7778 = vrot.lane.b32.xlu0 %v4381, 32
        %v7779 = vpop.permute.xlu0 %7778
        %7780 = vrot.lane.b32.xlu0 %v4386, 32
        %v7781 = vpop.permute.xlu0 %7780
        %7782 = vrot.lane.b32.xlu0 %v4391, 32
        %v7783 = vpop.permute.xlu0 %7782
        %7784 = vrot.lane.b32.xlu0 %v4396, 32
        %v7785 = vpop.permute.xlu0 %7784
        %7786 = vrot.lane.b32.xlu0 %v4401, 32
        %v7787 = vpop.permute.xlu0 %7786
        %7788 = vrot.lane.b32.xlu0 %v4406, 32
        %v7789 = vpop.permute.xlu0 %7788
        %7790 = vrot.lane.b32.xlu0 %v4411, 32
        %v7791 = vpop.permute.xlu0 %7790
        %7792 = vrot.lane.b32.xlu0 %v4416, 32
        %v7793 = vpop.permute.xlu0 %7792
        %7794 = vrot.lane.b32.xlu0 %v4421, 32
        %v7795 = vpop.permute.xlu0 %7794
        %7796 = vrot.lane.b32.xlu0 %v4426, 32
        %v7797 = vpop.permute.xlu0 %7796
        %7798 = vrot.lane.b32.xlu0 %v4431, 32
        %v7799 = vpop.permute.xlu0 %7798
        %7800 = vrot.lane.b32.xlu0 %v4436, 32
        %v7801 = vpop.permute.xlu0 %7800
        %7802 = vrot.lane.b32.xlu0 %v4441, 32
        %v7803 = vpop.permute.xlu0 %7802
        %7804 = vrot.lane.b32.xlu0 %v4446, 32
        %v7805 = vpop.permute.xlu0 %7804
        %7806 = vrot.lane.b32.xlu0 %v4451, 32
        %v7807 = vpop.permute.xlu0 %7806
        %7808 = vrot.lane.b32.xlu0 %v4456, 32
        %v7809 = vpop.permute.xlu0 %7808
        %7810 = vrot.lane.b32.xlu0 %v4461, 32
        %v7811 = vpop.permute.xlu0 %7810
        %7812 = vrot.lane.b32.xlu0 %v4466, 32
        %v7813 = vpop.permute.xlu0 %7812
        %7814 = vrot.lane.b32.xlu0 %v4471, 32
        %v7815 = vpop.permute.xlu0 %7814
        %7816 = vrot.lane.b32.xlu0 %v4476, 32
        %v7817 = vpop.permute.xlu0 %7816
        %7818 = vrot.lane.b32.xlu0 %v4481, 32
        %v7819 = vpop.permute.xlu0 %7818
        %7820 = vrot.lane.b32.xlu0 %v4486, 32
        %v7821 = vpop.permute.xlu0 %7820
        %7822 = vrot.lane.b32.xlu0 %v4491, 32
        %v7823 = vpop.permute.xlu0 %7822
        %7824 = vrot.lane.b32.xlu0 %v4496, 32
        %v7825 = vpop.permute.xlu0 %7824
        %7826 = vrot.lane.b32.xlu0 %v4501, 32
        %v7827 = vpop.permute.xlu0 %7826
        %7828 = vrot.lane.b32.xlu0 %v4506, 32
        %v7829 = vpop.permute.xlu0 %7828
        %7830 = vrot.lane.b32.xlu0 %v4511, 32
        %v7831 = vpop.permute.xlu0 %7830
        %7832 = vrot.lane.b32.xlu0 %v4516, 32
        %v7833 = vpop.permute.xlu0 %7832
        %7834 = vrot.lane.b32.xlu0 %v4521, 32
        %v7835 = vpop.permute.xlu0 %7834
        %7836 = vrot.lane.b32.xlu0 %v4526, 32
        %v7837 = vpop.permute.xlu0 %7836
        %7838 = vrot.lane.b32.xlu0 %v4531, 32
        %v7839 = vpop.permute.xlu0 %7838
        %7840 = vrot.lane.b32.xlu0 %v4536, 32
        %v7841 = vpop.permute.xlu0 %7840
        %7842 = vrot.lane.b32.xlu0 %v4541, 32
        %v7843 = vpop.permute.xlu0 %7842
        %7844 = vrot.lane.b32.xlu0 %v4546, 32
        %v7845 = vpop.permute.xlu0 %7844
        %7846 = vrot.lane.b32.xlu0 %v4551, 32
        %v7847 = vpop.permute.xlu0 %7846
        %7848 = vrot.lane.b32.xlu0 %v4556, 32
        %v7849 = vpop.permute.xlu0 %7848
        %7850 = vrot.lane.b32.xlu0 %v4561, 32
        %v7851 = vpop.permute.xlu0 %7850
        %7852 = vrot.lane.b32.xlu0 %v4566, 32
        %v7853 = vpop.permute.xlu0 %7852
        %7854 = vrot.lane.b32.xlu0 %v4571, 32
        %v7855 = vpop.permute.xlu0 %7854
        %7856 = vrot.lane.b32.xlu0 %v4576, 32
        %v7857 = vpop.permute.xlu0 %7856
        %7858 = vrot.lane.b32.xlu0 %v4581, 32
        %v7859 = vpop.permute.xlu0 %7858
        %7860 = vrot.lane.b32.xlu0 %v4586, 32
        %v7861 = vpop.permute.xlu0 %7860
        %7862 = vrot.lane.b32.xlu0 %v4591, 32
        %v7863 = vpop.permute.xlu0 %7862
        %7864 = vrot.lane.b32.xlu0 %v4596, 32
        %v7865 = vpop.permute.xlu0 %7864
        %7866 = vrot.lane.b32.xlu0 %v4601, 32
        %v7867 = vpop.permute.xlu0 %7866
        %7868 = vrot.lane.b32.xlu0 %v4606, 32
        %v7869 = vpop.permute.xlu0 %7868
        %7870 = vrot.lane.b32.xlu0 %v4611, 32
        %v7871 = vpop.permute.xlu0 %7870
        %7872 = vrot.lane.b32.xlu0 %v4616, 32
        %v7873 = vpop.permute.xlu0 %7872
        %7874 = vrot.lane.b32.xlu0 %v4621, 32
        %v7875 = vpop.permute.xlu0 %7874
        %7876 = vrot.lane.b32.xlu0 %v4626, 32
        %v7877 = vpop.permute.xlu0 %7876
        %7878 = vrot.lane.b32.xlu0 %v4631, 32
        %v7879 = vpop.permute.xlu0 %7878
        %7880 = vrot.lane.b32.xlu0 %v4636, 32
        %v7881 = vpop.permute.xlu0 %7880
        %7882 = vrot.lane.b32.xlu0 %v4641, 32
        %v7883 = vpop.permute.xlu0 %7882
        %7884 = vrot.lane.b32.xlu0 %v4646, 32
        %v7885 = vpop.permute.xlu0 %7884
        %7886 = vrot.lane.b32.xlu0 %v4651, 32
        %v7887 = vpop.permute.xlu0 %7886
        %7888 = vrot.lane.b32.xlu0 %v4656, 32
        %v7889 = vpop.permute.xlu0 %7888
        %7890 = vrot.lane.b32.xlu0 %v4661, 32
        %v7891 = vpop.permute.xlu0 %7890
        %7892 = vrot.lane.b32.xlu0 %v4666, 32
        %v7893 = vpop.permute.xlu0 %7892
        %7894 = vrot.lane.b32.xlu0 %v4671, 32
        %v7895 = vpop.permute.xlu0 %7894
        %7896 = vrot.lane.b32.xlu0 %v4676, 32
        %v7897 = vpop.permute.xlu0 %7896
        %7898 = vrot.lane.b32.xlu0 %v4681, 32
        %v7899 = vpop.permute.xlu0 %7898
        %7900 = vrot.lane.b32.xlu0 %v4686, 32
        %v7901 = vpop.permute.xlu0 %7900
        %7902 = vrot.lane.b32.xlu0 %v4691, 32
        %v7903 = vpop.permute.xlu0 %7902
        %7904 = vrot.lane.b32.xlu0 %v4696, 32
        %v7905 = vpop.permute.xlu0 %7904
        %7906 = vrot.lane.b32.xlu0 %v4701, 32
        %v7907 = vpop.permute.xlu0 %7906
        %7908 = vrot.lane.b32.xlu0 %v4706, 32
        %v7909 = vpop.permute.xlu0 %7908
        %7910 = vrot.lane.b32.xlu0 %v4711, 32
        %v7911 = vpop.permute.xlu0 %7910
        %7912 = vrot.lane.b32.xlu0 %v4716, 32
        %v7913 = vpop.permute.xlu0 %7912
        %7914 = vrot.lane.b32.xlu0 %v4721, 32
        %v7915 = vpop.permute.xlu0 %7914
        %7916 = vrot.lane.b32.xlu0 %v4726, 32
        %v7917 = vpop.permute.xlu0 %7916
        %7918 = vrot.lane.b32.xlu0 %v4731, 32
        %v7919 = vpop.permute.xlu0 %7918
        %7920 = vrot.lane.b32.xlu0 %v4736, 32
        %v7921 = vpop.permute.xlu0 %7920
        %7922 = vrot.lane.b32.xlu0 %v4741, 32
        %v7923 = vpop.permute.xlu0 %7922
        %7924 = vrot.lane.b32.xlu0 %v4746, 32
        %v7925 = vpop.permute.xlu0 %7924
        %7926 = vrot.lane.b32.xlu0 %v4751, 32
        %v7927 = vpop.permute.xlu0 %7926
        %7928 = vrot.lane.b32.xlu0 %v4756, 32
        %v7929 = vpop.permute.xlu0 %7928
        %7930 = vrot.lane.b32.xlu0 %v4761, 32
        %v7931 = vpop.permute.xlu0 %7930
        %7932 = vrot.lane.b32.xlu0 %v4766, 32
        %v7933 = vpop.permute.xlu0 %7932
        %7934 = vrot.lane.b32.xlu0 %v4771, 32
        %v7935 = vpop.permute.xlu0 %7934
        %7936 = vrot.lane.b32.xlu0 %v4776, 32
        %v7937 = vpop.permute.xlu0 %7936
        %7938 = vrot.lane.b32.xlu0 %v4781, 32
        %v7939 = vpop.permute.xlu0 %7938
        %7940 = vrot.lane.b32.xlu0 %v4786, 32
        %v7941 = vpop.permute.xlu0 %7940
        %7942 = vrot.lane.b32.xlu0 %v4791, 32
        %v7943 = vpop.permute.xlu0 %7942
        %7944 = vrot.lane.b32.xlu0 %v4796, 32
        %v7945 = vpop.permute.xlu0 %7944
        %7946 = vrot.lane.b32.xlu0 %v4801, 32
        %v7947 = vpop.permute.xlu0 %7946
        %7948 = vrot.lane.b32.xlu0 %v4806, 32
        %v7949 = vpop.permute.xlu0 %7948
        %7950 = vrot.lane.b32.xlu0 %v4811, 32
        %v7951 = vpop.permute.xlu0 %7950
        %7952 = vrot.lane.b32.xlu0 %v4816, 32
        %v7953 = vpop.permute.xlu0 %7952
        %7954 = vrot.lane.b32.xlu0 %v4821, 32
        %v7955 = vpop.permute.xlu0 %7954
        %7956 = vrot.lane.b32.xlu0 %v4826, 32
        %v7957 = vpop.permute.xlu0 %7956
        %7958 = vrot.lane.b32.xlu0 %v4831, 32
        %v7959 = vpop.permute.xlu0 %7958
        %7960 = vrot.lane.b32.xlu0 %v4836, 32
        %v7961 = vpop.permute.xlu0 %7960
        %7962 = vrot.lane.b32.xlu0 %v4841, 32
        %v7963 = vpop.permute.xlu0 %7962
        %7964 = vrot.lane.b32.xlu0 %v4846, 32
        %v7965 = vpop.permute.xlu0 %7964
        %7966 = vrot.lane.b32.xlu0 %v4851, 32
        %v7967 = vpop.permute.xlu0 %7966
        %7968 = vrot.lane.b32.xlu0 %v4856, 32
        %v7969 = vpop.permute.xlu0 %7968
        %7970 = vrot.lane.b32.xlu0 %v4861, 32
        %v7971 = vpop.permute.xlu0 %7970
        %7972 = vrot.lane.b32.xlu0 %v4866, 32
        %v7973 = vpop.permute.xlu0 %7972
        %7974 = vrot.lane.b32.xlu0 %v4871, 32
        %v7975 = vpop.permute.xlu0 %7974
        %7976 = vrot.lane.b32.xlu0 %v4876, 32
        %v7977 = vpop.permute.xlu0 %7976
        %7978 = vrot.lane.b32.xlu0 %v4881, 32
        %v7979 = vpop.permute.xlu0 %7978
        %7980 = vrot.lane.b32.xlu0 %v4886, 32
        %v7981 = vpop.permute.xlu0 %7980
        %7982 = vrot.lane.b32.xlu0 %v4891, 32
        %v7983 = vpop.permute.xlu0 %7982
        %7984 = vrot.lane.b32.xlu0 %v4896, 32
        %v7985 = vpop.permute.xlu0 %7984
        %7986 = vrot.lane.b32.xlu0 %v4901, 32
        %v7987 = vpop.permute.xlu0 %7986
        %7988 = vrot.lane.b32.xlu0 %v4906, 32
        %v7989 = vpop.permute.xlu0 %7988
        %7990 = vrot.lane.b32.xlu0 %v4911, 32
        %v7991 = vpop.permute.xlu0 %7990
        %7992 = vrot.lane.b32.xlu0 %v4916, 32
        %v7993 = vpop.permute.xlu0 %7992
        %7994 = vrot.lane.b32.xlu0 %v4921, 32
        %v7995 = vpop.permute.xlu0 %7994
        %7996 = vrot.lane.b32.xlu0 %v4926, 32
        %v7997 = vpop.permute.xlu0 %7996
        %7998 = vrot.lane.b32.xlu0 %v4931, 32
        %v7999 = vpop.permute.xlu0 %7998
        %8000 = vrot.lane.b32.xlu0 %v4936, 32
        %v8001 = vpop.permute.xlu0 %8000
        %8002 = vrot.lane.b32.xlu0 %v4941, 32
        %v8003 = vpop.permute.xlu0 %8002
        %8004 = vrot.lane.b32.xlu0 %v4946, 32
        %v8005 = vpop.permute.xlu0 %8004
        %8006 = vrot.lane.b32.xlu0 %v4951, 32
        %v8007 = vpop.permute.xlu0 %8006
        %8008 = vrot.lane.b32.xlu0 %v4956, 32
        %v8009 = vpop.permute.xlu0 %8008
        %8010 = vrot.lane.b32.xlu0 %v4961, 32
        %v8011 = vpop.permute.xlu0 %8010
        %8012 = vrot.lane.b32.xlu0 %v4966, 32
        %v8013 = vpop.permute.xlu0 %8012
        %8014 = vrot.lane.b32.xlu0 %v4971, 32
        %v8015 = vpop.permute.xlu0 %8014
        %8016 = vrot.lane.b32.xlu0 %v4976, 32
        %v8017 = vpop.permute.xlu0 %8016
        %8018 = vrot.lane.b32.xlu0 %v4981, 32
        %v8019 = vpop.permute.xlu0 %8018
        %8020 = vrot.lane.b32.xlu0 %v4986, 32
        %v8021 = vpop.permute.xlu0 %8020
        %8022 = vrot.lane.b32.xlu0 %v4991, 32
        %v8023 = vpop.permute.xlu0 %8022
        %8024 = vrot.lane.b32.xlu0 %v4996, 32
        %v8025 = vpop.permute.xlu0 %8024
        %8026 = vrot.lane.b32.xlu0 %v5001, 32
        %v8027 = vpop.permute.xlu0 %8026
        %8028 = vrot.lane.b32.xlu0 %v5006, 32
        %v8029 = vpop.permute.xlu0 %8028
        %8030 = vrot.lane.b32.xlu0 %v5011, 32
        %v8031 = vpop.permute.xlu0 %8030
        %8032 = vrot.lane.b32.xlu0 %v5016, 32
        %v8033 = vpop.permute.xlu0 %8032
        %8034 = vrot.lane.b32.xlu0 %v5021, 32
        %v8035 = vpop.permute.xlu0 %8034
        %8036 = vrot.lane.b32.xlu0 %v5026, 32
        %v8037 = vpop.permute.xlu0 %8036
        %8038 = vrot.lane.b32.xlu0 %v5031, 32
        %v8039 = vpop.permute.xlu0 %8038
        %8040 = vrot.lane.b32.xlu0 %v5036, 32
        %v8041 = vpop.permute.xlu0 %8040
        %8042 = vrot.lane.b32.xlu0 %v5041, 32
        %v8043 = vpop.permute.xlu0 %8042
        %8044 = vrot.lane.b32.xlu0 %v5046, 32
        %v8045 = vpop.permute.xlu0 %8044
        %8046 = vrot.lane.b32.xlu0 %v5051, 32
        %v8047 = vpop.permute.xlu0 %8046
        %8048 = vrot.lane.b32.xlu0 %v5056, 32
        %v8049 = vpop.permute.xlu0 %8048
        %8050 = vrot.lane.b32.xlu0 %v5061, 32
        %v8051 = vpop.permute.xlu0 %8050
        %8052 = vrot.lane.b32.xlu0 %v5066, 32
        %v8053 = vpop.permute.xlu0 %8052
        %8054 = vrot.lane.b32.xlu0 %v5071, 32
        %v8055 = vpop.permute.xlu0 %8054
        %8056 = vrot.lane.b32.xlu0 %v5076, 32
        %v8057 = vpop.permute.xlu0 %8056
        %8058 = vrot.lane.b32.xlu0 %v5081, 32
        %v8059 = vpop.permute.xlu0 %8058
        %8060 = vrot.lane.b32.xlu0 %v5086, 32
        %v8061 = vpop.permute.xlu0 %8060
        %8062 = vrot.lane.b32.xlu0 %v5091, 32
        %v8063 = vpop.permute.xlu0 %8062
        %8064 = vrot.lane.b32.xlu0 %v5096, 32
        %v8065 = vpop.permute.xlu0 %8064
        %8066 = vrot.lane.b32.xlu0 %v5101, 32
        %v8067 = vpop.permute.xlu0 %8066
        %8068 = vrot.lane.b32.xlu0 %v5106, 32
        %v8069 = vpop.permute.xlu0 %8068
        %8070 = vrot.lane.b32.xlu0 %v5111, 32
        %v8071 = vpop.permute.xlu0 %8070
        %8072 = vrot.lane.b32.xlu0 %v5116, 32
        %v8073 = vpop.permute.xlu0 %8072
        %8074 = vrot.lane.b32.xlu0 %v5121, 32
        %v8075 = vpop.permute.xlu0 %8074
        %8076 = vrot.lane.b32.xlu0 %v5126, 32
        %v8077 = vpop.permute.xlu0 %8076
        %8078 = vrot.lane.b32.xlu0 %v5131, 32
        %v8079 = vpop.permute.xlu0 %8078
        %8080 = vrot.lane.b32.xlu0 %v5136, 32
        %v8081 = vpop.permute.xlu0 %8080
        %8082 = vrot.lane.b32.xlu0 %v5141, 32
        %v8083 = vpop.permute.xlu0 %8082
        %8084 = vrot.lane.b32.xlu0 %v5146, 32
        %v8085 = vpop.permute.xlu0 %8084
        %8086 = vrot.lane.b32.xlu0 %v5151, 32
        %v8087 = vpop.permute.xlu0 %8086
        %8088 = vrot.lane.b32.xlu0 %v5156, 32
        %v8089 = vpop.permute.xlu0 %8088
        %8090 = vrot.lane.b32.xlu0 %v5161, 32
        %v8091 = vpop.permute.xlu0 %8090
        %8092 = vrot.lane.b32.xlu0 %v5166, 32
        %v8093 = vpop.permute.xlu0 %8092
        %8094 = vrot.lane.b32.xlu0 %v5171, 32
        %v8095 = vpop.permute.xlu0 %8094
        %8096 = vrot.lane.b32.xlu0 %v5176, 32
        %v8097 = vpop.permute.xlu0 %8096
        %8098 = vrot.lane.b32.xlu0 %v5181, 32
        %v8099 = vpop.permute.xlu0 %8098
        %8100 = vrot.lane.b32.xlu0 %v5186, 32
        %v8101 = vpop.permute.xlu0 %8100
        %8102 = vrot.lane.b32.xlu0 %v5191, 32
        %v8103 = vpop.permute.xlu0 %8102
        %8104 = vrot.lane.b32.xlu0 %v5196, 32
        %v8105 = vpop.permute.xlu0 %8104
        %8106 = vrot.lane.b32.xlu0 %v5201, 32
        %v8107 = vpop.permute.xlu0 %8106
        %8108 = vrot.lane.b32.xlu0 %v5206, 32
        %v8109 = vpop.permute.xlu0 %8108
        %8110 = vrot.lane.b32.xlu0 %v5211, 32
        %v8111 = vpop.permute.xlu0 %8110
        %8112 = vrot.lane.b32.xlu0 %v5216, 32
        %v8113 = vpop.permute.xlu0 %8112
        %8114 = vrot.lane.b32.xlu0 %v5221, 32
        %v8115 = vpop.permute.xlu0 %8114
        %8116 = vrot.lane.b32.xlu0 %v5226, 32
        %v8117 = vpop.permute.xlu0 %8116
        %8118 = vrot.lane.b32.xlu0 %v5231, 32
        %v8119 = vpop.permute.xlu0 %8118
        %8120 = vrot.lane.b32.xlu0 %v5236, 32
        %v8121 = vpop.permute.xlu0 %8120
        %8122 = vrot.lane.b32.xlu0 %v5241, 32
        %v8123 = vpop.permute.xlu0 %8122
        %8124 = vrot.lane.b32.xlu0 %v5246, 32
        %v8125 = vpop.permute.xlu0 %8124
        %8126 = vrot.lane.b32.xlu0 %v5251, 32
        %v8127 = vpop.permute.xlu0 %8126
        %8128 = vrot.lane.b32.xlu0 %v5256, 32
        %v8129 = vpop.permute.xlu0 %8128
        %8130 = vrot.lane.b32.xlu0 %v5261, 32
        %v8131 = vpop.permute.xlu0 %8130
        %8132 = vrot.lane.b32.xlu0 %v5266, 32
        %v8133 = vpop.permute.xlu0 %8132
        %8134 = vrot.lane.b32.xlu0 %v5271, 32
        %v8135 = vpop.permute.xlu0 %8134
        %8136 = vrot.lane.b32.xlu0 %v5276, 32
        %v8137 = vpop.permute.xlu0 %8136
        %8138 = vrot.lane.b32.xlu0 %v5281, 32
        %v8139 = vpop.permute.xlu0 %8138
        %8140 = vrot.lane.b32.xlu0 %v5286, 32
        %v8141 = vpop.permute.xlu0 %8140
        %8142 = vrot.lane.b32.xlu0 %v5291, 32
        %v8143 = vpop.permute.xlu0 %8142
        %8144 = vrot.lane.b32.xlu0 %v5296, 32
        %v8145 = vpop.permute.xlu0 %8144
        %8146 = vrot.lane.b32.xlu0 %v5301, 32
        %v8147 = vpop.permute.xlu0 %8146
        %8148 = vrot.lane.b32.xlu0 %v5306, 32
        %v8149 = vpop.permute.xlu0 %8148
        %8150 = vrot.lane.b32.xlu0 %v5311, 32
        %v8151 = vpop.permute.xlu0 %8150
        %8152 = vrot.lane.b32.xlu0 %v5316, 32
        %v8153 = vpop.permute.xlu0 %8152
        %8154 = vrot.lane.b32.xlu0 %v5321, 32
        %v8155 = vpop.permute.xlu0 %8154
        %8156 = vrot.lane.b32.xlu0 %v5326, 32
        %v8157 = vpop.permute.xlu0 %8156
        %8158 = vrot.lane.b32.xlu0 %v5331, 32
        %v8159 = vpop.permute.xlu0 %8158
        %8160 = vrot.lane.b32.xlu0 %v5336, 32
        %v8161 = vpop.permute.xlu0 %8160
        %8162 = vrot.lane.b32.xlu0 %v5341, 32
        %v8163 = vpop.permute.xlu0 %8162
        %8164 = vrot.lane.b32.xlu0 %v5346, 32
        %v8165 = vpop.permute.xlu0 %8164
        %8166 = vrot.lane.b32.xlu0 %v5351, 32
        %v8167 = vpop.permute.xlu0 %8166
        %8168 = vrot.lane.b32.xlu0 %v5356, 32
        %v8169 = vpop.permute.xlu0 %8168
        %vm8732 = vcmask 343296
        %8733 = vst.msk [vmem:[%s200] sm:$0xff] %vm8732, %v7047
        %8734 = vst.msk [vmem:[%s200 + $0x8] sm:$0xff] %vm8732, %v7049
        %8735 = vst.msk [vmem:[%s200 + $0x10] sm:$0xff] %vm8732, %v7051
        %8736 = vst.msk [vmem:[%s200 + $0x18] sm:$0xff] %vm8732, %v7053
        %8737 = vst.msk [vmem:[%s200 + $0x20] sm:$0xff] %vm8732, %v7055
        %8738 = vst.msk [vmem:[%s200 + $0x28] sm:$0xff] %vm8732, %v7057
        %8739 = vst.msk [vmem:[%s200 + $0x30] sm:$0xff] %vm8732, %v7059
        %8740 = vst.msk [vmem:[%s200 + $0x38] sm:$0xff] %vm8732, %v7061
        %8741 = vst.msk [vmem:[%s200 + $0x40] sm:$0xff] %vm8732, %v7063
        %8742 = vst.msk [vmem:[%s200 + $0x48] sm:$0xff] %vm8732, %v7065
        %8743 = vst.msk [vmem:[%s200 + $0x50] sm:$0xff] %vm8732, %v7067
        %8744 = vst.msk [vmem:[%s200 + $0x58] sm:$0xff] %vm8732, %v7069
        %8745 = vst.msk [vmem:[%s200 + $0x60] sm:$0xff] %vm8732, %v7071
        %8746 = vst.msk [vmem:[%s200 + $0x68] sm:$0xff] %vm8732, %v7073
        %8747 = vst.msk [vmem:[%s200 + $0x70] sm:$0xff] %vm8732, %v7075
        %8748 = vst.msk [vmem:[%s200 + $0x78] sm:$0xff] %vm8732, %v7077
        %8749 = vst.msk [vmem:[%s200 + $0x80] sm:$0xff] %vm8732, %v7079
        %8750 = vst.msk [vmem:[%s200 + $0x88] sm:$0xff] %vm8732, %v7081
        %8751 = vst.msk [vmem:[%s200 + $0x90] sm:$0xff] %vm8732, %v7083
        %8752 = vst.msk [vmem:[%s200 + $0x98] sm:$0xff] %vm8732, %v7085
        %8753 = vst.msk [vmem:[%s200 + $0xa0] sm:$0xff] %vm8732, %v7087
        %8754 = vst.msk [vmem:[%s200 + $0xa8] sm:$0xff] %vm8732, %v7089
        %8755 = vst.msk [vmem:[%s200 + $0xb0] sm:$0xff] %vm8732, %v7091
        %8756 = vst.msk [vmem:[%s200 + $0xb8] sm:$0xff] %vm8732, %v7093
        %8757 = vst.msk [vmem:[%s200 + $0xc0] sm:$0xff] %vm8732, %v7095
        %8758 = vst.msk [vmem:[%s200 + $0xc8] sm:$0xff] %vm8732, %v7097
        %8759 = vst.msk [vmem:[%s200 + $0xd0] sm:$0xff] %vm8732, %v7099
        %8760 = vst.msk [vmem:[%s200 + $0xd8] sm:$0xff] %vm8732, %v7101
        %8761 = vst.msk [vmem:[%s200 + $0xe0] sm:$0xff] %vm8732, %v7103
        %8762 = vst.msk [vmem:[%s200 + $0xe8] sm:$0xff] %vm8732, %v7105
        %8763 = vst.msk [vmem:[%s200 + $0xf0] sm:$0xff] %vm8732, %v7107
        %8764 = vst.msk [vmem:[%s200 + $0xf8] sm:$0xff] %vm8732, %v7109
        %8765 = vst.msk [vmem:[%s200 + $0x100] sm:$0xff] %vm8732, %v7111
        %8766 = vst.msk [vmem:[%s200 + $0x108] sm:$0xff] %vm8732, %v7113
        %8767 = vst.msk [vmem:[%s200 + $0x110] sm:$0xff] %vm8732, %v7115
        %8768 = vst.msk [vmem:[%s200 + $0x118] sm:$0xff] %vm8732, %v7117
        %8769 = vst.msk [vmem:[%s200 + $0x120] sm:$0xff] %vm8732, %v7119
        %8770 = vst.msk [vmem:[%s200 + $0x128] sm:$0xff] %vm8732, %v7121
        %8771 = vst.msk [vmem:[%s200 + $0x130] sm:$0xff] %vm8732, %v7123
        %8772 = vst.msk [vmem:[%s200 + $0x138] sm:$0xff] %vm8732, %v7125
        %8773 = vst.msk [vmem:[%s200 + $0x140] sm:$0xff] %vm8732, %v7127
        %8774 = vst.msk [vmem:[%s200 + $0x148] sm:$0xff] %vm8732, %v7129
        %8775 = vst.msk [vmem:[%s200 + $0x150] sm:$0xff] %vm8732, %v7131
        %8776 = vst.msk [vmem:[%s200 + $0x158] sm:$0xff] %vm8732, %v7133
        %8777 = vst.msk [vmem:[%s200 + $0x160] sm:$0xff] %vm8732, %v7135
        %8778 = vst.msk [vmem:[%s200 + $0x168] sm:$0xff] %vm8732, %v7137
        %8779 = vst.msk [vmem:[%s200 + $0x170] sm:$0xff] %vm8732, %v7139
        %8780 = vst.msk [vmem:[%s200 + $0x178] sm:$0xff] %vm8732, %v7141
        %8781 = vst.msk [vmem:[%s200 + $0x180] sm:$0xff] %vm8732, %v7143
        %8782 = vst.msk [vmem:[%s200 + $0x188] sm:$0xff] %vm8732, %v7145
        %8783 = vst.msk [vmem:[%s200 + $0x190] sm:$0xff] %vm8732, %v7147
        %8784 = vst.msk [vmem:[%s200 + $0x198] sm:$0xff] %vm8732, %v7149
        %8785 = vst.msk [vmem:[%s200 + $0x1a0] sm:$0xff] %vm8732, %v7151
        %8786 = vst.msk [vmem:[%s200 + $0x1a8] sm:$0xff] %vm8732, %v7153
        %8787 = vst.msk [vmem:[%s200 + $0x1b0] sm:$0xff] %vm8732, %v7155
        %8788 = vst.msk [vmem:[%s200 + $0x1b8] sm:$0xff] %vm8732, %v7157
        %8789 = vst.msk [vmem:[%s200 + $0x1c0] sm:$0xff] %vm8732, %v7159
        %8790 = vst.msk [vmem:[%s200 + $0x1c8] sm:$0xff] %vm8732, %v7161
        %8791 = vst.msk [vmem:[%s200 + $0x1d0] sm:$0xff] %vm8732, %v7163
        %8792 = vst.msk [vmem:[%s200 + $0x1d8] sm:$0xff] %vm8732, %v7165
        %8793 = vst.msk [vmem:[%s200 + $0x1e0] sm:$0xff] %vm8732, %v7167
        %8794 = vst.msk [vmem:[%s200 + $0x1e8] sm:$0xff] %vm8732, %v7169
        %8795 = vst.msk [vmem:[%s200 + $0x1f0] sm:$0xff] %vm8732, %v7171
        %8796 = vst.msk [vmem:[%s200 + $0x1f8] sm:$0xff] %vm8732, %v7173
        %8797 = vst.msk [vmem:[%s200 + $0x200] sm:$0xff] %vm8732, %v7175
        %8798 = vst.msk [vmem:[%s200 + $0x208] sm:$0xff] %vm8732, %v7177
        %8799 = vst.msk [vmem:[%s200 + $0x210] sm:$0xff] %vm8732, %v7179
        %8800 = vst.msk [vmem:[%s200 + $0x218] sm:$0xff] %vm8732, %v7181
        %8801 = vst.msk [vmem:[%s200 + $0x220] sm:$0xff] %vm8732, %v7183
        %8802 = vst.msk [vmem:[%s200 + $0x228] sm:$0xff] %vm8732, %v7185
        %8803 = vst.msk [vmem:[%s200 + $0x230] sm:$0xff] %vm8732, %v7187
        %8804 = vst.msk [vmem:[%s200 + $0x238] sm:$0xff] %vm8732, %v7189
        %8805 = vst.msk [vmem:[%s200 + $0x240] sm:$0xff] %vm8732, %v7191
        %8806 = vst.msk [vmem:[%s200 + $0x248] sm:$0xff] %vm8732, %v7193
        %8807 = vst.msk [vmem:[%s200 + $0x250] sm:$0xff] %vm8732, %v7195
        %8808 = vst.msk [vmem:[%s200 + $0x258] sm:$0xff] %vm8732, %v7197
        %8809 = vst.msk [vmem:[%s200 + $0x260] sm:$0xff] %vm8732, %v7199
        %8810 = vst.msk [vmem:[%s200 + $0x268] sm:$0xff] %vm8732, %v7201
        %8811 = vst.msk [vmem:[%s200 + $0x270] sm:$0xff] %vm8732, %v7203
        %8812 = vst.msk [vmem:[%s200 + $0x278] sm:$0xff] %vm8732, %v7205
        %8813 = vst.msk [vmem:[%s200 + $0x280] sm:$0xff] %vm8732, %v7207
        %8814 = vst.msk [vmem:[%s200 + $0x288] sm:$0xff] %vm8732, %v7209
        %8815 = vst.msk [vmem:[%s200 + $0x290] sm:$0xff] %vm8732, %v7211
        %8816 = vst.msk [vmem:[%s200 + $0x298] sm:$0xff] %vm8732, %v7213
        %8817 = vst.msk [vmem:[%s200 + $0x2a0] sm:$0xff] %vm8732, %v7215
        %8818 = vst.msk [vmem:[%s200 + $0x2a8] sm:$0xff] %vm8732, %v7217
        %8819 = vst.msk [vmem:[%s200 + $0x2b0] sm:$0xff] %vm8732, %v7219
        %8820 = vst.msk [vmem:[%s200 + $0x2b8] sm:$0xff] %vm8732, %v7221
        %8821 = vst.msk [vmem:[%s200 + $0x2c0] sm:$0xff] %vm8732, %v7223
        %8822 = vst.msk [vmem:[%s200 + $0x2c8] sm:$0xff] %vm8732, %v7225
        %8823 = vst.msk [vmem:[%s200 + $0x2d0] sm:$0xff] %vm8732, %v7227
        %8824 = vst.msk [vmem:[%s200 + $0x2d8] sm:$0xff] %vm8732, %v7229
        %8825 = vst.msk [vmem:[%s200 + $0x2e0] sm:$0xff] %vm8732, %v7231
        %8826 = vst.msk [vmem:[%s200 + $0x2e8] sm:$0xff] %vm8732, %v7233
        %8827 = vst.msk [vmem:[%s200 + $0x2f0] sm:$0xff] %vm8732, %v7235
        %8828 = vst.msk [vmem:[%s200 + $0x2f8] sm:$0xff] %vm8732, %v7237
        %8829 = vst.msk [vmem:[%s200 + $0x300] sm:$0xff] %vm8732, %v7239
        %8830 = vst.msk [vmem:[%s200 + $0x308] sm:$0xff] %vm8732, %v7241
        %8831 = vst.msk [vmem:[%s200 + $0x310] sm:$0xff] %vm8732, %v7243
        %8832 = vst.msk [vmem:[%s200 + $0x318] sm:$0xff] %vm8732, %v7245
        %8833 = vst.msk [vmem:[%s200 + $0x320] sm:$0xff] %vm8732, %v7247
        %8834 = vst.msk [vmem:[%s200 + $0x328] sm:$0xff] %vm8732, %v7249
        %8835 = vst.msk [vmem:[%s200 + $0x330] sm:$0xff] %vm8732, %v7251
        %8836 = vst.msk [vmem:[%s200 + $0x338] sm:$0xff] %vm8732, %v7253
        %8837 = vst.msk [vmem:[%s200 + $0x340] sm:$0xff] %vm8732, %v7255
        %8838 = vst.msk [vmem:[%s200 + $0x348] sm:$0xff] %vm8732, %v7257
        %8839 = vst.msk [vmem:[%s200 + $0x350] sm:$0xff] %vm8732, %v7259
        %8840 = vst.msk [vmem:[%s200 + $0x358] sm:$0xff] %vm8732, %v7261
        %8841 = vst.msk [vmem:[%s200 + $0x360] sm:$0xff] %vm8732, %v7263
        %8842 = vst.msk [vmem:[%s200 + $0x368] sm:$0xff] %vm8732, %v7265
        %8843 = vst.msk [vmem:[%s200 + $0x370] sm:$0xff] %vm8732, %v7267
        %8844 = vst.msk [vmem:[%s200 + $0x378] sm:$0xff] %vm8732, %v7269
        %8845 = vst.msk [vmem:[%s200 + $0x380] sm:$0xff] %vm8732, %v7271
        %8846 = vst.msk [vmem:[%s200 + $0x388] sm:$0xff] %vm8732, %v7273
        %8847 = vst.msk [vmem:[%s200 + $0x390] sm:$0xff] %vm8732, %v7275
        %8848 = vst.msk [vmem:[%s200 + $0x398] sm:$0xff] %vm8732, %v7277
        %8849 = vst.msk [vmem:[%s200 + $0x3a0] sm:$0xff] %vm8732, %v7279
        %8850 = vst.msk [vmem:[%s200 + $0x3a8] sm:$0xff] %vm8732, %v7281
        %8851 = vst.msk [vmem:[%s200 + $0x3b0] sm:$0xff] %vm8732, %v7283
        %8852 = vst.msk [vmem:[%s200 + $0x3b8] sm:$0xff] %vm8732, %v7285
        %8853 = vst.msk [vmem:[%s200 + $0x3c0] sm:$0xff] %vm8732, %v7287
        %8854 = vst.msk [vmem:[%s200 + $0x3c8] sm:$0xff] %vm8732, %v7289
        %8855 = vst.msk [vmem:[%s200 + $0x3d0] sm:$0xff] %vm8732, %v7291
        %8856 = vst.msk [vmem:[%s200 + $0x3d8] sm:$0xff] %vm8732, %v7293
        %8857 = vst.msk [vmem:[%s200 + $0x3e0] sm:$0xff] %vm8732, %v7295
        %8858 = vst.msk [vmem:[%s200 + $0x3e8] sm:$0xff] %vm8732, %v7297
        %8859 = vst.msk [vmem:[%s200 + $0x3f0] sm:$0xff] %vm8732, %v7299
        %8860 = vst.msk [vmem:[%s200 + $0x3f8] sm:$0xff] %vm8732, %v7301
        %8861 = vst.msk [vmem:[%s200 + $0x400] sm:$0xff] %vm8732, %v7303
        %8862 = vst.msk [vmem:[%s200 + $0x408] sm:$0xff] %vm8732, %v7305
        %8863 = vst.msk [vmem:[%s200 + $0x410] sm:$0xff] %vm8732, %v7307
        %8864 = vst.msk [vmem:[%s200 + $0x418] sm:$0xff] %vm8732, %v7309
        %8865 = vst.msk [vmem:[%s200 + $0x420] sm:$0xff] %vm8732, %v7311
        %8866 = vst.msk [vmem:[%s200 + $0x428] sm:$0xff] %vm8732, %v7313
        %8867 = vst.msk [vmem:[%s200 + $0x430] sm:$0xff] %vm8732, %v7315
        %8868 = vst.msk [vmem:[%s200 + $0x438] sm:$0xff] %vm8732, %v7317
        %8869 = vst.msk [vmem:[%s200 + $0x440] sm:$0xff] %vm8732, %v7319
        %8870 = vst.msk [vmem:[%s200 + $0x448] sm:$0xff] %vm8732, %v7321
        %8871 = vst.msk [vmem:[%s200 + $0x450] sm:$0xff] %vm8732, %v7323
        %8872 = vst.msk [vmem:[%s200 + $0x458] sm:$0xff] %vm8732, %v7325
        %8873 = vst.msk [vmem:[%s200 + $0x460] sm:$0xff] %vm8732, %v7327
        %8874 = vst.msk [vmem:[%s200 + $0x468] sm:$0xff] %vm8732, %v7329
        %8875 = vst.msk [vmem:[%s200 + $0x470] sm:$0xff] %vm8732, %v7331
        %8876 = vst.msk [vmem:[%s200 + $0x478] sm:$0xff] %vm8732, %v7333
        %8877 = vst.msk [vmem:[%s200 + $0x480] sm:$0xff] %vm8732, %v7335
        %8878 = vst.msk [vmem:[%s200 + $0x488] sm:$0xff] %vm8732, %v7337
        %8879 = vst.msk [vmem:[%s200 + $0x490] sm:$0xff] %vm8732, %v7339
        %8880 = vst.msk [vmem:[%s200 + $0x498] sm:$0xff] %vm8732, %v7341
        %8881 = vst.msk [vmem:[%s200 + $0x4a0] sm:$0xff] %vm8732, %v7343
        %8882 = vst.msk [vmem:[%s200 + $0x4a8] sm:$0xff] %vm8732, %v7345
        %8883 = vst.msk [vmem:[%s200 + $0x4b0] sm:$0xff] %vm8732, %v7347
        %8884 = vst.msk [vmem:[%s200 + $0x4b8] sm:$0xff] %vm8732, %v7349
        %8885 = vst.msk [vmem:[%s200 + $0x4c0] sm:$0xff] %vm8732, %v7351
        %8886 = vst.msk [vmem:[%s200 + $0x4c8] sm:$0xff] %vm8732, %v7353
        %8887 = vst.msk [vmem:[%s200 + $0x4d0] sm:$0xff] %vm8732, %v7355
        %8888 = vst.msk [vmem:[%s200 + $0x4d8] sm:$0xff] %vm8732, %v7357
        %8889 = vst.msk [vmem:[%s200 + $0x4e0] sm:$0xff] %vm8732, %v7359
        %8890 = vst.msk [vmem:[%s200 + $0x4e8] sm:$0xff] %vm8732, %v7361
        %8891 = vst.msk [vmem:[%s200 + $0x4f0] sm:$0xff] %vm8732, %v7363
        %8892 = vst.msk [vmem:[%s200 + $0x4f8] sm:$0xff] %vm8732, %v7365
        %8893 = vst.msk [vmem:[%s200 + $0x500] sm:$0xff] %vm8732, %v7367
        %8894 = vst.msk [vmem:[%s200 + $0x508] sm:$0xff] %vm8732, %v7369
        %8895 = vst.msk [vmem:[%s200 + $0x510] sm:$0xff] %vm8732, %v7371
        %8896 = vst.msk [vmem:[%s200 + $0x518] sm:$0xff] %vm8732, %v7373
        %8897 = vst.msk [vmem:[%s200 + $0x520] sm:$0xff] %vm8732, %v7375
        %8898 = vst.msk [vmem:[%s200 + $0x528] sm:$0xff] %vm8732, %v7377
        %8899 = vst.msk [vmem:[%s200 + $0x530] sm:$0xff] %vm8732, %v7379
        %8900 = vst.msk [vmem:[%s200 + $0x538] sm:$0xff] %vm8732, %v7381
        %8901 = vst.msk [vmem:[%s200 + $0x540] sm:$0xff] %vm8732, %v7383
        %8902 = vst.msk [vmem:[%s200 + $0x548] sm:$0xff] %vm8732, %v7385
        %8903 = vst.msk [vmem:[%s200 + $0x550] sm:$0xff] %vm8732, %v7387
        %8904 = vst.msk [vmem:[%s200 + $0x558] sm:$0xff] %vm8732, %v7389
        %8905 = vst.msk [vmem:[%s200 + $0x560] sm:$0xff] %vm8732, %v7391
        %8906 = vst.msk [vmem:[%s200 + $0x568] sm:$0xff] %vm8732, %v7393
        %8907 = vst.msk [vmem:[%s200 + $0x570] sm:$0xff] %vm8732, %v7395
        %8908 = vst.msk [vmem:[%s200 + $0x578] sm:$0xff] %vm8732, %v7397
        %8909 = vst.msk [vmem:[%s200 + $0x580] sm:$0xff] %vm8732, %v7399
        %8910 = vst.msk [vmem:[%s200 + $0x588] sm:$0xff] %vm8732, %v7401
        %8911 = vst.msk [vmem:[%s200 + $0x590] sm:$0xff] %vm8732, %v7403
        %8912 = vst.msk [vmem:[%s200 + $0x598] sm:$0xff] %vm8732, %v7405
        %8913 = vst.msk [vmem:[%s200 + $0x5a0] sm:$0xff] %vm8732, %v7407
        %8914 = vst.msk [vmem:[%s200 + $0x5a8] sm:$0xff] %vm8732, %v7409
        %8915 = vst.msk [vmem:[%s200 + $0x5b0] sm:$0xff] %vm8732, %v7411
        %8916 = vst.msk [vmem:[%s200 + $0x5b8] sm:$0xff] %vm8732, %v7413
        %8917 = vst.msk [vmem:[%s200 + $0x5c0] sm:$0xff] %vm8732, %v7415
        %8918 = vst.msk [vmem:[%s200 + $0x5c8] sm:$0xff] %vm8732, %v7417
        %8919 = vst.msk [vmem:[%s200 + $0x5d0] sm:$0xff] %vm8732, %v7419
        %8920 = vst.msk [vmem:[%s200 + $0x5d8] sm:$0xff] %vm8732, %v7421
        %8921 = vst.msk [vmem:[%s200 + $0x5e0] sm:$0xff] %vm8732, %v7423
        %8922 = vst.msk [vmem:[%s200 + $0x5e8] sm:$0xff] %vm8732, %v7425
        %8923 = vst.msk [vmem:[%s200 + $0x5f0] sm:$0xff] %vm8732, %v7427
        %8924 = vst.msk [vmem:[%s200 + $0x5f8] sm:$0xff] %vm8732, %v7429
        %8925 = vst.msk [vmem:[%s200 + $0x600] sm:$0xff] %vm8732, %v7431
        %8926 = vst.msk [vmem:[%s200 + $0x608] sm:$0xff] %vm8732, %v7433
        %8927 = vst.msk [vmem:[%s200 + $0x610] sm:$0xff] %vm8732, %v7435
        %8928 = vst.msk [vmem:[%s200 + $0x618] sm:$0xff] %vm8732, %v7437
        %8929 = vst.msk [vmem:[%s200 + $0x620] sm:$0xff] %vm8732, %v7439
        %8930 = vst.msk [vmem:[%s200 + $0x628] sm:$0xff] %vm8732, %v7441
        %8931 = vst.msk [vmem:[%s200 + $0x630] sm:$0xff] %vm8732, %v7443
        %8932 = vst.msk [vmem:[%s200 + $0x638] sm:$0xff] %vm8732, %v7445
        %8933 = vst.msk [vmem:[%s200 + $0x640] sm:$0xff] %vm8732, %v7447
        %8934 = vst.msk [vmem:[%s200 + $0x648] sm:$0xff] %vm8732, %v7449
        %8935 = vst.msk [vmem:[%s200 + $0x650] sm:$0xff] %vm8732, %v7451
        %8936 = vst.msk [vmem:[%s200 + $0x658] sm:$0xff] %vm8732, %v7453
        %8937 = vst.msk [vmem:[%s200 + $0x660] sm:$0xff] %vm8732, %v7455
        %8938 = vst.msk [vmem:[%s200 + $0x668] sm:$0xff] %vm8732, %v7457
        %8939 = vst.msk [vmem:[%s200 + $0x670] sm:$0xff] %vm8732, %v7459
        %8940 = vst.msk [vmem:[%s200 + $0x678] sm:$0xff] %vm8732, %v7461
        %8941 = vst.msk [vmem:[%s200 + $0x680] sm:$0xff] %vm8732, %v7463
        %8942 = vst.msk [vmem:[%s200 + $0x688] sm:$0xff] %vm8732, %v7465
        %8943 = vst.msk [vmem:[%s200 + $0x690] sm:$0xff] %vm8732, %v7467
        %8944 = vst.msk [vmem:[%s200 + $0x698] sm:$0xff] %vm8732, %v7469
        %8945 = vst.msk [vmem:[%s200 + $0x6a0] sm:$0xff] %vm8732, %v7471
        %8946 = vst.msk [vmem:[%s200 + $0x6a8] sm:$0xff] %vm8732, %v7473
        %8947 = vst.msk [vmem:[%s200 + $0x6b0] sm:$0xff] %vm8732, %v7475
        %8948 = vst.msk [vmem:[%s200 + $0x6b8] sm:$0xff] %vm8732, %v7477
        %8949 = vst.msk [vmem:[%s200 + $0x6c0] sm:$0xff] %vm8732, %v7479
        %8950 = vst.msk [vmem:[%s200 + $0x6c8] sm:$0xff] %vm8732, %v7481
        %8951 = vst.msk [vmem:[%s200 + $0x6d0] sm:$0xff] %vm8732, %v7483
        %8952 = vst.msk [vmem:[%s200 + $0x6d8] sm:$0xff] %vm8732, %v7485
        %8953 = vst.msk [vmem:[%s200 + $0x6e0] sm:$0xff] %vm8732, %v7487
        %8954 = vst.msk [vmem:[%s200 + $0x6e8] sm:$0xff] %vm8732, %v7489
        %8955 = vst.msk [vmem:[%s200 + $0x6f0] sm:$0xff] %vm8732, %v7491
        %8956 = vst.msk [vmem:[%s200 + $0x6f8] sm:$0xff] %vm8732, %v7493
        %8957 = vst.msk [vmem:[%s200 + $0x700] sm:$0xff] %vm8732, %v7495
        %8958 = vst.msk [vmem:[%s200 + $0x708] sm:$0xff] %vm8732, %v7497
        %8959 = vst.msk [vmem:[%s200 + $0x710] sm:$0xff] %vm8732, %v7499
        %8960 = vst.msk [vmem:[%s200 + $0x718] sm:$0xff] %vm8732, %v7501
        %8961 = vst.msk [vmem:[%s200 + $0x720] sm:$0xff] %vm8732, %v7503
        %8962 = vst.msk [vmem:[%s200 + $0x728] sm:$0xff] %vm8732, %v7505
        %8963 = vst.msk [vmem:[%s200 + $0x730] sm:$0xff] %vm8732, %v7507
        %8964 = vst.msk [vmem:[%s200 + $0x738] sm:$0xff] %vm8732, %v7509
        %8965 = vst.msk [vmem:[%s200 + $0x740] sm:$0xff] %vm8732, %v7511
        %8966 = vst.msk [vmem:[%s200 + $0x748] sm:$0xff] %vm8732, %v7513
        %8967 = vst.msk [vmem:[%s200 + $0x750] sm:$0xff] %vm8732, %v7515
        %8968 = vst.msk [vmem:[%s200 + $0x758] sm:$0xff] %vm8732, %v7517
        %8969 = vst.msk [vmem:[%s200 + $0x760] sm:$0xff] %vm8732, %v7519
        %8970 = vst.msk [vmem:[%s200 + $0x768] sm:$0xff] %vm8732, %v7521
        %8971 = vst.msk [vmem:[%s200 + $0x770] sm:$0xff] %vm8732, %v7523
        %8972 = vst.msk [vmem:[%s200 + $0x778] sm:$0xff] %vm8732, %v7525
        %8973 = vst.msk [vmem:[%s200 + $0x780] sm:$0xff] %vm8732, %v7527
        %8974 = vst.msk [vmem:[%s200 + $0x788] sm:$0xff] %vm8732, %v7529
        %8975 = vst.msk [vmem:[%s200 + $0x790] sm:$0xff] %vm8732, %v7531
        %8976 = vst.msk [vmem:[%s200 + $0x798] sm:$0xff] %vm8732, %v7533
        %8977 = vst.msk [vmem:[%s200 + $0x7a0] sm:$0xff] %vm8732, %v7535
        %8978 = vst.msk [vmem:[%s200 + $0x7a8] sm:$0xff] %vm8732, %v7537
        %8979 = vst.msk [vmem:[%s200 + $0x7b0] sm:$0xff] %vm8732, %v7539
        %8980 = vst.msk [vmem:[%s200 + $0x7b8] sm:$0xff] %vm8732, %v7541
        %8981 = vst.msk [vmem:[%s200 + $0x7c0] sm:$0xff] %vm8732, %v7543
        %8982 = vst.msk [vmem:[%s200 + $0x7c8] sm:$0xff] %vm8732, %v7545
        %8983 = vst.msk [vmem:[%s200 + $0x7d0] sm:$0xff] %vm8732, %v7547
        %8984 = vst.msk [vmem:[%s200 + $0x7d8] sm:$0xff] %vm8732, %v7549
        %8985 = vst.msk [vmem:[%s200 + $0x7e0] sm:$0xff] %vm8732, %v7551
        %8986 = vst.msk [vmem:[%s200 + $0x7e8] sm:$0xff] %vm8732, %v7553
        %8987 = vst.msk [vmem:[%s200 + $0x7f0] sm:$0xff] %vm8732, %v7555
        %8988 = vst.msk [vmem:[%s200 + $0x7f8] sm:$0xff] %vm8732, %v7557
        %8989 = vst.msk [vmem:[%s200 + $0x800] sm:$0xff] %vm8732, %v7559
        %8990 = vst.msk [vmem:[%s200 + $0x808] sm:$0xff] %vm8732, %v7561
        %8991 = vst.msk [vmem:[%s200 + $0x810] sm:$0xff] %vm8732, %v7563
        %8992 = vst.msk [vmem:[%s200 + $0x818] sm:$0xff] %vm8732, %v7565
        %8993 = vst.msk [vmem:[%s200 + $0x820] sm:$0xff] %vm8732, %v7567
        %8994 = vst.msk [vmem:[%s200 + $0x828] sm:$0xff] %vm8732, %v7569
        %8995 = vst.msk [vmem:[%s200 + $0x830] sm:$0xff] %vm8732, %v7571
        %8996 = vst.msk [vmem:[%s200 + $0x838] sm:$0xff] %vm8732, %v7573
        %8997 = vst.msk [vmem:[%s200 + $0x840] sm:$0xff] %vm8732, %v7575
        %8998 = vst.msk [vmem:[%s200 + $0x848] sm:$0xff] %vm8732, %v7577
        %8999 = vst.msk [vmem:[%s200 + $0x850] sm:$0xff] %vm8732, %v7579
        %9000 = vst.msk [vmem:[%s200 + $0x858] sm:$0xff] %vm8732, %v7581
        %9001 = vst.msk [vmem:[%s200 + $0x860] sm:$0xff] %vm8732, %v7583
        %9002 = vst.msk [vmem:[%s200 + $0x868] sm:$0xff] %vm8732, %v7585
        %9003 = vst.msk [vmem:[%s200 + $0x870] sm:$0xff] %vm8732, %v7587
        %9004 = vst.msk [vmem:[%s200 + $0x878] sm:$0xff] %vm8732, %v7589
        %9005 = vst.msk [vmem:[%s200 + $0x880] sm:$0xff] %vm8732, %v7591
        %9006 = vst.msk [vmem:[%s200 + $0x888] sm:$0xff] %vm8732, %v7593
        %9007 = vst.msk [vmem:[%s200 + $0x890] sm:$0xff] %vm8732, %v7595
        %9008 = vst.msk [vmem:[%s200 + $0x898] sm:$0xff] %vm8732, %v7597
        %9009 = vst.msk [vmem:[%s200 + $0x8a0] sm:$0xff] %vm8732, %v7599
        %9010 = vst.msk [vmem:[%s200 + $0x8a8] sm:$0xff] %vm8732, %v7601
        %9011 = vst.msk [vmem:[%s200 + $0x8b0] sm:$0xff] %vm8732, %v7603
        %9012 = vst.msk [vmem:[%s200 + $0x8b8] sm:$0xff] %vm8732, %v7605
        %9013 = vst.msk [vmem:[%s200 + $0x8c0] sm:$0xff] %vm8732, %v7607
        %9014 = vst.msk [vmem:[%s200 + $0x8c8] sm:$0xff] %vm8732, %v7609
        %9015 = vst.msk [vmem:[%s200 + $0x8d0] sm:$0xff] %vm8732, %v7611
        %9016 = vst.msk [vmem:[%s200 + $0x8d8] sm:$0xff] %vm8732, %v7613
        %9017 = vst.msk [vmem:[%s200 + $0x8e0] sm:$0xff] %vm8732, %v7615
        %9018 = vst.msk [vmem:[%s200 + $0x8e8] sm:$0xff] %vm8732, %v7617
        %9019 = vst.msk [vmem:[%s200 + $0x8f0] sm:$0xff] %vm8732, %v7619
        %9020 = vst.msk [vmem:[%s200 + $0x8f8] sm:$0xff] %vm8732, %v7621
        %9021 = vst.msk [vmem:[%s200 + $0x900] sm:$0xff] %vm8732, %v7623
        %9022 = vst.msk [vmem:[%s200 + $0x908] sm:$0xff] %vm8732, %v7625
        %9023 = vst.msk [vmem:[%s200 + $0x910] sm:$0xff] %vm8732, %v7627
        %9024 = vst.msk [vmem:[%s200 + $0x918] sm:$0xff] %vm8732, %v7629
        %9025 = vst.msk [vmem:[%s200 + $0x920] sm:$0xff] %vm8732, %v7631
        %9026 = vst.msk [vmem:[%s200 + $0x928] sm:$0xff] %vm8732, %v7633
        %9027 = vst.msk [vmem:[%s200 + $0x930] sm:$0xff] %vm8732, %v7635
        %9028 = vst.msk [vmem:[%s200 + $0x938] sm:$0xff] %vm8732, %v7637
        %9029 = vst.msk [vmem:[%s200 + $0x940] sm:$0xff] %vm8732, %v7639
        %9030 = vst.msk [vmem:[%s200 + $0x948] sm:$0xff] %vm8732, %v7641
        %9031 = vst.msk [vmem:[%s200 + $0x950] sm:$0xff] %vm8732, %v7643
        %9032 = vst.msk [vmem:[%s200 + $0x958] sm:$0xff] %vm8732, %v7645
        %9033 = vst.msk [vmem:[%s200 + $0x960] sm:$0xff] %vm8732, %v7647
        %9034 = vst.msk [vmem:[%s200 + $0x968] sm:$0xff] %vm8732, %v7649
        %9035 = vst.msk [vmem:[%s200 + $0x970] sm:$0xff] %vm8732, %v7651
        %9036 = vst.msk [vmem:[%s200 + $0x978] sm:$0xff] %vm8732, %v7653
        %9037 = vst.msk [vmem:[%s200 + $0x980] sm:$0xff] %vm8732, %v7655
        %9038 = vst.msk [vmem:[%s200 + $0x988] sm:$0xff] %vm8732, %v7657
        %9039 = vst.msk [vmem:[%s200 + $0x990] sm:$0xff] %vm8732, %v7659
        %9040 = vst.msk [vmem:[%s200 + $0x998] sm:$0xff] %vm8732, %v7661
        %9041 = vst.msk [vmem:[%s200 + $0x9a0] sm:$0xff] %vm8732, %v7663
        %9042 = vst.msk [vmem:[%s200 + $0x9a8] sm:$0xff] %vm8732, %v7665
        %9043 = vst.msk [vmem:[%s200 + $0x9b0] sm:$0xff] %vm8732, %v7667
        %9044 = vst.msk [vmem:[%s200 + $0x9b8] sm:$0xff] %vm8732, %v7669
        %9045 = vst.msk [vmem:[%s200 + $0x9c0] sm:$0xff] %vm8732, %v7671
        %9046 = vst.msk [vmem:[%s200 + $0x9c8] sm:$0xff] %vm8732, %v7673
        %9047 = vst.msk [vmem:[%s200 + $0x9d0] sm:$0xff] %vm8732, %v7675
        %9048 = vst.msk [vmem:[%s200 + $0x9d8] sm:$0xff] %vm8732, %v7677
        %9049 = vst.msk [vmem:[%s200 + $0x9e0] sm:$0xff] %vm8732, %v7679
        %9050 = vst.msk [vmem:[%s200 + $0x9e8] sm:$0xff] %vm8732, %v7681
        %9051 = vst.msk [vmem:[%s200 + $0x9f0] sm:$0xff] %vm8732, %v7683
        %9052 = vst.msk [vmem:[%s200 + $0x9f8] sm:$0xff] %vm8732, %v7685
        %9053 = vst.msk [vmem:[%s200 + $0xa00] sm:$0xff] %vm8732, %v7687
        %9054 = vst.msk [vmem:[%s200 + $0xa08] sm:$0xff] %vm8732, %v7689
        %9055 = vst.msk [vmem:[%s200 + $0xa10] sm:$0xff] %vm8732, %v7691
        %9056 = vst.msk [vmem:[%s200 + $0xa18] sm:$0xff] %vm8732, %v7693
        %9057 = vst.msk [vmem:[%s200 + $0xa20] sm:$0xff] %vm8732, %v7695
        %9058 = vst.msk [vmem:[%s200 + $0xa28] sm:$0xff] %vm8732, %v7697
        %9059 = vst.msk [vmem:[%s200 + $0xa30] sm:$0xff] %vm8732, %v7699
        %9060 = vst.msk [vmem:[%s200 + $0xa38] sm:$0xff] %vm8732, %v7701
        %9061 = vst.msk [vmem:[%s200 + $0xa40] sm:$0xff] %vm8732, %v7703
        %9062 = vst.msk [vmem:[%s200 + $0xa48] sm:$0xff] %vm8732, %v7705
        %9063 = vst.msk [vmem:[%s200 + $0xa50] sm:$0xff] %vm8732, %v7707
        %9064 = vst.msk [vmem:[%s200 + $0xa58] sm:$0xff] %vm8732, %v7709
        %9065 = vst.msk [vmem:[%s200 + $0xa60] sm:$0xff] %vm8732, %v7711
        %9066 = vst.msk [vmem:[%s200 + $0xa68] sm:$0xff] %vm8732, %v7713
        %9067 = vst.msk [vmem:[%s200 + $0xa70] sm:$0xff] %vm8732, %v7715
        %9068 = vst.msk [vmem:[%s200 + $0xa78] sm:$0xff] %vm8732, %v7717
        %9069 = vst.msk [vmem:[%s200 + $0xa80] sm:$0xff] %vm8732, %v7719
        %9070 = vst.msk [vmem:[%s200 + $0xa88] sm:$0xff] %vm8732, %v7721
        %9071 = vst.msk [vmem:[%s200 + $0xa90] sm:$0xff] %vm8732, %v7723
        %9072 = vst.msk [vmem:[%s200 + $0xa98] sm:$0xff] %vm8732, %v7725
        %9073 = vst.msk [vmem:[%s200 + $0xaa0] sm:$0xff] %vm8732, %v7727
        %9074 = vst.msk [vmem:[%s200 + $0xaa8] sm:$0xff] %vm8732, %v7729
        %9075 = vst.msk [vmem:[%s200 + $0xab0] sm:$0xff] %vm8732, %v7731
        %9076 = vst.msk [vmem:[%s200 + $0xab8] sm:$0xff] %vm8732, %v7733
        %9077 = vst.msk [vmem:[%s200 + $0xac0] sm:$0xff] %vm8732, %v7735
        %9078 = vst.msk [vmem:[%s200 + $0xac8] sm:$0xff] %vm8732, %v7737
        %9079 = vst.msk [vmem:[%s200 + $0xad0] sm:$0xff] %vm8732, %v7739
        %9080 = vst.msk [vmem:[%s200 + $0xad8] sm:$0xff] %vm8732, %v7741
        %9081 = vst.msk [vmem:[%s200 + $0xae0] sm:$0xff] %vm8732, %v7743
        %9082 = vst.msk [vmem:[%s200 + $0xae8] sm:$0xff] %vm8732, %v7745
        %9083 = vst.msk [vmem:[%s200 + $0xaf0] sm:$0xff] %vm8732, %v7747
        %9084 = vst.msk [vmem:[%s200 + $0xaf8] sm:$0xff] %vm8732, %v7749
        %9085 = vst.msk [vmem:[%s200 + $0xb00] sm:$0xff] %vm8732, %v7751
        %9086 = vst.msk [vmem:[%s200 + $0xb08] sm:$0xff] %vm8732, %v7753
        %9087 = vst.msk [vmem:[%s200 + $0xb10] sm:$0xff] %vm8732, %v7755
        %9088 = vst.msk [vmem:[%s200 + $0xb18] sm:$0xff] %vm8732, %v7757
        %9089 = vst.msk [vmem:[%s200 + $0xb20] sm:$0xff] %vm8732, %v7759
        %9090 = vst.msk [vmem:[%s200 + $0xb28] sm:$0xff] %vm8732, %v7761
        %9091 = vst.msk [vmem:[%s200 + $0xb30] sm:$0xff] %vm8732, %v7763
        %9092 = vst.msk [vmem:[%s200 + $0xb38] sm:$0xff] %vm8732, %v7765
        %9093 = vst.msk [vmem:[%s200 + $0xb40] sm:$0xff] %vm8732, %v7767
        %9094 = vst.msk [vmem:[%s200 + $0xb48] sm:$0xff] %vm8732, %v7769
        %9095 = vst.msk [vmem:[%s200 + $0xb50] sm:$0xff] %vm8732, %v7771
        %9096 = vst.msk [vmem:[%s200 + $0xb58] sm:$0xff] %vm8732, %v7773
        %9097 = vst.msk [vmem:[%s200 + $0xb60] sm:$0xff] %vm8732, %v7775
        %9098 = vst.msk [vmem:[%s200 + $0xb68] sm:$0xff] %vm8732, %v7777
        %9099 = vst.msk [vmem:[%s200 + $0xb70] sm:$0xff] %vm8732, %v7779
        %9100 = vst.msk [vmem:[%s200 + $0xb78] sm:$0xff] %vm8732, %v7781
        %9101 = vst.msk [vmem:[%s200 + $0xb80] sm:$0xff] %vm8732, %v7783
        %9102 = vst.msk [vmem:[%s200 + $0xb88] sm:$0xff] %vm8732, %v7785
        %9103 = vst.msk [vmem:[%s200 + $0xb90] sm:$0xff] %vm8732, %v7787
        %9104 = vst.msk [vmem:[%s200 + $0xb98] sm:$0xff] %vm8732, %v7789
        %9105 = vst.msk [vmem:[%s200 + $0xba0] sm:$0xff] %vm8732, %v7791
        %9106 = vst.msk [vmem:[%s200 + $0xba8] sm:$0xff] %vm8732, %v7793
        %9107 = vst.msk [vmem:[%s200 + $0xbb0] sm:$0xff] %vm8732, %v7795
        %9108 = vst.msk [vmem:[%s200 + $0xbb8] sm:$0xff] %vm8732, %v7797
        %9109 = vst.msk [vmem:[%s200 + $0xbc0] sm:$0xff] %vm8732, %v7799
        %9110 = vst.msk [vmem:[%s200 + $0xbc8] sm:$0xff] %vm8732, %v7801
        %9111 = vst.msk [vmem:[%s200 + $0xbd0] sm:$0xff] %vm8732, %v7803
        %9112 = vst.msk [vmem:[%s200 + $0xbd8] sm:$0xff] %vm8732, %v7805
        %9113 = vst.msk [vmem:[%s200 + $0xbe0] sm:$0xff] %vm8732, %v7807
        %9114 = vst.msk [vmem:[%s200 + $0xbe8] sm:$0xff] %vm8732, %v7809
        %9115 = vst.msk [vmem:[%s200 + $0xbf0] sm:$0xff] %vm8732, %v7811
        %9116 = vst.msk [vmem:[%s200 + $0xbf8] sm:$0xff] %vm8732, %v7813
        %9117 = vst.msk [vmem:[%s200 + $0xc00] sm:$0xff] %vm8732, %v7815
        %9118 = vst.msk [vmem:[%s200 + $0xc08] sm:$0xff] %vm8732, %v7817
        %9119 = vst.msk [vmem:[%s200 + $0xc10] sm:$0xff] %vm8732, %v7819
        %9120 = vst.msk [vmem:[%s200 + $0xc18] sm:$0xff] %vm8732, %v7821
        %9121 = vst.msk [vmem:[%s200 + $0xc20] sm:$0xff] %vm8732, %v7823
        %9122 = vst.msk [vmem:[%s200 + $0xc28] sm:$0xff] %vm8732, %v7825
        %9123 = vst.msk [vmem:[%s200 + $0xc30] sm:$0xff] %vm8732, %v7827
        %9124 = vst.msk [vmem:[%s200 + $0xc38] sm:$0xff] %vm8732, %v7829
        %9125 = vst.msk [vmem:[%s200 + $0xc40] sm:$0xff] %vm8732, %v7831
        %9126 = vst.msk [vmem:[%s200 + $0xc48] sm:$0xff] %vm8732, %v7833
        %9127 = vst.msk [vmem:[%s200 + $0xc50] sm:$0xff] %vm8732, %v7835
        %9128 = vst.msk [vmem:[%s200 + $0xc58] sm:$0xff] %vm8732, %v7837
        %9129 = vst.msk [vmem:[%s200 + $0xc60] sm:$0xff] %vm8732, %v7839
        %9130 = vst.msk [vmem:[%s200 + $0xc68] sm:$0xff] %vm8732, %v7841
        %9131 = vst.msk [vmem:[%s200 + $0xc70] sm:$0xff] %vm8732, %v7843
        %9132 = vst.msk [vmem:[%s200 + $0xc78] sm:$0xff] %vm8732, %v7845
        %9133 = vst.msk [vmem:[%s200 + $0xc80] sm:$0xff] %vm8732, %v7847
        %9134 = vst.msk [vmem:[%s200 + $0xc88] sm:$0xff] %vm8732, %v7849
        %9135 = vst.msk [vmem:[%s200 + $0xc90] sm:$0xff] %vm8732, %v7851
        %9136 = vst.msk [vmem:[%s200 + $0xc98] sm:$0xff] %vm8732, %v7853
        %9137 = vst.msk [vmem:[%s200 + $0xca0] sm:$0xff] %vm8732, %v7855
        %9138 = vst.msk [vmem:[%s200 + $0xca8] sm:$0xff] %vm8732, %v7857
        %9139 = vst.msk [vmem:[%s200 + $0xcb0] sm:$0xff] %vm8732, %v7859
        %9140 = vst.msk [vmem:[%s200 + $0xcb8] sm:$0xff] %vm8732, %v7861
        %9141 = vst.msk [vmem:[%s200 + $0xcc0] sm:$0xff] %vm8732, %v7863
        %9142 = vst.msk [vmem:[%s200 + $0xcc8] sm:$0xff] %vm8732, %v7865
        %9143 = vst.msk [vmem:[%s200 + $0xcd0] sm:$0xff] %vm8732, %v7867
        %9144 = vst.msk [vmem:[%s200 + $0xcd8] sm:$0xff] %vm8732, %v7869
        %9145 = vst.msk [vmem:[%s200 + $0xce0] sm:$0xff] %vm8732, %v7871
        %9146 = vst.msk [vmem:[%s200 + $0xce8] sm:$0xff] %vm8732, %v7873
        %9147 = vst.msk [vmem:[%s200 + $0xcf0] sm:$0xff] %vm8732, %v7875
        %9148 = vst.msk [vmem:[%s200 + $0xcf8] sm:$0xff] %vm8732, %v7877
        %9149 = vst.msk [vmem:[%s200 + $0xd00] sm:$0xff] %vm8732, %v7879
        %9150 = vst.msk [vmem:[%s200 + $0xd08] sm:$0xff] %vm8732, %v7881
        %9151 = vst.msk [vmem:[%s200 + $0xd10] sm:$0xff] %vm8732, %v7883
        %9152 = vst.msk [vmem:[%s200 + $0xd18] sm:$0xff] %vm8732, %v7885
        %9153 = vst.msk [vmem:[%s200 + $0xd20] sm:$0xff] %vm8732, %v7887
        %9154 = vst.msk [vmem:[%s200 + $0xd28] sm:$0xff] %vm8732, %v7889
        %9155 = vst.msk [vmem:[%s200 + $0xd30] sm:$0xff] %vm8732, %v7891
        %9156 = vst.msk [vmem:[%s200 + $0xd38] sm:$0xff] %vm8732, %v7893
        %9157 = vst.msk [vmem:[%s200 + $0xd40] sm:$0xff] %vm8732, %v7895
        %9158 = vst.msk [vmem:[%s200 + $0xd48] sm:$0xff] %vm8732, %v7897
        %9159 = vst.msk [vmem:[%s200 + $0xd50] sm:$0xff] %vm8732, %v7899
        %9160 = vst.msk [vmem:[%s200 + $0xd58] sm:$0xff] %vm8732, %v7901
        %9161 = vst.msk [vmem:[%s200 + $0xd60] sm:$0xff] %vm8732, %v7903
        %9162 = vst.msk [vmem:[%s200 + $0xd68] sm:$0xff] %vm8732, %v7905
        %9163 = vst.msk [vmem:[%s200 + $0xd70] sm:$0xff] %vm8732, %v7907
        %9164 = vst.msk [vmem:[%s200 + $0xd78] sm:$0xff] %vm8732, %v7909
        %9165 = vst.msk [vmem:[%s200 + $0xd80] sm:$0xff] %vm8732, %v7911
        %9166 = vst.msk [vmem:[%s200 + $0xd88] sm:$0xff] %vm8732, %v7913
        %9167 = vst.msk [vmem:[%s200 + $0xd90] sm:$0xff] %vm8732, %v7915
        %9168 = vst.msk [vmem:[%s200 + $0xd98] sm:$0xff] %vm8732, %v7917
        %9169 = vst.msk [vmem:[%s200 + $0xda0] sm:$0xff] %vm8732, %v7919
        %9170 = vst.msk [vmem:[%s200 + $0xda8] sm:$0xff] %vm8732, %v7921
        %9171 = vst.msk [vmem:[%s200 + $0xdb0] sm:$0xff] %vm8732, %v7923
        %9172 = vst.msk [vmem:[%s200 + $0xdb8] sm:$0xff] %vm8732, %v7925
        %9173 = vst.msk [vmem:[%s200 + $0xdc0] sm:$0xff] %vm8732, %v7927
        %9174 = vst.msk [vmem:[%s200 + $0xdc8] sm:$0xff] %vm8732, %v7929
        %9175 = vst.msk [vmem:[%s200 + $0xdd0] sm:$0xff] %vm8732, %v7931
        %9176 = vst.msk [vmem:[%s200 + $0xdd8] sm:$0xff] %vm8732, %v7933
        %9177 = vst.msk [vmem:[%s200 + $0xde0] sm:$0xff] %vm8732, %v7935
        %9178 = vst.msk [vmem:[%s200 + $0xde8] sm:$0xff] %vm8732, %v7937
        %9179 = vst.msk [vmem:[%s200 + $0xdf0] sm:$0xff] %vm8732, %v7939
        %9180 = vst.msk [vmem:[%s200 + $0xdf8] sm:$0xff] %vm8732, %v7941
        %9181 = vst.msk [vmem:[%s200 + $0xe00] sm:$0xff] %vm8732, %v7943
        %9182 = vst.msk [vmem:[%s200 + $0xe08] sm:$0xff] %vm8732, %v7945
        %9183 = vst.msk [vmem:[%s200 + $0xe10] sm:$0xff] %vm8732, %v7947
        %9184 = vst.msk [vmem:[%s200 + $0xe18] sm:$0xff] %vm8732, %v7949
        %9185 = vst.msk [vmem:[%s200 + $0xe20] sm:$0xff] %vm8732, %v7951
        %9186 = vst.msk [vmem:[%s200 + $0xe28] sm:$0xff] %vm8732, %v7953
        %9187 = vst.msk [vmem:[%s200 + $0xe30] sm:$0xff] %vm8732, %v7955
        %9188 = vst.msk [vmem:[%s200 + $0xe38] sm:$0xff] %vm8732, %v7957
        %9189 = vst.msk [vmem:[%s200 + $0xe40] sm:$0xff] %vm8732, %v7959
        %9190 = vst.msk [vmem:[%s200 + $0xe48] sm:$0xff] %vm8732, %v7961
        %9191 = vst.msk [vmem:[%s200 + $0xe50] sm:$0xff] %vm8732, %v7963
        %9192 = vst.msk [vmem:[%s200 + $0xe58] sm:$0xff] %vm8732, %v7965
        %9193 = vst.msk [vmem:[%s200 + $0xe60] sm:$0xff] %vm8732, %v7967
        %9194 = vst.msk [vmem:[%s200 + $0xe68] sm:$0xff] %vm8732, %v7969
        %9195 = vst.msk [vmem:[%s200 + $0xe70] sm:$0xff] %vm8732, %v7971
        %9196 = vst.msk [vmem:[%s200 + $0xe78] sm:$0xff] %vm8732, %v7973
        %9197 = vst.msk [vmem:[%s200 + $0xe80] sm:$0xff] %vm8732, %v7975
        %9198 = vst.msk [vmem:[%s200 + $0xe88] sm:$0xff] %vm8732, %v7977
        %9199 = vst.msk [vmem:[%s200 + $0xe90] sm:$0xff] %vm8732, %v7979
        %9200 = vst.msk [vmem:[%s200 + $0xe98] sm:$0xff] %vm8732, %v7981
        %9201 = vst.msk [vmem:[%s200 + $0xea0] sm:$0xff] %vm8732, %v7983
        %9202 = vst.msk [vmem:[%s200 + $0xea8] sm:$0xff] %vm8732, %v7985
        %9203 = vst.msk [vmem:[%s200 + $0xeb0] sm:$0xff] %vm8732, %v7987
        %9204 = vst.msk [vmem:[%s200 + $0xeb8] sm:$0xff] %vm8732, %v7989
        %9205 = vst.msk [vmem:[%s200 + $0xec0] sm:$0xff] %vm8732, %v7991
        %9206 = vst.msk [vmem:[%s200 + $0xec8] sm:$0xff] %vm8732, %v7993
        %9207 = vst.msk [vmem:[%s200 + $0xed0] sm:$0xff] %vm8732, %v7995
        %9208 = vst.msk [vmem:[%s200 + $0xed8] sm:$0xff] %vm8732, %v7997
        %9209 = vst.msk [vmem:[%s200 + $0xee0] sm:$0xff] %vm8732, %v7999
        %9210 = vst.msk [vmem:[%s200 + $0xee8] sm:$0xff] %vm8732, %v8001
        %9211 = vst.msk [vmem:[%s200 + $0xef0] sm:$0xff] %vm8732, %v8003
        %9212 = vst.msk [vmem:[%s200 + $0xef8] sm:$0xff] %vm8732, %v8005
        %9213 = vst.msk [vmem:[%s200 + $0xf00] sm:$0xff] %vm8732, %v8007
        %9214 = vst.msk [vmem:[%s200 + $0xf08] sm:$0xff] %vm8732, %v8009
        %9215 = vst.msk [vmem:[%s200 + $0xf10] sm:$0xff] %vm8732, %v8011
        %9216 = vst.msk [vmem:[%s200 + $0xf18] sm:$0xff] %vm8732, %v8013
        %9217 = vst.msk [vmem:[%s200 + $0xf20] sm:$0xff] %vm8732, %v8015
        %9218 = vst.msk [vmem:[%s200 + $0xf28] sm:$0xff] %vm8732, %v8017
        %9219 = vst.msk [vmem:[%s200 + $0xf30] sm:$0xff] %vm8732, %v8019
        %9220 = vst.msk [vmem:[%s200 + $0xf38] sm:$0xff] %vm8732, %v8021
        %9221 = vst.msk [vmem:[%s200 + $0xf40] sm:$0xff] %vm8732, %v8023
        %9222 = vst.msk [vmem:[%s200 + $0xf48] sm:$0xff] %vm8732, %v8025
        %9223 = vst.msk [vmem:[%s200 + $0xf50] sm:$0xff] %vm8732, %v8027
        %9224 = vst.msk [vmem:[%s200 + $0xf58] sm:$0xff] %vm8732, %v8029
        %9225 = vst.msk [vmem:[%s200 + $0xf60] sm:$0xff] %vm8732, %v8031
        %9226 = vst.msk [vmem:[%s200 + $0xf68] sm:$0xff] %vm8732, %v8033
        %9227 = vst.msk [vmem:[%s200 + $0xf70] sm:$0xff] %vm8732, %v8035
        %9228 = vst.msk [vmem:[%s200 + $0xf78] sm:$0xff] %vm8732, %v8037
        %9229 = vst.msk [vmem:[%s200 + $0xf80] sm:$0xff] %vm8732, %v8039
        %9230 = vst.msk [vmem:[%s200 + $0xf88] sm:$0xff] %vm8732, %v8041
        %9231 = vst.msk [vmem:[%s200 + $0xf90] sm:$0xff] %vm8732, %v8043
        %9232 = vst.msk [vmem:[%s200 + $0xf98] sm:$0xff] %vm8732, %v8045
        %9233 = vst.msk [vmem:[%s200 + $0xfa0] sm:$0xff] %vm8732, %v8047
        %9234 = vst.msk [vmem:[%s200 + $0xfa8] sm:$0xff] %vm8732, %v8049
        %9235 = vst.msk [vmem:[%s200 + $0xfb0] sm:$0xff] %vm8732, %v8051
        %9236 = vst.msk [vmem:[%s200 + $0xfb8] sm:$0xff] %vm8732, %v8053
        %9237 = vst.msk [vmem:[%s200 + $0xfc0] sm:$0xff] %vm8732, %v8055
        %9238 = vst.msk [vmem:[%s200 + $0xfc8] sm:$0xff] %vm8732, %v8057
        %9239 = vst.msk [vmem:[%s200 + $0xfd0] sm:$0xff] %vm8732, %v8059
        %9240 = vst.msk [vmem:[%s200 + $0xfd8] sm:$0xff] %vm8732, %v8061
        %9241 = vst.msk [vmem:[%s200 + $0xfe0] sm:$0xff] %vm8732, %v8063
        %9242 = vst.msk [vmem:[%s200 + $0xfe8] sm:$0xff] %vm8732, %v8065
        %9243 = vst.msk [vmem:[%s200 + $0xff0] sm:$0xff] %vm8732, %v8067
        %9244 = vst.msk [vmem:[%s200 + $0xff8] sm:$0xff] %vm8732, %v8069
        %9245 = vst.msk [vmem:[%s200 + $0x1000] sm:$0xff] %vm8732, %v8071
        %9246 = vst.msk [vmem:[%s200 + $0x1008] sm:$0xff] %vm8732, %v8073
        %9247 = vst.msk [vmem:[%s200 + $0x1010] sm:$0xff] %vm8732, %v8075
        %9248 = vst.msk [vmem:[%s200 + $0x1018] sm:$0xff] %vm8732, %v8077
        %9249 = vst.msk [vmem:[%s200 + $0x1020] sm:$0xff] %vm8732, %v8079
        %9250 = vst.msk [vmem:[%s200 + $0x1028] sm:$0xff] %vm8732, %v8081
        %9251 = vst.msk [vmem:[%s200 + $0x1030] sm:$0xff] %vm8732, %v8083
        %9252 = vst.msk [vmem:[%s200 + $0x1038] sm:$0xff] %vm8732, %v8085
        %9253 = vst.msk [vmem:[%s200 + $0x1040] sm:$0xff] %vm8732, %v8087
        %9254 = vst.msk [vmem:[%s200 + $0x1048] sm:$0xff] %vm8732, %v8089
        %9255 = vst.msk [vmem:[%s200 + $0x1050] sm:$0xff] %vm8732, %v8091
        %9256 = vst.msk [vmem:[%s200 + $0x1058] sm:$0xff] %vm8732, %v8093
        %9257 = vst.msk [vmem:[%s200 + $0x1060] sm:$0xff] %vm8732, %v8095
        %9258 = vst.msk [vmem:[%s200 + $0x1068] sm:$0xff] %vm8732, %v8097
        %9259 = vst.msk [vmem:[%s200 + $0x1070] sm:$0xff] %vm8732, %v8099
        %9260 = vst.msk [vmem:[%s200 + $0x1078] sm:$0xff] %vm8732, %v8101
        %9261 = vst.msk [vmem:[%s200 + $0x1080] sm:$0xff] %vm8732, %v8103
        %9262 = vst.msk [vmem:[%s200 + $0x1088] sm:$0xff] %vm8732, %v8105
        %9263 = vst.msk [vmem:[%s200 + $0x1090] sm:$0xff] %vm8732, %v8107
        %9264 = vst.msk [vmem:[%s200 + $0x1098] sm:$0xff] %vm8732, %v8109
        %9265 = vst.msk [vmem:[%s200 + $0x10a0] sm:$0xff] %vm8732, %v8111
        %9266 = vst.msk [vmem:[%s200 + $0x10a8] sm:$0xff] %vm8732, %v8113
        %9267 = vst.msk [vmem:[%s200 + $0x10b0] sm:$0xff] %vm8732, %v8115
        %9268 = vst.msk [vmem:[%s200 + $0x10b8] sm:$0xff] %vm8732, %v8117
        %9269 = vst.msk [vmem:[%s200 + $0x10c0] sm:$0xff] %vm8732, %v8119
        %9270 = vst.msk [vmem:[%s200 + $0x10c8] sm:$0xff] %vm8732, %v8121
        %9271 = vst.msk [vmem:[%s200 + $0x10d0] sm:$0xff] %vm8732, %v8123
        %9272 = vst.msk [vmem:[%s200 + $0x10d8] sm:$0xff] %vm8732, %v8125
        %9273 = vst.msk [vmem:[%s200 + $0x10e0] sm:$0xff] %vm8732, %v8127
        %9274 = vst.msk [vmem:[%s200 + $0x10e8] sm:$0xff] %vm8732, %v8129
        %9275 = vst.msk [vmem:[%s200 + $0x10f0] sm:$0xff] %vm8732, %v8131
        %9276 = vst.msk [vmem:[%s200 + $0x10f8] sm:$0xff] %vm8732, %v8133
        %9277 = vst.msk [vmem:[%s200 + $0x1100] sm:$0xff] %vm8732, %v8135
        %9278 = vst.msk [vmem:[%s200 + $0x1108] sm:$0xff] %vm8732, %v8137
        %9279 = vst.msk [vmem:[%s200 + $0x1110] sm:$0xff] %vm8732, %v8139
        %9280 = vst.msk [vmem:[%s200 + $0x1118] sm:$0xff] %vm8732, %v8141
        %9281 = vst.msk [vmem:[%s200 + $0x1120] sm:$0xff] %vm8732, %v8143
        %9282 = vst.msk [vmem:[%s200 + $0x1128] sm:$0xff] %vm8732, %v8145
        %9283 = vst.msk [vmem:[%s200 + $0x1130] sm:$0xff] %vm8732, %v8147
        %9284 = vst.msk [vmem:[%s200 + $0x1138] sm:$0xff] %vm8732, %v8149
        %9285 = vst.msk [vmem:[%s200 + $0x1140] sm:$0xff] %vm8732, %v8151
        %9286 = vst.msk [vmem:[%s200 + $0x1148] sm:$0xff] %vm8732, %v8153
        %9287 = vst.msk [vmem:[%s200 + $0x1150] sm:$0xff] %vm8732, %v8155
        %9288 = vst.msk [vmem:[%s200 + $0x1158] sm:$0xff] %vm8732, %v8157
        %9289 = vst.msk [vmem:[%s200 + $0x1160] sm:$0xff] %vm8732, %v8159
        %9290 = vst.msk [vmem:[%s200 + $0x1168] sm:$0xff] %vm8732, %v8161
        %9291 = vst.msk [vmem:[%s200 + $0x1170] sm:$0xff] %vm8732, %v8163
        %9292 = vst.msk [vmem:[%s200 + $0x1178] sm:$0xff] %vm8732, %v8165
        %9293 = vst.msk [vmem:[%s200 + $0x1180] sm:$0xff] %vm8732, %v8167
        %9294 = vst.msk [vmem:[%s200 + $0x1188] sm:$0xff] %vm8732, %v8169
        %s9295 = sand.u32 %s95, 1
        %s9296 = sand.u32 %s95, 1
        %s9297 = smul.addr %s9296, 4496
        %s9298 = scalar_lea.vmem [#allocation2], %s9297
        // Predicated region
        $region33: #{tpu_custom_call.1} parent=31 // pred_check
          %p9299 = pneg %p105
        $region34: #{tpu_custom_call.1} parent=31 // pred_check_branch
          %9301 = sbr.rel (%p9299) target = $region36
        $region35: #{tpu_custom_call.1} parent=31 // pred_region
          %s9302 = smul.u32 562, %s14
          %s9303 = ssub.s32 1125, %s9302
          %p9304 = scmp.lt.s32.totalorder %s9303, 562
          %s9305 = scalar_select %p9304, %s9303, 562
          %s9306 = smul.u32 128, %s9305
          %p9307 = scmp.ne.s32.totalorder 0, %s9306
          %s9308 = smul.addr %s9302, 8
          %s9309 = scalar_lea.vmem %s3, %s9308
          // Predicated region
          $region37: #{tpu_custom_call.1} parent=35 // pred_check
            %p9310 = pneg %p9307
          $region38: #{tpu_custom_call.1} parent=35 // pred_check_branch
            %9312 = sbr.rel (%p9310) target = $region40
          $region39: #{tpu_custom_call.1} parent=35 // pred_region
            // Predicated region
            $region41: #{tpu_custom_call.1} parent=39 // pred_check
              _
            $region42: #{tpu_custom_call.1} parent=39 // pred_check_branch
              %9314 = sbr.rel (0) target = $region44
            $region43: #{tpu_custom_call.1} parent=39 // pred_region
              // Predicated region
              $region63: #{tpu_custom_call.1} parent=43 // pred_check
                _
              $region64: #{tpu_custom_call.1} parent=43 // pred_check_branch
                %9490 = sbr.rel (0) target = $region66
              $region65: #{tpu_custom_call.1} parent=43 // pred_region
                %s9491 = sshrl.u32 %s9305, 6
                // While loop
                $region67: #{tpu_custom_call.1} parent=65 // loop_pre_header
                  _
                $region68: #{tpu_custom_call.1} parent=65 // loop_header
                  %s9493 = sphi 0, %s9495
                  %p9494 = scmp.ge.s32.totalorder %s9493, %s9491
                  %s9498 = sphi 0, %s9631
                  %s9499 = sphi %s9298, %s9634
                  %s9500 = sphi %s9309, %s9635
                $region69: #{tpu_custom_call.1} parent=65 // loop_header_branch
                  %9497 = sbr.rel (%p9494) target = $region73
                $region70: #{tpu_custom_call.1} parent=65 // loop_body
                  %v9501 = vld [vmem:[%s9499] sm:$0xff]
                  %9502 = vst [vmem:[%s9500] sm:$0xff] %v9501
                  %v9503 = vld [vmem:[%s9499 + $0x8] sm:$0xff]
                  %9504 = vst [vmem:[%s9500 + $0x8] sm:$0xff] %v9503
                  %v9505 = vld [vmem:[%s9499 + $0x10] sm:$0xff]
                  %9506 = vst [vmem:[%s9500 + $0x10] sm:$0xff] %v9505
                  %v9507 = vld [vmem:[%s9499 + $0x18] sm:$0xff]
                  %9508 = vst [vmem:[%s9500 + $0x18] sm:$0xff] %v9507
                  %v9509 = vld [vmem:[%s9499 + $0x20] sm:$0xff]
                  %9510 = vst [vmem:[%s9500 + $0x20] sm:$0xff] %v9509
                  %v9511 = vld [vmem:[%s9499 + $0x28] sm:$0xff]
                  %9512 = vst [vmem:[%s9500 + $0x28] sm:$0xff] %v9511
                  %v9513 = vld [vmem:[%s9499 + $0x30] sm:$0xff]
                  %9514 = vst [vmem:[%s9500 + $0x30] sm:$0xff] %v9513
                  %v9515 = vld [vmem:[%s9499 + $0x38] sm:$0xff]
                  %9516 = vst [vmem:[%s9500 + $0x38] sm:$0xff] %v9515
                  %v9517 = vld [vmem:[%s9499 + $0x40] sm:$0xff]
                  %9518 = vst [vmem:[%s9500 + $0x40] sm:$0xff] %v9517
                  %v9519 = vld [vmem:[%s9499 + $0x48] sm:$0xff]
                  %9520 = vst [vmem:[%s9500 + $0x48] sm:$0xff] %v9519
                  %v9521 = vld [vmem:[%s9499 + $0x50] sm:$0xff]
                  %9522 = vst [vmem:[%s9500 + $0x50] sm:$0xff] %v9521
                  %v9523 = vld [vmem:[%s9499 + $0x58] sm:$0xff]
                  %9524 = vst [vmem:[%s9500 + $0x58] sm:$0xff] %v9523
                  %v9525 = vld [vmem:[%s9499 + $0x60] sm:$0xff]
                  %9526 = vst [vmem:[%s9500 + $0x60] sm:$0xff] %v9525
                  %v9527 = vld [vmem:[%s9499 + $0x68] sm:$0xff]
                  %9528 = vst [vmem:[%s9500 + $0x68] sm:$0xff] %v9527
                  %v9529 = vld [vmem:[%s9499 + $0x70] sm:$0xff]
                  %9530 = vst [vmem:[%s9500 + $0x70] sm:$0xff] %v9529
                  %v9531 = vld [vmem:[%s9499 + $0x78] sm:$0xff]
                  %9532 = vst [vmem:[%s9500 + $0x78] sm:$0xff] %v9531
                  %v9533 = vld [vmem:[%s9499 + $0x80] sm:$0xff]
                  %9534 = vst [vmem:[%s9500 + $0x80] sm:$0xff] %v9533
                  %v9535 = vld [vmem:[%s9499 + $0x88] sm:$0xff]
                  %9536 = vst [vmem:[%s9500 + $0x88] sm:$0xff] %v9535
                  %v9537 = vld [vmem:[%s9499 + $0x90] sm:$0xff]
                  %9538 = vst [vmem:[%s9500 + $0x90] sm:$0xff] %v9537
                  %v9539 = vld [vmem:[%s9499 + $0x98] sm:$0xff]
                  %9540 = vst [vmem:[%s9500 + $0x98] sm:$0xff] %v9539
                  %v9541 = vld [vmem:[%s9499 + $0xa0] sm:$0xff]
                  %9542 = vst [vmem:[%s9500 + $0xa0] sm:$0xff] %v9541
                  %v9543 = vld [vmem:[%s9499 + $0xa8] sm:$0xff]
                  %9544 = vst [vmem:[%s9500 + $0xa8] sm:$0xff] %v9543
                  %v9545 = vld [vmem:[%s9499 + $0xb0] sm:$0xff]
                  %9546 = vst [vmem:[%s9500 + $0xb0] sm:$0xff] %v9545
                  %v9547 = vld [vmem:[%s9499 + $0xb8] sm:$0xff]
                  %9548 = vst [vmem:[%s9500 + $0xb8] sm:$0xff] %v9547
                  %v9549 = vld [vmem:[%s9499 + $0xc0] sm:$0xff]
                  %9550 = vst [vmem:[%s9500 + $0xc0] sm:$0xff] %v9549
                  %v9551 = vld [vmem:[%s9499 + $0xc8] sm:$0xff]
                  %9552 = vst [vmem:[%s9500 + $0xc8] sm:$0xff] %v9551
                  %v9553 = vld [vmem:[%s9499 + $0xd0] sm:$0xff]
                  %9554 = vst [vmem:[%s9500 + $0xd0] sm:$0xff] %v9553
                  %v9555 = vld [vmem:[%s9499 + $0xd8] sm:$0xff]
                  %9556 = vst [vmem:[%s9500 + $0xd8] sm:$0xff] %v9555
                  %v9557 = vld [vmem:[%s9499 + $0xe0] sm:$0xff]
                  %9558 = vst [vmem:[%s9500 + $0xe0] sm:$0xff] %v9557
                  %v9559 = vld [vmem:[%s9499 + $0xe8] sm:$0xff]
                  %9560 = vst [vmem:[%s9500 + $0xe8] sm:$0xff] %v9559
                  %v9561 = vld [vmem:[%s9499 + $0xf0] sm:$0xff]
                  %9562 = vst [vmem:[%s9500 + $0xf0] sm:$0xff] %v9561
                  %v9563 = vld [vmem:[%s9499 + $0xf8] sm:$0xff]
                  %9564 = vst [vmem:[%s9500 + $0xf8] sm:$0xff] %v9563
                  %v9565 = vld [vmem:[%s9499 + $0x100] sm:$0xff]
                  %9566 = vst [vmem:[%s9500 + $0x100] sm:$0xff] %v9565
                  %v9567 = vld [vmem:[%s9499 + $0x108] sm:$0xff]
                  %9568 = vst [vmem:[%s9500 + $0x108] sm:$0xff] %v9567
                  %v9569 = vld [vmem:[%s9499 + $0x110] sm:$0xff]
                  %9570 = vst [vmem:[%s9500 + $0x110] sm:$0xff] %v9569
                  %v9571 = vld [vmem:[%s9499 + $0x118] sm:$0xff]
                  %9572 = vst [vmem:[%s9500 + $0x118] sm:$0xff] %v9571
                  %v9573 = vld [vmem:[%s9499 + $0x120] sm:$0xff]
                  %9574 = vst [vmem:[%s9500 + $0x120] sm:$0xff] %v9573
                  %v9575 = vld [vmem:[%s9499 + $0x128] sm:$0xff]
                  %9576 = vst [vmem:[%s9500 + $0x128] sm:$0xff] %v9575
                  %v9577 = vld [vmem:[%s9499 + $0x130] sm:$0xff]
                  %9578 = vst [vmem:[%s9500 + $0x130] sm:$0xff] %v9577
                  %v9579 = vld [vmem:[%s9499 + $0x138] sm:$0xff]
                  %9580 = vst [vmem:[%s9500 + $0x138] sm:$0xff] %v9579
                  %v9581 = vld [vmem:[%s9499 + $0x140] sm:$0xff]
                  %9582 = vst [vmem:[%s9500 + $0x140] sm:$0xff] %v9581
                  %v9583 = vld [vmem:[%s9499 + $0x148] sm:$0xff]
                  %9584 = vst [vmem:[%s9500 + $0x148] sm:$0xff] %v9583
                  %v9585 = vld [vmem:[%s9499 + $0x150] sm:$0xff]
                  %9586 = vst [vmem:[%s9500 + $0x150] sm:$0xff] %v9585
                  %v9587 = vld [vmem:[%s9499 + $0x158] sm:$0xff]
                  %9588 = vst [vmem:[%s9500 + $0x158] sm:$0xff] %v9587
                  %v9589 = vld [vmem:[%s9499 + $0x160] sm:$0xff]
                  %9590 = vst [vmem:[%s9500 + $0x160] sm:$0xff] %v9589
                  %v9591 = vld [vmem:[%s9499 + $0x168] sm:$0xff]
                  %9592 = vst [vmem:[%s9500 + $0x168] sm:$0xff] %v9591
                  %v9593 = vld [vmem:[%s9499 + $0x170] sm:$0xff]
                  %9594 = vst [vmem:[%s9500 + $0x170] sm:$0xff] %v9593
                  %v9595 = vld [vmem:[%s9499 + $0x178] sm:$0xff]
                  %9596 = vst [vmem:[%s9500 + $0x178] sm:$0xff] %v9595
                  %v9597 = vld [vmem:[%s9499 + $0x180] sm:$0xff]
                  %9598 = vst [vmem:[%s9500 + $0x180] sm:$0xff] %v9597
                  %v9599 = vld [vmem:[%s9499 + $0x188] sm:$0xff]
                  %9600 = vst [vmem:[%s9500 + $0x188] sm:$0xff] %v9599
                  %v9601 = vld [vmem:[%s9499 + $0x190] sm:$0xff]
                  %9602 = vst [vmem:[%s9500 + $0x190] sm:$0xff] %v9601
                  %v9603 = vld [vmem:[%s9499 + $0x198] sm:$0xff]
                  %9604 = vst [vmem:[%s9500 + $0x198] sm:$0xff] %v9603
                  %v9605 = vld [vmem:[%s9499 + $0x1a0] sm:$0xff]
                  %9606 = vst [vmem:[%s9500 + $0x1a0] sm:$0xff] %v9605
                  %v9607 = vld [vmem:[%s9499 + $0x1a8] sm:$0xff]
                  %9608 = vst [vmem:[%s9500 + $0x1a8] sm:$0xff] %v9607
                  %v9609 = vld [vmem:[%s9499 + $0x1b0] sm:$0xff]
                  %9610 = vst [vmem:[%s9500 + $0x1b0] sm:$0xff] %v9609
                  %v9611 = vld [vmem:[%s9499 + $0x1b8] sm:$0xff]
                  %9612 = vst [vmem:[%s9500 + $0x1b8] sm:$0xff] %v9611
                  %v9613 = vld [vmem:[%s9499 + $0x1c0] sm:$0xff]
                  %9614 = vst [vmem:[%s9500 + $0x1c0] sm:$0xff] %v9613
                  %v9615 = vld [vmem:[%s9499 + $0x1c8] sm:$0xff]
                  %9616 = vst [vmem:[%s9500 + $0x1c8] sm:$0xff] %v9615
                  %v9617 = vld [vmem:[%s9499 + $0x1d0] sm:$0xff]
                  %9618 = vst [vmem:[%s9500 + $0x1d0] sm:$0xff] %v9617
                  %v9619 = vld [vmem:[%s9499 + $0x1d8] sm:$0xff]
                  %9620 = vst [vmem:[%s9500 + $0x1d8] sm:$0xff] %v9619
                  %v9621 = vld [vmem:[%s9499 + $0x1e0] sm:$0xff]
                  %9622 = vst [vmem:[%s9500 + $0x1e0] sm:$0xff] %v9621
                  %v9623 = vld [vmem:[%s9499 + $0x1e8] sm:$0xff]
                  %9624 = vst [vmem:[%s9500 + $0x1e8] sm:$0xff] %v9623
                  %v9625 = vld [vmem:[%s9499 + $0x1f0] sm:$0xff]
                  %9626 = vst [vmem:[%s9500 + $0x1f0] sm:$0xff] %v9625
                  %v9627 = vld [vmem:[%s9499 + $0x1f8] sm:$0xff]
                  %9628 = vst [vmem:[%s9500 + $0x1f8] sm:$0xff] %v9627
                  %s9629 = sadd.s32 1, %s9498
                  %p9630 = scmp.ge.s32.totalorder %s9629, %s9491
                  %s9631 = scalar_select %p9630, 0, %s9629
                  %s9632 = smul.u32 %s9631, 512
                  %s9633 = smul.u32 %s9631, 512
                  %s9634 = scalar_lea.vmem %s9298, %s9632 [#allocation2]
                  %s9635 = scalar_lea.vmem %s9309, %s9633
                $region71: #{tpu_custom_call.1} parent=65 // loop_footer
                  %s9495 = sadd.s32 %s9493, 1
                $region72: #{tpu_custom_call.1} parent=65 // loop_footer_branch
                  %9492 = sbr.rel target = $region68
                $region73: #{tpu_custom_call.1} parent=65 // loop_exit
                  _
                %s9636 = sshrl.u32 %s9305, 6
                %s9637 = sand.u32 %s9305, 63
                %s9638 = smul.u32 %s9636, 64
                %s9639 = smul.u32 8, %s9638
                %s9640 = scalar_lea.vmem %s9298, %s9639 [#allocation2]
                %s9641 = smul.u32 8, %s9638
                %s9642 = scalar_lea.vmem %s9309, %s9641
                // While loop
                $region74: #{tpu_custom_call.1} parent=65 // loop_pre_header
                  _
                $region75: #{tpu_custom_call.1} parent=65 // loop_header
                  %s9644 = sphi 0, %s9646
                  %p9645 = scmp.ge.s32.totalorder %s9644, %s9637
                  %s9649 = sphi 0, %s9656
                  %s9650 = sphi %s9640, %s9659
                  %s9651 = sphi %s9642, %s9660
                $region76: #{tpu_custom_call.1} parent=65 // loop_header_branch
                  %9648 = sbr.rel (%p9645) target = $region80
                $region77: #{tpu_custom_call.1} parent=65 // loop_body
                  %v9652 = vld [vmem:[%s9650] sm:$0xff]
                  %9653 = vst [vmem:[%s9651] sm:$0xff] %v9652
                  %s9654 = sadd.s32 1, %s9649
                  %p9655 = scmp.ge.s32.totalorder %s9654, %s9637
                  %s9656 = scalar_select %p9655, 0, %s9654
                  %s9657 = smul.u32 %s9656, 8
                  %s9658 = smul.u32 %s9656, 8
                  %s9659 = scalar_lea.vmem %s9640, %s9657 [#allocation2]
                  %s9660 = scalar_lea.vmem %s9642, %s9658
                $region78: #{tpu_custom_call.1} parent=65 // loop_footer
                  %s9646 = sadd.s32 %s9644, 1
                $region79: #{tpu_custom_call.1} parent=65 // loop_footer_branch
                  %9643 = sbr.rel target = $region75
                $region80: #{tpu_custom_call.1} parent=65 // loop_exit
                  _
              $region66: #{tpu_custom_call.1} parent=43 // pred_fallthru
                _
              // Predicated region
              $region81: #{tpu_custom_call.1} parent=43 // pred_check
                _
              $region82: #{tpu_custom_call.1} parent=43 // pred_check_branch
                %9662 = sbr.rel target = $region84
              $region83: #{tpu_custom_call.1} parent=43 // pred_region
                _
              $region84: #{tpu_custom_call.1} parent=43 // pred_fallthru
                _
            $region44: #{tpu_custom_call.1} parent=39 // pred_fallthru
              _
            // Predicated region
            $region45: #{tpu_custom_call.1} parent=39 // pred_check
              _
            $region46: #{tpu_custom_call.1} parent=39 // pred_check_branch
              %9316 = sbr.rel target = $region48
            $region47: #{tpu_custom_call.1} parent=39 // pred_region
              %s9318 = ssub.s32 256, 1
              %s9319 = sshrl.u32 %s9305, 6
              // While loop
              $region49: #{tpu_custom_call.1} parent=47 // loop_pre_header
                _
              $region50: #{tpu_custom_call.1} parent=47 // loop_header
                %s9321 = sphi 0, %s9323
                %p9322 = scmp.ge.s32.totalorder %s9321, %s9319
                %s9326 = sphi 0, %s9459
                %s9327 = sphi %s9298, %s9462
                %s9328 = sphi %s9309, %s9463
              $region51: #{tpu_custom_call.1} parent=47 // loop_header_branch
                %9325 = sbr.rel (%p9322) target = $region55
              $region52: #{tpu_custom_call.1} parent=47 // loop_body
                %v9329 = vld [vmem:[%s9327] sm:%s9318]
                %9330 = vst [vmem:[%s9328] sm:%s9318] %v9329
                %v9331 = vld [vmem:[%s9327 + $0x8] sm:%s9318]
                %9332 = vst [vmem:[%s9328 + $0x8] sm:%s9318] %v9331
                %v9333 = vld [vmem:[%s9327 + $0x10] sm:%s9318]
                %9334 = vst [vmem:[%s9328 + $0x10] sm:%s9318] %v9333
                %v9335 = vld [vmem:[%s9327 + $0x18] sm:%s9318]
                %9336 = vst [vmem:[%s9328 + $0x18] sm:%s9318] %v9335
                %v9337 = vld [vmem:[%s9327 + $0x20] sm:%s9318]
                %9338 = vst [vmem:[%s9328 + $0x20] sm:%s9318] %v9337
                %v9339 = vld [vmem:[%s9327 + $0x28] sm:%s9318]
                %9340 = vst [vmem:[%s9328 + $0x28] sm:%s9318] %v9339
                %v9341 = vld [vmem:[%s9327 + $0x30] sm:%s9318]
                %9342 = vst [vmem:[%s9328 + $0x30] sm:%s9318] %v9341
                %v9343 = vld [vmem:[%s9327 + $0x38] sm:%s9318]
                %9344 = vst [vmem:[%s9328 + $0x38] sm:%s9318] %v9343
                %v9345 = vld [vmem:[%s9327 + $0x40] sm:%s9318]
                %9346 = vst [vmem:[%s9328 + $0x40] sm:%s9318] %v9345
                %v9347 = vld [vmem:[%s9327 + $0x48] sm:%s9318]
                %9348 = vst [vmem:[%s9328 + $0x48] sm:%s9318] %v9347
                %v9349 = vld [vmem:[%s9327 + $0x50] sm:%s9318]
                %9350 = vst [vmem:[%s9328 + $0x50] sm:%s9318] %v9349
                %v9351 = vld [vmem:[%s9327 + $0x58] sm:%s9318]
                %9352 = vst [vmem:[%s9328 + $0x58] sm:%s9318] %v9351
                %v9353 = vld [vmem:[%s9327 + $0x60] sm:%s9318]
                %9354 = vst [vmem:[%s9328 + $0x60] sm:%s9318] %v9353
                %v9355 = vld [vmem:[%s9327 + $0x68] sm:%s9318]
                %9356 = vst [vmem:[%s9328 + $0x68] sm:%s9318] %v9355
                %v9357 = vld [vmem:[%s9327 + $0x70] sm:%s9318]
                %9358 = vst [vmem:[%s9328 + $0x70] sm:%s9318] %v9357
                %v9359 = vld [vmem:[%s9327 + $0x78] sm:%s9318]
                %9360 = vst [vmem:[%s9328 + $0x78] sm:%s9318] %v9359
                %v9361 = vld [vmem:[%s9327 + $0x80] sm:%s9318]
                %9362 = vst [vmem:[%s9328 + $0x80] sm:%s9318] %v9361
                %v9363 = vld [vmem:[%s9327 + $0x88] sm:%s9318]
                %9364 = vst [vmem:[%s9328 + $0x88] sm:%s9318] %v9363
                %v9365 = vld [vmem:[%s9327 + $0x90] sm:%s9318]
                %9366 = vst [vmem:[%s9328 + $0x90] sm:%s9318] %v9365
                %v9367 = vld [vmem:[%s9327 + $0x98] sm:%s9318]
                %9368 = vst [vmem:[%s9328 + $0x98] sm:%s9318] %v9367
                %v9369 = vld [vmem:[%s9327 + $0xa0] sm:%s9318]
                %9370 = vst [vmem:[%s9328 + $0xa0] sm:%s9318] %v9369
                %v9371 = vld [vmem:[%s9327 + $0xa8] sm:%s9318]
                %9372 = vst [vmem:[%s9328 + $0xa8] sm:%s9318] %v9371
                %v9373 = vld [vmem:[%s9327 + $0xb0] sm:%s9318]
                %9374 = vst [vmem:[%s9328 + $0xb0] sm:%s9318] %v9373
                %v9375 = vld [vmem:[%s9327 + $0xb8] sm:%s9318]
                %9376 = vst [vmem:[%s9328 + $0xb8] sm:%s9318] %v9375
                %v9377 = vld [vmem:[%s9327 + $0xc0] sm:%s9318]
                %9378 = vst [vmem:[%s9328 + $0xc0] sm:%s9318] %v9377
                %v9379 = vld [vmem:[%s9327 + $0xc8] sm:%s9318]
                %9380 = vst [vmem:[%s9328 + $0xc8] sm:%s9318] %v9379
                %v9381 = vld [vmem:[%s9327 + $0xd0] sm:%s9318]
                %9382 = vst [vmem:[%s9328 + $0xd0] sm:%s9318] %v9381
                %v9383 = vld [vmem:[%s9327 + $0xd8] sm:%s9318]
                %9384 = vst [vmem:[%s9328 + $0xd8] sm:%s9318] %v9383
                %v9385 = vld [vmem:[%s9327 + $0xe0] sm:%s9318]
                %9386 = vst [vmem:[%s9328 + $0xe0] sm:%s9318] %v9385
                %v9387 = vld [vmem:[%s9327 + $0xe8] sm:%s9318]
                %9388 = vst [vmem:[%s9328 + $0xe8] sm:%s9318] %v9387
                %v9389 = vld [vmem:[%s9327 + $0xf0] sm:%s9318]
                %9390 = vst [vmem:[%s9328 + $0xf0] sm:%s9318] %v9389
                %v9391 = vld [vmem:[%s9327 + $0xf8] sm:%s9318]
                %9392 = vst [vmem:[%s9328 + $0xf8] sm:%s9318] %v9391
                %v9393 = vld [vmem:[%s9327 + $0x100] sm:%s9318]
                %9394 = vst [vmem:[%s9328 + $0x100] sm:%s9318] %v9393
                %v9395 = vld [vmem:[%s9327 + $0x108] sm:%s9318]
                %9396 = vst [vmem:[%s9328 + $0x108] sm:%s9318] %v9395
                %v9397 = vld [vmem:[%s9327 + $0x110] sm:%s9318]
                %9398 = vst [vmem:[%s9328 + $0x110] sm:%s9318] %v9397
                %v9399 = vld [vmem:[%s9327 + $0x118] sm:%s9318]
                %9400 = vst [vmem:[%s9328 + $0x118] sm:%s9318] %v9399
                %v9401 = vld [vmem:[%s9327 + $0x120] sm:%s9318]
                %9402 = vst [vmem:[%s9328 + $0x120] sm:%s9318] %v9401
                %v9403 = vld [vmem:[%s9327 + $0x128] sm:%s9318]
                %9404 = vst [vmem:[%s9328 + $0x128] sm:%s9318] %v9403
                %v9405 = vld [vmem:[%s9327 + $0x130] sm:%s9318]
                %9406 = vst [vmem:[%s9328 + $0x130] sm:%s9318] %v9405
                %v9407 = vld [vmem:[%s9327 + $0x138] sm:%s9318]
                %9408 = vst [vmem:[%s9328 + $0x138] sm:%s9318] %v9407
                %v9409 = vld [vmem:[%s9327 + $0x140] sm:%s9318]
                %9410 = vst [vmem:[%s9328 + $0x140] sm:%s9318] %v9409
                %v9411 = vld [vmem:[%s9327 + $0x148] sm:%s9318]
                %9412 = vst [vmem:[%s9328 + $0x148] sm:%s9318] %v9411
                %v9413 = vld [vmem:[%s9327 + $0x150] sm:%s9318]
                %9414 = vst [vmem:[%s9328 + $0x150] sm:%s9318] %v9413
                %v9415 = vld [vmem:[%s9327 + $0x158] sm:%s9318]
                %9416 = vst [vmem:[%s9328 + $0x158] sm:%s9318] %v9415
                %v9417 = vld [vmem:[%s9327 + $0x160] sm:%s9318]
                %9418 = vst [vmem:[%s9328 + $0x160] sm:%s9318] %v9417
                %v9419 = vld [vmem:[%s9327 + $0x168] sm:%s9318]
                %9420 = vst [vmem:[%s9328 + $0x168] sm:%s9318] %v9419
                %v9421 = vld [vmem:[%s9327 + $0x170] sm:%s9318]
                %9422 = vst [vmem:[%s9328 + $0x170] sm:%s9318] %v9421
                %v9423 = vld [vmem:[%s9327 + $0x178] sm:%s9318]
                %9424 = vst [vmem:[%s9328 + $0x178] sm:%s9318] %v9423
                %v9425 = vld [vmem:[%s9327 + $0x180] sm:%s9318]
                %9426 = vst [vmem:[%s9328 + $0x180] sm:%s9318] %v9425
                %v9427 = vld [vmem:[%s9327 + $0x188] sm:%s9318]
                %9428 = vst [vmem:[%s9328 + $0x188] sm:%s9318] %v9427
                %v9429 = vld [vmem:[%s9327 + $0x190] sm:%s9318]
                %9430 = vst [vmem:[%s9328 + $0x190] sm:%s9318] %v9429
                %v9431 = vld [vmem:[%s9327 + $0x198] sm:%s9318]
                %9432 = vst [vmem:[%s9328 + $0x198] sm:%s9318] %v9431
                %v9433 = vld [vmem:[%s9327 + $0x1a0] sm:%s9318]
                %9434 = vst [vmem:[%s9328 + $0x1a0] sm:%s9318] %v9433
                %v9435 = vld [vmem:[%s9327 + $0x1a8] sm:%s9318]
                %9436 = vst [vmem:[%s9328 + $0x1a8] sm:%s9318] %v9435
                %v9437 = vld [vmem:[%s9327 + $0x1b0] sm:%s9318]
                %9438 = vst [vmem:[%s9328 + $0x1b0] sm:%s9318] %v9437
                %v9439 = vld [vmem:[%s9327 + $0x1b8] sm:%s9318]
                %9440 = vst [vmem:[%s9328 + $0x1b8] sm:%s9318] %v9439
                %v9441 = vld [vmem:[%s9327 + $0x1c0] sm:%s9318]
                %9442 = vst [vmem:[%s9328 + $0x1c0] sm:%s9318] %v9441
                %v9443 = vld [vmem:[%s9327 + $0x1c8] sm:%s9318]
                %9444 = vst [vmem:[%s9328 + $0x1c8] sm:%s9318] %v9443
                %v9445 = vld [vmem:[%s9327 + $0x1d0] sm:%s9318]
                %9446 = vst [vmem:[%s9328 + $0x1d0] sm:%s9318] %v9445
                %v9447 = vld [vmem:[%s9327 + $0x1d8] sm:%s9318]
                %9448 = vst [vmem:[%s9328 + $0x1d8] sm:%s9318] %v9447
                %v9449 = vld [vmem:[%s9327 + $0x1e0] sm:%s9318]
                %9450 = vst [vmem:[%s9328 + $0x1e0] sm:%s9318] %v9449
                %v9451 = vld [vmem:[%s9327 + $0x1e8] sm:%s9318]
                %9452 = vst [vmem:[%s9328 + $0x1e8] sm:%s9318] %v9451
                %v9453 = vld [vmem:[%s9327 + $0x1f0] sm:%s9318]
                %9454 = vst [vmem:[%s9328 + $0x1f0] sm:%s9318] %v9453
                %v9455 = vld [vmem:[%s9327 + $0x1f8] sm:%s9318]
                %9456 = vst [vmem:[%s9328 + $0x1f8] sm:%s9318] %v9455
                %s9457 = sadd.s32 1, %s9326
                %p9458 = scmp.ge.s32.totalorder %s9457, %s9319
                %s9459 = scalar_select %p9458, 0, %s9457
                %s9460 = smul.u32 %s9459, 512
                %s9461 = smul.u32 %s9459, 512
                %s9462 = scalar_lea.vmem %s9298, %s9460 [#allocation2]
                %s9463 = scalar_lea.vmem %s9309, %s9461
              $region53: #{tpu_custom_call.1} parent=47 // loop_footer
                %s9323 = sadd.s32 %s9321, 1
              $region54: #{tpu_custom_call.1} parent=47 // loop_footer_branch
                %9320 = sbr.rel target = $region50
              $region55: #{tpu_custom_call.1} parent=47 // loop_exit
                _
              %s9464 = sshrl.u32 %s9305, 6
              %s9465 = sand.u32 %s9305, 63
              %s9466 = smul.u32 %s9464, 64
              %s9467 = smul.u32 8, %s9466
              %s9468 = scalar_lea.vmem %s9298, %s9467 [#allocation2]
              %s9469 = smul.u32 8, %s9466
              %s9470 = scalar_lea.vmem %s9309, %s9469
              // While loop
              $region56: #{tpu_custom_call.1} parent=47 // loop_pre_header
                _
              $region57: #{tpu_custom_call.1} parent=47 // loop_header
                %s9472 = sphi 0, %s9474
                %p9473 = scmp.ge.s32.totalorder %s9472, %s9465
                %s9477 = sphi 0, %s9484
                %s9478 = sphi %s9468, %s9487
                %s9479 = sphi %s9470, %s9488
              $region58: #{tpu_custom_call.1} parent=47 // loop_header_branch
                %9476 = sbr.rel (%p9473) target = $region62
              $region59: #{tpu_custom_call.1} parent=47 // loop_body
                %v9480 = vld [vmem:[%s9478] sm:%s9318]
                %9481 = vst [vmem:[%s9479] sm:%s9318] %v9480
                %s9482 = sadd.s32 1, %s9477
                %p9483 = scmp.ge.s32.totalorder %s9482, %s9465
                %s9484 = scalar_select %p9483, 0, %s9482
                %s9485 = smul.u32 %s9484, 8
                %s9486 = smul.u32 %s9484, 8
                %s9487 = scalar_lea.vmem %s9468, %s9485 [#allocation2]
                %s9488 = scalar_lea.vmem %s9470, %s9486
              $region60: #{tpu_custom_call.1} parent=47 // loop_footer
                %s9474 = sadd.s32 %s9472, 1
              $region61: #{tpu_custom_call.1} parent=47 // loop_footer_branch
                %9471 = sbr.rel target = $region57
              $region62: #{tpu_custom_call.1} parent=47 // loop_exit
                _
            $region48: #{tpu_custom_call.1} parent=39 // pred_fallthru
              _
          $region40: #{tpu_custom_call.1} parent=35 // pred_fallthru
            _
          %9663 = vnop
        $region36: #{tpu_custom_call.1} parent=31 // pred_fallthru
          _
      $region32: #{tpu_custom_call.1} parent=5 // pred_fallthru
        _
      %p9664 = scmp.le.s32.totalorder 2, %s9
      // Predicated region
      $region85: #{tpu_custom_call.1} parent=5 // pred_check
        %p9665 = pneg %p9664
      $region86: #{tpu_custom_call.1} parent=5 // pred_check_branch
        %9667 = sbr.rel (%p9665) target = $region88
      $region87: #{tpu_custom_call.1} parent=5 // pred_region
        %s9668 = ssub.s32 %s9, 2
        // Predicated region
        $region89: #{tpu_custom_call.1} parent=87 // pred_check
          %p9669 = pneg %p111
        $region90: #{tpu_custom_call.1} parent=87 // pred_check_branch
          %9671 = sbr.rel (%p9669) target = $region92
        $region91: #{tpu_custom_call.1} parent=87 // pred_region
          %s9672 = sand.u32 %s96, 1
          %s9673 = sand.u32 %s96, 1
          %s9674 = smul.addr %s9673, 4496
          %s9675 = scalar_lea.vmem [#allocation2], %s9674
        $region92: #{tpu_custom_call.1} parent=87 // pred_fallthru
          _
      $region88: #{tpu_custom_call.1} parent=5 // pred_fallthru
        _
    $region6: #{tpu_custom_call.1} parent=1 // loop_footer
      %s13 = sadd.s32 1, %s9
    $region7: #{tpu_custom_call.1} parent=1 // loop_footer_branch
      %8 = sbr.rel target = $region3
    $region8: #{tpu_custom_call.1} parent=1 // loop_exit
      _

</llo_original>
